<compile_context>
chip_gen: v6e
topology: v6e:2x2x1
jax: 0.10.0
libtpu: 0.0.40
codegen_flags: <defaults>
</compile_context>

<pallas_src>
import collections
import functools

import jax
import jax.numpy as jnp
from jax import lax
from jax.experimental import pallas as pl
from jax.experimental.pallas import tpu as pltpu

LANE = 128      # vreg lane width: every gate column segment is padded to this
SUBLANE = 8     # row-offset granularity used when packing weight blocks


def _round_up(x, m):
    return (x + m - 1) // m * m


PackMeta = collections.namedtuple(
    "PackMeta",
    [
        "I", "H1", "H2", "H3", "O",
        "HP1", "HP2", "HP3", "OP",
        "r_wih1", "r_whh1", "r_wih2", "r_whh2", "r_wih3", "r_whh3",
        "r_wlin", "r_bias",
    ],
)


# --------------------------- fused LSTM+Linear kernel ---------------------------
def _build_kernel(meta, T):
    m = meta
    H = (m.H1, m.H2, m.H3)
    HP = (m.HP1, m.HP2, m.HP3)
    GW = (4 * m.HP1, 4 * m.HP2, 4 * m.HP3)
    r_wih = (m.r_wih1, m.r_wih2, m.r_wih3)
    r_whh = (m.r_whh1, m.r_whh2, m.r_whh3)

    def kernel(seq_ref, wpack_ref, out_ref, gx_scr, h3_scr):
        def bias(layer):
            r = m.r_bias + layer
            return wpack_ref[r:r + 1, :GW[layer]]              # (1, 4*HP)

        def cell(x_gates, h_prev, c_prev, layer):
            """One LSTM cell update.  Gate columns: [ i | f | o | g ], each HP wide."""
            Hl, HPl = H[layer], HP[layer]
            r = r_whh[layer]
            rec = jnp.dot(                                      # (1, 4*HP) on the MXU
                h_prev[:, :Hl],                                 # offset-0 prefix slice
                wpack_ref[r:r + Hl, :GW[layer]],
                preferred_element_type=jnp.float32,
            )
            gates = x_gates + rec
            sig = jax.nn.sigmoid(gates[:, :3 * HPl])            # i, f, o  (one EUP pass)
            g_t = jnp.tanh(gates[:, 3 * HPl:])                  # g        (one EUP pass)
            i_g = sig[:, :HPl]                                  # 128-aligned vreg slices
            f_g = sig[:, HPl:2 * HPl]
            o_g = sig[:, 2 * HPl:3 * HPl]
            c_new = f_g * c_prev + i_g * g_t
            h_new = o_g * jnp.tanh(c_new)
            # Padded lanes stay exactly 0: zero weight cols / bias -> i=f=o=0.5,
            # g=0, so c_pad = 0.5*0 + 0.5*0 = 0 and h_pad = 0.5*tanh(0) = 0.
            return h_new, c_new

        def in_proj(x_prev, layer):
            """Input projection (+ bias) for layers 2/3 from the previous layer's h."""
            Hin = H[layer - 1]
            r = r_wih[layer]
            return jnp.dot(
                x_prev[:, :Hin],
                wpack_ref[r:r + Hin, :GW[layer]],
                preferred_element_type=jnp.float32,
            ) + bias(layer)

        # Hoisted layer-1 input projection: one (T, I) @ (I, 4*HP1) MXU matmul.
        # Kept in VMEM scratch so each step's row is a 1-sublane load (load slot)
        # instead of a sublane extraction from a live vreg.
        gx_scr[...] = jnp.dot(
            seq_ref[...],
            wpack_ref[m.r_wih1:m.r_wih1 + m.I, :GW[0]],
            preferred_element_type=jnp.float32,
        ) + bias(0)

        h1 = jnp.zeros((1, HP[0]), jnp.float32); c1 = h1
        h2 = jnp.zeros((1, HP[1]), jnp.float32); c2 = h2
        h3 = jnp.zeros((1, HP[2]), jnp.float32); c3 = h3

        # Wavefront schedule: step k runs layer1@t=k, layer2@t=k-1, layer3@t=k-2.
        # Each cell at step k only reads values produced at step k-1, so the three
        # layers' matmuls/activations overlap inside a step; critical path = T+2.
        for k in range(T + 2):                                  # T static -> fully unrolled
            t1, t2, t3 = k, k - 1, k - 2
            h1_in, h2_in = h1, h2                               # outputs of step k-1
            if t1 < T:
                h1, c1 = cell(gx_scr[t1:t1 + 1, :], h1, c1, 0)
            if 0 <= t2 < T:
                h2, c2 = cell(in_proj(h1_in, 1), h2, c2, 1)
            if 0 <= t3 < T:
                h3, c3 = cell(in_proj(h2_in, 2), h3, c3, 2)
                h3_scr[t3:t3 + 1, :] = h3                       # only layer-3 hits scratch

        # Final Linear over all T rows, written as a lane-dense (T, OP) slab.
        out_ref[...] = jnp.dot(
            h3_scr[...][:, :m.H3],
            wpack_ref[m.r_wlin:m.r_wlin + m.H3, :m.OP],
            preferred_element_type=jnp.float32,
        ) + wpack_ref[m.r_bias + 3:m.r_bias + 4, :m.OP]

    return kernel


# ------------------------------ parameter prep -----------------------------------
def prepare_params(params):
    """One-time repack: transpose, sum biases, spread each gate onto its own
    128-lane-aligned column segment ([i,f,o,g]), and concatenate every weight and
    bias into a single contiguous buffer (one DMA descriptor for the kernel)."""
    layers = [params["lstm_1"], params["lstm_2"], params["lstm_3"]]
    lin = params["linear"]
    I = layers[0]["w_ih"].shape[1]
    Hs = [q["w_hh"].shape[1] for q in layers]
    O = lin["w"].shape[0]
    HPs = [_round_up(h, LANE) for h in Hs]
    OP = _round_up(O, LANE)
    GWs = [4 * hp for hp in HPs]
    PACKW = max(GWs + [OP])

    GATE_SLOTS = (0, 1, 3, 2)   # kernel order [i,f,o,g] <- PyTorch order [i,f,g,o]

    def gate_w(w, H, HP):                       # w: (4H, in) -> (in, 4*HP)
        w_t = jnp.transpose(w).astype(jnp.float32)
        out = jnp.zeros((w.shape[1], 4 * HP), jnp.float32)
        for s, g in enumerate(GATE_SLOTS):
            out = out.at[:, s * HP:s * HP + H].set(w_t[:, g * H:(g + 1) * H])
        return out

    def gate_b(b, H, HP):                       # b: (4H,) -> (1, 4*HP)
        out = jnp.zeros((1, 4 * HP), jnp.float32)
        for s, g in enumerate(GATE_SLOTS):
            out = out.at[0, s * HP:s * HP + H].set(b[g * H:(g + 1) * H])
        return out

    blocks, offsets, row = [], {}, 0

    def add(name, mat):
        nonlocal row
        nrows = _round_up(mat.shape[0], SUBLANE)
        padded = jnp.zeros((nrows, PACKW), jnp.float32)
        padded = padded.at[:mat.shape[0], :mat.shape[1]].set(mat)
        blocks.append(padded)
        offsets[name] = row
        row += nrows

    add("wih1", gate_w(layers[0]["w_ih"], Hs[0], HPs[0]))
    add("whh1", gate_w(layers[0]["w_hh"], Hs[0], HPs[0]))
    add("wih2", gate_w(layers[1]["w_ih"], Hs[1], HPs[1]))
    add("whh2", gate_w(layers[1]["w_hh"], Hs[1], HPs[1]))
    add("wih3", gate_w(layers[2]["w_ih"], Hs[2], HPs[2]))
    add("whh3", gate_w(layers[2]["w_hh"], Hs[2], HPs[2]))
    wlin = jnp.zeros((Hs[2], OP), jnp.float32)
    wlin = wlin.at[:, :O].set(jnp.transpose(lin["w"]).astype(jnp.float32))
    add("wlin", wlin)
    bias_blk = jnp.zeros((4, PACKW), jnp.float32)
    for l in range(3):
        bias_blk = bias_blk.at[l:l + 1, :GWs[l]].set(
            gate_b(layers[l]["b_ih"] + layers[l]["b_hh"], Hs[l], HPs[l]))
    bias_blk = bias_blk.at[3, :O].set(lin["b"].astype(jnp.float32))
    add("bias", bias_blk)

    wpack = jnp.concatenate(blocks, axis=0)
    meta = PackMeta(
        I=I, H1=Hs[0], H2=Hs[1], H3=Hs[2], O=O,
        HP1=HPs[0], HP2=HPs[1], HP3=HPs[2], OP=OP,
        r_wih1=offsets["wih1"], r_whh1=offsets["whh1"],
        r_wih2=offsets["wih2"], r_whh2=offsets["whh2"],
        r_wih3=offsets["wih3"], r_whh3=offsets["whh3"],
        r_wlin=offsets["wlin"], r_bias=offsets["bias"],
    )
    return wpack, meta


# -------------------------------- forward wrapper --------------------------------
@functools.partial(jax.jit, static_argnums=2)
def lstm_model_forward(wpack, seq, meta):
    """seq: (T, input_size) float32.  Hidden states start at zero (init_hidden)."""
    T, I = seq.shape
    assert I == meta.I
    rows, packw = wpack.shape
    kernel = _build_kernel(meta, T)

    full = lambda shape: pl.BlockSpec(shape, lambda: (0,) * len(shape))
    out_pad = pl.pallas_call(
        kernel,
        out_shape=jax.ShapeDtypeStruct((T, meta.OP), jnp.float32),
        grid=(),
        in_specs=[full((T, I)), full((rows, packw))],
        out_specs=full((T, meta.OP)),
        scratch_shapes=[
            pltpu.VMEM((T, 4 * meta.HP1), jnp.float32),   # hoisted layer-1 gate inputs
            pltpu.VMEM((T, meta.HP3), jnp.float32),       # layer-3 hidden sequence
        ],
    )(seq, wpack)
    # TODO(synk): for multi-sequence throughput, add a leading batch grid axis with
    # dimension_semantics=("parallel",) (fills MXU rows / both v7x TensorCores);
    # a single stateful sequence, as in this module, cannot be batched that way.
    return out_pad[:, :meta.O]


# ------------------------------- parameter init -----------------------------------
def init_params(key, input_size, h1, h2, h3, out_size):
    """Deterministic init mimicking PyTorch's U(-1/sqrt(H), 1/sqrt(H))."""
    params = {}

    def lstm_params(key, in_dim, hid):
        k = 1.0 / jnp.sqrt(jnp.float32(hid))
        ks = jax.random.split(key, 4)
        return dict(
            w_ih=jax.random.uniform(ks[0], (4 * hid, in_dim), jnp.float32, -k, k),
            w_hh=jax.random.uniform(ks[1], (4 * hid, hid), jnp.float32, -k, k),
            b_ih=jax.random.uniform(ks[2], (4 * hid,), jnp.float32, -k, k),
            b_hh=jax.random.uniform(ks[3], (4 * hid,), jnp.float32, -k, k),
        )

    k1, k2, k3, k4 = jax.random.split(key, 4)
    params["lstm_1"] = lstm_params(k1, input_size, h1)
    params["lstm_2"] = lstm_params(k2, h1, h2)
    params["lstm_3"] = lstm_params(k3, h2, h3)
    kl = 1.0 / jnp.sqrt(jnp.float32(h3))
    kw, kb = jax.random.split(k4)
    params["linear"] = dict(
        w=jax.random.uniform(kw, (out_size, h3), jnp.float32, -kl, kl),
        b=jax.random.uniform(kb, (out_size,), jnp.float32, -kl, kl),
    )
    return params


# ------------------------------ pure-JAX reference --------------------------------
def _ref_lstm_layer(x, w_ih, w_hh, b_ih, b_hh):
    H = w_hh.shape[1]

    def step(carry, x_t):
        h, c = carry
        gates = x_t @ w_ih.T + h @ w_hh.T + b_ih + b_hh
        i = jax.nn.sigmoid(gates[0 * H:1 * H])
        f = jax.nn.sigmoid(gates[1 * H:2 * H])
        g = jnp.tanh(gates[2 * H:3 * H])
        o = jax.nn.sigmoid(gates[3 * H:4 * H])
        c_new = f * c + i * g
        h_new = o * jnp.tanh(c_new)
        return (h_new, c_new), h_new

    init = (jnp.zeros((H,), jnp.float32), jnp.zeros((H,), jnp.float32))
    _, hs = lax.scan(step, init, x)
    return hs


def _ref_forward(params, seq):
    p1, p2, p3 = params["lstm_1"], params["lstm_2"], params["lstm_3"]
    h1 = _ref_lstm_layer(seq, p1["w_ih"], p1["w_hh"], p1["b_ih"], p1["b_hh"])
    h2 = _ref_lstm_layer(h1, p2["w_ih"], p2["w_hh"], p2["b_ih"], p2["b_hh"])
    h3 = _ref_lstm_layer(h2, p3["w_ih"], p3["w_hh"], p3["b_ih"], p3["b_hh"])
    return h3 @ params["linear"]["w"].T + params["linear"]["b"]


if __name__ == "__main__":
    T = 8
    INPUT_SIZE = 4
    H1, H2, H3 = 32, 32, 32
    OUT_SIZE = 2

    key = jax.random.PRNGKey(0)
    kp, kx = jax.random.split(key)
    params = init_params(kp, INPUT_SIZE, H1, H2, H3, OUT_SIZE)
    wpack, meta = prepare_params(params)      # one-time repack into a single buffer
    seq = jax.random.normal(kx, (T, INPUT_SIZE), jnp.float32)

    out = lstm_model_forward(wpack, seq, meta)
    out = jax.block_until_ready(out)

    ref = _ref_forward(params, seq)
    assert out.shape == (T, OUT_SIZE)
    assert jnp.allclose(out, ref, atol=1e-4, rtol=1e-4), "mismatch vs reference"

    print("KERNEL_OK")
</pallas_src>

<mosaic_0001>
module attributes {stable_mosaic.version = 11 : i64} {
  func.func @kernel(%arg0: memref<8x4xf32, #tpu.memory_space<vmem>>, %arg1: memref<208x512xf32, #tpu.memory_space<vmem>>, %arg2: memref<8x128xf32, #tpu.memory_space<vmem>>, %arg3: memref<8x512xf32, #tpu.memory_space<vmem>>, %arg4: memref<8x128xf32, #tpu.memory_space<vmem>>) attributes {dimension_semantics = [], scalar_prefetch = 0 : i64, scratch_operands = 2 : i64, tpu.core_type = #tpu.core_type<tc>} {
    %c0 = arith.constant 0 : index
    %c0_0 = arith.constant 0 : index
    %0 = vector.load %arg0[%c0, %c0_0] : memref<8x4xf32, #tpu.memory_space<vmem>>, vector<8x4xf32>
    %c0_1 = arith.constant 0 : index
    %c0_2 = arith.constant 0 : index
    %1 = vector.load %arg1[%c0_1, %c0_2] : memref<208x512xf32, #tpu.memory_space<vmem>>, vector<4x512xf32>
    %cst = arith.constant dense<0.000000e+00> : vector<8x512xf32>
    %2 = tpu.matmul %0, %1, %cst {dimension_numbers = #tpu.dot_dimension_numbers<[1], [0], [0], [1], [0, 0, 1, 1], [], []>} : vector<8x4xf32>, vector<4x512xf32>, vector<8x512xf32> -> vector<8x512xf32>
    %c200 = arith.constant 200 : index
    %c0_3 = arith.constant 0 : index
    %3 = vector.load %arg1[%c200, %c0_3] : memref<208x512xf32, #tpu.memory_space<vmem>>, vector<1x512xf32>
    %4 = vector.broadcast %3 : vector<1x512xf32> to vector<8x512xf32>
    %5 = arith.addf %2, %4 : vector<8x512xf32>
    %c0_4 = arith.constant 0 : index
    %c0_5 = arith.constant 0 : index
    %6 = vector.load %arg3[%c0_4, %c0_5] : memref<8x512xf32, #tpu.memory_space<vmem>>, vector<8x512xf32>
    tpu.vector_store %arg3[%c0_4, %c0_5], %5 {strides = array<i32>} : memref<8x512xf32, #tpu.memory_space<vmem>>, vector<8x512xf32>,
    %cst_6 = arith.constant 0.000000e+00 : f32
    %7 = vector.broadcast %cst_6 : f32 to vector<1x128xf32>
    %cst_7 = arith.constant 0.000000e+00 : f32
    %8 = vector.broadcast %cst_7 : f32 to vector<1x128xf32>
    %cst_8 = arith.constant 0.000000e+00 : f32
    %9 = vector.broadcast %cst_8 : f32 to vector<1x128xf32>
    %c0_9 = arith.constant 0 : index
    %c0_10 = arith.constant 0 : index
    %10 = vector.load %arg3[%c0_9, %c0_10] : memref<8x512xf32, #tpu.memory_space<vmem>>, vector<1x512xf32>
    %11 = vector.extract_strided_slice %7 {offsets = [0, 0], sizes = [1, 32], strides = [1, 1]} : vector<1x128xf32> to vector<1x32xf32>
    %c8 = arith.constant 8 : index
    %c0_11 = arith.constant 0 : index
    %12 = vector.load %arg1[%c8, %c0_11] : memref<208x512xf32, #tpu.memory_space<vmem>>, vector<32x512xf32>
    %cst_12 = arith.constant dense<0.000000e+00> : vector<1x512xf32>
    %13 = tpu.matmul %11, %12, %cst_12 {dimension_numbers = #tpu.dot_dimension_numbers<[1], [0], [0], [1], [0, 0, 1, 1], [], []>} : vector<1x32xf32>, vector<32x512xf32>, vector<1x512xf32> -> vector<1x512xf32>
    %14 = arith.addf %10, %13 : vector<1x512xf32>
    %15 = vector.extract_strided_slice %14 {offsets = [0, 0], sizes = [1, 384], strides = [1, 1]} : vector<1x512xf32> to vector<1x384xf32>
    %16 = arith.negf %15 : vector<1x384xf32>
    %17 = math.exp %16 : vector<1x384xf32>
    %cst_13 = arith.constant 1.000000e+00 : f32
    %18 = vector.broadcast %cst_13 : f32 to vector<1x384xf32>
    %19 = arith.addf %18, %17 : vector<1x384xf32>
    %20 = arith.divf %18, %19 : vector<1x384xf32>
    %21 = vector.extract_strided_slice %14 {offsets = [0, 384], sizes = [1, 128], strides = [1, 1]} : vector<1x512xf32> to vector<1x128xf32>
    %22 = math.tanh %21 : vector<1x128xf32>
    %23 = vector.extract_strided_slice %20 {offsets = [0, 0], sizes = [1, 128], strides = [1, 1]} : vector<1x384xf32> to vector<1x128xf32>
    %24 = vector.extract_strided_slice %20 {offsets = [0, 128], sizes = [1, 128], strides = [1, 1]} : vector<1x384xf32> to vector<1x128xf32>
    %25 = vector.extract_strided_slice %20 {offsets = [0, 256], sizes = [1, 128], strides = [1, 1]} : vector<1x384xf32> to vector<1x128xf32>
    %26 = arith.mulf %24, %7 : vector<1x128xf32>
    %27 = arith.mulf %23, %22 : vector<1x128xf32>
    %28 = arith.addf %26, %27 : vector<1x128xf32>
    %29 = math.tanh %28 : vector<1x128xf32>
    %30 = arith.mulf %25, %29 : vector<1x128xf32>
    %c1 = arith.constant 1 : index
    %c0_14 = arith.constant 0 : index
    %31 = vector.load %arg3[%c1, %c0_14] : memref<8x512xf32, #tpu.memory_space<vmem>>, vector<1x512xf32>
    %32 = vector.extract_strided_slice %30 {offsets = [0, 0], sizes = [1, 32], strides = [1, 1]} : vector<1x128xf32> to vector<1x32xf32>
    %c8_15 = arith.constant 8 : index
    %c0_16 = arith.constant 0 : index
    %33 = vector.load %arg1[%c8_15, %c0_16] : memref<208x512xf32, #tpu.memory_space<vmem>>, vector<32x512xf32>
    %cst_17 = arith.constant dense<0.000000e+00> : vector<1x512xf32>
    %34 = tpu.matmul %32, %33, %cst_17 {dimension_numbers = #tpu.dot_dimension_numbers<[1], [0], [0], [1], [0, 0, 1, 1], [], []>} : vector<1x32xf32>, vector<32x512xf32>, vector<1x512xf32> -> vector<1x512xf32>
    %35 = arith.addf %31, %34 : vector<1x512xf32>
    %36 = vector.extract_strided_slice %35 {offsets = [0, 0], sizes = [1, 384], strides = [1, 1]} : vector<1x512xf32> to vector<1x384xf32>
    %37 = arith.negf %36 : vector<1x384xf32>
    %38 = math.exp %37 : vector<1x384xf32>
    %cst_18 = arith.constant 1.000000e+00 : f32
    %39 = vector.broadcast %cst_18 : f32 to vector<1x384xf32>
    %40 = arith.addf %39, %38 : vector<1x384xf32>
    %41 = arith.divf %39, %40 : vector<1x384xf32>
    %42 = vector.extract_strided_slice %35 {offsets = [0, 384], sizes = [1, 128], strides = [1, 1]} : vector<1x512xf32> to vector<1x128xf32>
    %43 = math.tanh %42 : vector<1x128xf32>
    %44 = vector.extract_strided_slice %41 {offsets = [0, 0], sizes = [1, 128], strides = [1, 1]} : vector<1x384xf32> to vector<1x128xf32>
    %45 = vector.extract_strided_slice %41 {offsets = [0, 128], sizes = [1, 128], strides = [1, 1]} : vector<1x384xf32> to vector<1x128xf32>
    %46 = vector.extract_strided_slice %41 {offsets = [0, 256], sizes = [1, 128], strides = [1, 1]} : vector<1x384xf32> to vector<1x128xf32>
    %47 = arith.mulf %45, %28 : vector<1x128xf32>
    %48 = arith.mulf %44, %43 : vector<1x128xf32>
    %49 = arith.addf %47, %48 : vector<1x128xf32>
    %50 = math.tanh %49 : vector<1x128xf32>
    %51 = arith.mulf %46, %50 : vector<1x128xf32>
    %52 = vector.extract_strided_slice %30 {offsets = [0, 0], sizes = [1, 32], strides = [1, 1]} : vector<1x128xf32> to vector<1x32xf32>
    %c40 = arith.constant 40 : index
    %c0_19 = arith.constant 0 : index
    %53 = vector.load %arg1[%c40, %c0_19] : memref<208x512xf32, #tpu.memory_space<vmem>>, vector<32x512xf32>
    %cst_20 = arith.constant dense<0.000000e+00> : vector<1x512xf32>
    %54 = tpu.matmul %52, %53, %cst_20 {dimension_numbers = #tpu.dot_dimension_numbers<[1], [0], [0], [1], [0, 0, 1, 1], [], []>} : vector<1x32xf32>, vector<32x512xf32>, vector<1x512xf32> -> vector<1x512xf32>
    %c201 = arith.constant 201 : index
    %c0_21 = arith.constant 0 : index
    %55 = vector.load %arg1[%c201, %c0_21] : memref<208x512xf32, #tpu.memory_space<vmem>>, vector<1x512xf32>
    %56 = arith.addf %54, %55 : vector<1x512xf32>
    %57 = vector.extract_strided_slice %8 {offsets = [0, 0], sizes = [1, 32], strides = [1, 1]} : vector<1x128xf32> to vector<1x32xf32>
    %c72 = arith.constant 72 : index
    %c0_22 = arith.constant 0 : index
    %58 = vector.load %arg1[%c72, %c0_22] : memref<208x512xf32, #tpu.memory_space<vmem>>, vector<32x512xf32>
    %cst_23 = arith.constant dense<0.000000e+00> : vector<1x512xf32>
    %59 = tpu.matmul %57, %58, %cst_23 {dimension_numbers = #tpu.dot_dimension_numbers<[1], [0], [0], [1], [0, 0, 1, 1], [], []>} : vector<1x32xf32>, vector<32x512xf32>, vector<1x512xf32> -> vector<1x512xf32>
    %60 = arith.addf %56, %59 : vector<1x512xf32>
    %61 = vector.extract_strided_slice %60 {offsets = [0, 0], sizes = [1, 384], strides = [1, 1]} : vector<1x512xf32> to vector<1x384xf32>
    %62 = arith.negf %61 : vector<1x384xf32>
    %63 = math.exp %62 : vector<1x384xf32>
    %cst_24 = arith.constant 1.000000e+00 : f32
    %64 = vector.broadcast %cst_24 : f32 to vector<1x384xf32>
    %65 = arith.addf %64, %63 : vector<1x384xf32>
    %66 = arith.divf %64, %65 : vector<1x384xf32>
    %67 = vector.extract_strided_slice %60 {offsets = [0, 384], sizes = [1, 128], strides = [1, 1]} : vector<1x512xf32> to vector<1x128xf32>
    %68 = math.tanh %67 : vector<1x128xf32>
    %69 = vector.extract_strided_slice %66 {offsets = [0, 0], sizes = [1, 128], strides = [1, 1]} : vector<1x384xf32> to vector<1x128xf32>
    %70 = vector.extract_strided_slice %66 {offsets = [0, 128], sizes = [1, 128], strides = [1, 1]} : vector<1x384xf32> to vector<1x128xf32>
    %71 = vector.extract_strided_slice %66 {offsets = [0, 256], sizes = [1, 128], strides = [1, 1]} : vector<1x384xf32> to vector<1x128xf32>
    %72 = arith.mulf %70, %8 : vector<1x128xf32>
    %73 = arith.mulf %69, %68 : vector<1x128xf32>
    %74 = arith.addf %72, %73 : vector<1x128xf32>
    %75 = math.tanh %74 : vector<1x128xf32>
    %76 = arith.mulf %71, %75 : vector<1x128xf32>
    %c2 = arith.constant 2 : index
    %c0_25 = arith.constant 0 : index
    %77 = vector.load %arg3[%c2, %c0_25] : memref<8x512xf32, #tpu.memory_space<vmem>>, vector<1x512xf32>
    %78 = vector.extract_strided_slice %51 {offsets = [0, 0], sizes = [1, 32], strides = [1, 1]} : vector<1x128xf32> to vector<1x32xf32>
    %c8_26 = arith.constant 8 : index
    %c0_27 = arith.constant 0 : index
    %79 = vector.load %arg1[%c8_26, %c0_27] : memref<208x512xf32, #tpu.memory_space<vmem>>, vector<32x512xf32>
    %cst_28 = arith.constant dense<0.000000e+00> : vector<1x512xf32>
    %80 = tpu.matmul %78, %79, %cst_28 {dimension_numbers = #tpu.dot_dimension_numbers<[1], [0], [0], [1], [0, 0, 1, 1], [], []>} : vector<1x32xf32>, vector<32x512xf32>, vector<1x512xf32> -> vector<1x512xf32>
    %81 = arith.addf %77, %80 : vector<1x512xf32>
    %82 = vector.extract_strided_slice %81 {offsets = [0, 0], sizes = [1, 384], strides = [1, 1]} : vector<1x512xf32> to vector<1x384xf32>
    %83 = arith.negf %82 : vector<1x384xf32>
    %84 = math.exp %83 : vector<1x384xf32>
    %cst_29 = arith.constant 1.000000e+00 : f32
    %85 = vector.broadcast %cst_29 : f32 to vector<1x384xf32>
    %86 = arith.addf %85, %84 : vector<1x384xf32>
    %87 = arith.divf %85, %86 : vector<1x384xf32>
    %88 = vector.extract_strided_slice %81 {offsets = [0, 384], sizes = [1, 128], strides = [1, 1]} : vector<1x512xf32> to vector<1x128xf32>
    %89 = math.tanh %88 : vector<1x128xf32>
    %90 = vector.extract_strided_slice %87 {offsets = [0, 0], sizes = [1, 128], strides = [1, 1]} : vector<1x384xf32> to vector<1x128xf32>
    %91 = vector.extract_strided_slice %87 {offsets = [0, 128], sizes = [1, 128], strides = [1, 1]} : vector<1x384xf32> to vector<1x128xf32>
    %92 = vector.extract_strided_slice %87 {offsets = [0, 256], sizes = [1, 128], strides = [1, 1]} : vector<1x384xf32> to vector<1x128xf32>
    %93 = arith.mulf %91, %49 : vector<1x128xf32>
    %94 = arith.mulf %90, %89 : vector<1x128xf32>
    %95 = arith.addf %93, %94 : vector<1x128xf32>
    %96 = math.tanh %95 : vector<1x128xf32>
    %97 = arith.mulf %92, %96 : vector<1x128xf32>
    %98 = vector.extract_strided_slice %51 {offsets = [0, 0], sizes = [1, 32], strides = [1, 1]} : vector<1x128xf32> to vector<1x32xf32>
    %c40_30 = arith.constant 40 : index
    %c0_31 = arith.constant 0 : index
    %99 = vector.load %arg1[%c40_30, %c0_31] : memref<208x512xf32, #tpu.memory_space<vmem>>, vector<32x512xf32>
    %cst_32 = arith.constant dense<0.000000e+00> : vector<1x512xf32>
    %100 = tpu.matmul %98, %99, %cst_32 {dimension_numbers = #tpu.dot_dimension_numbers<[1], [0], [0], [1], [0, 0, 1, 1], [], []>} : vector<1x32xf32>, vector<32x512xf32>, vector<1x512xf32> -> vector<1x512xf32>
    %c201_33 = arith.constant 201 : index
    %c0_34 = arith.constant 0 : index
    %101 = vector.load %arg1[%c201_33, %c0_34] : memref<208x512xf32, #tpu.memory_space<vmem>>, vector<1x512xf32>
    %102 = arith.addf %100, %101 : vector<1x512xf32>
    %103 = vector.extract_strided_slice %76 {offsets = [0, 0], sizes = [1, 32], strides = [1, 1]} : vector<1x128xf32> to vector<1x32xf32>
    %c72_35 = arith.constant 72 : index
    %c0_36 = arith.constant 0 : index
    %104 = vector.load %arg1[%c72_35, %c0_36] : memref<208x512xf32, #tpu.memory_space<vmem>>, vector<32x512xf32>
    %cst_37 = arith.constant dense<0.000000e+00> : vector<1x512xf32>
    %105 = tpu.matmul %103, %104, %cst_37 {dimension_numbers = #tpu.dot_dimension_numbers<[1], [0], [0], [1], [0, 0, 1, 1], [], []>} : vector<1x32xf32>, vector<32x512xf32>, vector<1x512xf32> -> vector<1x512xf32>
    %106 = arith.addf %102, %105 : vector<1x512xf32>
    %107 = vector.extract_strided_slice %106 {offsets = [0, 0], sizes = [1, 384], strides = [1, 1]} : vector<1x512xf32> to vector<1x384xf32>
    %108 = arith.negf %107 : vector<1x384xf32>
    %109 = math.exp %108 : vector<1x384xf32>
    %cst_38 = arith.constant 1.000000e+00 : f32
    %110 = vector.broadcast %cst_38 : f32 to vector<1x384xf32>
    %111 = arith.addf %110, %109 : vector<1x384xf32>
    %112 = arith.divf %110, %111 : vector<1x384xf32>
    %113 = vector.extract_strided_slice %106 {offsets = [0, 384], sizes = [1, 128], strides = [1, 1]} : vector<1x512xf32> to vector<1x128xf32>
    %114 = math.tanh %113 : vector<1x128xf32>
    %115 = vector.extract_strided_slice %112 {offsets = [0, 0], sizes = [1, 128], strides = [1, 1]} : vector<1x384xf32> to vector<1x128xf32>
    %116 = vector.extract_strided_slice %112 {offsets = [0, 128], sizes = [1, 128], strides = [1, 1]} : vector<1x384xf32> to vector<1x128xf32>
    %117 = vector.extract_strided_slice %112 {offsets = [0, 256], sizes = [1, 128], strides = [1, 1]} : vector<1x384xf32> to vector<1x128xf32>
    %118 = arith.mulf %116, %74 : vector<1x128xf32>
    %119 = arith.mulf %115, %114 : vector<1x128xf32>
    %120 = arith.addf %118, %119 : vector<1x128xf32>
    %121 = math.tanh %120 : vector<1x128xf32>
    %122 = arith.mulf %117, %121 : vector<1x128xf32>
    %123 = vector.extract_strided_slice %76 {offsets = [0, 0], sizes = [1, 32], strides = [1, 1]} : vector<1x128xf32> to vector<1x32xf32>
    %c104 = arith.constant 104 : index
    %c0_39 = arith.constant 0 : index
    %124 = vector.load %arg1[%c104, %c0_39] : memref<208x512xf32, #tpu.memory_space<vmem>>, vector<32x512xf32>
    %cst_40 = arith.constant dense<0.000000e+00> : vector<1x512xf32>
    %125 = tpu.matmul %123, %124, %cst_40 {dimension_numbers = #tpu.dot_dimension_numbers<[1], [0], [0], [1], [0, 0, 1, 1], [], []>} : vector<1x32xf32>, vector<32x512xf32>, vector<1x512xf32> -> vector<1x512xf32>
    %c202 = arith.constant 202 : index
    %c0_41 = arith.constant 0 : index
    %126 = vector.load %arg1[%c202, %c0_41] : memref<208x512xf32, #tpu.memory_space<vmem>>, vector<1x512xf32>
    %127 = arith.addf %125, %126 : vector<1x512xf32>
    %128 = vector.extract_strided_slice %9 {offsets = [0, 0], sizes = [1, 32], strides = [1, 1]} : vector<1x128xf32> to vector<1x32xf32>
    %c136 = arith.constant 136 : index
    %c0_42 = arith.constant 0 : index
    %129 = vector.load %arg1[%c136, %c0_42] : memref<208x512xf32, #tpu.memory_space<vmem>>, vector<32x512xf32>
    %cst_43 = arith.constant dense<0.000000e+00> : vector<1x512xf32>
    %130 = tpu.matmul %128, %129, %cst_43 {dimension_numbers = #tpu.dot_dimension_numbers<[1], [0], [0], [1], [0, 0, 1, 1], [], []>} : vector<1x32xf32>, vector<32x512xf32>, vector<1x512xf32> -> vector<1x512xf32>
    %131 = arith.addf %127, %130 : vector<1x512xf32>
    %132 = vector.extract_strided_slice %131 {offsets = [0, 0], sizes = [1, 384], strides = [1, 1]} : vector<1x512xf32> to vector<1x384xf32>
    %133 = arith.negf %132 : vector<1x384xf32>
    %134 = math.exp %133 : vector<1x384xf32>
    %cst_44 = arith.constant 1.000000e+00 : f32
    %135 = vector.broadcast %cst_44 : f32 to vector<1x384xf32>
    %136 = arith.addf %135, %134 : vector<1x384xf32>
    %137 = arith.divf %135, %136 : vector<1x384xf32>
    %138 = vector.extract_strided_slice %131 {offsets = [0, 384], sizes = [1, 128], strides = [1, 1]} : vector<1x512xf32> to vector<1x128xf32>
    %139 = math.tanh %138 : vector<1x128xf32>
    %140 = vector.extract_strided_slice %137 {offsets = [0, 0], sizes = [1, 128], strides = [1, 1]} : vector<1x384xf32> to vector<1x128xf32>
    %141 = vector.extract_strided_slice %137 {offsets = [0, 128], sizes = [1, 128], strides = [1, 1]} : vector<1x384xf32> to vector<1x128xf32>
    %142 = vector.extract_strided_slice %137 {offsets = [0, 256], sizes = [1, 128], strides = [1, 1]} : vector<1x384xf32> to vector<1x128xf32>
    %143 = arith.mulf %141, %9 : vector<1x128xf32>
    %144 = arith.mulf %140, %139 : vector<1x128xf32>
    %145 = arith.addf %143, %144 : vector<1x128xf32>
    %146 = math.tanh %145 : vector<1x128xf32>
    %147 = arith.mulf %142, %146 : vector<1x128xf32>
    %c0_45 = arith.constant 0 : index
    %c0_46 = arith.constant 0 : index
    %148 = vector.load %arg4[%c0_45, %c0_46] : memref<8x128xf32, #tpu.memory_space<vmem>>, vector<1x128xf32>
    tpu.vector_store %arg4[%c0_45, %c0_46], %147 {strides = array<i32>} : memref<8x128xf32, #tpu.memory_space<vmem>>, vector<1x128xf32>,
    %c3 = arith.constant 3 : index
    %c0_47 = arith.constant 0 : index
    %149 = vector.load %arg3[%c3, %c0_47] : memref<8x512xf32, #tpu.memory_space<vmem>>, vector<1x512xf32>
    %150 = vector.extract_strided_slice %97 {offsets = [0, 0], sizes = [1, 32], strides = [1, 1]} : vector<1x128xf32> to vector<1x32xf32>
    %c8_48 = arith.constant 8 : index
    %c0_49 = arith.constant 0 : index
    %151 = vector.load %arg1[%c8_48, %c0_49] : memref<208x512xf32, #tpu.memory_space<vmem>>, vector<32x512xf32>
    %cst_50 = arith.constant dense<0.000000e+00> : vector<1x512xf32>
    %152 = tpu.matmul %150, %151, %cst_50 {dimension_numbers = #tpu.dot_dimension_numbers<[1], [0], [0], [1], [0, 0, 1, 1], [], []>} : vector<1x32xf32>, vector<32x512xf32>, vector<1x512xf32> -> vector<1x512xf32>
    %153 = arith.addf %149, %152 : vector<1x512xf32>
    %154 = vector.extract_strided_slice %153 {offsets = [0, 0], sizes = [1, 384], strides = [1, 1]} : vector<1x512xf32> to vector<1x384xf32>
    %155 = arith.negf %154 : vector<1x384xf32>
    %156 = math.exp %155 : vector<1x384xf32>
    %cst_51 = arith.constant 1.000000e+00 : f32
    %157 = vector.broadcast %cst_51 : f32 to vector<1x384xf32>
    %158 = arith.addf %157, %156 : vector<1x384xf32>
    %159 = arith.divf %157, %158 : vector<1x384xf32>
    %160 = vector.extract_strided_slice %153 {offsets = [0, 384], sizes = [1, 128], strides = [1, 1]} : vector<1x512xf32> to vector<1x128xf32>
    %161 = math.tanh %160 : vector<1x128xf32>
    %162 = vector.extract_strided_slice %159 {offsets = [0, 0], sizes = [1, 128], strides = [1, 1]} : vector<1x384xf32> to vector<1x128xf32>
    %163 = vector.extract_strided_slice %159 {offsets = [0, 128], sizes = [1, 128], strides = [1, 1]} : vector<1x384xf32> to vector<1x128xf32>
    %164 = vector.extract_strided_slice %159 {offsets = [0, 256], sizes = [1, 128], strides = [1, 1]} : vector<1x384xf32> to vector<1x128xf32>
    %165 = arith.mulf %163, %95 : vector<1x128xf32>
    %166 = arith.mulf %162, %161 : vector<1x128xf32>
    %167 = arith.addf %165, %166 : vector<1x128xf32>
    %168 = math.tanh %167 : vector<1x128xf32>
    %169 = arith.mulf %164, %168 : vector<1x128xf32>
    %170 = vector.extract_strided_slice %97 {offsets = [0, 0], sizes = [1, 32], strides = [1, 1]} : vector<1x128xf32> to vector<1x32xf32>
    %c40_52 = arith.constant 40 : index
    %c0_53 = arith.constant 0 : index
    %171 = vector.load %arg1[%c40_52, %c0_53] : memref<208x512xf32, #tpu.memory_space<vmem>>, vector<32x512xf32>
    %cst_54 = arith.constant dense<0.000000e+00> : vector<1x512xf32>
    %172 = tpu.matmul %170, %171, %cst_54 {dimension_numbers = #tpu.dot_dimension_numbers<[1], [0], [0], [1], [0, 0, 1, 1], [], []>} : vector<1x32xf32>, vector<32x512xf32>, vector<1x512xf32> -> vector<1x512xf32>
    %c201_55 = arith.constant 201 : index
    %c0_56 = arith.constant 0 : index
    %173 = vector.load %arg1[%c201_55, %c0_56] : memref<208x512xf32, #tpu.memory_space<vmem>>, vector<1x512xf32>
    %174 = arith.addf %172, %173 : vector<1x512xf32>
    %175 = vector.extract_strided_slice %122 {offsets = [0, 0], sizes = [1, 32], strides = [1, 1]} : vector<1x128xf32> to vector<1x32xf32>
    %c72_57 = arith.constant 72 : index
    %c0_58 = arith.constant 0 : index
    %176 = vector.load %arg1[%c72_57, %c0_58] : memref<208x512xf32, #tpu.memory_space<vmem>>, vector<32x512xf32>
    %cst_59 = arith.constant dense<0.000000e+00> : vector<1x512xf32>
    %177 = tpu.matmul %175, %176, %cst_59 {dimension_numbers = #tpu.dot_dimension_numbers<[1], [0], [0], [1], [0, 0, 1, 1], [], []>} : vector<1x32xf32>, vector<32x512xf32>, vector<1x512xf32> -> vector<1x512xf32>
    %178 = arith.addf %174, %177 : vector<1x512xf32>
    %179 = vector.extract_strided_slice %178 {offsets = [0, 0], sizes = [1, 384], strides = [1, 1]} : vector<1x512xf32> to vector<1x384xf32>
    %180 = arith.negf %179 : vector<1x384xf32>
    %181 = math.exp %180 : vector<1x384xf32>
    %cst_60 = arith.constant 1.000000e+00 : f32
    %182 = vector.broadcast %cst_60 : f32 to vector<1x384xf32>
    %183 = arith.addf %182, %181 : vector<1x384xf32>
    %184 = arith.divf %182, %183 : vector<1x384xf32>
    %185 = vector.extract_strided_slice %178 {offsets = [0, 384], sizes = [1, 128], strides = [1, 1]} : vector<1x512xf32> to vector<1x128xf32>
    %186 = math.tanh %185 : vector<1x128xf32>
    %187 = vector.extract_strided_slice %184 {offsets = [0, 0], sizes = [1, 128], strides = [1, 1]} : vector<1x384xf32> to vector<1x128xf32>
    %188 = vector.extract_strided_slice %184 {offsets = [0, 128], sizes = [1, 128], strides = [1, 1]} : vector<1x384xf32> to vector<1x128xf32>
    %189 = vector.extract_strided_slice %184 {offsets = [0, 256], sizes = [1, 128], strides = [1, 1]} : vector<1x384xf32> to vector<1x128xf32>
    %190 = arith.mulf %188, %120 : vector<1x128xf32>
    %191 = arith.mulf %187, %186 : vector<1x128xf32>
    %192 = arith.addf %190, %191 : vector<1x128xf32>
    %193 = math.tanh %192 : vector<1x128xf32>
    %194 = arith.mulf %189, %193 : vector<1x128xf32>
    %195 = vector.extract_strided_slice %122 {offsets = [0, 0], sizes = [1, 32], strides = [1, 1]} : vector<1x128xf32> to vector<1x32xf32>
    %c104_61 = arith.constant 104 : index
    %c0_62 = arith.constant 0 : index
    %196 = vector.load %arg1[%c104_61, %c0_62] : memref<208x512xf32, #tpu.memory_space<vmem>>, vector<32x512xf32>
    %cst_63 = arith.constant dense<0.000000e+00> : vector<1x512xf32>
    %197 = tpu.matmul %195, %196, %cst_63 {dimension_numbers = #tpu.dot_dimension_numbers<[1], [0], [0], [1], [0, 0, 1, 1], [], []>} : vector<1x32xf32>, vector<32x512xf32>, vector<1x512xf32> -> vector<1x512xf32>
    %c202_64 = arith.constant 202 : index
    %c0_65 = arith.constant 0 : index
    %198 = vector.load %arg1[%c202_64, %c0_65] : memref<208x512xf32, #tpu.memory_space<vmem>>, vector<1x512xf32>
    %199 = arith.addf %197, %198 : vector<1x512xf32>
    %200 = vector.extract_strided_slice %147 {offsets = [0, 0], sizes = [1, 32], strides = [1, 1]} : vector<1x128xf32> to vector<1x32xf32>
    %c136_66 = arith.constant 136 : index
    %c0_67 = arith.constant 0 : index
    %201 = vector.load %arg1[%c136_66, %c0_67] : memref<208x512xf32, #tpu.memory_space<vmem>>, vector<32x512xf32>
    %cst_68 = arith.constant dense<0.000000e+00> : vector<1x512xf32>
    %202 = tpu.matmul %200, %201, %cst_68 {dimension_numbers = #tpu.dot_dimension_numbers<[1], [0], [0], [1], [0, 0, 1, 1], [], []>} : vector<1x32xf32>, vector<32x512xf32>, vector<1x512xf32> -> vector<1x512xf32>
    %203 = arith.addf %199, %202 : vector<1x512xf32>
    %204 = vector.extract_strided_slice %203 {offsets = [0, 0], sizes = [1, 384], strides = [1, 1]} : vector<1x512xf32> to vector<1x384xf32>
    %205 = arith.negf %204 : vector<1x384xf32>
    %206 = math.exp %205 : vector<1x384xf32>
    %cst_69 = arith.constant 1.000000e+00 : f32
    %207 = vector.broadcast %cst_69 : f32 to vector<1x384xf32>
    %208 = arith.addf %207, %206 : vector<1x384xf32>
    %209 = arith.divf %207, %208 : vector<1x384xf32>
    %210 = vector.extract_strided_slice %203 {offsets = [0, 384], sizes = [1, 128], strides = [1, 1]} : vector<1x512xf32> to vector<1x128xf32>
    %211 = math.tanh %210 : vector<1x128xf32>
    %212 = vector.extract_strided_slice %209 {offsets = [0, 0], sizes = [1, 128], strides = [1, 1]} : vector<1x384xf32> to vector<1x128xf32>
    %213 = vector.extract_strided_slice %209 {offsets = [0, 128], sizes = [1, 128], strides = [1, 1]} : vector<1x384xf32> to vector<1x128xf32>
    %214 = vector.extract_strided_slice %209 {offsets = [0, 256], sizes = [1, 128], strides = [1, 1]} : vector<1x384xf32> to vector<1x128xf32>
    %215 = arith.mulf %213, %145 : vector<1x128xf32>
    %216 = arith.mulf %212, %211 : vector<1x128xf32>
    %217 = arith.addf %215, %216 : vector<1x128xf32>
    %218 = math.tanh %217 : vector<1x128xf32>
    %219 = arith.mulf %214, %218 : vector<1x128xf32>
    %c1_70 = arith.constant 1 : index
    %c0_71 = arith.constant 0 : index
    %220 = vector.load %arg4[%c1_70, %c0_71] : memref<8x128xf32, #tpu.memory_space<vmem>>, vector<1x128xf32>
    tpu.vector_store %arg4[%c1_70, %c0_71], %219 {strides = array<i32>} : memref<8x128xf32, #tpu.memory_space<vmem>>, vector<1x128xf32>,
    %c4 = arith.constant 4 : index
    %c0_72 = arith.constant 0 : index
    %221 = vector.load %arg3[%c4, %c0_72] : memref<8x512xf32, #tpu.memory_space<vmem>>, vector<1x512xf32>
    %222 = vector.extract_strided_slice %169 {offsets = [0, 0], sizes = [1, 32], strides = [1, 1]} : vector<1x128xf32> to vector<1x32xf32>
    %c8_73 = arith.constant 8 : index
    %c0_74 = arith.constant 0 : index
    %223 = vector.load %arg1[%c8_73, %c0_74] : memref<208x512xf32, #tpu.memory_space<vmem>>, vector<32x512xf32>
    %cst_75 = arith.constant dense<0.000000e+00> : vector<1x512xf32>
    %224 = tpu.matmul %222, %223, %cst_75 {dimension_numbers = #tpu.dot_dimension_numbers<[1], [0], [0], [1], [0, 0, 1, 1], [], []>} : vector<1x32xf32>, vector<32x512xf32>, vector<1x512xf32> -> vector<1x512xf32>
    %225 = arith.addf %221, %224 : vector<1x512xf32>
    %226 = vector.extract_strided_slice %225 {offsets = [0, 0], sizes = [1, 384], strides = [1, 1]} : vector<1x512xf32> to vector<1x384xf32>
    %227 = arith.negf %226 : vector<1x384xf32>
    %228 = math.exp %227 : vector<1x384xf32>
    %cst_76 = arith.constant 1.000000e+00 : f32
    %229 = vector.broadcast %cst_76 : f32 to vector<1x384xf32>
    %230 = arith.addf %229, %228 : vector<1x384xf32>
    %231 = arith.divf %229, %230 : vector<1x384xf32>
    %232 = vector.extract_strided_slice %225 {offsets = [0, 384], sizes = [1, 128], strides = [1, 1]} : vector<1x512xf32> to vector<1x128xf32>
    %233 = math.tanh %232 : vector<1x128xf32>
    %234 = vector.extract_strided_slice %231 {offsets = [0, 0], sizes = [1, 128], strides = [1, 1]} : vector<1x384xf32> to vector<1x128xf32>
    %235 = vector.extract_strided_slice %231 {offsets = [0, 128], sizes = [1, 128], strides = [1, 1]} : vector<1x384xf32> to vector<1x128xf32>
    %236 = vector.extract_strided_slice %231 {offsets = [0, 256], sizes = [1, 128], strides = [1, 1]} : vector<1x384xf32> to vector<1x128xf32>
    %237 = arith.mulf %235, %167 : vector<1x128xf32>
    %238 = arith.mulf %234, %233 : vector<1x128xf32>
    %239 = arith.addf %237, %238 : vector<1x128xf32>
    %240 = math.tanh %239 : vector<1x128xf32>
    %241 = arith.mulf %236, %240 : vector<1x128xf32>
    %242 = vector.extract_strided_slice %169 {offsets = [0, 0], sizes = [1, 32], strides = [1, 1]} : vector<1x128xf32> to vector<1x32xf32>
    %c40_77 = arith.constant 40 : index
    %c0_78 = arith.constant 0 : index
    %243 = vector.load %arg1[%c40_77, %c0_78] : memref<208x512xf32, #tpu.memory_space<vmem>>, vector<32x512xf32>
    %cst_79 = arith.constant dense<0.000000e+00> : vector<1x512xf32>
    %244 = tpu.matmul %242, %243, %cst_79 {dimension_numbers = #tpu.dot_dimension_numbers<[1], [0], [0], [1], [0, 0, 1, 1], [], []>} : vector<1x32xf32>, vector<32x512xf32>, vector<1x512xf32> -> vector<1x512xf32>
    %c201_80 = arith.constant 201 : index
    %c0_81 = arith.constant 0 : index
    %245 = vector.load %arg1[%c201_80, %c0_81] : memref<208x512xf32, #tpu.memory_space<vmem>>, vector<1x512xf32>
    %246 = arith.addf %244, %245 : vector<1x512xf32>
    %247 = vector.extract_strided_slice %194 {offsets = [0, 0], sizes = [1, 32], strides = [1, 1]} : vector<1x128xf32> to vector<1x32xf32>
    %c72_82 = arith.constant 72 : index
    %c0_83 = arith.constant 0 : index
    %248 = vector.load %arg1[%c72_82, %c0_83] : memref<208x512xf32, #tpu.memory_space<vmem>>, vector<32x512xf32>
    %cst_84 = arith.constant dense<0.000000e+00> : vector<1x512xf32>
    %249 = tpu.matmul %247, %248, %cst_84 {dimension_numbers = #tpu.dot_dimension_numbers<[1], [0], [0], [1], [0, 0, 1, 1], [], []>} : vector<1x32xf32>, vector<32x512xf32>, vector<1x512xf32> -> vector<1x512xf32>
    %250 = arith.addf %246, %249 : vector<1x512xf32>
    %251 = vector.extract_strided_slice %250 {offsets = [0, 0], sizes = [1, 384], strides = [1, 1]} : vector<1x512xf32> to vector<1x384xf32>
    %252 = arith.negf %251 : vector<1x384xf32>
    %253 = math.exp %252 : vector<1x384xf32>
    %cst_85 = arith.constant 1.000000e+00 : f32
    %254 = vector.broadcast %cst_85 : f32 to vector<1x384xf32>
    %255 = arith.addf %254, %253 : vector<1x384xf32>
    %256 = arith.divf %254, %255 : vector<1x384xf32>
    %257 = vector.extract_strided_slice %250 {offsets = [0, 384], sizes = [1, 128], strides = [1, 1]} : vector<1x512xf32> to vector<1x128xf32>
    %258 = math.tanh %257 : vector<1x128xf32>
    %259 = vector.extract_strided_slice %256 {offsets = [0, 0], sizes = [1, 128], strides = [1, 1]} : vector<1x384xf32> to vector<1x128xf32>
    %260 = vector.extract_strided_slice %256 {offsets = [0, 128], sizes = [1, 128], strides = [1, 1]} : vector<1x384xf32> to vector<1x128xf32>
    %261 = vector.extract_strided_slice %256 {offsets = [0, 256], sizes = [1, 128], strides = [1, 1]} : vector<1x384xf32> to vector<1x128xf32>
    %262 = arith.mulf %260, %192 : vector<1x128xf32>
    %263 = arith.mulf %259, %258 : vector<1x128xf32>
    %264 = arith.addf %262, %263 : vector<1x128xf32>
    %265 = math.tanh %264 : vector<1x128xf32>
    %266 = arith.mulf %261, %265 : vector<1x128xf32>
    %267 = vector.extract_strided_slice %194 {offsets = [0, 0], sizes = [1, 32], strides = [1, 1]} : vector<1x128xf32> to vector<1x32xf32>
    %c104_86 = arith.constant 104 : index
    %c0_87 = arith.constant 0 : index
    %268 = vector.load %arg1[%c104_86, %c0_87] : memref<208x512xf32, #tpu.memory_space<vmem>>, vector<32x512xf32>
    %cst_88 = arith.constant dense<0.000000e+00> : vector<1x512xf32>
    %269 = tpu.matmul %267, %268, %cst_88 {dimension_numbers = #tpu.dot_dimension_numbers<[1], [0], [0], [1], [0, 0, 1, 1], [], []>} : vector<1x32xf32>, vector<32x512xf32>, vector<1x512xf32> -> vector<1x512xf32>
    %c202_89 = arith.constant 202 : index
    %c0_90 = arith.constant 0 : index
    %270 = vector.load %arg1[%c202_89, %c0_90] : memref<208x512xf32, #tpu.memory_space<vmem>>, vector<1x512xf32>
    %271 = arith.addf %269, %270 : vector<1x512xf32>
    %272 = vector.extract_strided_slice %219 {offsets = [0, 0], sizes = [1, 32], strides = [1, 1]} : vector<1x128xf32> to vector<1x32xf32>
    %c136_91 = arith.constant 136 : index
    %c0_92 = arith.constant 0 : index
    %273 = vector.load %arg1[%c136_91, %c0_92] : memref<208x512xf32, #tpu.memory_space<vmem>>, vector<32x512xf32>
    %cst_93 = arith.constant dense<0.000000e+00> : vector<1x512xf32>
    %274 = tpu.matmul %272, %273, %cst_93 {dimension_numbers = #tpu.dot_dimension_numbers<[1], [0], [0], [1], [0, 0, 1, 1], [], []>} : vector<1x32xf32>, vector<32x512xf32>, vector<1x512xf32> -> vector<1x512xf32>
    %275 = arith.addf %271, %274 : vector<1x512xf32>
    %276 = vector.extract_strided_slice %275 {offsets = [0, 0], sizes = [1, 384], strides = [1, 1]} : vector<1x512xf32> to vector<1x384xf32>
    %277 = arith.negf %276 : vector<1x384xf32>
    %278 = math.exp %277 : vector<1x384xf32>
    %cst_94 = arith.constant 1.000000e+00 : f32
    %279 = vector.broadcast %cst_94 : f32 to vector<1x384xf32>
    %280 = arith.addf %279, %278 : vector<1x384xf32>
    %281 = arith.divf %279, %280 : vector<1x384xf32>
    %282 = vector.extract_strided_slice %275 {offsets = [0, 384], sizes = [1, 128], strides = [1, 1]} : vector<1x512xf32> to vector<1x128xf32>
    %283 = math.tanh %282 : vector<1x128xf32>
    %284 = vector.extract_strided_slice %281 {offsets = [0, 0], sizes = [1, 128], strides = [1, 1]} : vector<1x384xf32> to vector<1x128xf32>
    %285 = vector.extract_strided_slice %281 {offsets = [0, 128], sizes = [1, 128], strides = [1, 1]} : vector<1x384xf32> to vector<1x128xf32>
    %286 = vector.extract_strided_slice %281 {offsets = [0, 256], sizes = [1, 128], strides = [1, 1]} : vector<1x384xf32> to vector<1x128xf32>
    %287 = arith.mulf %285, %217 : vector<1x128xf32>
    %288 = arith.mulf %284, %283 : vector<1x128xf32>
    %289 = arith.addf %287, %288 : vector<1x128xf32>
    %290 = math.tanh %289 : vector<1x128xf32>
    %291 = arith.mulf %286, %290 : vector<1x128xf32>
    %c2_95 = arith.constant 2 : index
    %c0_96 = arith.constant 0 : index
    %292 = vector.load %arg4[%c2_95, %c0_96] : memref<8x128xf32, #tpu.memory_space<vmem>>, vector<1x128xf32>
    tpu.vector_store %arg4[%c2_95, %c0_96], %291 {strides = array<i32>} : memref<8x128xf32, #tpu.memory_space<vmem>>, vector<1x128xf32>,
    %c5 = arith.constant 5 : index
    %c0_97 = arith.constant 0 : index
    %293 = vector.load %arg3[%c5, %c0_97] : memref<8x512xf32, #tpu.memory_space<vmem>>, vector<1x512xf32>
    %294 = vector.extract_strided_slice %241 {offsets = [0, 0], sizes = [1, 32], strides = [1, 1]} : vector<1x128xf32> to vector<1x32xf32>
    %c8_98 = arith.constant 8 : index
    %c0_99 = arith.constant 0 : index
    %295 = vector.load %arg1[%c8_98, %c0_99] : memref<208x512xf32, #tpu.memory_space<vmem>>, vector<32x512xf32>
    %cst_100 = arith.constant dense<0.000000e+00> : vector<1x512xf32>
    %296 = tpu.matmul %294, %295, %cst_100 {dimension_numbers = #tpu.dot_dimension_numbers<[1], [0], [0], [1], [0, 0, 1, 1], [], []>} : vector<1x32xf32>, vector<32x512xf32>, vector<1x512xf32> -> vector<1x512xf32>
    %297 = arith.addf %293, %296 : vector<1x512xf32>
    %298 = vector.extract_strided_slice %297 {offsets = [0, 0], sizes = [1, 384], strides = [1, 1]} : vector<1x512xf32> to vector<1x384xf32>
    %299 = arith.negf %298 : vector<1x384xf32>
    %300 = math.exp %299 : vector<1x384xf32>
    %cst_101 = arith.constant 1.000000e+00 : f32
    %301 = vector.broadcast %cst_101 : f32 to vector<1x384xf32>
    %302 = arith.addf %301, %300 : vector<1x384xf32>
    %303 = arith.divf %301, %302 : vector<1x384xf32>
    %304 = vector.extract_strided_slice %297 {offsets = [0, 384], sizes = [1, 128], strides = [1, 1]} : vector<1x512xf32> to vector<1x128xf32>
    %305 = math.tanh %304 : vector<1x128xf32>
    %306 = vector.extract_strided_slice %303 {offsets = [0, 0], sizes = [1, 128], strides = [1, 1]} : vector<1x384xf32> to vector<1x128xf32>
    %307 = vector.extract_strided_slice %303 {offsets = [0, 128], sizes = [1, 128], strides = [1, 1]} : vector<1x384xf32> to vector<1x128xf32>
    %308 = vector.extract_strided_slice %303 {offsets = [0, 256], sizes = [1, 128], strides = [1, 1]} : vector<1x384xf32> to vector<1x128xf32>
    %309 = arith.mulf %307, %239 : vector<1x128xf32>
    %310 = arith.mulf %306, %305 : vector<1x128xf32>
    %311 = arith.addf %309, %310 : vector<1x128xf32>
    %312 = math.tanh %311 : vector<1x128xf32>
    %313 = arith.mulf %308, %312 : vector<1x128xf32>
    %314 = vector.extract_strided_slice %241 {offsets = [0, 0], sizes = [1, 32], strides = [1, 1]} : vector<1x128xf32> to vector<1x32xf32>
    %c40_102 = arith.constant 40 : index
    %c0_103 = arith.constant 0 : index
    %315 = vector.load %arg1[%c40_102, %c0_103] : memref<208x512xf32, #tpu.memory_space<vmem>>, vector<32x512xf32>
    %cst_104 = arith.constant dense<0.000000e+00> : vector<1x512xf32>
    %316 = tpu.matmul %314, %315, %cst_104 {dimension_numbers = #tpu.dot_dimension_numbers<[1], [0], [0], [1], [0, 0, 1, 1], [], []>} : vector<1x32xf32>, vector<32x512xf32>, vector<1x512xf32> -> vector<1x512xf32>
    %c201_105 = arith.constant 201 : index
    %c0_106 = arith.constant 0 : index
    %317 = vector.load %arg1[%c201_105, %c0_106] : memref<208x512xf32, #tpu.memory_space<vmem>>, vector<1x512xf32>
    %318 = arith.addf %316, %317 : vector<1x512xf32>
    %319 = vector.extract_strided_slice %266 {offsets = [0, 0], sizes = [1, 32], strides = [1, 1]} : vector<1x128xf32> to vector<1x32xf32>
    %c72_107 = arith.constant 72 : index
    %c0_108 = arith.constant 0 : index
    %320 = vector.load %arg1[%c72_107, %c0_108] : memref<208x512xf32, #tpu.memory_space<vmem>>, vector<32x512xf32>
    %cst_109 = arith.constant dense<0.000000e+00> : vector<1x512xf32>
    %321 = tpu.matmul %319, %320, %cst_109 {dimension_numbers = #tpu.dot_dimension_numbers<[1], [0], [0], [1], [0, 0, 1, 1], [], []>} : vector<1x32xf32>, vector<32x512xf32>, vector<1x512xf32> -> vector<1x512xf32>
    %322 = arith.addf %318, %321 : vector<1x512xf32>
    %323 = vector.extract_strided_slice %322 {offsets = [0, 0], sizes = [1, 384], strides = [1, 1]} : vector<1x512xf32> to vector<1x384xf32>
    %324 = arith.negf %323 : vector<1x384xf32>
    %325 = math.exp %324 : vector<1x384xf32>
    %cst_110 = arith.constant 1.000000e+00 : f32
    %326 = vector.broadcast %cst_110 : f32 to vector<1x384xf32>
    %327 = arith.addf %326, %325 : vector<1x384xf32>
    %328 = arith.divf %326, %327 : vector<1x384xf32>
    %329 = vector.extract_strided_slice %322 {offsets = [0, 384], sizes = [1, 128], strides = [1, 1]} : vector<1x512xf32> to vector<1x128xf32>
    %330 = math.tanh %329 : vector<1x128xf32>
    %331 = vector.extract_strided_slice %328 {offsets = [0, 0], sizes = [1, 128], strides = [1, 1]} : vector<1x384xf32> to vector<1x128xf32>
    %332 = vector.extract_strided_slice %328 {offsets = [0, 128], sizes = [1, 128], strides = [1, 1]} : vector<1x384xf32> to vector<1x128xf32>
    %333 = vector.extract_strided_slice %328 {offsets = [0, 256], sizes = [1, 128], strides = [1, 1]} : vector<1x384xf32> to vector<1x128xf32>
    %334 = arith.mulf %332, %264 : vector<1x128xf32>
    %335 = arith.mulf %331, %330 : vector<1x128xf32>
    %336 = arith.addf %334, %335 : vector<1x128xf32>
    %337 = math.tanh %336 : vector<1x128xf32>
    %338 = arith.mulf %333, %337 : vector<1x128xf32>
    %339 = vector.extract_strided_slice %266 {offsets = [0, 0], sizes = [1, 32], strides = [1, 1]} : vector<1x128xf32> to vector<1x32xf32>
    %c104_111 = arith.constant 104 : index
    %c0_112 = arith.constant 0 : index
    %340 = vector.load %arg1[%c104_111, %c0_112] : memref<208x512xf32, #tpu.memory_space<vmem>>, vector<32x512xf32>
    %cst_113 = arith.constant dense<0.000000e+00> : vector<1x512xf32>
    %341 = tpu.matmul %339, %340, %cst_113 {dimension_numbers = #tpu.dot_dimension_numbers<[1], [0], [0], [1], [0, 0, 1, 1], [], []>} : vector<1x32xf32>, vector<32x512xf32>, vector<1x512xf32> -> vector<1x512xf32>
    %c202_114 = arith.constant 202 : index
    %c0_115 = arith.constant 0 : index
    %342 = vector.load %arg1[%c202_114, %c0_115] : memref<208x512xf32, #tpu.memory_space<vmem>>, vector<1x512xf32>
    %343 = arith.addf %341, %342 : vector<1x512xf32>
    %344 = vector.extract_strided_slice %291 {offsets = [0, 0], sizes = [1, 32], strides = [1, 1]} : vector<1x128xf32> to vector<1x32xf32>
    %c136_116 = arith.constant 136 : index
    %c0_117 = arith.constant 0 : index
    %345 = vector.load %arg1[%c136_116, %c0_117] : memref<208x512xf32, #tpu.memory_space<vmem>>, vector<32x512xf32>
    %cst_118 = arith.constant dense<0.000000e+00> : vector<1x512xf32>
    %346 = tpu.matmul %344, %345, %cst_118 {dimension_numbers = #tpu.dot_dimension_numbers<[1], [0], [0], [1], [0, 0, 1, 1], [], []>} : vector<1x32xf32>, vector<32x512xf32>, vector<1x512xf32> -> vector<1x512xf32>
    %347 = arith.addf %343, %346 : vector<1x512xf32>
    %348 = vector.extract_strided_slice %347 {offsets = [0, 0], sizes = [1, 384], strides = [1, 1]} : vector<1x512xf32> to vector<1x384xf32>
    %349 = arith.negf %348 : vector<1x384xf32>
    %350 = math.exp %349 : vector<1x384xf32>
    %cst_119 = arith.constant 1.000000e+00 : f32
    %351 = vector.broadcast %cst_119 : f32 to vector<1x384xf32>
    %352 = arith.addf %351, %350 : vector<1x384xf32>
    %353 = arith.divf %351, %352 : vector<1x384xf32>
    %354 = vector.extract_strided_slice %347 {offsets = [0, 384], sizes = [1, 128], strides = [1, 1]} : vector<1x512xf32> to vector<1x128xf32>
    %355 = math.tanh %354 : vector<1x128xf32>
    %356 = vector.extract_strided_slice %353 {offsets = [0, 0], sizes = [1, 128], strides = [1, 1]} : vector<1x384xf32> to vector<1x128xf32>
    %357 = vector.extract_strided_slice %353 {offsets = [0, 128], sizes = [1, 128], strides = [1, 1]} : vector<1x384xf32> to vector<1x128xf32>
    %358 = vector.extract_strided_slice %353 {offsets = [0, 256], sizes = [1, 128], strides = [1, 1]} : vector<1x384xf32> to vector<1x128xf32>
    %359 = arith.mulf %357, %289 : vector<1x128xf32>
    %360 = arith.mulf %356, %355 : vector<1x128xf32>
    %361 = arith.addf %359, %360 : vector<1x128xf32>
    %362 = math.tanh %361 : vector<1x128xf32>
    %363 = arith.mulf %358, %362 : vector<1x128xf32>
    %c3_120 = arith.constant 3 : index
    %c0_121 = arith.constant 0 : index
    %364 = vector.load %arg4[%c3_120, %c0_121] : memref<8x128xf32, #tpu.memory_space<vmem>>, vector<1x128xf32>
    tpu.vector_store %arg4[%c3_120, %c0_121], %363 {strides = array<i32>} : memref<8x128xf32, #tpu.memory_space<vmem>>, vector<1x128xf32>,
    %c6 = arith.constant 6 : index
    %c0_122 = arith.constant 0 : index
    %365 = vector.load %arg3[%c6, %c0_122] : memref<8x512xf32, #tpu.memory_space<vmem>>, vector<1x512xf32>
    %366 = vector.extract_strided_slice %313 {offsets = [0, 0], sizes = [1, 32], strides = [1, 1]} : vector<1x128xf32> to vector<1x32xf32>
    %c8_123 = arith.constant 8 : index
    %c0_124 = arith.constant 0 : index
    %367 = vector.load %arg1[%c8_123, %c0_124] : memref<208x512xf32, #tpu.memory_space<vmem>>, vector<32x512xf32>
    %cst_125 = arith.constant dense<0.000000e+00> : vector<1x512xf32>
    %368 = tpu.matmul %366, %367, %cst_125 {dimension_numbers = #tpu.dot_dimension_numbers<[1], [0], [0], [1], [0, 0, 1, 1], [], []>} : vector<1x32xf32>, vector<32x512xf32>, vector<1x512xf32> -> vector<1x512xf32>
    %369 = arith.addf %365, %368 : vector<1x512xf32>
    %370 = vector.extract_strided_slice %369 {offsets = [0, 0], sizes = [1, 384], strides = [1, 1]} : vector<1x512xf32> to vector<1x384xf32>
    %371 = arith.negf %370 : vector<1x384xf32>
    %372 = math.exp %371 : vector<1x384xf32>
    %cst_126 = arith.constant 1.000000e+00 : f32
    %373 = vector.broadcast %cst_126 : f32 to vector<1x384xf32>
    %374 = arith.addf %373, %372 : vector<1x384xf32>
    %375 = arith.divf %373, %374 : vector<1x384xf32>
    %376 = vector.extract_strided_slice %369 {offsets = [0, 384], sizes = [1, 128], strides = [1, 1]} : vector<1x512xf32> to vector<1x128xf32>
    %377 = math.tanh %376 : vector<1x128xf32>
    %378 = vector.extract_strided_slice %375 {offsets = [0, 0], sizes = [1, 128], strides = [1, 1]} : vector<1x384xf32> to vector<1x128xf32>
    %379 = vector.extract_strided_slice %375 {offsets = [0, 128], sizes = [1, 128], strides = [1, 1]} : vector<1x384xf32> to vector<1x128xf32>
    %380 = vector.extract_strided_slice %375 {offsets = [0, 256], sizes = [1, 128], strides = [1, 1]} : vector<1x384xf32> to vector<1x128xf32>
    %381 = arith.mulf %379, %311 : vector<1x128xf32>
    %382 = arith.mulf %378, %377 : vector<1x128xf32>
    %383 = arith.addf %381, %382 : vector<1x128xf32>
    %384 = math.tanh %383 : vector<1x128xf32>
    %385 = arith.mulf %380, %384 : vector<1x128xf32>
    %386 = vector.extract_strided_slice %313 {offsets = [0, 0], sizes = [1, 32], strides = [1, 1]} : vector<1x128xf32> to vector<1x32xf32>
    %c40_127 = arith.constant 40 : index
    %c0_128 = arith.constant 0 : index
    %387 = vector.load %arg1[%c40_127, %c0_128] : memref<208x512xf32, #tpu.memory_space<vmem>>, vector<32x512xf32>
    %cst_129 = arith.constant dense<0.000000e+00> : vector<1x512xf32>
    %388 = tpu.matmul %386, %387, %cst_129 {dimension_numbers = #tpu.dot_dimension_numbers<[1], [0], [0], [1], [0, 0, 1, 1], [], []>} : vector<1x32xf32>, vector<32x512xf32>, vector<1x512xf32> -> vector<1x512xf32>
    %c201_130 = arith.constant 201 : index
    %c0_131 = arith.constant 0 : index
    %389 = vector.load %arg1[%c201_130, %c0_131] : memref<208x512xf32, #tpu.memory_space<vmem>>, vector<1x512xf32>
    %390 = arith.addf %388, %389 : vector<1x512xf32>
    %391 = vector.extract_strided_slice %338 {offsets = [0, 0], sizes = [1, 32], strides = [1, 1]} : vector<1x128xf32> to vector<1x32xf32>
    %c72_132 = arith.constant 72 : index
    %c0_133 = arith.constant 0 : index
    %392 = vector.load %arg1[%c72_132, %c0_133] : memref<208x512xf32, #tpu.memory_space<vmem>>, vector<32x512xf32>
    %cst_134 = arith.constant dense<0.000000e+00> : vector<1x512xf32>
    %393 = tpu.matmul %391, %392, %cst_134 {dimension_numbers = #tpu.dot_dimension_numbers<[1], [0], [0], [1], [0, 0, 1, 1], [], []>} : vector<1x32xf32>, vector<32x512xf32>, vector<1x512xf32> -> vector<1x512xf32>
    %394 = arith.addf %390, %393 : vector<1x512xf32>
    %395 = vector.extract_strided_slice %394 {offsets = [0, 0], sizes = [1, 384], strides = [1, 1]} : vector<1x512xf32> to vector<1x384xf32>
    %396 = arith.negf %395 : vector<1x384xf32>
    %397 = math.exp %396 : vector<1x384xf32>
    %cst_135 = arith.constant 1.000000e+00 : f32
    %398 = vector.broadcast %cst_135 : f32 to vector<1x384xf32>
    %399 = arith.addf %398, %397 : vector<1x384xf32>
    %400 = arith.divf %398, %399 : vector<1x384xf32>
    %401 = vector.extract_strided_slice %394 {offsets = [0, 384], sizes = [1, 128], strides = [1, 1]} : vector<1x512xf32> to vector<1x128xf32>
    %402 = math.tanh %401 : vector<1x128xf32>
    %403 = vector.extract_strided_slice %400 {offsets = [0, 0], sizes = [1, 128], strides = [1, 1]} : vector<1x384xf32> to vector<1x128xf32>
    %404 = vector.extract_strided_slice %400 {offsets = [0, 128], sizes = [1, 128], strides = [1, 1]} : vector<1x384xf32> to vector<1x128xf32>
    %405 = vector.extract_strided_slice %400 {offsets = [0, 256], sizes = [1, 128], strides = [1, 1]} : vector<1x384xf32> to vector<1x128xf32>
    %406 = arith.mulf %404, %336 : vector<1x128xf32>
    %407 = arith.mulf %403, %402 : vector<1x128xf32>
    %408 = arith.addf %406, %407 : vector<1x128xf32>
    %409 = math.tanh %408 : vector<1x128xf32>
    %410 = arith.mulf %405, %409 : vector<1x128xf32>
    %411 = vector.extract_strided_slice %338 {offsets = [0, 0], sizes = [1, 32], strides = [1, 1]} : vector<1x128xf32> to vector<1x32xf32>
    %c104_136 = arith.constant 104 : index
    %c0_137 = arith.constant 0 : index
    %412 = vector.load %arg1[%c104_136, %c0_137] : memref<208x512xf32, #tpu.memory_space<vmem>>, vector<32x512xf32>
    %cst_138 = arith.constant dense<0.000000e+00> : vector<1x512xf32>
    %413 = tpu.matmul %411, %412, %cst_138 {dimension_numbers = #tpu.dot_dimension_numbers<[1], [0], [0], [1], [0, 0, 1, 1], [], []>} : vector<1x32xf32>, vector<32x512xf32>, vector<1x512xf32> -> vector<1x512xf32>
    %c202_139 = arith.constant 202 : index
    %c0_140 = arith.constant 0 : index
    %414 = vector.load %arg1[%c202_139, %c0_140] : memref<208x512xf32, #tpu.memory_space<vmem>>, vector<1x512xf32>
    %415 = arith.addf %413, %414 : vector<1x512xf32>
    %416 = vector.extract_strided_slice %363 {offsets = [0, 0], sizes = [1, 32], strides = [1, 1]} : vector<1x128xf32> to vector<1x32xf32>
    %c136_141 = arith.constant 136 : index
    %c0_142 = arith.constant 0 : index
    %417 = vector.load %arg1[%c136_141, %c0_142] : memref<208x512xf32, #tpu.memory_space<vmem>>, vector<32x512xf32>
    %cst_143 = arith.constant dense<0.000000e+00> : vector<1x512xf32>
    %418 = tpu.matmul %416, %417, %cst_143 {dimension_numbers = #tpu.dot_dimension_numbers<[1], [0], [0], [1], [0, 0, 1, 1], [], []>} : vector<1x32xf32>, vector<32x512xf32>, vector<1x512xf32> -> vector<1x512xf32>
    %419 = arith.addf %415, %418 : vector<1x512xf32>
    %420 = vector.extract_strided_slice %419 {offsets = [0, 0], sizes = [1, 384], strides = [1, 1]} : vector<1x512xf32> to vector<1x384xf32>
    %421 = arith.negf %420 : vector<1x384xf32>
    %422 = math.exp %421 : vector<1x384xf32>
    %cst_144 = arith.constant 1.000000e+00 : f32
    %423 = vector.broadcast %cst_144 : f32 to vector<1x384xf32>
    %424 = arith.addf %423, %422 : vector<1x384xf32>
    %425 = arith.divf %423, %424 : vector<1x384xf32>
    %426 = vector.extract_strided_slice %419 {offsets = [0, 384], sizes = [1, 128], strides = [1, 1]} : vector<1x512xf32> to vector<1x128xf32>
    %427 = math.tanh %426 : vector<1x128xf32>
    %428 = vector.extract_strided_slice %425 {offsets = [0, 0], sizes = [1, 128], strides = [1, 1]} : vector<1x384xf32> to vector<1x128xf32>
    %429 = vector.extract_strided_slice %425 {offsets = [0, 128], sizes = [1, 128], strides = [1, 1]} : vector<1x384xf32> to vector<1x128xf32>
    %430 = vector.extract_strided_slice %425 {offsets = [0, 256], sizes = [1, 128], strides = [1, 1]} : vector<1x384xf32> to vector<1x128xf32>
    %431 = arith.mulf %429, %361 : vector<1x128xf32>
    %432 = arith.mulf %428, %427 : vector<1x128xf32>
    %433 = arith.addf %431, %432 : vector<1x128xf32>
    %434 = math.tanh %433 : vector<1x128xf32>
    %435 = arith.mulf %430, %434 : vector<1x128xf32>
    %c4_145 = arith.constant 4 : index
    %c0_146 = arith.constant 0 : index
    %436 = vector.load %arg4[%c4_145, %c0_146] : memref<8x128xf32, #tpu.memory_space<vmem>>, vector<1x128xf32>
    tpu.vector_store %arg4[%c4_145, %c0_146], %435 {strides = array<i32>} : memref<8x128xf32, #tpu.memory_space<vmem>>, vector<1x128xf32>,
    %c7 = arith.constant 7 : index
    %c0_147 = arith.constant 0 : index
    %437 = vector.load %arg3[%c7, %c0_147] : memref<8x512xf32, #tpu.memory_space<vmem>>, vector<1x512xf32>
    %438 = vector.extract_strided_slice %385 {offsets = [0, 0], sizes = [1, 32], strides = [1, 1]} : vector<1x128xf32> to vector<1x32xf32>
    %c8_148 = arith.constant 8 : index
    %c0_149 = arith.constant 0 : index
    %439 = vector.load %arg1[%c8_148, %c0_149] : memref<208x512xf32, #tpu.memory_space<vmem>>, vector<32x512xf32>
    %cst_150 = arith.constant dense<0.000000e+00> : vector<1x512xf32>
    %440 = tpu.matmul %438, %439, %cst_150 {dimension_numbers = #tpu.dot_dimension_numbers<[1], [0], [0], [1], [0, 0, 1, 1], [], []>} : vector<1x32xf32>, vector<32x512xf32>, vector<1x512xf32> -> vector<1x512xf32>
    %441 = arith.addf %437, %440 : vector<1x512xf32>
    %442 = vector.extract_strided_slice %441 {offsets = [0, 0], sizes = [1, 384], strides = [1, 1]} : vector<1x512xf32> to vector<1x384xf32>
    %443 = arith.negf %442 : vector<1x384xf32>
    %444 = math.exp %443 : vector<1x384xf32>
    %cst_151 = arith.constant 1.000000e+00 : f32
    %445 = vector.broadcast %cst_151 : f32 to vector<1x384xf32>
    %446 = arith.addf %445, %444 : vector<1x384xf32>
    %447 = arith.divf %445, %446 : vector<1x384xf32>
    %448 = vector.extract_strided_slice %441 {offsets = [0, 384], sizes = [1, 128], strides = [1, 1]} : vector<1x512xf32> to vector<1x128xf32>
    %449 = math.tanh %448 : vector<1x128xf32>
    %450 = vector.extract_strided_slice %447 {offsets = [0, 0], sizes = [1, 128], strides = [1, 1]} : vector<1x384xf32> to vector<1x128xf32>
    %451 = vector.extract_strided_slice %447 {offsets = [0, 128], sizes = [1, 128], strides = [1, 1]} : vector<1x384xf32> to vector<1x128xf32>
    %452 = vector.extract_strided_slice %447 {offsets = [0, 256], sizes = [1, 128], strides = [1, 1]} : vector<1x384xf32> to vector<1x128xf32>
    %453 = arith.mulf %451, %383 : vector<1x128xf32>
    %454 = arith.mulf %450, %449 : vector<1x128xf32>
    %455 = arith.addf %453, %454 : vector<1x128xf32>
    %456 = math.tanh %455 : vector<1x128xf32>
    %457 = arith.mulf %452, %456 : vector<1x128xf32>
    %458 = vector.extract_strided_slice %385 {offsets = [0, 0], sizes = [1, 32], strides = [1, 1]} : vector<1x128xf32> to vector<1x32xf32>
    %c40_152 = arith.constant 40 : index
    %c0_153 = arith.constant 0 : index
    %459 = vector.load %arg1[%c40_152, %c0_153] : memref<208x512xf32, #tpu.memory_space<vmem>>, vector<32x512xf32>
    %cst_154 = arith.constant dense<0.000000e+00> : vector<1x512xf32>
    %460 = tpu.matmul %458, %459, %cst_154 {dimension_numbers = #tpu.dot_dimension_numbers<[1], [0], [0], [1], [0, 0, 1, 1], [], []>} : vector<1x32xf32>, vector<32x512xf32>, vector<1x512xf32> -> vector<1x512xf32>
    %c201_155 = arith.constant 201 : index
    %c0_156 = arith.constant 0 : index
    %461 = vector.load %arg1[%c201_155, %c0_156] : memref<208x512xf32, #tpu.memory_space<vmem>>, vector<1x512xf32>
    %462 = arith.addf %460, %461 : vector<1x512xf32>
    %463 = vector.extract_strided_slice %410 {offsets = [0, 0], sizes = [1, 32], strides = [1, 1]} : vector<1x128xf32> to vector<1x32xf32>
    %c72_157 = arith.constant 72 : index
    %c0_158 = arith.constant 0 : index
    %464 = vector.load %arg1[%c72_157, %c0_158] : memref<208x512xf32, #tpu.memory_space<vmem>>, vector<32x512xf32>
    %cst_159 = arith.constant dense<0.000000e+00> : vector<1x512xf32>
    %465 = tpu.matmul %463, %464, %cst_159 {dimension_numbers = #tpu.dot_dimension_numbers<[1], [0], [0], [1], [0, 0, 1, 1], [], []>} : vector<1x32xf32>, vector<32x512xf32>, vector<1x512xf32> -> vector<1x512xf32>
    %466 = arith.addf %462, %465 : vector<1x512xf32>
    %467 = vector.extract_strided_slice %466 {offsets = [0, 0], sizes = [1, 384], strides = [1, 1]} : vector<1x512xf32> to vector<1x384xf32>
    %468 = arith.negf %467 : vector<1x384xf32>
    %469 = math.exp %468 : vector<1x384xf32>
    %cst_160 = arith.constant 1.000000e+00 : f32
    %470 = vector.broadcast %cst_160 : f32 to vector<1x384xf32>
    %471 = arith.addf %470, %469 : vector<1x384xf32>
    %472 = arith.divf %470, %471 : vector<1x384xf32>
    %473 = vector.extract_strided_slice %466 {offsets = [0, 384], sizes = [1, 128], strides = [1, 1]} : vector<1x512xf32> to vector<1x128xf32>
    %474 = math.tanh %473 : vector<1x128xf32>
    %475 = vector.extract_strided_slice %472 {offsets = [0, 0], sizes = [1, 128], strides = [1, 1]} : vector<1x384xf32> to vector<1x128xf32>
    %476 = vector.extract_strided_slice %472 {offsets = [0, 128], sizes = [1, 128], strides = [1, 1]} : vector<1x384xf32> to vector<1x128xf32>
    %477 = vector.extract_strided_slice %472 {offsets = [0, 256], sizes = [1, 128], strides = [1, 1]} : vector<1x384xf32> to vector<1x128xf32>
    %478 = arith.mulf %476, %408 : vector<1x128xf32>
    %479 = arith.mulf %475, %474 : vector<1x128xf32>
    %480 = arith.addf %478, %479 : vector<1x128xf32>
    %481 = math.tanh %480 : vector<1x128xf32>
    %482 = arith.mulf %477, %481 : vector<1x128xf32>
    %483 = vector.extract_strided_slice %410 {offsets = [0, 0], sizes = [1, 32], strides = [1, 1]} : vector<1x128xf32> to vector<1x32xf32>
    %c104_161 = arith.constant 104 : index
    %c0_162 = arith.constant 0 : index
    %484 = vector.load %arg1[%c104_161, %c0_162] : memref<208x512xf32, #tpu.memory_space<vmem>>, vector<32x512xf32>
    %cst_163 = arith.constant dense<0.000000e+00> : vector<1x512xf32>
    %485 = tpu.matmul %483, %484, %cst_163 {dimension_numbers = #tpu.dot_dimension_numbers<[1], [0], [0], [1], [0, 0, 1, 1], [], []>} : vector<1x32xf32>, vector<32x512xf32>, vector<1x512xf32> -> vector<1x512xf32>
    %c202_164 = arith.constant 202 : index
    %c0_165 = arith.constant 0 : index
    %486 = vector.load %arg1[%c202_164, %c0_165] : memref<208x512xf32, #tpu.memory_space<vmem>>, vector<1x512xf32>
    %487 = arith.addf %485, %486 : vector<1x512xf32>
    %488 = vector.extract_strided_slice %435 {offsets = [0, 0], sizes = [1, 32], strides = [1, 1]} : vector<1x128xf32> to vector<1x32xf32>
    %c136_166 = arith.constant 136 : index
    %c0_167 = arith.constant 0 : index
    %489 = vector.load %arg1[%c136_166, %c0_167] : memref<208x512xf32, #tpu.memory_space<vmem>>, vector<32x512xf32>
    %cst_168 = arith.constant dense<0.000000e+00> : vector<1x512xf32>
    %490 = tpu.matmul %488, %489, %cst_168 {dimension_numbers = #tpu.dot_dimension_numbers<[1], [0], [0], [1], [0, 0, 1, 1], [], []>} : vector<1x32xf32>, vector<32x512xf32>, vector<1x512xf32> -> vector<1x512xf32>
    %491 = arith.addf %487, %490 : vector<1x512xf32>
    %492 = vector.extract_strided_slice %491 {offsets = [0, 0], sizes = [1, 384], strides = [1, 1]} : vector<1x512xf32> to vector<1x384xf32>
    %493 = arith.negf %492 : vector<1x384xf32>
    %494 = math.exp %493 : vector<1x384xf32>
    %cst_169 = arith.constant 1.000000e+00 : f32
    %495 = vector.broadcast %cst_169 : f32 to vector<1x384xf32>
    %496 = arith.addf %495, %494 : vector<1x384xf32>
    %497 = arith.divf %495, %496 : vector<1x384xf32>
    %498 = vector.extract_strided_slice %491 {offsets = [0, 384], sizes = [1, 128], strides = [1, 1]} : vector<1x512xf32> to vector<1x128xf32>
    %499 = math.tanh %498 : vector<1x128xf32>
    %500 = vector.extract_strided_slice %497 {offsets = [0, 0], sizes = [1, 128], strides = [1, 1]} : vector<1x384xf32> to vector<1x128xf32>
    %501 = vector.extract_strided_slice %497 {offsets = [0, 128], sizes = [1, 128], strides = [1, 1]} : vector<1x384xf32> to vector<1x128xf32>
    %502 = vector.extract_strided_slice %497 {offsets = [0, 256], sizes = [1, 128], strides = [1, 1]} : vector<1x384xf32> to vector<1x128xf32>
    %503 = arith.mulf %501, %433 : vector<1x128xf32>
    %504 = arith.mulf %500, %499 : vector<1x128xf32>
    %505 = arith.addf %503, %504 : vector<1x128xf32>
    %506 = math.tanh %505 : vector<1x128xf32>
    %507 = arith.mulf %502, %506 : vector<1x128xf32>
    %c5_170 = arith.constant 5 : index
    %c0_171 = arith.constant 0 : index
    %508 = vector.load %arg4[%c5_170, %c0_171] : memref<8x128xf32, #tpu.memory_space<vmem>>, vector<1x128xf32>
    tpu.vector_store %arg4[%c5_170, %c0_171], %507 {strides = array<i32>} : memref<8x128xf32, #tpu.memory_space<vmem>>, vector<1x128xf32>,
    %509 = vector.extract_strided_slice %457 {offsets = [0, 0], sizes = [1, 32], strides = [1, 1]} : vector<1x128xf32> to vector<1x32xf32>
    %c40_172 = arith.constant 40 : index
    %c0_173 = arith.constant 0 : index
    %510 = vector.load %arg1[%c40_172, %c0_173] : memref<208x512xf32, #tpu.memory_space<vmem>>, vector<32x512xf32>
    %cst_174 = arith.constant dense<0.000000e+00> : vector<1x512xf32>
    %511 = tpu.matmul %509, %510, %cst_174 {dimension_numbers = #tpu.dot_dimension_numbers<[1], [0], [0], [1], [0, 0, 1, 1], [], []>} : vector<1x32xf32>, vector<32x512xf32>, vector<1x512xf32> -> vector<1x512xf32>
    %c201_175 = arith.constant 201 : index
    %c0_176 = arith.constant 0 : index
    %512 = vector.load %arg1[%c201_175, %c0_176] : memref<208x512xf32, #tpu.memory_space<vmem>>, vector<1x512xf32>
    %513 = arith.addf %511, %512 : vector<1x512xf32>
    %514 = vector.extract_strided_slice %482 {offsets = [0, 0], sizes = [1, 32], strides = [1, 1]} : vector<1x128xf32> to vector<1x32xf32>
    %c72_177 = arith.constant 72 : index
    %c0_178 = arith.constant 0 : index
    %515 = vector.load %arg1[%c72_177, %c0_178] : memref<208x512xf32, #tpu.memory_space<vmem>>, vector<32x512xf32>
    %cst_179 = arith.constant dense<0.000000e+00> : vector<1x512xf32>
    %516 = tpu.matmul %514, %515, %cst_179 {dimension_numbers = #tpu.dot_dimension_numbers<[1], [0], [0], [1], [0, 0, 1, 1], [], []>} : vector<1x32xf32>, vector<32x512xf32>, vector<1x512xf32> -> vector<1x512xf32>
    %517 = arith.addf %513, %516 : vector<1x512xf32>
    %518 = vector.extract_strided_slice %517 {offsets = [0, 0], sizes = [1, 384], strides = [1, 1]} : vector<1x512xf32> to vector<1x384xf32>
    %519 = arith.negf %518 : vector<1x384xf32>
    %520 = math.exp %519 : vector<1x384xf32>
    %cst_180 = arith.constant 1.000000e+00 : f32
    %521 = vector.broadcast %cst_180 : f32 to vector<1x384xf32>
    %522 = arith.addf %521, %520 : vector<1x384xf32>
    %523 = arith.divf %521, %522 : vector<1x384xf32>
    %524 = vector.extract_strided_slice %517 {offsets = [0, 384], sizes = [1, 128], strides = [1, 1]} : vector<1x512xf32> to vector<1x128xf32>
    %525 = math.tanh %524 : vector<1x128xf32>
    %526 = vector.extract_strided_slice %523 {offsets = [0, 0], sizes = [1, 128], strides = [1, 1]} : vector<1x384xf32> to vector<1x128xf32>
    %527 = vector.extract_strided_slice %523 {offsets = [0, 128], sizes = [1, 128], strides = [1, 1]} : vector<1x384xf32> to vector<1x128xf32>
    %528 = vector.extract_strided_slice %523 {offsets = [0, 256], sizes = [1, 128], strides = [1, 1]} : vector<1x384xf32> to vector<1x128xf32>
    %529 = arith.mulf %527, %480 : vector<1x128xf32>
    %530 = arith.mulf %526, %525 : vector<1x128xf32>
    %531 = arith.addf %529, %530 : vector<1x128xf32>
    %532 = math.tanh %531 : vector<1x128xf32>
    %533 = arith.mulf %528, %532 : vector<1x128xf32>
    %534 = vector.extract_strided_slice %482 {offsets = [0, 0], sizes = [1, 32], strides = [1, 1]} : vector<1x128xf32> to vector<1x32xf32>
    %c104_181 = arith.constant 104 : index
    %c0_182 = arith.constant 0 : index
    %535 = vector.load %arg1[%c104_181, %c0_182] : memref<208x512xf32, #tpu.memory_space<vmem>>, vector<32x512xf32>
    %cst_183 = arith.constant dense<0.000000e+00> : vector<1x512xf32>
    %536 = tpu.matmul %534, %535, %cst_183 {dimension_numbers = #tpu.dot_dimension_numbers<[1], [0], [0], [1], [0, 0, 1, 1], [], []>} : vector<1x32xf32>, vector<32x512xf32>, vector<1x512xf32> -> vector<1x512xf32>
    %c202_184 = arith.constant 202 : index
    %c0_185 = arith.constant 0 : index
    %537 = vector.load %arg1[%c202_184, %c0_185] : memref<208x512xf32, #tpu.memory_space<vmem>>, vector<1x512xf32>
    %538 = arith.addf %536, %537 : vector<1x512xf32>
    %539 = vector.extract_strided_slice %507 {offsets = [0, 0], sizes = [1, 32], strides = [1, 1]} : vector<1x128xf32> to vector<1x32xf32>
    %c136_186 = arith.constant 136 : index
    %c0_187 = arith.constant 0 : index
    %540 = vector.load %arg1[%c136_186, %c0_187] : memref<208x512xf32, #tpu.memory_space<vmem>>, vector<32x512xf32>
    %cst_188 = arith.constant dense<0.000000e+00> : vector<1x512xf32>
    %541 = tpu.matmul %539, %540, %cst_188 {dimension_numbers = #tpu.dot_dimension_numbers<[1], [0], [0], [1], [0, 0, 1, 1], [], []>} : vector<1x32xf32>, vector<32x512xf32>, vector<1x512xf32> -> vector<1x512xf32>
    %542 = arith.addf %538, %541 : vector<1x512xf32>
    %543 = vector.extract_strided_slice %542 {offsets = [0, 0], sizes = [1, 384], strides = [1, 1]} : vector<1x512xf32> to vector<1x384xf32>
    %544 = arith.negf %543 : vector<1x384xf32>
    %545 = math.exp %544 : vector<1x384xf32>
    %cst_189 = arith.constant 1.000000e+00 : f32
    %546 = vector.broadcast %cst_189 : f32 to vector<1x384xf32>
    %547 = arith.addf %546, %545 : vector<1x384xf32>
    %548 = arith.divf %546, %547 : vector<1x384xf32>
    %549 = vector.extract_strided_slice %542 {offsets = [0, 384], sizes = [1, 128], strides = [1, 1]} : vector<1x512xf32> to vector<1x128xf32>
    %550 = math.tanh %549 : vector<1x128xf32>
    %551 = vector.extract_strided_slice %548 {offsets = [0, 0], sizes = [1, 128], strides = [1, 1]} : vector<1x384xf32> to vector<1x128xf32>
    %552 = vector.extract_strided_slice %548 {offsets = [0, 128], sizes = [1, 128], strides = [1, 1]} : vector<1x384xf32> to vector<1x128xf32>
    %553 = vector.extract_strided_slice %548 {offsets = [0, 256], sizes = [1, 128], strides = [1, 1]} : vector<1x384xf32> to vector<1x128xf32>
    %554 = arith.mulf %552, %505 : vector<1x128xf32>
    %555 = arith.mulf %551, %550 : vector<1x128xf32>
    %556 = arith.addf %554, %555 : vector<1x128xf32>
    %557 = math.tanh %556 : vector<1x128xf32>
    %558 = arith.mulf %553, %557 : vector<1x128xf32>
    %c6_190 = arith.constant 6 : index
    %c0_191 = arith.constant 0 : index
    %559 = vector.load %arg4[%c6_190, %c0_191] : memref<8x128xf32, #tpu.memory_space<vmem>>, vector<1x128xf32>
    tpu.vector_store %arg4[%c6_190, %c0_191], %558 {strides = array<i32>} : memref<8x128xf32, #tpu.memory_space<vmem>>, vector<1x128xf32>,
    %560 = vector.extract_strided_slice %533 {offsets = [0, 0], sizes = [1, 32], strides = [1, 1]} : vector<1x128xf32> to vector<1x32xf32>
    %c104_192 = arith.constant 104 : index
    %c0_193 = arith.constant 0 : index
    %561 = vector.load %arg1[%c104_192, %c0_193] : memref<208x512xf32, #tpu.memory_space<vmem>>, vector<32x512xf32>
    %cst_194 = arith.constant dense<0.000000e+00> : vector<1x512xf32>
    %562 = tpu.matmul %560, %561, %cst_194 {dimension_numbers = #tpu.dot_dimension_numbers<[1], [0], [0], [1], [0, 0, 1, 1], [], []>} : vector<1x32xf32>, vector<32x512xf32>, vector<1x512xf32> -> vector<1x512xf32>
    %c202_195 = arith.constant 202 : index
    %c0_196 = arith.constant 0 : index
    %563 = vector.load %arg1[%c202_195, %c0_196] : memref<208x512xf32, #tpu.memory_space<vmem>>, vector<1x512xf32>
    %564 = arith.addf %562, %563 : vector<1x512xf32>
    %565 = vector.extract_strided_slice %558 {offsets = [0, 0], sizes = [1, 32], strides = [1, 1]} : vector<1x128xf32> to vector<1x32xf32>
    %c136_197 = arith.constant 136 : index
    %c0_198 = arith.constant 0 : index
    %566 = vector.load %arg1[%c136_197, %c0_198] : memref<208x512xf32, #tpu.memory_space<vmem>>, vector<32x512xf32>
    %cst_199 = arith.constant dense<0.000000e+00> : vector<1x512xf32>
    %567 = tpu.matmul %565, %566, %cst_199 {dimension_numbers = #tpu.dot_dimension_numbers<[1], [0], [0], [1], [0, 0, 1, 1], [], []>} : vector<1x32xf32>, vector<32x512xf32>, vector<1x512xf32> -> vector<1x512xf32>
    %568 = arith.addf %564, %567 : vector<1x512xf32>
    %569 = vector.extract_strided_slice %568 {offsets = [0, 0], sizes = [1, 384], strides = [1, 1]} : vector<1x512xf32> to vector<1x384xf32>
    %570 = arith.negf %569 : vector<1x384xf32>
    %571 = math.exp %570 : vector<1x384xf32>
    %cst_200 = arith.constant 1.000000e+00 : f32
    %572 = vector.broadcast %cst_200 : f32 to vector<1x384xf32>
    %573 = arith.addf %572, %571 : vector<1x384xf32>
    %574 = arith.divf %572, %573 : vector<1x384xf32>
    %575 = vector.extract_strided_slice %568 {offsets = [0, 384], sizes = [1, 128], strides = [1, 1]} : vector<1x512xf32> to vector<1x128xf32>
    %576 = math.tanh %575 : vector<1x128xf32>
    %577 = vector.extract_strided_slice %574 {offsets = [0, 0], sizes = [1, 128], strides = [1, 1]} : vector<1x384xf32> to vector<1x128xf32>
    %578 = vector.extract_strided_slice %574 {offsets = [0, 128], sizes = [1, 128], strides = [1, 1]} : vector<1x384xf32> to vector<1x128xf32>
    %579 = vector.extract_strided_slice %574 {offsets = [0, 256], sizes = [1, 128], strides = [1, 1]} : vector<1x384xf32> to vector<1x128xf32>
    %580 = arith.mulf %578, %556 : vector<1x128xf32>
    %581 = arith.mulf %577, %576 : vector<1x128xf32>
    %582 = arith.addf %580, %581 : vector<1x128xf32>
    %583 = math.tanh %582 : vector<1x128xf32>
    %584 = arith.mulf %579, %583 : vector<1x128xf32>
    %c7_201 = arith.constant 7 : index
    %c0_202 = arith.constant 0 : index
    %585 = vector.load %arg4[%c7_201, %c0_202] : memref<8x128xf32, #tpu.memory_space<vmem>>, vector<1x128xf32>
    tpu.vector_store %arg4[%c7_201, %c0_202], %584 {strides = array<i32>} : memref<8x128xf32, #tpu.memory_space<vmem>>, vector<1x128xf32>,
    %c0_203 = arith.constant 0 : index
    %c0_204 = arith.constant 0 : index
    %586 = vector.load %arg4[%c0_203, %c0_204] : memref<8x128xf32, #tpu.memory_space<vmem>>, vector<8x128xf32>
    %587 = vector.extract_strided_slice %586 {offsets = [0, 0], sizes = [8, 32], strides = [1, 1]} : vector<8x128xf32> to vector<8x32xf32>
    %c168 = arith.constant 168 : index
    %c0_205 = arith.constant 0 : index
    %588 = vector.load %arg1[%c168, %c0_205] : memref<208x512xf32, #tpu.memory_space<vmem>>, vector<32x128xf32>
    %cst_206 = arith.constant dense<0.000000e+00> : vector<8x128xf32>
    %589 = tpu.matmul %587, %588, %cst_206 {dimension_numbers = #tpu.dot_dimension_numbers<[1], [0], [0], [1], [0, 0, 1, 1], [], []>} : vector<8x32xf32>, vector<32x128xf32>, vector<8x128xf32> -> vector<8x128xf32>
    %c203 = arith.constant 203 : index
    %c0_207 = arith.constant 0 : index
    %590 = vector.load %arg1[%c203, %c0_207] : memref<208x512xf32, #tpu.memory_space<vmem>>, vector<1x128xf32>
    %591 = vector.broadcast %590 : vector<1x128xf32> to vector<8x128xf32>
    %592 = arith.addf %589, %591 : vector<8x128xf32>
    %c0_208 = arith.constant 0 : index
    %c0_209 = arith.constant 0 : index
    %593 = vector.load %arg2[%c0_208, %c0_209] : memref<8x128xf32, #tpu.memory_space<vmem>>, vector<8x128xf32>
    tpu.vector_store %arg2[%c0_208, %c0_209], %592 {strides = array<i32>} : memref<8x128xf32, #tpu.memory_space<vmem>>, vector<8x128xf32>,
    return
  }
}

</mosaic_0001>

<llo_original>
// kernel: lstm_model_forward.1
$region0: #{lstm_model_forward.1}
  #allocation0 [shape = 'u32[]', space=smem, size = 0x4, offset = 0x4, fixed_abs, tag = 'smem constant byte address 0x4 - core index']
  #allocation1 [shape = 'u32[144,128]{1,0:T(1,128)}', space=vmem, size = 0x12000, scoped, tag = 'internal scratch']
  #allocation2 [shape = 'f32[8,512]{1,0:T(8,128)}', space=vmem, size = 0x4000, scoped, tag = 'scratch operand']
  #allocation3 [shape = 'f32[8,128]{1,0:T(8,128)}', space=vmem, size = 0x1000, scoped, tag = 'scratch operand']
  %s0 = inlined_call_operand.vmem [shape: f32[8,4], index: 0, kind: input, shape index: {}]
  %s1 = inlined_call_operand.hbm [shape: f32[208,512], index: 1, kind: input, shape index: {}]
  %s2 = inlined_call_operand.vmem [shape: f32[8,128], index: 2, kind: output, shape index: {}]
  %s3 = sld [smem:[#allocation0]]
  $region22: #{lstm_model_forward.1} parent=0
    _
  %s5 = ssub.s32 1, %s3
  %s6 = scalar_select 0, %s5, %s3
  $region1: #{lstm_model_forward.1} parent=0
    #allocation4 [shape = 'u8[425984]{0}', space=vmem, size = 0x68000, scoped, tag = 'input window, operand 1, single buffered']
    #allocation5 [shape = 's32[1]{0}', space=sflag, size = 0x4, scoped, tag = 'scoped memory for lstm_model_forward.1']
    %7 = vsyncpa [#allocation5], 0
    // Predicated region
    $region2: #{lstm_model_forward.1} parent=1 // pred_check
      _
    $region3: #{lstm_model_forward.1} parent=1 // pred_check_branch
      %9 = sbr.rel (0) target = $region5
    $region4: #{lstm_model_forward.1} parent=1 // pred_region
      _
    $region5: #{lstm_model_forward.1} parent=1 // pred_fallthru
      _
    // Predicated region
    $region6: #{lstm_model_forward.1} parent=1 // pred_check
      _
    $region7: #{lstm_model_forward.1} parent=1 // pred_check_branch
      %11 = sbr.rel (0) target = $region9
    $region8: #{lstm_model_forward.1} parent=1 // pred_region
      %s13 = ssub.s32 13312, 13312
      %14 = vsyncadd [#allocation5], %s13
      %s15 = sshll.u32 [#allocation4], 4
      %s16 = int_to_ptr.vmem [resolvable:$true] %s15
      %21 = dma.hbm_to_vmem [thread:$0]  %s1, 13312, %s16, [#allocation5], 512, 512, 32
    $region9: #{lstm_model_forward.1} parent=1 // pred_fallthru
      _
    // Predicated region
    $region10: #{lstm_model_forward.1} parent=1 // pred_check
      _
    $region11: #{lstm_model_forward.1} parent=1 // pred_check_branch
      %23 = sbr.rel (0) target = $region13
    $region12: #{lstm_model_forward.1} parent=1 // pred_region
      %24 = dma.done [#allocation5], 13312
    $region13: #{lstm_model_forward.1} parent=1 // pred_fallthru
      _
    %v25 = vld [vmem:[%s0] sm:$0xff]
    %v26 = vld [vmem:[#allocation4] sm:$0xf]
    %v27 = vld [vmem:[#allocation4 + $0x8] sm:$0xf]
    %v28 = vld [vmem:[#allocation4 + $0x10] sm:$0xf]
    %v29 = vld [vmem:[#allocation4 + $0x18] sm:$0xf]
    %s30 = scalar_lea.vmem [#allocation4], 800
    %v31 = vld [vmem:[%s30] ss:$8 sm:$0xf]
    %v33 = vlaneseq
    %v34 = vshrl.u32 %v33, 7
    %v35 = vsub.s32 0, %v34
    %v36 = vrot.slane %v31, %v35
    %v37 = vlaneseq
    %v38 = vshrl.u32 %v37, 7
    %v39 = vsub.s32 1, %v38
    %v40 = vrot.slane %v31, %v39
    %v41 = vlaneseq
    %v42 = vshrl.u32 %v41, 7
    %v43 = vsub.s32 2, %v42
    %v44 = vrot.slane %v31, %v43
    %v45 = vlaneseq
    %v46 = vshrl.u32 %v45, 7
    %v47 = vsub.s32 3, %v46
    %v48 = vrot.slane %v31, %v47
    %vm53 = vcmask 31744
    %v55 = vsel %vm53, %v25, 0
    %vm57 = vcmask 1043456
    %v59 = vsel %vm57, %v26, 0
    %v62 = vsel %vm57, %v27, 0
    %v65 = vsel %vm57, %v28, 0
    %v68 = vsel %vm57, %v29, 0
    %70 = vmatprep.subr.mxu0 0.0
    %71 = vmatpush1.msra.mxu0 0.0
    %72 = vmatprep.subr.mxu0 0.0
    %73 = vmatpush1.msra.mxu0 0.0
    %74 = vmatprep.subr.mxu0 0.0
    %75 = vmatpush1.msra.mxu0 0.0
    %76 = vmatprep.subr.mxu0 0.0
    %77 = vmatpush1.msra.mxu0 0.0
    %78 = vmatprep.subr.mxu0 0.0
    %79 = vmatpush1.msra.mxu0 0.0
    %80 = vmatprep.subr.mxu0 0.0
    %81 = vmatpush1.msra.mxu0 0.0
    %82 = vmatprep.subr.mxu0 0.0
    %83 = vmatpush1.msra.mxu0 0.0
    %84 = vmatprep.subr.mxu0 0.0
    %85 = vmatpush1.msra.mxu0 0.0
    %86 = vmatprep.subr.mxu0 0.0
    %87 = vmatpush1.msra.mxu0 0.0
    %88 = vmatprep.subr.mxu0 0.0
    %89 = vmatpush1.msra.mxu0 0.0
    %90 = vmatprep.subr.mxu0 0.0
    %91 = vmatpush1.msra.mxu0 0.0
    %92 = vmatprep.subr.mxu0 0.0
    %93 = vmatpush1.msra.mxu0 0.0
    %94 = vmatprep.subr.mxu0 0.0
    %95 = vmatpush1.msra.mxu0 0.0
    %96 = vmatprep.subr.mxu0 0.0
    %97 = vmatpush1.msra.mxu0 0.0
    %98 = vmatprep.subr.mxu0 0.0
    %99 = vmatpush1.msra.mxu0 0.0
    %100 = vmatprep.subr.mxu0 %v62
    %101 = vmatpush1.msra.mxu0 %v59
    %102 = vmatprep.subr.mxu0 0.0
    %103 = vmatpush2.msra.mxu0 0.0
    %104 = vmatprep.subr.mxu0 0.0
    %105 = vmatpush2.msra.mxu0 0.0
    %106 = vmatprep.subr.mxu0 0.0
    %107 = vmatpush2.msra.mxu0 0.0
    %108 = vmatprep.subr.mxu0 0.0
    %109 = vmatpush2.msra.mxu0 0.0
    %110 = vmatprep.subr.mxu0 0.0
    %111 = vmatpush2.msra.mxu0 0.0
    %112 = vmatprep.subr.mxu0 0.0
    %113 = vmatpush2.msra.mxu0 0.0
    %114 = vmatprep.subr.mxu0 0.0
    %115 = vmatpush2.msra.mxu0 0.0
    %116 = vmatprep.subr.mxu0 0.0
    %117 = vmatpush2.msra.mxu0 0.0
    %118 = vmatprep.subr.mxu0 0.0
    %119 = vmatpush2.msra.mxu0 0.0
    %120 = vmatprep.subr.mxu0 0.0
    %121 = vmatpush2.msra.mxu0 0.0
    %122 = vmatprep.subr.mxu0 0.0
    %123 = vmatpush2.msra.mxu0 0.0
    %124 = vmatprep.subr.mxu0 0.0
    %125 = vmatpush2.msra.mxu0 0.0
    %126 = vmatprep.subr.mxu0 0.0
    %127 = vmatpush2.msra.mxu0 0.0
    %128 = vmatprep.subr.mxu0 0.0
    %129 = vmatpush2.msra.mxu0 0.0
    %130 = vmatprep.subr.mxu0 0.0
    %131 = vmatpush2.msra.mxu0 0.0
    %132 = vmatprep.subr.mxu0 0.0
    %133 = vmatpush2.msra.mxu0 0.0
    %134 = vmatprep.mubr.f32.mxu0 0.0
    %135 = vmatmul.mubr.f32.gmra.mxu0 %v55
    %v136 = vpop.f32.mrf.mxu0
    %v137 = vadd.f32 %v36, %v136
    %v138 = vpop.f32.mrf.mxu0
    %v139 = vadd.f32 %v40, %v138
    %140 = vdwg.mxu0
    %141 = vmatprep.subr.mxu0 0.0
    %142 = vmatpush1.msra.mxu0 0.0
    %143 = vmatprep.subr.mxu0 0.0
    %144 = vmatpush1.msra.mxu0 0.0
    %145 = vmatprep.subr.mxu0 0.0
    %146 = vmatpush1.msra.mxu0 0.0
    %147 = vmatprep.subr.mxu0 0.0
    %148 = vmatpush1.msra.mxu0 0.0
    %149 = vmatprep.subr.mxu0 0.0
    %150 = vmatpush1.msra.mxu0 0.0
    %151 = vmatprep.subr.mxu0 0.0
    %152 = vmatpush1.msra.mxu0 0.0
    %153 = vmatprep.subr.mxu0 0.0
    %154 = vmatpush1.msra.mxu0 0.0
    %155 = vmatprep.subr.mxu0 0.0
    %156 = vmatpush1.msra.mxu0 0.0
    %157 = vmatprep.subr.mxu0 0.0
    %158 = vmatpush1.msra.mxu0 0.0
    %159 = vmatprep.subr.mxu0 0.0
    %160 = vmatpush1.msra.mxu0 0.0
    %161 = vmatprep.subr.mxu0 0.0
    %162 = vmatpush1.msra.mxu0 0.0
    %163 = vmatprep.subr.mxu0 0.0
    %164 = vmatpush1.msra.mxu0 0.0
    %165 = vmatprep.subr.mxu0 0.0
    %166 = vmatpush1.msra.mxu0 0.0
    %167 = vmatprep.subr.mxu0 0.0
    %168 = vmatpush1.msra.mxu0 0.0
    %169 = vmatprep.subr.mxu0 0.0
    %170 = vmatpush1.msra.mxu0 0.0
    %171 = vmatprep.subr.mxu0 %v68
    %172 = vmatpush1.msra.mxu0 %v65
    %173 = vmatprep.subr.mxu0 0.0
    %174 = vmatpush2.msra.mxu0 0.0
    %175 = vmatprep.subr.mxu0 0.0
    %176 = vmatpush2.msra.mxu0 0.0
    %177 = vmatprep.subr.mxu0 0.0
    %178 = vmatpush2.msra.mxu0 0.0
    %179 = vmatprep.subr.mxu0 0.0
    %180 = vmatpush2.msra.mxu0 0.0
    %181 = vmatprep.subr.mxu0 0.0
    %182 = vmatpush2.msra.mxu0 0.0
    %183 = vmatprep.subr.mxu0 0.0
    %184 = vmatpush2.msra.mxu0 0.0
    %185 = vmatprep.subr.mxu0 0.0
    %186 = vmatpush2.msra.mxu0 0.0
    %187 = vmatprep.subr.mxu0 0.0
    %188 = vmatpush2.msra.mxu0 0.0
    %189 = vmatprep.subr.mxu0 0.0
    %190 = vmatpush2.msra.mxu0 0.0
    %191 = vmatprep.subr.mxu0 0.0
    %192 = vmatpush2.msra.mxu0 0.0
    %193 = vmatprep.subr.mxu0 0.0
    %194 = vmatpush2.msra.mxu0 0.0
    %195 = vmatprep.subr.mxu0 0.0
    %196 = vmatpush2.msra.mxu0 0.0
    %197 = vmatprep.subr.mxu0 0.0
    %198 = vmatpush2.msra.mxu0 0.0
    %199 = vmatprep.subr.mxu0 0.0
    %200 = vmatpush2.msra.mxu0 0.0
    %201 = vmatprep.subr.mxu0 0.0
    %202 = vmatpush2.msra.mxu0 0.0
    %203 = vmatprep.subr.mxu0 0.0
    %204 = vmatpush2.msra.mxu0 0.0
    %205 = vmatprep.mubr.f32.mxu0 0.0
    %206 = vmatmul.mubr.f32.gmra.mxu0 %v55
    %v207 = vpop.f32.mrf.mxu0
    %v208 = vadd.f32 %v44, %v207
    %v209 = vpop.f32.mrf.mxu0
    %v210 = vadd.f32 %v48, %v209
    %211 = vdwg.mxu0
    %212 = vst [vmem:[#allocation2] sm:$0xff] %v137
    %213 = vst [vmem:[#allocation2 + $0x8] sm:$0xff] %v139
    %214 = vst [vmem:[#allocation2 + $0x10] sm:$0xff] %v208
    %215 = vst [vmem:[#allocation2 + $0x18] sm:$0xff] %v210
    %v216 = vld [vmem:[#allocation2] ss:$8 sm:$0xf]
    %v217 = vld [vmem:[#allocation4 + $0x20] sm:$0xff]
    %v218 = vld [vmem:[#allocation4 + $0x28] sm:$0xff]
    %v219 = vld [vmem:[#allocation4 + $0x30] sm:$0xff]
    %v220 = vld [vmem:[#allocation4 + $0x38] sm:$0xff]
    %v221 = vld [vmem:[#allocation4 + $0x40] sm:$0xff]
    %v222 = vld [vmem:[#allocation4 + $0x48] sm:$0xff]
    %v223 = vld [vmem:[#allocation4 + $0x50] sm:$0xff]
    %v224 = vld [vmem:[#allocation4 + $0x58] sm:$0xff]
    %v225 = vld [vmem:[#allocation4 + $0x60] sm:$0xff]
    %v226 = vld [vmem:[#allocation4 + $0x68] sm:$0xff]
    %v227 = vld [vmem:[#allocation4 + $0x70] sm:$0xff]
    %v228 = vld [vmem:[#allocation4 + $0x78] sm:$0xff]
    %v229 = vld [vmem:[#allocation4 + $0x80] sm:$0xff]
    %v230 = vld [vmem:[#allocation4 + $0x88] sm:$0xff]
    %v231 = vld [vmem:[#allocation4 + $0x90] sm:$0xff]
    %v232 = vld [vmem:[#allocation4 + $0x98] sm:$0xff]
    %vm233 = vcmask 261120
    %v235 = vsel %vm233, 0.0, 0
    %237 = vmatprep.subr.mxu0 0.0
    %238 = vmatpush1.msra.mxu0 0.0
    %239 = vmatprep.subr.mxu0 0.0
    %240 = vmatpush1.msra.mxu0 0.0
    %241 = vmatprep.subr.mxu0 0.0
    %242 = vmatpush1.msra.mxu0 0.0
    %243 = vmatprep.subr.mxu0 0.0
    %244 = vmatpush1.msra.mxu0 0.0
    %245 = vmatprep.subr.mxu0 0.0
    %246 = vmatpush1.msra.mxu0 0.0
    %247 = vmatprep.subr.mxu0 0.0
    %248 = vmatpush1.msra.mxu0 0.0
    %249 = vmatprep.subr.mxu0 0.0
    %250 = vmatpush1.msra.mxu0 0.0
    %251 = vmatprep.subr.mxu0 0.0
    %252 = vmatpush1.msra.mxu0 0.0
    %253 = vmatprep.subr.mxu0 0.0
    %254 = vmatpush1.msra.mxu0 0.0
    %255 = vmatprep.subr.mxu0 0.0
    %256 = vmatpush1.msra.mxu0 0.0
    %257 = vmatprep.subr.mxu0 0.0
    %258 = vmatpush1.msra.mxu0 0.0
    %259 = vmatprep.subr.mxu0 0.0
    %260 = vmatpush1.msra.mxu0 0.0
    %261 = vmatprep.subr.mxu0 %v230
    %262 = vmatpush1.msra.mxu0 %v229
    %263 = vmatprep.subr.mxu0 %v226
    %264 = vmatpush1.msra.mxu0 %v225
    %265 = vmatprep.subr.mxu0 %v222
    %266 = vmatpush1.msra.mxu0 %v221
    %267 = vmatprep.subr.mxu0 %v218
    %268 = vmatpush1.msra.mxu0 %v217
    %269 = vmatprep.subr.mxu0 0.0
    %270 = vmatpush2.msra.mxu0 0.0
    %271 = vmatprep.subr.mxu0 0.0
    %272 = vmatpush2.msra.mxu0 0.0
    %273 = vmatprep.subr.mxu0 0.0
    %274 = vmatpush2.msra.mxu0 0.0
    %275 = vmatprep.subr.mxu0 0.0
    %276 = vmatpush2.msra.mxu0 0.0
    %277 = vmatprep.subr.mxu0 0.0
    %278 = vmatpush2.msra.mxu0 0.0
    %279 = vmatprep.subr.mxu0 0.0
    %280 = vmatpush2.msra.mxu0 0.0
    %281 = vmatprep.subr.mxu0 0.0
    %282 = vmatpush2.msra.mxu0 0.0
    %283 = vmatprep.subr.mxu0 0.0
    %284 = vmatpush2.msra.mxu0 0.0
    %285 = vmatprep.subr.mxu0 0.0
    %286 = vmatpush2.msra.mxu0 0.0
    %287 = vmatprep.subr.mxu0 0.0
    %288 = vmatpush2.msra.mxu0 0.0
    %289 = vmatprep.subr.mxu0 0.0
    %290 = vmatpush2.msra.mxu0 0.0
    %291 = vmatprep.subr.mxu0 0.0
    %292 = vmatpush2.msra.mxu0 0.0
    %293 = vmatprep.subr.mxu0 0.0
    %294 = vmatpush2.msra.mxu0 0.0
    %295 = vmatprep.subr.mxu0 0.0
    %296 = vmatpush2.msra.mxu0 0.0
    %297 = vmatprep.subr.mxu0 0.0
    %298 = vmatpush2.msra.mxu0 0.0
    %299 = vmatprep.subr.mxu0 0.0
    %300 = vmatpush2.msra.mxu0 0.0
    %301 = vmatprep.mubr.f32.mxu0 0.0
    %302 = vmatmul.mubr.f32.gmra.mxu0 %v235
    %v303 = vpop.f32.mrf.mxu0
    %v304 = vadd.f32 0.0, %v303
    %v305 = vpop.f32.mrf.mxu0
    %v306 = vadd.f32 0.0, %v305
    %307 = vdwg.mxu0
    %308 = vmatprep.subr.mxu0 0.0
    %309 = vmatpush1.msra.mxu0 0.0
    %310 = vmatprep.subr.mxu0 0.0
    %311 = vmatpush1.msra.mxu0 0.0
    %312 = vmatprep.subr.mxu0 0.0
    %313 = vmatpush1.msra.mxu0 0.0
    %314 = vmatprep.subr.mxu0 0.0
    %315 = vmatpush1.msra.mxu0 0.0
    %316 = vmatprep.subr.mxu0 0.0
    %317 = vmatpush1.msra.mxu0 0.0
    %318 = vmatprep.subr.mxu0 0.0
    %319 = vmatpush1.msra.mxu0 0.0
    %320 = vmatprep.subr.mxu0 0.0
    %321 = vmatpush1.msra.mxu0 0.0
    %322 = vmatprep.subr.mxu0 0.0
    %323 = vmatpush1.msra.mxu0 0.0
    %324 = vmatprep.subr.mxu0 0.0
    %325 = vmatpush1.msra.mxu0 0.0
    %326 = vmatprep.subr.mxu0 0.0
    %327 = vmatpush1.msra.mxu0 0.0
    %328 = vmatprep.subr.mxu0 0.0
    %329 = vmatpush1.msra.mxu0 0.0
    %330 = vmatprep.subr.mxu0 0.0
    %331 = vmatpush1.msra.mxu0 0.0
    %332 = vmatprep.subr.mxu0 %v232
    %333 = vmatpush1.msra.mxu0 %v231
    %334 = vmatprep.subr.mxu0 %v228
    %335 = vmatpush1.msra.mxu0 %v227
    %336 = vmatprep.subr.mxu0 %v224
    %337 = vmatpush1.msra.mxu0 %v223
    %338 = vmatprep.subr.mxu0 %v220
    %339 = vmatpush1.msra.mxu0 %v219
    %340 = vmatprep.subr.mxu0 0.0
    %341 = vmatpush2.msra.mxu0 0.0
    %342 = vmatprep.subr.mxu0 0.0
    %343 = vmatpush2.msra.mxu0 0.0
    %344 = vmatprep.subr.mxu0 0.0
    %345 = vmatpush2.msra.mxu0 0.0
    %346 = vmatprep.subr.mxu0 0.0
    %347 = vmatpush2.msra.mxu0 0.0
    %348 = vmatprep.subr.mxu0 0.0
    %349 = vmatpush2.msra.mxu0 0.0
    %350 = vmatprep.subr.mxu0 0.0
    %351 = vmatpush2.msra.mxu0 0.0
    %352 = vmatprep.subr.mxu0 0.0
    %353 = vmatpush2.msra.mxu0 0.0
    %354 = vmatprep.subr.mxu0 0.0
    %355 = vmatpush2.msra.mxu0 0.0
    %356 = vmatprep.subr.mxu0 0.0
    %357 = vmatpush2.msra.mxu0 0.0
    %358 = vmatprep.subr.mxu0 0.0
    %359 = vmatpush2.msra.mxu0 0.0
    %360 = vmatprep.subr.mxu0 0.0
    %361 = vmatpush2.msra.mxu0 0.0
    %362 = vmatprep.subr.mxu0 0.0
    %363 = vmatpush2.msra.mxu0 0.0
    %364 = vmatprep.subr.mxu0 0.0
    %365 = vmatpush2.msra.mxu0 0.0
    %366 = vmatprep.subr.mxu0 0.0
    %367 = vmatpush2.msra.mxu0 0.0
    %368 = vmatprep.subr.mxu0 0.0
    %369 = vmatpush2.msra.mxu0 0.0
    %370 = vmatprep.subr.mxu0 0.0
    %371 = vmatpush2.msra.mxu0 0.0
    %372 = vmatprep.mubr.f32.mxu0 0.0
    %373 = vmatmul.mubr.f32.gmra.mxu0 %v235
    %v374 = vpop.f32.mrf.mxu0
    %v375 = vadd.f32 0.0, %v374
    %v376 = vpop.f32.mrf.mxu0
    %v377 = vadd.f32 0.0, %v376
    %378 = vdwg.mxu0
    %v383 = vcombine.low %v304, %v306
    %v384 = vcombine.low %v375, %v377
    %v386 = vunpack.c.l.s4 1966171168
    %v387 = vunpack.c.0.s8 %v386
    %v388 = vlaneseq
    %v389 = vshrl.u32 %v388, 7
    %v390 = vsub.s32 %v387, %v389
    %v391 = vrot.slane %v383, %v390
    %v393 = vunpack.c.l.s4 1966171168
    %v394 = vunpack.c.0.s8 %v393
    %v395 = vlaneseq
    %v396 = vshrl.u32 %v395, 7
    %v397 = vsub.s32 %v394, %v396
    %v398 = vrot.slane %v384, %v397
    %v399 = vcombine.low %v391, %v398
    %v401 = vunpack.c.l.s4 1966171168
    %v402 = vunpack.c.0.s8 %v401
    %v403 = vlaneseq
    %v404 = vshrl.u32 %v403, 7
    %v405 = vsub.s32 %v402, %v404
    %v406 = vrot.slane %v399, %v405
    %v408 = vadd.f32 %v216, %v406
    %v409 = vxor.u32 %v408, 2147483648
    %v410 = vmul.f32 %v409, 1.442695
    %v411 = vpow.pop %v410
    %v412 = vadd.f32 %v411, 1.0
    %v413 = vrcp.pop %v412
    %v414 = vmul.f32 1.0, %v413
    %v416 = vrot.slane %v408, 3
    %v418 = vtanh.pop %v416
    %v420 = vrot.slane %v414, 1
    %v422 = vmul.f32 %v420, 0.0
    %v423 = vmul.f32 %v414, %v418
    %v424 = vadd.f32 %v422, %v423
    %v425 = vtanh.pop %v424
    %v426 = vrot.slane %v414, 2
    %v428 = vmul.f32 %v426, %v425
    %s429 = scalar_lea.vmem [#allocation2], 1
    %v430 = vld [vmem:[%s429] ss:$8 sm:$0xf]
    %v432 = vsel %vm233, %v428, 0
    %434 = vmatprep.subr.mxu0 0.0
    %435 = vmatpush1.msra.mxu0 0.0
    %436 = vmatprep.subr.mxu0 0.0
    %437 = vmatpush1.msra.mxu0 0.0
    %438 = vmatprep.subr.mxu0 0.0
    %439 = vmatpush1.msra.mxu0 0.0
    %440 = vmatprep.subr.mxu0 0.0
    %441 = vmatpush1.msra.mxu0 0.0
    %442 = vmatprep.subr.mxu0 0.0
    %443 = vmatpush1.msra.mxu0 0.0
    %444 = vmatprep.subr.mxu0 0.0
    %445 = vmatpush1.msra.mxu0 0.0
    %446 = vmatprep.subr.mxu0 0.0
    %447 = vmatpush1.msra.mxu0 0.0
    %448 = vmatprep.subr.mxu0 0.0
    %449 = vmatpush1.msra.mxu0 0.0
    %450 = vmatprep.subr.mxu0 0.0
    %451 = vmatpush1.msra.mxu0 0.0
    %452 = vmatprep.subr.mxu0 0.0
    %453 = vmatpush1.msra.mxu0 0.0
    %454 = vmatprep.subr.mxu0 0.0
    %455 = vmatpush1.msra.mxu0 0.0
    %456 = vmatprep.subr.mxu0 0.0
    %457 = vmatpush1.msra.mxu0 0.0
    %458 = vmatprep.subr.mxu0 %v230
    %459 = vmatpush1.msra.mxu0 %v229
    %460 = vmatprep.subr.mxu0 %v226
    %461 = vmatpush1.msra.mxu0 %v225
    %462 = vmatprep.subr.mxu0 %v222
    %463 = vmatpush1.msra.mxu0 %v221
    %464 = vmatprep.subr.mxu0 %v218
    %465 = vmatpush1.msra.mxu0 %v217
    %466 = vmatprep.subr.mxu0 0.0
    %467 = vmatpush2.msra.mxu0 0.0
    %468 = vmatprep.subr.mxu0 0.0
    %469 = vmatpush2.msra.mxu0 0.0
    %470 = vmatprep.subr.mxu0 0.0
    %471 = vmatpush2.msra.mxu0 0.0
    %472 = vmatprep.subr.mxu0 0.0
    %473 = vmatpush2.msra.mxu0 0.0
    %474 = vmatprep.subr.mxu0 0.0
    %475 = vmatpush2.msra.mxu0 0.0
    %476 = vmatprep.subr.mxu0 0.0
    %477 = vmatpush2.msra.mxu0 0.0
    %478 = vmatprep.subr.mxu0 0.0
    %479 = vmatpush2.msra.mxu0 0.0
    %480 = vmatprep.subr.mxu0 0.0
    %481 = vmatpush2.msra.mxu0 0.0
    %482 = vmatprep.subr.mxu0 0.0
    %483 = vmatpush2.msra.mxu0 0.0
    %484 = vmatprep.subr.mxu0 0.0
    %485 = vmatpush2.msra.mxu0 0.0
    %486 = vmatprep.subr.mxu0 0.0
    %487 = vmatpush2.msra.mxu0 0.0
    %488 = vmatprep.subr.mxu0 0.0
    %489 = vmatpush2.msra.mxu0 0.0
    %490 = vmatprep.subr.mxu0 0.0
    %491 = vmatpush2.msra.mxu0 0.0
    %492 = vmatprep.subr.mxu0 0.0
    %493 = vmatpush2.msra.mxu0 0.0
    %494 = vmatprep.subr.mxu0 0.0
    %495 = vmatpush2.msra.mxu0 0.0
    %496 = vmatprep.subr.mxu0 0.0
    %497 = vmatpush2.msra.mxu0 0.0
    %498 = vmatprep.mubr.f32.mxu0 0.0
    %499 = vmatmul.mubr.f32.gmra.mxu0 %v432
    %v500 = vpop.f32.mrf.mxu0
    %v501 = vadd.f32 0.0, %v500
    %v502 = vpop.f32.mrf.mxu0
    %v503 = vadd.f32 0.0, %v502
    %504 = vdwg.mxu0
    %505 = vmatprep.subr.mxu0 0.0
    %506 = vmatpush1.msra.mxu0 0.0
    %507 = vmatprep.subr.mxu0 0.0
    %508 = vmatpush1.msra.mxu0 0.0
    %509 = vmatprep.subr.mxu0 0.0
    %510 = vmatpush1.msra.mxu0 0.0
    %511 = vmatprep.subr.mxu0 0.0
    %512 = vmatpush1.msra.mxu0 0.0
    %513 = vmatprep.subr.mxu0 0.0
    %514 = vmatpush1.msra.mxu0 0.0
    %515 = vmatprep.subr.mxu0 0.0
    %516 = vmatpush1.msra.mxu0 0.0
    %517 = vmatprep.subr.mxu0 0.0
    %518 = vmatpush1.msra.mxu0 0.0
    %519 = vmatprep.subr.mxu0 0.0
    %520 = vmatpush1.msra.mxu0 0.0
    %521 = vmatprep.subr.mxu0 0.0
    %522 = vmatpush1.msra.mxu0 0.0
    %523 = vmatprep.subr.mxu0 0.0
    %524 = vmatpush1.msra.mxu0 0.0
    %525 = vmatprep.subr.mxu0 0.0
    %526 = vmatpush1.msra.mxu0 0.0
    %527 = vmatprep.subr.mxu0 0.0
    %528 = vmatpush1.msra.mxu0 0.0
    %529 = vmatprep.subr.mxu0 %v232
    %530 = vmatpush1.msra.mxu0 %v231
    %531 = vmatprep.subr.mxu0 %v228
    %532 = vmatpush1.msra.mxu0 %v227
    %533 = vmatprep.subr.mxu0 %v224
    %534 = vmatpush1.msra.mxu0 %v223
    %535 = vmatprep.subr.mxu0 %v220
    %536 = vmatpush1.msra.mxu0 %v219
    %537 = vmatprep.subr.mxu0 0.0
    %538 = vmatpush2.msra.mxu0 0.0
    %539 = vmatprep.subr.mxu0 0.0
    %540 = vmatpush2.msra.mxu0 0.0
    %541 = vmatprep.subr.mxu0 0.0
    %542 = vmatpush2.msra.mxu0 0.0
    %543 = vmatprep.subr.mxu0 0.0
    %544 = vmatpush2.msra.mxu0 0.0
    %545 = vmatprep.subr.mxu0 0.0
    %546 = vmatpush2.msra.mxu0 0.0
    %547 = vmatprep.subr.mxu0 0.0
    %548 = vmatpush2.msra.mxu0 0.0
    %549 = vmatprep.subr.mxu0 0.0
    %550 = vmatpush2.msra.mxu0 0.0
    %551 = vmatprep.subr.mxu0 0.0
    %552 = vmatpush2.msra.mxu0 0.0
    %553 = vmatprep.subr.mxu0 0.0
    %554 = vmatpush2.msra.mxu0 0.0
    %555 = vmatprep.subr.mxu0 0.0
    %556 = vmatpush2.msra.mxu0 0.0
    %557 = vmatprep.subr.mxu0 0.0
    %558 = vmatpush2.msra.mxu0 0.0
    %559 = vmatprep.subr.mxu0 0.0
    %560 = vmatpush2.msra.mxu0 0.0
    %561 = vmatprep.subr.mxu0 0.0
    %562 = vmatpush2.msra.mxu0 0.0
    %563 = vmatprep.subr.mxu0 0.0
    %564 = vmatpush2.msra.mxu0 0.0
    %565 = vmatprep.subr.mxu0 0.0
    %566 = vmatpush2.msra.mxu0 0.0
    %567 = vmatprep.subr.mxu0 0.0
    %568 = vmatpush2.msra.mxu0 0.0
    %569 = vmatprep.mubr.f32.mxu0 0.0
    %570 = vmatmul.mubr.f32.gmra.mxu0 %v432
    %v571 = vpop.f32.mrf.mxu0
    %v572 = vadd.f32 0.0, %v571
    %v573 = vpop.f32.mrf.mxu0
    %v574 = vadd.f32 0.0, %v573
    %575 = vdwg.mxu0
    %v580 = vcombine.low %v501, %v503
    %v581 = vcombine.low %v572, %v574
    %v583 = vunpack.c.l.s4 1966171168
    %v584 = vunpack.c.0.s8 %v583
    %v585 = vlaneseq
    %v586 = vshrl.u32 %v585, 7
    %v587 = vsub.s32 %v584, %v586
    %v588 = vrot.slane %v580, %v587
    %v590 = vunpack.c.l.s4 1966171168
    %v591 = vunpack.c.0.s8 %v590
    %v592 = vlaneseq
    %v593 = vshrl.u32 %v592, 7
    %v594 = vsub.s32 %v591, %v593
    %v595 = vrot.slane %v581, %v594
    %v596 = vcombine.low %v588, %v595
    %v598 = vunpack.c.l.s4 1966171168
    %v599 = vunpack.c.0.s8 %v598
    %v600 = vlaneseq
    %v601 = vshrl.u32 %v600, 7
    %v602 = vsub.s32 %v599, %v601
    %v603 = vrot.slane %v596, %v602
    %v605 = vadd.f32 %v430, %v603
    %v606 = vxor.u32 %v605, 2147483648
    %v607 = vmul.f32 %v606, 1.442695
    %v608 = vpow.pop %v607
    %v609 = vadd.f32 %v608, 1.0
    %v610 = vrcp.pop %v609
    %v611 = vmul.f32 1.0, %v610
    %v613 = vrot.slane %v605, 3
    %v615 = vtanh.pop %v613
    %v617 = vrot.slane %v611, 1
    %v619 = vmul.f32 %v617, %v424
    %v620 = vmul.f32 %v611, %v615
    %v621 = vadd.f32 %v619, %v620
    %v622 = vtanh.pop %v621
    %v623 = vrot.slane %v611, 2
    %v625 = vmul.f32 %v623, %v622
    %v626 = vld [vmem:[#allocation4 + $0xa0] sm:$0xff]
    %v627 = vld [vmem:[#allocation4 + $0xa8] sm:$0xff]
    %v628 = vld [vmem:[#allocation4 + $0xb0] sm:$0xff]
    %v629 = vld [vmem:[#allocation4 + $0xb8] sm:$0xff]
    %v630 = vld [vmem:[#allocation4 + $0xc0] sm:$0xff]
    %v631 = vld [vmem:[#allocation4 + $0xc8] sm:$0xff]
    %v632 = vld [vmem:[#allocation4 + $0xd0] sm:$0xff]
    %v633 = vld [vmem:[#allocation4 + $0xd8] sm:$0xff]
    %v634 = vld [vmem:[#allocation4 + $0xe0] sm:$0xff]
    %v635 = vld [vmem:[#allocation4 + $0xe8] sm:$0xff]
    %v636 = vld [vmem:[#allocation4 + $0xf0] sm:$0xff]
    %v637 = vld [vmem:[#allocation4 + $0xf8] sm:$0xff]
    %v638 = vld [vmem:[#allocation4 + $0x100] sm:$0xff]
    %v639 = vld [vmem:[#allocation4 + $0x108] sm:$0xff]
    %v640 = vld [vmem:[#allocation4 + $0x110] sm:$0xff]
    %v641 = vld [vmem:[#allocation4 + $0x118] sm:$0xff]
    %s642 = scalar_lea.vmem [#allocation4], 801
    %v643 = vld [vmem:[%s642] ss:$8 sm:$0xf]
    %v645 = vlaneseq
    %v646 = vshrl.u32 %v645, 7
    %v647 = vsub.s32 0, %v646
    %v648 = vrot.slane %v643, %v647
    %v649 = vlaneseq
    %v650 = vshrl.u32 %v649, 7
    %v651 = vsub.s32 1, %v650
    %v652 = vrot.slane %v643, %v651
    %v653 = vlaneseq
    %v654 = vshrl.u32 %v653, 7
    %v655 = vsub.s32 2, %v654
    %v656 = vrot.slane %v643, %v655
    %v657 = vlaneseq
    %v658 = vshrl.u32 %v657, 7
    %v659 = vsub.s32 3, %v658
    %v660 = vrot.slane %v643, %v659
    %665 = vmatprep.subr.mxu0 0.0
    %666 = vmatpush1.msra.mxu0 0.0
    %667 = vmatprep.subr.mxu0 0.0
    %668 = vmatpush1.msra.mxu0 0.0
    %669 = vmatprep.subr.mxu0 0.0
    %670 = vmatpush1.msra.mxu0 0.0
    %671 = vmatprep.subr.mxu0 0.0
    %672 = vmatpush1.msra.mxu0 0.0
    %673 = vmatprep.subr.mxu0 0.0
    %674 = vmatpush1.msra.mxu0 0.0
    %675 = vmatprep.subr.mxu0 0.0
    %676 = vmatpush1.msra.mxu0 0.0
    %677 = vmatprep.subr.mxu0 0.0
    %678 = vmatpush1.msra.mxu0 0.0
    %679 = vmatprep.subr.mxu0 0.0
    %680 = vmatpush1.msra.mxu0 0.0
    %681 = vmatprep.subr.mxu0 0.0
    %682 = vmatpush1.msra.mxu0 0.0
    %683 = vmatprep.subr.mxu0 0.0
    %684 = vmatpush1.msra.mxu0 0.0
    %685 = vmatprep.subr.mxu0 0.0
    %686 = vmatpush1.msra.mxu0 0.0
    %687 = vmatprep.subr.mxu0 0.0
    %688 = vmatpush1.msra.mxu0 0.0
    %689 = vmatprep.subr.mxu0 %v639
    %690 = vmatpush1.msra.mxu0 %v638
    %691 = vmatprep.subr.mxu0 %v635
    %692 = vmatpush1.msra.mxu0 %v634
    %693 = vmatprep.subr.mxu0 %v631
    %694 = vmatpush1.msra.mxu0 %v630
    %695 = vmatprep.subr.mxu0 %v627
    %696 = vmatpush1.msra.mxu0 %v626
    %697 = vmatprep.subr.mxu0 0.0
    %698 = vmatpush2.msra.mxu0 0.0
    %699 = vmatprep.subr.mxu0 0.0
    %700 = vmatpush2.msra.mxu0 0.0
    %701 = vmatprep.subr.mxu0 0.0
    %702 = vmatpush2.msra.mxu0 0.0
    %703 = vmatprep.subr.mxu0 0.0
    %704 = vmatpush2.msra.mxu0 0.0
    %705 = vmatprep.subr.mxu0 0.0
    %706 = vmatpush2.msra.mxu0 0.0
    %707 = vmatprep.subr.mxu0 0.0
    %708 = vmatpush2.msra.mxu0 0.0
    %709 = vmatprep.subr.mxu0 0.0
    %710 = vmatpush2.msra.mxu0 0.0
    %711 = vmatprep.subr.mxu0 0.0
    %712 = vmatpush2.msra.mxu0 0.0
    %713 = vmatprep.subr.mxu0 0.0
    %714 = vmatpush2.msra.mxu0 0.0
    %715 = vmatprep.subr.mxu0 0.0
    %716 = vmatpush2.msra.mxu0 0.0
    %717 = vmatprep.subr.mxu0 0.0
    %718 = vmatpush2.msra.mxu0 0.0
    %719 = vmatprep.subr.mxu0 0.0
    %720 = vmatpush2.msra.mxu0 0.0
    %721 = vmatprep.subr.mxu0 0.0
    %722 = vmatpush2.msra.mxu0 0.0
    %723 = vmatprep.subr.mxu0 0.0
    %724 = vmatpush2.msra.mxu0 0.0
    %725 = vmatprep.subr.mxu0 0.0
    %726 = vmatpush2.msra.mxu0 0.0
    %727 = vmatprep.subr.mxu0 0.0
    %728 = vmatpush2.msra.mxu0 0.0
    %729 = vmatprep.mubr.f32.mxu0 0.0
    %730 = vmatmul.mubr.f32.gmra.mxu0 %v432
    %v731 = vpop.f32.mrf.mxu0
    %v732 = vadd.f32 %v648, %v731
    %v733 = vpop.f32.mrf.mxu0
    %v734 = vadd.f32 %v652, %v733
    %735 = vdwg.mxu0
    %736 = vmatprep.subr.mxu0 0.0
    %737 = vmatpush1.msra.mxu0 0.0
    %738 = vmatprep.subr.mxu0 0.0
    %739 = vmatpush1.msra.mxu0 0.0
    %740 = vmatprep.subr.mxu0 0.0
    %741 = vmatpush1.msra.mxu0 0.0
    %742 = vmatprep.subr.mxu0 0.0
    %743 = vmatpush1.msra.mxu0 0.0
    %744 = vmatprep.subr.mxu0 0.0
    %745 = vmatpush1.msra.mxu0 0.0
    %746 = vmatprep.subr.mxu0 0.0
    %747 = vmatpush1.msra.mxu0 0.0
    %748 = vmatprep.subr.mxu0 0.0
    %749 = vmatpush1.msra.mxu0 0.0
    %750 = vmatprep.subr.mxu0 0.0
    %751 = vmatpush1.msra.mxu0 0.0
    %752 = vmatprep.subr.mxu0 0.0
    %753 = vmatpush1.msra.mxu0 0.0
    %754 = vmatprep.subr.mxu0 0.0
    %755 = vmatpush1.msra.mxu0 0.0
    %756 = vmatprep.subr.mxu0 0.0
    %757 = vmatpush1.msra.mxu0 0.0
    %758 = vmatprep.subr.mxu0 0.0
    %759 = vmatpush1.msra.mxu0 0.0
    %760 = vmatprep.subr.mxu0 %v641
    %761 = vmatpush1.msra.mxu0 %v640
    %762 = vmatprep.subr.mxu0 %v637
    %763 = vmatpush1.msra.mxu0 %v636
    %764 = vmatprep.subr.mxu0 %v633
    %765 = vmatpush1.msra.mxu0 %v632
    %766 = vmatprep.subr.mxu0 %v629
    %767 = vmatpush1.msra.mxu0 %v628
    %768 = vmatprep.subr.mxu0 0.0
    %769 = vmatpush2.msra.mxu0 0.0
    %770 = vmatprep.subr.mxu0 0.0
    %771 = vmatpush2.msra.mxu0 0.0
    %772 = vmatprep.subr.mxu0 0.0
    %773 = vmatpush2.msra.mxu0 0.0
    %774 = vmatprep.subr.mxu0 0.0
    %775 = vmatpush2.msra.mxu0 0.0
    %776 = vmatprep.subr.mxu0 0.0
    %777 = vmatpush2.msra.mxu0 0.0
    %778 = vmatprep.subr.mxu0 0.0
    %779 = vmatpush2.msra.mxu0 0.0
    %780 = vmatprep.subr.mxu0 0.0
    %781 = vmatpush2.msra.mxu0 0.0
    %782 = vmatprep.subr.mxu0 0.0
    %783 = vmatpush2.msra.mxu0 0.0
    %784 = vmatprep.subr.mxu0 0.0
    %785 = vmatpush2.msra.mxu0 0.0
    %786 = vmatprep.subr.mxu0 0.0
    %787 = vmatpush2.msra.mxu0 0.0
    %788 = vmatprep.subr.mxu0 0.0
    %789 = vmatpush2.msra.mxu0 0.0
    %790 = vmatprep.subr.mxu0 0.0
    %791 = vmatpush2.msra.mxu0 0.0
    %792 = vmatprep.subr.mxu0 0.0
    %793 = vmatpush2.msra.mxu0 0.0
    %794 = vmatprep.subr.mxu0 0.0
    %795 = vmatpush2.msra.mxu0 0.0
    %796 = vmatprep.subr.mxu0 0.0
    %797 = vmatpush2.msra.mxu0 0.0
    %798 = vmatprep.subr.mxu0 0.0
    %799 = vmatpush2.msra.mxu0 0.0
    %800 = vmatprep.mubr.f32.mxu0 0.0
    %801 = vmatmul.mubr.f32.gmra.mxu0 %v432
    %v802 = vpop.f32.mrf.mxu0
    %v803 = vadd.f32 %v656, %v802
    %v804 = vpop.f32.mrf.mxu0
    %v805 = vadd.f32 %v660, %v804
    %806 = vdwg.mxu0
    %v807 = vld [vmem:[#allocation4 + $0x120] sm:$0xff]
    %v808 = vld [vmem:[#allocation4 + $0x128] sm:$0xff]
    %v809 = vld [vmem:[#allocation4 + $0x130] sm:$0xff]
    %v810 = vld [vmem:[#allocation4 + $0x138] sm:$0xff]
    %v811 = vld [vmem:[#allocation4 + $0x140] sm:$0xff]
    %v812 = vld [vmem:[#allocation4 + $0x148] sm:$0xff]
    %v813 = vld [vmem:[#allocation4 + $0x150] sm:$0xff]
    %v814 = vld [vmem:[#allocation4 + $0x158] sm:$0xff]
    %v815 = vld [vmem:[#allocation4 + $0x160] sm:$0xff]
    %v816 = vld [vmem:[#allocation4 + $0x168] sm:$0xff]
    %v817 = vld [vmem:[#allocation4 + $0x170] sm:$0xff]
    %v818 = vld [vmem:[#allocation4 + $0x178] sm:$0xff]
    %v819 = vld [vmem:[#allocation4 + $0x180] sm:$0xff]
    %v820 = vld [vmem:[#allocation4 + $0x188] sm:$0xff]
    %v821 = vld [vmem:[#allocation4 + $0x190] sm:$0xff]
    %v822 = vld [vmem:[#allocation4 + $0x198] sm:$0xff]
    %823 = vmatprep.subr.mxu0 0.0
    %824 = vmatpush1.msra.mxu0 0.0
    %825 = vmatprep.subr.mxu0 0.0
    %826 = vmatpush1.msra.mxu0 0.0
    %827 = vmatprep.subr.mxu0 0.0
    %828 = vmatpush1.msra.mxu0 0.0
    %829 = vmatprep.subr.mxu0 0.0
    %830 = vmatpush1.msra.mxu0 0.0
    %831 = vmatprep.subr.mxu0 0.0
    %832 = vmatpush1.msra.mxu0 0.0
    %833 = vmatprep.subr.mxu0 0.0
    %834 = vmatpush1.msra.mxu0 0.0
    %835 = vmatprep.subr.mxu0 0.0
    %836 = vmatpush1.msra.mxu0 0.0
    %837 = vmatprep.subr.mxu0 0.0
    %838 = vmatpush1.msra.mxu0 0.0
    %839 = vmatprep.subr.mxu0 0.0
    %840 = vmatpush1.msra.mxu0 0.0
    %841 = vmatprep.subr.mxu0 0.0
    %842 = vmatpush1.msra.mxu0 0.0
    %843 = vmatprep.subr.mxu0 0.0
    %844 = vmatpush1.msra.mxu0 0.0
    %845 = vmatprep.subr.mxu0 0.0
    %846 = vmatpush1.msra.mxu0 0.0
    %847 = vmatprep.subr.mxu0 %v820
    %848 = vmatpush1.msra.mxu0 %v819
    %849 = vmatprep.subr.mxu0 %v816
    %850 = vmatpush1.msra.mxu0 %v815
    %851 = vmatprep.subr.mxu0 %v812
    %852 = vmatpush1.msra.mxu0 %v811
    %853 = vmatprep.subr.mxu0 %v808
    %854 = vmatpush1.msra.mxu0 %v807
    %855 = vmatprep.subr.mxu0 0.0
    %856 = vmatpush2.msra.mxu0 0.0
    %857 = vmatprep.subr.mxu0 0.0
    %858 = vmatpush2.msra.mxu0 0.0
    %859 = vmatprep.subr.mxu0 0.0
    %860 = vmatpush2.msra.mxu0 0.0
    %861 = vmatprep.subr.mxu0 0.0
    %862 = vmatpush2.msra.mxu0 0.0
    %863 = vmatprep.subr.mxu0 0.0
    %864 = vmatpush2.msra.mxu0 0.0
    %865 = vmatprep.subr.mxu0 0.0
    %866 = vmatpush2.msra.mxu0 0.0
    %867 = vmatprep.subr.mxu0 0.0
    %868 = vmatpush2.msra.mxu0 0.0
    %869 = vmatprep.subr.mxu0 0.0
    %870 = vmatpush2.msra.mxu0 0.0
    %871 = vmatprep.subr.mxu0 0.0
    %872 = vmatpush2.msra.mxu0 0.0
    %873 = vmatprep.subr.mxu0 0.0
    %874 = vmatpush2.msra.mxu0 0.0
    %875 = vmatprep.subr.mxu0 0.0
    %876 = vmatpush2.msra.mxu0 0.0
    %877 = vmatprep.subr.mxu0 0.0
    %878 = vmatpush2.msra.mxu0 0.0
    %879 = vmatprep.subr.mxu0 0.0
    %880 = vmatpush2.msra.mxu0 0.0
    %881 = vmatprep.subr.mxu0 0.0
    %882 = vmatpush2.msra.mxu0 0.0
    %883 = vmatprep.subr.mxu0 0.0
    %884 = vmatpush2.msra.mxu0 0.0
    %885 = vmatprep.subr.mxu0 0.0
    %886 = vmatpush2.msra.mxu0 0.0
    %887 = vmatprep.mubr.f32.mxu0 0.0
    %888 = vmatmul.mubr.f32.gmra.mxu0 %v235
    %v889 = vpop.f32.mrf.mxu0
    %v890 = vadd.f32 0.0, %v889
    %v891 = vpop.f32.mrf.mxu0
    %v892 = vadd.f32 0.0, %v891
    %893 = vdwg.mxu0
    %894 = vmatprep.subr.mxu0 0.0
    %895 = vmatpush1.msra.mxu0 0.0
    %896 = vmatprep.subr.mxu0 0.0
    %897 = vmatpush1.msra.mxu0 0.0
    %898 = vmatprep.subr.mxu0 0.0
    %899 = vmatpush1.msra.mxu0 0.0
    %900 = vmatprep.subr.mxu0 0.0
    %901 = vmatpush1.msra.mxu0 0.0
    %902 = vmatprep.subr.mxu0 0.0
    %903 = vmatpush1.msra.mxu0 0.0
    %904 = vmatprep.subr.mxu0 0.0
    %905 = vmatpush1.msra.mxu0 0.0
    %906 = vmatprep.subr.mxu0 0.0
    %907 = vmatpush1.msra.mxu0 0.0
    %908 = vmatprep.subr.mxu0 0.0
    %909 = vmatpush1.msra.mxu0 0.0
    %910 = vmatprep.subr.mxu0 0.0
    %911 = vmatpush1.msra.mxu0 0.0
    %912 = vmatprep.subr.mxu0 0.0
    %913 = vmatpush1.msra.mxu0 0.0
    %914 = vmatprep.subr.mxu0 0.0
    %915 = vmatpush1.msra.mxu0 0.0
    %916 = vmatprep.subr.mxu0 0.0
    %917 = vmatpush1.msra.mxu0 0.0
    %918 = vmatprep.subr.mxu0 %v822
    %919 = vmatpush1.msra.mxu0 %v821
    %920 = vmatprep.subr.mxu0 %v818
    %921 = vmatpush1.msra.mxu0 %v817
    %922 = vmatprep.subr.mxu0 %v814
    %923 = vmatpush1.msra.mxu0 %v813
    %924 = vmatprep.subr.mxu0 %v810
    %925 = vmatpush1.msra.mxu0 %v809
    %926 = vmatprep.subr.mxu0 0.0
    %927 = vmatpush2.msra.mxu0 0.0
    %928 = vmatprep.subr.mxu0 0.0
    %929 = vmatpush2.msra.mxu0 0.0
    %930 = vmatprep.subr.mxu0 0.0
    %931 = vmatpush2.msra.mxu0 0.0
    %932 = vmatprep.subr.mxu0 0.0
    %933 = vmatpush2.msra.mxu0 0.0
    %934 = vmatprep.subr.mxu0 0.0
    %935 = vmatpush2.msra.mxu0 0.0
    %936 = vmatprep.subr.mxu0 0.0
    %937 = vmatpush2.msra.mxu0 0.0
    %938 = vmatprep.subr.mxu0 0.0
    %939 = vmatpush2.msra.mxu0 0.0
    %940 = vmatprep.subr.mxu0 0.0
    %941 = vmatpush2.msra.mxu0 0.0
    %942 = vmatprep.subr.mxu0 0.0
    %943 = vmatpush2.msra.mxu0 0.0
    %944 = vmatprep.subr.mxu0 0.0
    %945 = vmatpush2.msra.mxu0 0.0
    %946 = vmatprep.subr.mxu0 0.0
    %947 = vmatpush2.msra.mxu0 0.0
    %948 = vmatprep.subr.mxu0 0.0
    %949 = vmatpush2.msra.mxu0 0.0
    %950 = vmatprep.subr.mxu0 0.0
    %951 = vmatpush2.msra.mxu0 0.0
    %952 = vmatprep.subr.mxu0 0.0
    %953 = vmatpush2.msra.mxu0 0.0
    %954 = vmatprep.subr.mxu0 0.0
    %955 = vmatpush2.msra.mxu0 0.0
    %956 = vmatprep.subr.mxu0 0.0
    %957 = vmatpush2.msra.mxu0 0.0
    %958 = vmatprep.mubr.f32.mxu0 0.0
    %959 = vmatmul.mubr.f32.gmra.mxu0 %v235
    %v960 = vpop.f32.mrf.mxu0
    %v961 = vadd.f32 0.0, %v960
    %v962 = vpop.f32.mrf.mxu0
    %v963 = vadd.f32 0.0, %v962
    %964 = vdwg.mxu0
    %v965 = vadd.f32 %v732, %v890
    %v966 = vadd.f32 %v734, %v892
    %v967 = vadd.f32 %v803, %v961
    %v968 = vadd.f32 %v805, %v963
    %v969 = vxor.u32 %v965, 2147483648
    %v970 = vxor.u32 %v966, 2147483648
    %v971 = vxor.u32 %v967, 2147483648
    %v972 = vmul.f32 %v969, 1.442695
    %v973 = vpow.pop %v972
    %v974 = vmul.f32 %v970, 1.442695
    %v975 = vpow.pop %v974
    %v976 = vmul.f32 %v971, 1.442695
    %v977 = vpow.pop %v976
    %v978 = vadd.f32 %v973, 1.0
    %v979 = vadd.f32 %v975, 1.0
    %v980 = vadd.f32 %v977, 1.0
    %v981 = vrcp.pop %v978
    %v982 = vmul.f32 1.0, %v981
    %v983 = vrcp.pop %v979
    %v984 = vmul.f32 1.0, %v983
    %v985 = vrcp.pop %v980
    %v986 = vmul.f32 1.0, %v985
    %v987 = vtanh.pop %v968
    %v988 = vmul.f32 %v984, 0.0
    %v989 = vmul.f32 %v982, %v987
    %v990 = vadd.f32 %v988, %v989
    %v991 = vtanh.pop %v990
    %v992 = vmul.f32 %v986, %v991
    %s993 = scalar_lea.vmem [#allocation2], 2
    %v994 = vld [vmem:[%s993] ss:$8 sm:$0xf]
    %v996 = vsel %vm233, %v625, 0
    %998 = vmatprep.subr.mxu0 0.0
    %999 = vmatpush1.msra.mxu0 0.0
    %1000 = vmatprep.subr.mxu0 0.0
    %1001 = vmatpush1.msra.mxu0 0.0
    %1002 = vmatprep.subr.mxu0 0.0
    %1003 = vmatpush1.msra.mxu0 0.0
    %1004 = vmatprep.subr.mxu0 0.0
    %1005 = vmatpush1.msra.mxu0 0.0
    %1006 = vmatprep.subr.mxu0 0.0
    %1007 = vmatpush1.msra.mxu0 0.0
    %1008 = vmatprep.subr.mxu0 0.0
    %1009 = vmatpush1.msra.mxu0 0.0
    %1010 = vmatprep.subr.mxu0 0.0
    %1011 = vmatpush1.msra.mxu0 0.0
    %1012 = vmatprep.subr.mxu0 0.0
    %1013 = vmatpush1.msra.mxu0 0.0
    %1014 = vmatprep.subr.mxu0 0.0
    %1015 = vmatpush1.msra.mxu0 0.0
    %1016 = vmatprep.subr.mxu0 0.0
    %1017 = vmatpush1.msra.mxu0 0.0
    %1018 = vmatprep.subr.mxu0 0.0
    %1019 = vmatpush1.msra.mxu0 0.0
    %1020 = vmatprep.subr.mxu0 0.0
    %1021 = vmatpush1.msra.mxu0 0.0
    %1022 = vmatprep.subr.mxu0 %v230
    %1023 = vmatpush1.msra.mxu0 %v229
    %1024 = vmatprep.subr.mxu0 %v226
    %1025 = vmatpush1.msra.mxu0 %v225
    %1026 = vmatprep.subr.mxu0 %v222
    %1027 = vmatpush1.msra.mxu0 %v221
    %1028 = vmatprep.subr.mxu0 %v218
    %1029 = vmatpush1.msra.mxu0 %v217
    %1030 = vmatprep.subr.mxu0 0.0
    %1031 = vmatpush2.msra.mxu0 0.0
    %1032 = vmatprep.subr.mxu0 0.0
    %1033 = vmatpush2.msra.mxu0 0.0
    %1034 = vmatprep.subr.mxu0 0.0
    %1035 = vmatpush2.msra.mxu0 0.0
    %1036 = vmatprep.subr.mxu0 0.0
    %1037 = vmatpush2.msra.mxu0 0.0
    %1038 = vmatprep.subr.mxu0 0.0
    %1039 = vmatpush2.msra.mxu0 0.0
    %1040 = vmatprep.subr.mxu0 0.0
    %1041 = vmatpush2.msra.mxu0 0.0
    %1042 = vmatprep.subr.mxu0 0.0
    %1043 = vmatpush2.msra.mxu0 0.0
    %1044 = vmatprep.subr.mxu0 0.0
    %1045 = vmatpush2.msra.mxu0 0.0
    %1046 = vmatprep.subr.mxu0 0.0
    %1047 = vmatpush2.msra.mxu0 0.0
    %1048 = vmatprep.subr.mxu0 0.0
    %1049 = vmatpush2.msra.mxu0 0.0
    %1050 = vmatprep.subr.mxu0 0.0
    %1051 = vmatpush2.msra.mxu0 0.0
    %1052 = vmatprep.subr.mxu0 0.0
    %1053 = vmatpush2.msra.mxu0 0.0
    %1054 = vmatprep.subr.mxu0 0.0
    %1055 = vmatpush2.msra.mxu0 0.0
    %1056 = vmatprep.subr.mxu0 0.0
    %1057 = vmatpush2.msra.mxu0 0.0
    %1058 = vmatprep.subr.mxu0 0.0
    %1059 = vmatpush2.msra.mxu0 0.0
    %1060 = vmatprep.subr.mxu0 0.0
    %1061 = vmatpush2.msra.mxu0 0.0
    %1062 = vmatprep.mubr.f32.mxu0 0.0
    %1063 = vmatmul.mubr.f32.gmra.mxu0 %v996
    %v1064 = vpop.f32.mrf.mxu0
    %v1065 = vadd.f32 0.0, %v1064
    %v1066 = vpop.f32.mrf.mxu0
    %v1067 = vadd.f32 0.0, %v1066
    %1068 = vdwg.mxu0
    %1069 = vmatprep.subr.mxu0 0.0
    %1070 = vmatpush1.msra.mxu0 0.0
    %1071 = vmatprep.subr.mxu0 0.0
    %1072 = vmatpush1.msra.mxu0 0.0
    %1073 = vmatprep.subr.mxu0 0.0
    %1074 = vmatpush1.msra.mxu0 0.0
    %1075 = vmatprep.subr.mxu0 0.0
    %1076 = vmatpush1.msra.mxu0 0.0
    %1077 = vmatprep.subr.mxu0 0.0
    %1078 = vmatpush1.msra.mxu0 0.0
    %1079 = vmatprep.subr.mxu0 0.0
    %1080 = vmatpush1.msra.mxu0 0.0
    %1081 = vmatprep.subr.mxu0 0.0
    %1082 = vmatpush1.msra.mxu0 0.0
    %1083 = vmatprep.subr.mxu0 0.0
    %1084 = vmatpush1.msra.mxu0 0.0
    %1085 = vmatprep.subr.mxu0 0.0
    %1086 = vmatpush1.msra.mxu0 0.0
    %1087 = vmatprep.subr.mxu0 0.0
    %1088 = vmatpush1.msra.mxu0 0.0
    %1089 = vmatprep.subr.mxu0 0.0
    %1090 = vmatpush1.msra.mxu0 0.0
    %1091 = vmatprep.subr.mxu0 0.0
    %1092 = vmatpush1.msra.mxu0 0.0
    %1093 = vmatprep.subr.mxu0 %v232
    %1094 = vmatpush1.msra.mxu0 %v231
    %1095 = vmatprep.subr.mxu0 %v228
    %1096 = vmatpush1.msra.mxu0 %v227
    %1097 = vmatprep.subr.mxu0 %v224
    %1098 = vmatpush1.msra.mxu0 %v223
    %1099 = vmatprep.subr.mxu0 %v220
    %1100 = vmatpush1.msra.mxu0 %v219
    %1101 = vmatprep.subr.mxu0 0.0
    %1102 = vmatpush2.msra.mxu0 0.0
    %1103 = vmatprep.subr.mxu0 0.0
    %1104 = vmatpush2.msra.mxu0 0.0
    %1105 = vmatprep.subr.mxu0 0.0
    %1106 = vmatpush2.msra.mxu0 0.0
    %1107 = vmatprep.subr.mxu0 0.0
    %1108 = vmatpush2.msra.mxu0 0.0
    %1109 = vmatprep.subr.mxu0 0.0
    %1110 = vmatpush2.msra.mxu0 0.0
    %1111 = vmatprep.subr.mxu0 0.0
    %1112 = vmatpush2.msra.mxu0 0.0
    %1113 = vmatprep.subr.mxu0 0.0
    %1114 = vmatpush2.msra.mxu0 0.0
    %1115 = vmatprep.subr.mxu0 0.0
    %1116 = vmatpush2.msra.mxu0 0.0
    %1117 = vmatprep.subr.mxu0 0.0
    %1118 = vmatpush2.msra.mxu0 0.0
    %1119 = vmatprep.subr.mxu0 0.0
    %1120 = vmatpush2.msra.mxu0 0.0
    %1121 = vmatprep.subr.mxu0 0.0
    %1122 = vmatpush2.msra.mxu0 0.0
    %1123 = vmatprep.subr.mxu0 0.0
    %1124 = vmatpush2.msra.mxu0 0.0
    %1125 = vmatprep.subr.mxu0 0.0
    %1126 = vmatpush2.msra.mxu0 0.0
    %1127 = vmatprep.subr.mxu0 0.0
    %1128 = vmatpush2.msra.mxu0 0.0
    %1129 = vmatprep.subr.mxu0 0.0
    %1130 = vmatpush2.msra.mxu0 0.0
    %1131 = vmatprep.subr.mxu0 0.0
    %1132 = vmatpush2.msra.mxu0 0.0
    %1133 = vmatprep.mubr.f32.mxu0 0.0
    %1134 = vmatmul.mubr.f32.gmra.mxu0 %v996
    %v1135 = vpop.f32.mrf.mxu0
    %v1136 = vadd.f32 0.0, %v1135
    %v1137 = vpop.f32.mrf.mxu0
    %v1138 = vadd.f32 0.0, %v1137
    %1139 = vdwg.mxu0
    %v1144 = vcombine.low %v1065, %v1067
    %v1145 = vcombine.low %v1136, %v1138
    %v1147 = vunpack.c.l.s4 1966171168
    %v1148 = vunpack.c.0.s8 %v1147
    %v1149 = vlaneseq
    %v1150 = vshrl.u32 %v1149, 7
    %v1151 = vsub.s32 %v1148, %v1150
    %v1152 = vrot.slane %v1144, %v1151
    %v1154 = vunpack.c.l.s4 1966171168
    %v1155 = vunpack.c.0.s8 %v1154
    %v1156 = vlaneseq
    %v1157 = vshrl.u32 %v1156, 7
    %v1158 = vsub.s32 %v1155, %v1157
    %v1159 = vrot.slane %v1145, %v1158
    %v1160 = vcombine.low %v1152, %v1159
    %v1162 = vunpack.c.l.s4 1966171168
    %v1163 = vunpack.c.0.s8 %v1162
    %v1164 = vlaneseq
    %v1165 = vshrl.u32 %v1164, 7
    %v1166 = vsub.s32 %v1163, %v1165
    %v1167 = vrot.slane %v1160, %v1166
    %v1169 = vadd.f32 %v994, %v1167
    %v1170 = vxor.u32 %v1169, 2147483648
    %v1171 = vmul.f32 %v1170, 1.442695
    %v1172 = vpow.pop %v1171
    %v1173 = vadd.f32 %v1172, 1.0
    %v1174 = vrcp.pop %v1173
    %v1175 = vmul.f32 1.0, %v1174
    %v1177 = vrot.slane %v1169, 3
    %v1179 = vtanh.pop %v1177
    %v1181 = vrot.slane %v1175, 1
    %v1183 = vmul.f32 %v1181, %v621
    %v1184 = vmul.f32 %v1175, %v1179
    %v1185 = vadd.f32 %v1183, %v1184
    %v1186 = vtanh.pop %v1185
    %v1187 = vrot.slane %v1175, 2
    %v1189 = vmul.f32 %v1187, %v1186
    %1190 = vmatprep.subr.mxu0 0.0
    %1191 = vmatpush1.msra.mxu0 0.0
    %1192 = vmatprep.subr.mxu0 0.0
    %1193 = vmatpush1.msra.mxu0 0.0
    %1194 = vmatprep.subr.mxu0 0.0
    %1195 = vmatpush1.msra.mxu0 0.0
    %1196 = vmatprep.subr.mxu0 0.0
    %1197 = vmatpush1.msra.mxu0 0.0
    %1198 = vmatprep.subr.mxu0 0.0
    %1199 = vmatpush1.msra.mxu0 0.0
    %1200 = vmatprep.subr.mxu0 0.0
    %1201 = vmatpush1.msra.mxu0 0.0
    %1202 = vmatprep.subr.mxu0 0.0
    %1203 = vmatpush1.msra.mxu0 0.0
    %1204 = vmatprep.subr.mxu0 0.0
    %1205 = vmatpush1.msra.mxu0 0.0
    %1206 = vmatprep.subr.mxu0 0.0
    %1207 = vmatpush1.msra.mxu0 0.0
    %1208 = vmatprep.subr.mxu0 0.0
    %1209 = vmatpush1.msra.mxu0 0.0
    %1210 = vmatprep.subr.mxu0 0.0
    %1211 = vmatpush1.msra.mxu0 0.0
    %1212 = vmatprep.subr.mxu0 0.0
    %1213 = vmatpush1.msra.mxu0 0.0
    %1214 = vmatprep.subr.mxu0 %v639
    %1215 = vmatpush1.msra.mxu0 %v638
    %1216 = vmatprep.subr.mxu0 %v635
    %1217 = vmatpush1.msra.mxu0 %v634
    %1218 = vmatprep.subr.mxu0 %v631
    %1219 = vmatpush1.msra.mxu0 %v630
    %1220 = vmatprep.subr.mxu0 %v627
    %1221 = vmatpush1.msra.mxu0 %v626
    %1222 = vmatprep.subr.mxu0 0.0
    %1223 = vmatpush2.msra.mxu0 0.0
    %1224 = vmatprep.subr.mxu0 0.0
    %1225 = vmatpush2.msra.mxu0 0.0
    %1226 = vmatprep.subr.mxu0 0.0
    %1227 = vmatpush2.msra.mxu0 0.0
    %1228 = vmatprep.subr.mxu0 0.0
    %1229 = vmatpush2.msra.mxu0 0.0
    %1230 = vmatprep.subr.mxu0 0.0
    %1231 = vmatpush2.msra.mxu0 0.0
    %1232 = vmatprep.subr.mxu0 0.0
    %1233 = vmatpush2.msra.mxu0 0.0
    %1234 = vmatprep.subr.mxu0 0.0
    %1235 = vmatpush2.msra.mxu0 0.0
    %1236 = vmatprep.subr.mxu0 0.0
    %1237 = vmatpush2.msra.mxu0 0.0
    %1238 = vmatprep.subr.mxu0 0.0
    %1239 = vmatpush2.msra.mxu0 0.0
    %1240 = vmatprep.subr.mxu0 0.0
    %1241 = vmatpush2.msra.mxu0 0.0
    %1242 = vmatprep.subr.mxu0 0.0
    %1243 = vmatpush2.msra.mxu0 0.0
    %1244 = vmatprep.subr.mxu0 0.0
    %1245 = vmatpush2.msra.mxu0 0.0
    %1246 = vmatprep.subr.mxu0 0.0
    %1247 = vmatpush2.msra.mxu0 0.0
    %1248 = vmatprep.subr.mxu0 0.0
    %1249 = vmatpush2.msra.mxu0 0.0
    %1250 = vmatprep.subr.mxu0 0.0
    %1251 = vmatpush2.msra.mxu0 0.0
    %1252 = vmatprep.subr.mxu0 0.0
    %1253 = vmatpush2.msra.mxu0 0.0
    %1254 = vmatprep.mubr.f32.mxu0 0.0
    %1255 = vmatmul.mubr.f32.gmra.mxu0 %v996
    %v1256 = vpop.f32.mrf.mxu0
    %v1257 = vadd.f32 %v648, %v1256
    %v1258 = vpop.f32.mrf.mxu0
    %v1259 = vadd.f32 %v652, %v1258
    %1260 = vdwg.mxu0
    %1261 = vmatprep.subr.mxu0 0.0
    %1262 = vmatpush1.msra.mxu0 0.0
    %1263 = vmatprep.subr.mxu0 0.0
    %1264 = vmatpush1.msra.mxu0 0.0
    %1265 = vmatprep.subr.mxu0 0.0
    %1266 = vmatpush1.msra.mxu0 0.0
    %1267 = vmatprep.subr.mxu0 0.0
    %1268 = vmatpush1.msra.mxu0 0.0
    %1269 = vmatprep.subr.mxu0 0.0
    %1270 = vmatpush1.msra.mxu0 0.0
    %1271 = vmatprep.subr.mxu0 0.0
    %1272 = vmatpush1.msra.mxu0 0.0
    %1273 = vmatprep.subr.mxu0 0.0
    %1274 = vmatpush1.msra.mxu0 0.0
    %1275 = vmatprep.subr.mxu0 0.0
    %1276 = vmatpush1.msra.mxu0 0.0
    %1277 = vmatprep.subr.mxu0 0.0
    %1278 = vmatpush1.msra.mxu0 0.0
    %1279 = vmatprep.subr.mxu0 0.0
    %1280 = vmatpush1.msra.mxu0 0.0
    %1281 = vmatprep.subr.mxu0 0.0
    %1282 = vmatpush1.msra.mxu0 0.0
    %1283 = vmatprep.subr.mxu0 0.0
    %1284 = vmatpush1.msra.mxu0 0.0
    %1285 = vmatprep.subr.mxu0 %v641
    %1286 = vmatpush1.msra.mxu0 %v640
    %1287 = vmatprep.subr.mxu0 %v637
    %1288 = vmatpush1.msra.mxu0 %v636
    %1289 = vmatprep.subr.mxu0 %v633
    %1290 = vmatpush1.msra.mxu0 %v632
    %1291 = vmatprep.subr.mxu0 %v629
    %1292 = vmatpush1.msra.mxu0 %v628
    %1293 = vmatprep.subr.mxu0 0.0
    %1294 = vmatpush2.msra.mxu0 0.0
    %1295 = vmatprep.subr.mxu0 0.0
    %1296 = vmatpush2.msra.mxu0 0.0
    %1297 = vmatprep.subr.mxu0 0.0
    %1298 = vmatpush2.msra.mxu0 0.0
    %1299 = vmatprep.subr.mxu0 0.0
    %1300 = vmatpush2.msra.mxu0 0.0
    %1301 = vmatprep.subr.mxu0 0.0
    %1302 = vmatpush2.msra.mxu0 0.0
    %1303 = vmatprep.subr.mxu0 0.0
    %1304 = vmatpush2.msra.mxu0 0.0
    %1305 = vmatprep.subr.mxu0 0.0
    %1306 = vmatpush2.msra.mxu0 0.0
    %1307 = vmatprep.subr.mxu0 0.0
    %1308 = vmatpush2.msra.mxu0 0.0
    %1309 = vmatprep.subr.mxu0 0.0
    %1310 = vmatpush2.msra.mxu0 0.0
    %1311 = vmatprep.subr.mxu0 0.0
    %1312 = vmatpush2.msra.mxu0 0.0
    %1313 = vmatprep.subr.mxu0 0.0
    %1314 = vmatpush2.msra.mxu0 0.0
    %1315 = vmatprep.subr.mxu0 0.0
    %1316 = vmatpush2.msra.mxu0 0.0
    %1317 = vmatprep.subr.mxu0 0.0
    %1318 = vmatpush2.msra.mxu0 0.0
    %1319 = vmatprep.subr.mxu0 0.0
    %1320 = vmatpush2.msra.mxu0 0.0
    %1321 = vmatprep.subr.mxu0 0.0
    %1322 = vmatpush2.msra.mxu0 0.0
    %1323 = vmatprep.subr.mxu0 0.0
    %1324 = vmatpush2.msra.mxu0 0.0
    %1325 = vmatprep.mubr.f32.mxu0 0.0
    %1326 = vmatmul.mubr.f32.gmra.mxu0 %v996
    %v1327 = vpop.f32.mrf.mxu0
    %v1328 = vadd.f32 %v656, %v1327
    %v1329 = vpop.f32.mrf.mxu0
    %v1330 = vadd.f32 %v660, %v1329
    %1331 = vdwg.mxu0
    %v1333 = vsel %vm233, %v992, 0
    %1335 = vmatprep.subr.mxu0 0.0
    %1336 = vmatpush1.msra.mxu0 0.0
    %1337 = vmatprep.subr.mxu0 0.0
    %1338 = vmatpush1.msra.mxu0 0.0
    %1339 = vmatprep.subr.mxu0 0.0
    %1340 = vmatpush1.msra.mxu0 0.0
    %1341 = vmatprep.subr.mxu0 0.0
    %1342 = vmatpush1.msra.mxu0 0.0
    %1343 = vmatprep.subr.mxu0 0.0
    %1344 = vmatpush1.msra.mxu0 0.0
    %1345 = vmatprep.subr.mxu0 0.0
    %1346 = vmatpush1.msra.mxu0 0.0
    %1347 = vmatprep.subr.mxu0 0.0
    %1348 = vmatpush1.msra.mxu0 0.0
    %1349 = vmatprep.subr.mxu0 0.0
    %1350 = vmatpush1.msra.mxu0 0.0
    %1351 = vmatprep.subr.mxu0 0.0
    %1352 = vmatpush1.msra.mxu0 0.0
    %1353 = vmatprep.subr.mxu0 0.0
    %1354 = vmatpush1.msra.mxu0 0.0
    %1355 = vmatprep.subr.mxu0 0.0
    %1356 = vmatpush1.msra.mxu0 0.0
    %1357 = vmatprep.subr.mxu0 0.0
    %1358 = vmatpush1.msra.mxu0 0.0
    %1359 = vmatprep.subr.mxu0 %v820
    %1360 = vmatpush1.msra.mxu0 %v819
    %1361 = vmatprep.subr.mxu0 %v816
    %1362 = vmatpush1.msra.mxu0 %v815
    %1363 = vmatprep.subr.mxu0 %v812
    %1364 = vmatpush1.msra.mxu0 %v811
    %1365 = vmatprep.subr.mxu0 %v808
    %1366 = vmatpush1.msra.mxu0 %v807
    %1367 = vmatprep.subr.mxu0 0.0
    %1368 = vmatpush2.msra.mxu0 0.0
    %1369 = vmatprep.subr.mxu0 0.0
    %1370 = vmatpush2.msra.mxu0 0.0
    %1371 = vmatprep.subr.mxu0 0.0
    %1372 = vmatpush2.msra.mxu0 0.0
    %1373 = vmatprep.subr.mxu0 0.0
    %1374 = vmatpush2.msra.mxu0 0.0
    %1375 = vmatprep.subr.mxu0 0.0
    %1376 = vmatpush2.msra.mxu0 0.0
    %1377 = vmatprep.subr.mxu0 0.0
    %1378 = vmatpush2.msra.mxu0 0.0
    %1379 = vmatprep.subr.mxu0 0.0
    %1380 = vmatpush2.msra.mxu0 0.0
    %1381 = vmatprep.subr.mxu0 0.0
    %1382 = vmatpush2.msra.mxu0 0.0
    %1383 = vmatprep.subr.mxu0 0.0
    %1384 = vmatpush2.msra.mxu0 0.0
    %1385 = vmatprep.subr.mxu0 0.0
    %1386 = vmatpush2.msra.mxu0 0.0
    %1387 = vmatprep.subr.mxu0 0.0
    %1388 = vmatpush2.msra.mxu0 0.0
    %1389 = vmatprep.subr.mxu0 0.0
    %1390 = vmatpush2.msra.mxu0 0.0
    %1391 = vmatprep.subr.mxu0 0.0
    %1392 = vmatpush2.msra.mxu0 0.0
    %1393 = vmatprep.subr.mxu0 0.0
    %1394 = vmatpush2.msra.mxu0 0.0
    %1395 = vmatprep.subr.mxu0 0.0
    %1396 = vmatpush2.msra.mxu0 0.0
    %1397 = vmatprep.subr.mxu0 0.0
    %1398 = vmatpush2.msra.mxu0 0.0
    %1399 = vmatprep.mubr.f32.mxu0 0.0
    %1400 = vmatmul.mubr.f32.gmra.mxu0 %v1333
    %v1401 = vpop.f32.mrf.mxu0
    %v1402 = vadd.f32 0.0, %v1401
    %v1403 = vpop.f32.mrf.mxu0
    %v1404 = vadd.f32 0.0, %v1403
    %1405 = vdwg.mxu0
    %1406 = vmatprep.subr.mxu0 0.0
    %1407 = vmatpush1.msra.mxu0 0.0
    %1408 = vmatprep.subr.mxu0 0.0
    %1409 = vmatpush1.msra.mxu0 0.0
    %1410 = vmatprep.subr.mxu0 0.0
    %1411 = vmatpush1.msra.mxu0 0.0
    %1412 = vmatprep.subr.mxu0 0.0
    %1413 = vmatpush1.msra.mxu0 0.0
    %1414 = vmatprep.subr.mxu0 0.0
    %1415 = vmatpush1.msra.mxu0 0.0
    %1416 = vmatprep.subr.mxu0 0.0
    %1417 = vmatpush1.msra.mxu0 0.0
    %1418 = vmatprep.subr.mxu0 0.0
    %1419 = vmatpush1.msra.mxu0 0.0
    %1420 = vmatprep.subr.mxu0 0.0
    %1421 = vmatpush1.msra.mxu0 0.0
    %1422 = vmatprep.subr.mxu0 0.0
    %1423 = vmatpush1.msra.mxu0 0.0
    %1424 = vmatprep.subr.mxu0 0.0
    %1425 = vmatpush1.msra.mxu0 0.0
    %1426 = vmatprep.subr.mxu0 0.0
    %1427 = vmatpush1.msra.mxu0 0.0
    %1428 = vmatprep.subr.mxu0 0.0
    %1429 = vmatpush1.msra.mxu0 0.0
    %1430 = vmatprep.subr.mxu0 %v822
    %1431 = vmatpush1.msra.mxu0 %v821
    %1432 = vmatprep.subr.mxu0 %v818
    %1433 = vmatpush1.msra.mxu0 %v817
    %1434 = vmatprep.subr.mxu0 %v814
    %1435 = vmatpush1.msra.mxu0 %v813
    %1436 = vmatprep.subr.mxu0 %v810
    %1437 = vmatpush1.msra.mxu0 %v809
    %1438 = vmatprep.subr.mxu0 0.0
    %1439 = vmatpush2.msra.mxu0 0.0
    %1440 = vmatprep.subr.mxu0 0.0
    %1441 = vmatpush2.msra.mxu0 0.0
    %1442 = vmatprep.subr.mxu0 0.0
    %1443 = vmatpush2.msra.mxu0 0.0
    %1444 = vmatprep.subr.mxu0 0.0
    %1445 = vmatpush2.msra.mxu0 0.0
    %1446 = vmatprep.subr.mxu0 0.0
    %1447 = vmatpush2.msra.mxu0 0.0
    %1448 = vmatprep.subr.mxu0 0.0
    %1449 = vmatpush2.msra.mxu0 0.0
    %1450 = vmatprep.subr.mxu0 0.0
    %1451 = vmatpush2.msra.mxu0 0.0
    %1452 = vmatprep.subr.mxu0 0.0
    %1453 = vmatpush2.msra.mxu0 0.0
    %1454 = vmatprep.subr.mxu0 0.0
    %1455 = vmatpush2.msra.mxu0 0.0
    %1456 = vmatprep.subr.mxu0 0.0
    %1457 = vmatpush2.msra.mxu0 0.0
    %1458 = vmatprep.subr.mxu0 0.0
    %1459 = vmatpush2.msra.mxu0 0.0
    %1460 = vmatprep.subr.mxu0 0.0
    %1461 = vmatpush2.msra.mxu0 0.0
    %1462 = vmatprep.subr.mxu0 0.0
    %1463 = vmatpush2.msra.mxu0 0.0
    %1464 = vmatprep.subr.mxu0 0.0
    %1465 = vmatpush2.msra.mxu0 0.0
    %1466 = vmatprep.subr.mxu0 0.0
    %1467 = vmatpush2.msra.mxu0 0.0
    %1468 = vmatprep.subr.mxu0 0.0
    %1469 = vmatpush2.msra.mxu0 0.0
    %1470 = vmatprep.mubr.f32.mxu0 0.0
    %1471 = vmatmul.mubr.f32.gmra.mxu0 %v1333
    %v1472 = vpop.f32.mrf.mxu0
    %v1473 = vadd.f32 0.0, %v1472
    %v1474 = vpop.f32.mrf.mxu0
    %v1475 = vadd.f32 0.0, %v1474
    %1476 = vdwg.mxu0
    %v1477 = vadd.f32 %v1257, %v1402
    %v1478 = vadd.f32 %v1259, %v1404
    %v1479 = vadd.f32 %v1328, %v1473
    %v1480 = vadd.f32 %v1330, %v1475
    %v1481 = vxor.u32 %v1477, 2147483648
    %v1482 = vxor.u32 %v1478, 2147483648
    %v1483 = vxor.u32 %v1479, 2147483648
    %v1484 = vmul.f32 %v1481, 1.442695
    %v1485 = vpow.pop %v1484
    %v1486 = vmul.f32 %v1482, 1.442695
    %v1487 = vpow.pop %v1486
    %v1488 = vmul.f32 %v1483, 1.442695
    %v1489 = vpow.pop %v1488
    %v1490 = vadd.f32 %v1485, 1.0
    %v1491 = vadd.f32 %v1487, 1.0
    %v1492 = vadd.f32 %v1489, 1.0
    %v1493 = vrcp.pop %v1490
    %v1494 = vmul.f32 1.0, %v1493
    %v1495 = vrcp.pop %v1491
    %v1496 = vmul.f32 1.0, %v1495
    %v1497 = vrcp.pop %v1492
    %v1498 = vmul.f32 1.0, %v1497
    %v1499 = vtanh.pop %v1480
    %v1500 = vmul.f32 %v1496, %v990
    %v1501 = vmul.f32 %v1494, %v1499
    %v1502 = vadd.f32 %v1500, %v1501
    %v1503 = vtanh.pop %v1502
    %v1504 = vmul.f32 %v1498, %v1503
    %v1505 = vld [vmem:[#allocation4 + $0x1a0] sm:$0xff]
    %v1506 = vld [vmem:[#allocation4 + $0x1a8] sm:$0xff]
    %v1507 = vld [vmem:[#allocation4 + $0x1b0] sm:$0xff]
    %v1508 = vld [vmem:[#allocation4 + $0x1b8] sm:$0xff]
    %v1509 = vld [vmem:[#allocation4 + $0x1c0] sm:$0xff]
    %v1510 = vld [vmem:[#allocation4 + $0x1c8] sm:$0xff]
    %v1511 = vld [vmem:[#allocation4 + $0x1d0] sm:$0xff]
    %v1512 = vld [vmem:[#allocation4 + $0x1d8] sm:$0xff]
    %v1513 = vld [vmem:[#allocation4 + $0x1e0] sm:$0xff]
    %v1514 = vld [vmem:[#allocation4 + $0x1e8] sm:$0xff]
    %v1515 = vld [vmem:[#allocation4 + $0x1f0] sm:$0xff]
    %v1516 = vld [vmem:[#allocation4 + $0x1f8] sm:$0xff]
    %v1517 = vld [vmem:[#allocation4 + $0x200] sm:$0xff]
    %v1518 = vld [vmem:[#allocation4 + $0x208] sm:$0xff]
    %v1519 = vld [vmem:[#allocation4 + $0x210] sm:$0xff]
    %v1520 = vld [vmem:[#allocation4 + $0x218] sm:$0xff]
    %s1521 = scalar_lea.vmem [#allocation4], 802
    %v1522 = vld [vmem:[%s1521] ss:$8 sm:$0xf]
    %v1524 = vlaneseq
    %v1525 = vshrl.u32 %v1524, 7
    %v1526 = vsub.s32 0, %v1525
    %v1527 = vrot.slane %v1522, %v1526
    %v1528 = vlaneseq
    %v1529 = vshrl.u32 %v1528, 7
    %v1530 = vsub.s32 1, %v1529
    %v1531 = vrot.slane %v1522, %v1530
    %v1532 = vlaneseq
    %v1533 = vshrl.u32 %v1532, 7
    %v1534 = vsub.s32 2, %v1533
    %v1535 = vrot.slane %v1522, %v1534
    %v1536 = vlaneseq
    %v1537 = vshrl.u32 %v1536, 7
    %v1538 = vsub.s32 3, %v1537
    %v1539 = vrot.slane %v1522, %v1538
    %1544 = vmatprep.subr.mxu0 0.0
    %1545 = vmatpush1.msra.mxu0 0.0
    %1546 = vmatprep.subr.mxu0 0.0
    %1547 = vmatpush1.msra.mxu0 0.0
    %1548 = vmatprep.subr.mxu0 0.0
    %1549 = vmatpush1.msra.mxu0 0.0
    %1550 = vmatprep.subr.mxu0 0.0
    %1551 = vmatpush1.msra.mxu0 0.0
    %1552 = vmatprep.subr.mxu0 0.0
    %1553 = vmatpush1.msra.mxu0 0.0
    %1554 = vmatprep.subr.mxu0 0.0
    %1555 = vmatpush1.msra.mxu0 0.0
    %1556 = vmatprep.subr.mxu0 0.0
    %1557 = vmatpush1.msra.mxu0 0.0
    %1558 = vmatprep.subr.mxu0 0.0
    %1559 = vmatpush1.msra.mxu0 0.0
    %1560 = vmatprep.subr.mxu0 0.0
    %1561 = vmatpush1.msra.mxu0 0.0
    %1562 = vmatprep.subr.mxu0 0.0
    %1563 = vmatpush1.msra.mxu0 0.0
    %1564 = vmatprep.subr.mxu0 0.0
    %1565 = vmatpush1.msra.mxu0 0.0
    %1566 = vmatprep.subr.mxu0 0.0
    %1567 = vmatpush1.msra.mxu0 0.0
    %1568 = vmatprep.subr.mxu0 %v1518
    %1569 = vmatpush1.msra.mxu0 %v1517
    %1570 = vmatprep.subr.mxu0 %v1514
    %1571 = vmatpush1.msra.mxu0 %v1513
    %1572 = vmatprep.subr.mxu0 %v1510
    %1573 = vmatpush1.msra.mxu0 %v1509
    %1574 = vmatprep.subr.mxu0 %v1506
    %1575 = vmatpush1.msra.mxu0 %v1505
    %1576 = vmatprep.subr.mxu0 0.0
    %1577 = vmatpush2.msra.mxu0 0.0
    %1578 = vmatprep.subr.mxu0 0.0
    %1579 = vmatpush2.msra.mxu0 0.0
    %1580 = vmatprep.subr.mxu0 0.0
    %1581 = vmatpush2.msra.mxu0 0.0
    %1582 = vmatprep.subr.mxu0 0.0
    %1583 = vmatpush2.msra.mxu0 0.0
    %1584 = vmatprep.subr.mxu0 0.0
    %1585 = vmatpush2.msra.mxu0 0.0
    %1586 = vmatprep.subr.mxu0 0.0
    %1587 = vmatpush2.msra.mxu0 0.0
    %1588 = vmatprep.subr.mxu0 0.0
    %1589 = vmatpush2.msra.mxu0 0.0
    %1590 = vmatprep.subr.mxu0 0.0
    %1591 = vmatpush2.msra.mxu0 0.0
    %1592 = vmatprep.subr.mxu0 0.0
    %1593 = vmatpush2.msra.mxu0 0.0
    %1594 = vmatprep.subr.mxu0 0.0
    %1595 = vmatpush2.msra.mxu0 0.0
    %1596 = vmatprep.subr.mxu0 0.0
    %1597 = vmatpush2.msra.mxu0 0.0
    %1598 = vmatprep.subr.mxu0 0.0
    %1599 = vmatpush2.msra.mxu0 0.0
    %1600 = vmatprep.subr.mxu0 0.0
    %1601 = vmatpush2.msra.mxu0 0.0
    %1602 = vmatprep.subr.mxu0 0.0
    %1603 = vmatpush2.msra.mxu0 0.0
    %1604 = vmatprep.subr.mxu0 0.0
    %1605 = vmatpush2.msra.mxu0 0.0
    %1606 = vmatprep.subr.mxu0 0.0
    %1607 = vmatpush2.msra.mxu0 0.0
    %1608 = vmatprep.mubr.f32.mxu0 0.0
    %1609 = vmatmul.mubr.f32.gmra.mxu0 %v1333
    %v1610 = vpop.f32.mrf.mxu0
    %v1611 = vadd.f32 %v1527, %v1610
    %v1612 = vpop.f32.mrf.mxu0
    %v1613 = vadd.f32 %v1531, %v1612
    %1614 = vdwg.mxu0
    %1615 = vmatprep.subr.mxu0 0.0
    %1616 = vmatpush1.msra.mxu0 0.0
    %1617 = vmatprep.subr.mxu0 0.0
    %1618 = vmatpush1.msra.mxu0 0.0
    %1619 = vmatprep.subr.mxu0 0.0
    %1620 = vmatpush1.msra.mxu0 0.0
    %1621 = vmatprep.subr.mxu0 0.0
    %1622 = vmatpush1.msra.mxu0 0.0
    %1623 = vmatprep.subr.mxu0 0.0
    %1624 = vmatpush1.msra.mxu0 0.0
    %1625 = vmatprep.subr.mxu0 0.0
    %1626 = vmatpush1.msra.mxu0 0.0
    %1627 = vmatprep.subr.mxu0 0.0
    %1628 = vmatpush1.msra.mxu0 0.0
    %1629 = vmatprep.subr.mxu0 0.0
    %1630 = vmatpush1.msra.mxu0 0.0
    %1631 = vmatprep.subr.mxu0 0.0
    %1632 = vmatpush1.msra.mxu0 0.0
    %1633 = vmatprep.subr.mxu0 0.0
    %1634 = vmatpush1.msra.mxu0 0.0
    %1635 = vmatprep.subr.mxu0 0.0
    %1636 = vmatpush1.msra.mxu0 0.0
    %1637 = vmatprep.subr.mxu0 0.0
    %1638 = vmatpush1.msra.mxu0 0.0
    %1639 = vmatprep.subr.mxu0 %v1520
    %1640 = vmatpush1.msra.mxu0 %v1519
    %1641 = vmatprep.subr.mxu0 %v1516
    %1642 = vmatpush1.msra.mxu0 %v1515
    %1643 = vmatprep.subr.mxu0 %v1512
    %1644 = vmatpush1.msra.mxu0 %v1511
    %1645 = vmatprep.subr.mxu0 %v1508
    %1646 = vmatpush1.msra.mxu0 %v1507
    %1647 = vmatprep.subr.mxu0 0.0
    %1648 = vmatpush2.msra.mxu0 0.0
    %1649 = vmatprep.subr.mxu0 0.0
    %1650 = vmatpush2.msra.mxu0 0.0
    %1651 = vmatprep.subr.mxu0 0.0
    %1652 = vmatpush2.msra.mxu0 0.0
    %1653 = vmatprep.subr.mxu0 0.0
    %1654 = vmatpush2.msra.mxu0 0.0
    %1655 = vmatprep.subr.mxu0 0.0
    %1656 = vmatpush2.msra.mxu0 0.0
    %1657 = vmatprep.subr.mxu0 0.0
    %1658 = vmatpush2.msra.mxu0 0.0
    %1659 = vmatprep.subr.mxu0 0.0
    %1660 = vmatpush2.msra.mxu0 0.0
    %1661 = vmatprep.subr.mxu0 0.0
    %1662 = vmatpush2.msra.mxu0 0.0
    %1663 = vmatprep.subr.mxu0 0.0
    %1664 = vmatpush2.msra.mxu0 0.0
    %1665 = vmatprep.subr.mxu0 0.0
    %1666 = vmatpush2.msra.mxu0 0.0
    %1667 = vmatprep.subr.mxu0 0.0
    %1668 = vmatpush2.msra.mxu0 0.0
    %1669 = vmatprep.subr.mxu0 0.0
    %1670 = vmatpush2.msra.mxu0 0.0
    %1671 = vmatprep.subr.mxu0 0.0
    %1672 = vmatpush2.msra.mxu0 0.0
    %1673 = vmatprep.subr.mxu0 0.0
    %1674 = vmatpush2.msra.mxu0 0.0
    %1675 = vmatprep.subr.mxu0 0.0
    %1676 = vmatpush2.msra.mxu0 0.0
    %1677 = vmatprep.subr.mxu0 0.0
    %1678 = vmatpush2.msra.mxu0 0.0
    %1679 = vmatprep.mubr.f32.mxu0 0.0
    %1680 = vmatmul.mubr.f32.gmra.mxu0 %v1333
    %v1681 = vpop.f32.mrf.mxu0
    %v1682 = vadd.f32 %v1535, %v1681
    %v1683 = vpop.f32.mrf.mxu0
    %v1684 = vadd.f32 %v1539, %v1683
    %1685 = vdwg.mxu0
    %v1686 = vld [vmem:[#allocation4 + $0x220] sm:$0xff]
    %v1687 = vld [vmem:[#allocation4 + $0x228] sm:$0xff]
    %v1688 = vld [vmem:[#allocation4 + $0x230] sm:$0xff]
    %v1689 = vld [vmem:[#allocation4 + $0x238] sm:$0xff]
    %v1690 = vld [vmem:[#allocation4 + $0x240] sm:$0xff]
    %v1691 = vld [vmem:[#allocation4 + $0x248] sm:$0xff]
    %v1692 = vld [vmem:[#allocation4 + $0x250] sm:$0xff]
    %v1693 = vld [vmem:[#allocation4 + $0x258] sm:$0xff]
    %v1694 = vld [vmem:[#allocation4 + $0x260] sm:$0xff]
    %v1695 = vld [vmem:[#allocation4 + $0x268] sm:$0xff]
    %v1696 = vld [vmem:[#allocation4 + $0x270] sm:$0xff]
    %v1697 = vld [vmem:[#allocation4 + $0x278] sm:$0xff]
    %v1698 = vld [vmem:[#allocation4 + $0x280] sm:$0xff]
    %v1699 = vld [vmem:[#allocation4 + $0x288] sm:$0xff]
    %v1700 = vld [vmem:[#allocation4 + $0x290] sm:$0xff]
    %v1701 = vld [vmem:[#allocation4 + $0x298] sm:$0xff]
    %1702 = vmatprep.subr.mxu0 0.0
    %1703 = vmatpush1.msra.mxu0 0.0
    %1704 = vmatprep.subr.mxu0 0.0
    %1705 = vmatpush1.msra.mxu0 0.0
    %1706 = vmatprep.subr.mxu0 0.0
    %1707 = vmatpush1.msra.mxu0 0.0
    %1708 = vmatprep.subr.mxu0 0.0
    %1709 = vmatpush1.msra.mxu0 0.0
    %1710 = vmatprep.subr.mxu0 0.0
    %1711 = vmatpush1.msra.mxu0 0.0
    %1712 = vmatprep.subr.mxu0 0.0
    %1713 = vmatpush1.msra.mxu0 0.0
    %1714 = vmatprep.subr.mxu0 0.0
    %1715 = vmatpush1.msra.mxu0 0.0
    %1716 = vmatprep.subr.mxu0 0.0
    %1717 = vmatpush1.msra.mxu0 0.0
    %1718 = vmatprep.subr.mxu0 0.0
    %1719 = vmatpush1.msra.mxu0 0.0
    %1720 = vmatprep.subr.mxu0 0.0
    %1721 = vmatpush1.msra.mxu0 0.0
    %1722 = vmatprep.subr.mxu0 0.0
    %1723 = vmatpush1.msra.mxu0 0.0
    %1724 = vmatprep.subr.mxu0 0.0
    %1725 = vmatpush1.msra.mxu0 0.0
    %1726 = vmatprep.subr.mxu0 %v1699
    %1727 = vmatpush1.msra.mxu0 %v1698
    %1728 = vmatprep.subr.mxu0 %v1695
    %1729 = vmatpush1.msra.mxu0 %v1694
    %1730 = vmatprep.subr.mxu0 %v1691
    %1731 = vmatpush1.msra.mxu0 %v1690
    %1732 = vmatprep.subr.mxu0 %v1687
    %1733 = vmatpush1.msra.mxu0 %v1686
    %1734 = vmatprep.subr.mxu0 0.0
    %1735 = vmatpush2.msra.mxu0 0.0
    %1736 = vmatprep.subr.mxu0 0.0
    %1737 = vmatpush2.msra.mxu0 0.0
    %1738 = vmatprep.subr.mxu0 0.0
    %1739 = vmatpush2.msra.mxu0 0.0
    %1740 = vmatprep.subr.mxu0 0.0
    %1741 = vmatpush2.msra.mxu0 0.0
    %1742 = vmatprep.subr.mxu0 0.0
    %1743 = vmatpush2.msra.mxu0 0.0
    %1744 = vmatprep.subr.mxu0 0.0
    %1745 = vmatpush2.msra.mxu0 0.0
    %1746 = vmatprep.subr.mxu0 0.0
    %1747 = vmatpush2.msra.mxu0 0.0
    %1748 = vmatprep.subr.mxu0 0.0
    %1749 = vmatpush2.msra.mxu0 0.0
    %1750 = vmatprep.subr.mxu0 0.0
    %1751 = vmatpush2.msra.mxu0 0.0
    %1752 = vmatprep.subr.mxu0 0.0
    %1753 = vmatpush2.msra.mxu0 0.0
    %1754 = vmatprep.subr.mxu0 0.0
    %1755 = vmatpush2.msra.mxu0 0.0
    %1756 = vmatprep.subr.mxu0 0.0
    %1757 = vmatpush2.msra.mxu0 0.0
    %1758 = vmatprep.subr.mxu0 0.0
    %1759 = vmatpush2.msra.mxu0 0.0
    %1760 = vmatprep.subr.mxu0 0.0
    %1761 = vmatpush2.msra.mxu0 0.0
    %1762 = vmatprep.subr.mxu0 0.0
    %1763 = vmatpush2.msra.mxu0 0.0
    %1764 = vmatprep.subr.mxu0 0.0
    %1765 = vmatpush2.msra.mxu0 0.0
    %1766 = vmatprep.mubr.f32.mxu0 0.0
    %1767 = vmatmul.mubr.f32.gmra.mxu0 %v235
    %v1768 = vpop.f32.mrf.mxu0
    %v1769 = vadd.f32 0.0, %v1768
    %v1770 = vpop.f32.mrf.mxu0
    %v1771 = vadd.f32 0.0, %v1770
    %1772 = vdwg.mxu0
    %1773 = vmatprep.subr.mxu0 0.0
    %1774 = vmatpush1.msra.mxu0 0.0
    %1775 = vmatprep.subr.mxu0 0.0
    %1776 = vmatpush1.msra.mxu0 0.0
    %1777 = vmatprep.subr.mxu0 0.0
    %1778 = vmatpush1.msra.mxu0 0.0
    %1779 = vmatprep.subr.mxu0 0.0
    %1780 = vmatpush1.msra.mxu0 0.0
    %1781 = vmatprep.subr.mxu0 0.0
    %1782 = vmatpush1.msra.mxu0 0.0
    %1783 = vmatprep.subr.mxu0 0.0
    %1784 = vmatpush1.msra.mxu0 0.0
    %1785 = vmatprep.subr.mxu0 0.0
    %1786 = vmatpush1.msra.mxu0 0.0
    %1787 = vmatprep.subr.mxu0 0.0
    %1788 = vmatpush1.msra.mxu0 0.0
    %1789 = vmatprep.subr.mxu0 0.0
    %1790 = vmatpush1.msra.mxu0 0.0
    %1791 = vmatprep.subr.mxu0 0.0
    %1792 = vmatpush1.msra.mxu0 0.0
    %1793 = vmatprep.subr.mxu0 0.0
    %1794 = vmatpush1.msra.mxu0 0.0
    %1795 = vmatprep.subr.mxu0 0.0
    %1796 = vmatpush1.msra.mxu0 0.0
    %1797 = vmatprep.subr.mxu0 %v1701
    %1798 = vmatpush1.msra.mxu0 %v1700
    %1799 = vmatprep.subr.mxu0 %v1697
    %1800 = vmatpush1.msra.mxu0 %v1696
    %1801 = vmatprep.subr.mxu0 %v1693
    %1802 = vmatpush1.msra.mxu0 %v1692
    %1803 = vmatprep.subr.mxu0 %v1689
    %1804 = vmatpush1.msra.mxu0 %v1688
    %1805 = vmatprep.subr.mxu0 0.0
    %1806 = vmatpush2.msra.mxu0 0.0
    %1807 = vmatprep.subr.mxu0 0.0
    %1808 = vmatpush2.msra.mxu0 0.0
    %1809 = vmatprep.subr.mxu0 0.0
    %1810 = vmatpush2.msra.mxu0 0.0
    %1811 = vmatprep.subr.mxu0 0.0
    %1812 = vmatpush2.msra.mxu0 0.0
    %1813 = vmatprep.subr.mxu0 0.0
    %1814 = vmatpush2.msra.mxu0 0.0
    %1815 = vmatprep.subr.mxu0 0.0
    %1816 = vmatpush2.msra.mxu0 0.0
    %1817 = vmatprep.subr.mxu0 0.0
    %1818 = vmatpush2.msra.mxu0 0.0
    %1819 = vmatprep.subr.mxu0 0.0
    %1820 = vmatpush2.msra.mxu0 0.0
    %1821 = vmatprep.subr.mxu0 0.0
    %1822 = vmatpush2.msra.mxu0 0.0
    %1823 = vmatprep.subr.mxu0 0.0
    %1824 = vmatpush2.msra.mxu0 0.0
    %1825 = vmatprep.subr.mxu0 0.0
    %1826 = vmatpush2.msra.mxu0 0.0
    %1827 = vmatprep.subr.mxu0 0.0
    %1828 = vmatpush2.msra.mxu0 0.0
    %1829 = vmatprep.subr.mxu0 0.0
    %1830 = vmatpush2.msra.mxu0 0.0
    %1831 = vmatprep.subr.mxu0 0.0
    %1832 = vmatpush2.msra.mxu0 0.0
    %1833 = vmatprep.subr.mxu0 0.0
    %1834 = vmatpush2.msra.mxu0 0.0
    %1835 = vmatprep.subr.mxu0 0.0
    %1836 = vmatpush2.msra.mxu0 0.0
    %1837 = vmatprep.mubr.f32.mxu0 0.0
    %1838 = vmatmul.mubr.f32.gmra.mxu0 %v235
    %v1839 = vpop.f32.mrf.mxu0
    %v1840 = vadd.f32 0.0, %v1839
    %v1841 = vpop.f32.mrf.mxu0
    %v1842 = vadd.f32 0.0, %v1841
    %1843 = vdwg.mxu0
    %v1844 = vadd.f32 %v1611, %v1769
    %v1845 = vadd.f32 %v1613, %v1771
    %v1846 = vadd.f32 %v1682, %v1840
    %v1847 = vadd.f32 %v1684, %v1842
    %v1848 = vxor.u32 %v1844, 2147483648
    %v1849 = vxor.u32 %v1845, 2147483648
    %v1850 = vxor.u32 %v1846, 2147483648
    %v1851 = vmul.f32 %v1848, 1.442695
    %v1852 = vpow.pop %v1851
    %v1853 = vmul.f32 %v1849, 1.442695
    %v1854 = vpow.pop %v1853
    %v1855 = vmul.f32 %v1850, 1.442695
    %v1856 = vpow.pop %v1855
    %v1857 = vadd.f32 %v1852, 1.0
    %v1858 = vadd.f32 %v1854, 1.0
    %v1859 = vadd.f32 %v1856, 1.0
    %v1860 = vrcp.pop %v1857
    %v1861 = vmul.f32 1.0, %v1860
    %v1862 = vrcp.pop %v1858
    %v1863 = vmul.f32 1.0, %v1862
    %v1864 = vrcp.pop %v1859
    %v1865 = vmul.f32 1.0, %v1864
    %v1866 = vtanh.pop %v1847
    %v1867 = vmul.f32 %v1863, 0.0
    %v1868 = vmul.f32 %v1861, %v1866
    %v1869 = vadd.f32 %v1867, %v1868
    %v1870 = vtanh.pop %v1869
    %v1871 = vmul.f32 %v1865, %v1870
    %1872 = vst [vmem:[#allocation3] sm:$0x1] %v1871
    %s1873 = scalar_lea.vmem [#allocation2], 3
    %v1874 = vld [vmem:[%s1873] ss:$8 sm:$0xf]
    %v1875 = vld [vmem:[#allocation4 + $0x20] sm:$0xff]
    %v1876 = vld [vmem:[#allocation4 + $0x28] sm:$0xff]
    %v1877 = vld [vmem:[#allocation4 + $0x30] sm:$0xff]
    %v1878 = vld [vmem:[#allocation4 + $0x38] sm:$0xff]
    %v1879 = vld [vmem:[#allocation4 + $0x40] sm:$0xff]
    %v1880 = vld [vmem:[#allocation4 + $0x48] sm:$0xff]
    %v1881 = vld [vmem:[#allocation4 + $0x50] sm:$0xff]
    %v1882 = vld [vmem:[#allocation4 + $0x58] sm:$0xff]
    %v1883 = vld [vmem:[#allocation4 + $0x60] sm:$0xff]
    %v1884 = vld [vmem:[#allocation4 + $0x68] sm:$0xff]
    %v1885 = vld [vmem:[#allocation4 + $0x70] sm:$0xff]
    %v1886 = vld [vmem:[#allocation4 + $0x78] sm:$0xff]
    %v1887 = vld [vmem:[#allocation4 + $0x80] sm:$0xff]
    %v1888 = vld [vmem:[#allocation4 + $0x88] sm:$0xff]
    %v1889 = vld [vmem:[#allocation4 + $0x90] sm:$0xff]
    %v1890 = vld [vmem:[#allocation4 + $0x98] sm:$0xff]
    %v1892 = vsel %vm233, %v1189, 0
    %1894 = vmatprep.subr.mxu0 0.0
    %1895 = vmatpush1.msra.mxu0 0.0
    %1896 = vmatprep.subr.mxu0 0.0
    %1897 = vmatpush1.msra.mxu0 0.0
    %1898 = vmatprep.subr.mxu0 0.0
    %1899 = vmatpush1.msra.mxu0 0.0
    %1900 = vmatprep.subr.mxu0 0.0
    %1901 = vmatpush1.msra.mxu0 0.0
    %1902 = vmatprep.subr.mxu0 0.0
    %1903 = vmatpush1.msra.mxu0 0.0
    %1904 = vmatprep.subr.mxu0 0.0
    %1905 = vmatpush1.msra.mxu0 0.0
    %1906 = vmatprep.subr.mxu0 0.0
    %1907 = vmatpush1.msra.mxu0 0.0
    %1908 = vmatprep.subr.mxu0 0.0
    %1909 = vmatpush1.msra.mxu0 0.0
    %1910 = vmatprep.subr.mxu0 0.0
    %1911 = vmatpush1.msra.mxu0 0.0
    %1912 = vmatprep.subr.mxu0 0.0
    %1913 = vmatpush1.msra.mxu0 0.0
    %1914 = vmatprep.subr.mxu0 0.0
    %1915 = vmatpush1.msra.mxu0 0.0
    %1916 = vmatprep.subr.mxu0 0.0
    %1917 = vmatpush1.msra.mxu0 0.0
    %1918 = vmatprep.subr.mxu0 %v1888
    %1919 = vmatpush1.msra.mxu0 %v1887
    %1920 = vmatprep.subr.mxu0 %v1884
    %1921 = vmatpush1.msra.mxu0 %v1883
    %1922 = vmatprep.subr.mxu0 %v1880
    %1923 = vmatpush1.msra.mxu0 %v1879
    %1924 = vmatprep.subr.mxu0 %v1876
    %1925 = vmatpush1.msra.mxu0 %v1875
    %1926 = vmatprep.subr.mxu0 0.0
    %1927 = vmatpush2.msra.mxu0 0.0
    %1928 = vmatprep.subr.mxu0 0.0
    %1929 = vmatpush2.msra.mxu0 0.0
    %1930 = vmatprep.subr.mxu0 0.0
    %1931 = vmatpush2.msra.mxu0 0.0
    %1932 = vmatprep.subr.mxu0 0.0
    %1933 = vmatpush2.msra.mxu0 0.0
    %1934 = vmatprep.subr.mxu0 0.0
    %1935 = vmatpush2.msra.mxu0 0.0
    %1936 = vmatprep.subr.mxu0 0.0
    %1937 = vmatpush2.msra.mxu0 0.0
    %1938 = vmatprep.subr.mxu0 0.0
    %1939 = vmatpush2.msra.mxu0 0.0
    %1940 = vmatprep.subr.mxu0 0.0
    %1941 = vmatpush2.msra.mxu0 0.0
    %1942 = vmatprep.subr.mxu0 0.0
    %1943 = vmatpush2.msra.mxu0 0.0
    %1944 = vmatprep.subr.mxu0 0.0
    %1945 = vmatpush2.msra.mxu0 0.0
    %1946 = vmatprep.subr.mxu0 0.0
    %1947 = vmatpush2.msra.mxu0 0.0
    %1948 = vmatprep.subr.mxu0 0.0
    %1949 = vmatpush2.msra.mxu0 0.0
    %1950 = vmatprep.subr.mxu0 0.0
    %1951 = vmatpush2.msra.mxu0 0.0
    %1952 = vmatprep.subr.mxu0 0.0
    %1953 = vmatpush2.msra.mxu0 0.0
    %1954 = vmatprep.subr.mxu0 0.0
    %1955 = vmatpush2.msra.mxu0 0.0
    %1956 = vmatprep.subr.mxu0 0.0
    %1957 = vmatpush2.msra.mxu0 0.0
    %1958 = vmatprep.mubr.f32.mxu0 0.0
    %1959 = vmatmul.mubr.f32.gmra.mxu0 %v1892
    %v1960 = vpop.f32.mrf.mxu0
    %v1961 = vadd.f32 0.0, %v1960
    %v1962 = vpop.f32.mrf.mxu0
    %v1963 = vadd.f32 0.0, %v1962
    %1964 = vdwg.mxu0
    %1965 = vmatprep.subr.mxu0 0.0
    %1966 = vmatpush1.msra.mxu0 0.0
    %1967 = vmatprep.subr.mxu0 0.0
    %1968 = vmatpush1.msra.mxu0 0.0
    %1969 = vmatprep.subr.mxu0 0.0
    %1970 = vmatpush1.msra.mxu0 0.0
    %1971 = vmatprep.subr.mxu0 0.0
    %1972 = vmatpush1.msra.mxu0 0.0
    %1973 = vmatprep.subr.mxu0 0.0
    %1974 = vmatpush1.msra.mxu0 0.0
    %1975 = vmatprep.subr.mxu0 0.0
    %1976 = vmatpush1.msra.mxu0 0.0
    %1977 = vmatprep.subr.mxu0 0.0
    %1978 = vmatpush1.msra.mxu0 0.0
    %1979 = vmatprep.subr.mxu0 0.0
    %1980 = vmatpush1.msra.mxu0 0.0
    %1981 = vmatprep.subr.mxu0 0.0
    %1982 = vmatpush1.msra.mxu0 0.0
    %1983 = vmatprep.subr.mxu0 0.0
    %1984 = vmatpush1.msra.mxu0 0.0
    %1985 = vmatprep.subr.mxu0 0.0
    %1986 = vmatpush1.msra.mxu0 0.0
    %1987 = vmatprep.subr.mxu0 0.0
    %1988 = vmatpush1.msra.mxu0 0.0
    %1989 = vmatprep.subr.mxu0 %v1890
    %1990 = vmatpush1.msra.mxu0 %v1889
    %1991 = vmatprep.subr.mxu0 %v1886
    %1992 = vmatpush1.msra.mxu0 %v1885
    %1993 = vmatprep.subr.mxu0 %v1882
    %1994 = vmatpush1.msra.mxu0 %v1881
    %1995 = vmatprep.subr.mxu0 %v1878
    %1996 = vmatpush1.msra.mxu0 %v1877
    %1997 = vmatprep.subr.mxu0 0.0
    %1998 = vmatpush2.msra.mxu0 0.0
    %1999 = vmatprep.subr.mxu0 0.0
    %2000 = vmatpush2.msra.mxu0 0.0
    %2001 = vmatprep.subr.mxu0 0.0
    %2002 = vmatpush2.msra.mxu0 0.0
    %2003 = vmatprep.subr.mxu0 0.0
    %2004 = vmatpush2.msra.mxu0 0.0
    %2005 = vmatprep.subr.mxu0 0.0
    %2006 = vmatpush2.msra.mxu0 0.0
    %2007 = vmatprep.subr.mxu0 0.0
    %2008 = vmatpush2.msra.mxu0 0.0
    %2009 = vmatprep.subr.mxu0 0.0
    %2010 = vmatpush2.msra.mxu0 0.0
    %2011 = vmatprep.subr.mxu0 0.0
    %2012 = vmatpush2.msra.mxu0 0.0
    %2013 = vmatprep.subr.mxu0 0.0
    %2014 = vmatpush2.msra.mxu0 0.0
    %2015 = vmatprep.subr.mxu0 0.0
    %2016 = vmatpush2.msra.mxu0 0.0
    %2017 = vmatprep.subr.mxu0 0.0
    %2018 = vmatpush2.msra.mxu0 0.0
    %2019 = vmatprep.subr.mxu0 0.0
    %2020 = vmatpush2.msra.mxu0 0.0
    %2021 = vmatprep.subr.mxu0 0.0
    %2022 = vmatpush2.msra.mxu0 0.0
    %2023 = vmatprep.subr.mxu0 0.0
    %2024 = vmatpush2.msra.mxu0 0.0
    %2025 = vmatprep.subr.mxu0 0.0
    %2026 = vmatpush2.msra.mxu0 0.0
    %2027 = vmatprep.subr.mxu0 0.0
    %2028 = vmatpush2.msra.mxu0 0.0
    %2029 = vmatprep.mubr.f32.mxu0 0.0
    %2030 = vmatmul.mubr.f32.gmra.mxu0 %v1892
    %v2031 = vpop.f32.mrf.mxu0
    %v2032 = vadd.f32 0.0, %v2031
    %v2033 = vpop.f32.mrf.mxu0
    %v2034 = vadd.f32 0.0, %v2033
    %2035 = vdwg.mxu0
    %v2040 = vcombine.low %v1961, %v1963
    %v2041 = vcombine.low %v2032, %v2034
    %v2043 = vunpack.c.l.s4 1966171168
    %v2044 = vunpack.c.0.s8 %v2043
    %v2045 = vlaneseq
    %v2046 = vshrl.u32 %v2045, 7
    %v2047 = vsub.s32 %v2044, %v2046
    %v2048 = vrot.slane %v2040, %v2047
    %v2050 = vunpack.c.l.s4 1966171168
    %v2051 = vunpack.c.0.s8 %v2050
    %v2052 = vlaneseq
    %v2053 = vshrl.u32 %v2052, 7
    %v2054 = vsub.s32 %v2051, %v2053
    %v2055 = vrot.slane %v2041, %v2054
    %v2056 = vcombine.low %v2048, %v2055
    %v2058 = vunpack.c.l.s4 1966171168
    %v2059 = vunpack.c.0.s8 %v2058
    %v2060 = vlaneseq
    %v2061 = vshrl.u32 %v2060, 7
    %v2062 = vsub.s32 %v2059, %v2061
    %v2063 = vrot.slane %v2056, %v2062
    %v2065 = vadd.f32 %v1874, %v2063
    %v2066 = vxor.u32 %v2065, 2147483648
    %v2067 = vmul.f32 %v2066, 1.442695
    %v2068 = vpow.pop %v2067
    %v2069 = vadd.f32 %v2068, 1.0
    %v2070 = vrcp.pop %v2069
    %v2071 = vmul.f32 1.0, %v2070
    %v2073 = vrot.slane %v2065, 3
    %v2075 = vtanh.pop %v2073
    %v2077 = vrot.slane %v2071, 1
    %v2079 = vmul.f32 %v2077, %v1185
    %v2080 = vmul.f32 %v2071, %v2075
    %v2081 = vadd.f32 %v2079, %v2080
    %v2082 = vtanh.pop %v2081
    %v2083 = vrot.slane %v2071, 2
    %v2085 = vmul.f32 %v2083, %v2082
    %v2086 = vld [vmem:[#allocation4 + $0xa0] sm:$0xff]
    %v2087 = vld [vmem:[#allocation4 + $0xa8] sm:$0xff]
    %v2088 = vld [vmem:[#allocation4 + $0xb0] sm:$0xff]
    %v2089 = vld [vmem:[#allocation4 + $0xb8] sm:$0xff]
    %v2090 = vld [vmem:[#allocation4 + $0xc0] sm:$0xff]
    %v2091 = vld [vmem:[#allocation4 + $0xc8] sm:$0xff]
    %v2092 = vld [vmem:[#allocation4 + $0xd0] sm:$0xff]
    %v2093 = vld [vmem:[#allocation4 + $0xd8] sm:$0xff]
    %v2094 = vld [vmem:[#allocation4 + $0xe0] sm:$0xff]
    %v2095 = vld [vmem:[#allocation4 + $0xe8] sm:$0xff]
    %v2096 = vld [vmem:[#allocation4 + $0xf0] sm:$0xff]
    %v2097 = vld [vmem:[#allocation4 + $0xf8] sm:$0xff]
    %v2098 = vld [vmem:[#allocation4 + $0x100] sm:$0xff]
    %v2099 = vld [vmem:[#allocation4 + $0x108] sm:$0xff]
    %v2100 = vld [vmem:[#allocation4 + $0x110] sm:$0xff]
    %v2101 = vld [vmem:[#allocation4 + $0x118] sm:$0xff]
    %v2102 = vld [vmem:[%s642] ss:$8 sm:$0xf]
    %v2104 = vlaneseq
    %v2105 = vshrl.u32 %v2104, 7
    %v2106 = vsub.s32 0, %v2105
    %v2107 = vrot.slane %v2102, %v2106
    %v2108 = vlaneseq
    %v2109 = vshrl.u32 %v2108, 7
    %v2110 = vsub.s32 1, %v2109
    %v2111 = vrot.slane %v2102, %v2110
    %v2112 = vlaneseq
    %v2113 = vshrl.u32 %v2112, 7
    %v2114 = vsub.s32 2, %v2113
    %v2115 = vrot.slane %v2102, %v2114
    %v2116 = vlaneseq
    %v2117 = vshrl.u32 %v2116, 7
    %v2118 = vsub.s32 3, %v2117
    %v2119 = vrot.slane %v2102, %v2118
    %2124 = vmatprep.subr.mxu0 0.0
    %2125 = vmatpush1.msra.mxu0 0.0
    %2126 = vmatprep.subr.mxu0 0.0
    %2127 = vmatpush1.msra.mxu0 0.0
    %2128 = vmatprep.subr.mxu0 0.0
    %2129 = vmatpush1.msra.mxu0 0.0
    %2130 = vmatprep.subr.mxu0 0.0
    %2131 = vmatpush1.msra.mxu0 0.0
    %2132 = vmatprep.subr.mxu0 0.0
    %2133 = vmatpush1.msra.mxu0 0.0
    %2134 = vmatprep.subr.mxu0 0.0
    %2135 = vmatpush1.msra.mxu0 0.0
    %2136 = vmatprep.subr.mxu0 0.0
    %2137 = vmatpush1.msra.mxu0 0.0
    %2138 = vmatprep.subr.mxu0 0.0
    %2139 = vmatpush1.msra.mxu0 0.0
    %2140 = vmatprep.subr.mxu0 0.0
    %2141 = vmatpush1.msra.mxu0 0.0
    %2142 = vmatprep.subr.mxu0 0.0
    %2143 = vmatpush1.msra.mxu0 0.0
    %2144 = vmatprep.subr.mxu0 0.0
    %2145 = vmatpush1.msra.mxu0 0.0
    %2146 = vmatprep.subr.mxu0 0.0
    %2147 = vmatpush1.msra.mxu0 0.0
    %2148 = vmatprep.subr.mxu0 %v2099
    %2149 = vmatpush1.msra.mxu0 %v2098
    %2150 = vmatprep.subr.mxu0 %v2095
    %2151 = vmatpush1.msra.mxu0 %v2094
    %2152 = vmatprep.subr.mxu0 %v2091
    %2153 = vmatpush1.msra.mxu0 %v2090
    %2154 = vmatprep.subr.mxu0 %v2087
    %2155 = vmatpush1.msra.mxu0 %v2086
    %2156 = vmatprep.subr.mxu0 0.0
    %2157 = vmatpush2.msra.mxu0 0.0
    %2158 = vmatprep.subr.mxu0 0.0
    %2159 = vmatpush2.msra.mxu0 0.0
    %2160 = vmatprep.subr.mxu0 0.0
    %2161 = vmatpush2.msra.mxu0 0.0
    %2162 = vmatprep.subr.mxu0 0.0
    %2163 = vmatpush2.msra.mxu0 0.0
    %2164 = vmatprep.subr.mxu0 0.0
    %2165 = vmatpush2.msra.mxu0 0.0
    %2166 = vmatprep.subr.mxu0 0.0
    %2167 = vmatpush2.msra.mxu0 0.0
    %2168 = vmatprep.subr.mxu0 0.0
    %2169 = vmatpush2.msra.mxu0 0.0
    %2170 = vmatprep.subr.mxu0 0.0
    %2171 = vmatpush2.msra.mxu0 0.0
    %2172 = vmatprep.subr.mxu0 0.0
    %2173 = vmatpush2.msra.mxu0 0.0
    %2174 = vmatprep.subr.mxu0 0.0
    %2175 = vmatpush2.msra.mxu0 0.0
    %2176 = vmatprep.subr.mxu0 0.0
    %2177 = vmatpush2.msra.mxu0 0.0
    %2178 = vmatprep.subr.mxu0 0.0
    %2179 = vmatpush2.msra.mxu0 0.0
    %2180 = vmatprep.subr.mxu0 0.0
    %2181 = vmatpush2.msra.mxu0 0.0
    %2182 = vmatprep.subr.mxu0 0.0
    %2183 = vmatpush2.msra.mxu0 0.0
    %2184 = vmatprep.subr.mxu0 0.0
    %2185 = vmatpush2.msra.mxu0 0.0
    %2186 = vmatprep.subr.mxu0 0.0
    %2187 = vmatpush2.msra.mxu0 0.0
    %2188 = vmatprep.mubr.f32.mxu0 0.0
    %2189 = vmatmul.mubr.f32.gmra.mxu0 %v1892
    %v2190 = vpop.f32.mrf.mxu0
    %v2191 = vadd.f32 %v2107, %v2190
    %v2192 = vpop.f32.mrf.mxu0
    %v2193 = vadd.f32 %v2111, %v2192
    %2194 = vdwg.mxu0
    %2195 = vmatprep.subr.mxu0 0.0
    %2196 = vmatpush1.msra.mxu0 0.0
    %2197 = vmatprep.subr.mxu0 0.0
    %2198 = vmatpush1.msra.mxu0 0.0
    %2199 = vmatprep.subr.mxu0 0.0
    %2200 = vmatpush1.msra.mxu0 0.0
    %2201 = vmatprep.subr.mxu0 0.0
    %2202 = vmatpush1.msra.mxu0 0.0
    %2203 = vmatprep.subr.mxu0 0.0
    %2204 = vmatpush1.msra.mxu0 0.0
    %2205 = vmatprep.subr.mxu0 0.0
    %2206 = vmatpush1.msra.mxu0 0.0
    %2207 = vmatprep.subr.mxu0 0.0
    %2208 = vmatpush1.msra.mxu0 0.0
    %2209 = vmatprep.subr.mxu0 0.0
    %2210 = vmatpush1.msra.mxu0 0.0
    %2211 = vmatprep.subr.mxu0 0.0
    %2212 = vmatpush1.msra.mxu0 0.0
    %2213 = vmatprep.subr.mxu0 0.0
    %2214 = vmatpush1.msra.mxu0 0.0
    %2215 = vmatprep.subr.mxu0 0.0
    %2216 = vmatpush1.msra.mxu0 0.0
    %2217 = vmatprep.subr.mxu0 0.0
    %2218 = vmatpush1.msra.mxu0 0.0
    %2219 = vmatprep.subr.mxu0 %v2101
    %2220 = vmatpush1.msra.mxu0 %v2100
    %2221 = vmatprep.subr.mxu0 %v2097
    %2222 = vmatpush1.msra.mxu0 %v2096
    %2223 = vmatprep.subr.mxu0 %v2093
    %2224 = vmatpush1.msra.mxu0 %v2092
    %2225 = vmatprep.subr.mxu0 %v2089
    %2226 = vmatpush1.msra.mxu0 %v2088
    %2227 = vmatprep.subr.mxu0 0.0
    %2228 = vmatpush2.msra.mxu0 0.0
    %2229 = vmatprep.subr.mxu0 0.0
    %2230 = vmatpush2.msra.mxu0 0.0
    %2231 = vmatprep.subr.mxu0 0.0
    %2232 = vmatpush2.msra.mxu0 0.0
    %2233 = vmatprep.subr.mxu0 0.0
    %2234 = vmatpush2.msra.mxu0 0.0
    %2235 = vmatprep.subr.mxu0 0.0
    %2236 = vmatpush2.msra.mxu0 0.0
    %2237 = vmatprep.subr.mxu0 0.0
    %2238 = vmatpush2.msra.mxu0 0.0
    %2239 = vmatprep.subr.mxu0 0.0
    %2240 = vmatpush2.msra.mxu0 0.0
    %2241 = vmatprep.subr.mxu0 0.0
    %2242 = vmatpush2.msra.mxu0 0.0
    %2243 = vmatprep.subr.mxu0 0.0
    %2244 = vmatpush2.msra.mxu0 0.0
    %2245 = vmatprep.subr.mxu0 0.0
    %2246 = vmatpush2.msra.mxu0 0.0
    %2247 = vmatprep.subr.mxu0 0.0
    %2248 = vmatpush2.msra.mxu0 0.0
    %2249 = vmatprep.subr.mxu0 0.0
    %2250 = vmatpush2.msra.mxu0 0.0
    %2251 = vmatprep.subr.mxu0 0.0
    %2252 = vmatpush2.msra.mxu0 0.0
    %2253 = vmatprep.subr.mxu0 0.0
    %2254 = vmatpush2.msra.mxu0 0.0
    %2255 = vmatprep.subr.mxu0 0.0
    %2256 = vmatpush2.msra.mxu0 0.0
    %2257 = vmatprep.subr.mxu0 0.0
    %2258 = vmatpush2.msra.mxu0 0.0
    %2259 = vmatprep.mubr.f32.mxu0 0.0
    %2260 = vmatmul.mubr.f32.gmra.mxu0 %v1892
    %v2261 = vpop.f32.mrf.mxu0
    %v2262 = vadd.f32 %v2115, %v2261
    %v2263 = vpop.f32.mrf.mxu0
    %v2264 = vadd.f32 %v2119, %v2263
    %2265 = vdwg.mxu0
    %v2266 = vld [vmem:[#allocation4 + $0x120] sm:$0xff]
    %v2267 = vld [vmem:[#allocation4 + $0x128] sm:$0xff]
    %v2268 = vld [vmem:[#allocation4 + $0x130] sm:$0xff]
    %v2269 = vld [vmem:[#allocation4 + $0x138] sm:$0xff]
    %v2270 = vld [vmem:[#allocation4 + $0x140] sm:$0xff]
    %v2271 = vld [vmem:[#allocation4 + $0x148] sm:$0xff]
    %v2272 = vld [vmem:[#allocation4 + $0x150] sm:$0xff]
    %v2273 = vld [vmem:[#allocation4 + $0x158] sm:$0xff]
    %v2274 = vld [vmem:[#allocation4 + $0x160] sm:$0xff]
    %v2275 = vld [vmem:[#allocation4 + $0x168] sm:$0xff]
    %v2276 = vld [vmem:[#allocation4 + $0x170] sm:$0xff]
    %v2277 = vld [vmem:[#allocation4 + $0x178] sm:$0xff]
    %v2278 = vld [vmem:[#allocation4 + $0x180] sm:$0xff]
    %v2279 = vld [vmem:[#allocation4 + $0x188] sm:$0xff]
    %v2280 = vld [vmem:[#allocation4 + $0x190] sm:$0xff]
    %v2281 = vld [vmem:[#allocation4 + $0x198] sm:$0xff]
    %v2283 = vsel %vm233, %v1504, 0
    %2285 = vmatprep.subr.mxu0 0.0
    %2286 = vmatpush1.msra.mxu0 0.0
    %2287 = vmatprep.subr.mxu0 0.0
    %2288 = vmatpush1.msra.mxu0 0.0
    %2289 = vmatprep.subr.mxu0 0.0
    %2290 = vmatpush1.msra.mxu0 0.0
    %2291 = vmatprep.subr.mxu0 0.0
    %2292 = vmatpush1.msra.mxu0 0.0
    %2293 = vmatprep.subr.mxu0 0.0
    %2294 = vmatpush1.msra.mxu0 0.0
    %2295 = vmatprep.subr.mxu0 0.0
    %2296 = vmatpush1.msra.mxu0 0.0
    %2297 = vmatprep.subr.mxu0 0.0
    %2298 = vmatpush1.msra.mxu0 0.0
    %2299 = vmatprep.subr.mxu0 0.0
    %2300 = vmatpush1.msra.mxu0 0.0
    %2301 = vmatprep.subr.mxu0 0.0
    %2302 = vmatpush1.msra.mxu0 0.0
    %2303 = vmatprep.subr.mxu0 0.0
    %2304 = vmatpush1.msra.mxu0 0.0
    %2305 = vmatprep.subr.mxu0 0.0
    %2306 = vmatpush1.msra.mxu0 0.0
    %2307 = vmatprep.subr.mxu0 0.0
    %2308 = vmatpush1.msra.mxu0 0.0
    %2309 = vmatprep.subr.mxu0 %v2279
    %2310 = vmatpush1.msra.mxu0 %v2278
    %2311 = vmatprep.subr.mxu0 %v2275
    %2312 = vmatpush1.msra.mxu0 %v2274
    %2313 = vmatprep.subr.mxu0 %v2271
    %2314 = vmatpush1.msra.mxu0 %v2270
    %2315 = vmatprep.subr.mxu0 %v2267
    %2316 = vmatpush1.msra.mxu0 %v2266
    %2317 = vmatprep.subr.mxu0 0.0
    %2318 = vmatpush2.msra.mxu0 0.0
    %2319 = vmatprep.subr.mxu0 0.0
    %2320 = vmatpush2.msra.mxu0 0.0
    %2321 = vmatprep.subr.mxu0 0.0
    %2322 = vmatpush2.msra.mxu0 0.0
    %2323 = vmatprep.subr.mxu0 0.0
    %2324 = vmatpush2.msra.mxu0 0.0
    %2325 = vmatprep.subr.mxu0 0.0
    %2326 = vmatpush2.msra.mxu0 0.0
    %2327 = vmatprep.subr.mxu0 0.0
    %2328 = vmatpush2.msra.mxu0 0.0
    %2329 = vmatprep.subr.mxu0 0.0
    %2330 = vmatpush2.msra.mxu0 0.0
    %2331 = vmatprep.subr.mxu0 0.0
    %2332 = vmatpush2.msra.mxu0 0.0
    %2333 = vmatprep.subr.mxu0 0.0
    %2334 = vmatpush2.msra.mxu0 0.0
    %2335 = vmatprep.subr.mxu0 0.0
    %2336 = vmatpush2.msra.mxu0 0.0
    %2337 = vmatprep.subr.mxu0 0.0
    %2338 = vmatpush2.msra.mxu0 0.0
    %2339 = vmatprep.subr.mxu0 0.0
    %2340 = vmatpush2.msra.mxu0 0.0
    %2341 = vmatprep.subr.mxu0 0.0
    %2342 = vmatpush2.msra.mxu0 0.0
    %2343 = vmatprep.subr.mxu0 0.0
    %2344 = vmatpush2.msra.mxu0 0.0
    %2345 = vmatprep.subr.mxu0 0.0
    %2346 = vmatpush2.msra.mxu0 0.0
    %2347 = vmatprep.subr.mxu0 0.0
    %2348 = vmatpush2.msra.mxu0 0.0
    %2349 = vmatprep.mubr.f32.mxu0 0.0
    %2350 = vmatmul.mubr.f32.gmra.mxu0 %v2283
    %v2351 = vpop.f32.mrf.mxu0
    %v2352 = vadd.f32 0.0, %v2351
    %v2353 = vpop.f32.mrf.mxu0
    %v2354 = vadd.f32 0.0, %v2353
    %2355 = vdwg.mxu0
    %2356 = vmatprep.subr.mxu0 0.0
    %2357 = vmatpush1.msra.mxu0 0.0
    %2358 = vmatprep.subr.mxu0 0.0
    %2359 = vmatpush1.msra.mxu0 0.0
    %2360 = vmatprep.subr.mxu0 0.0
    %2361 = vmatpush1.msra.mxu0 0.0
    %2362 = vmatprep.subr.mxu0 0.0
    %2363 = vmatpush1.msra.mxu0 0.0
    %2364 = vmatprep.subr.mxu0 0.0
    %2365 = vmatpush1.msra.mxu0 0.0
    %2366 = vmatprep.subr.mxu0 0.0
    %2367 = vmatpush1.msra.mxu0 0.0
    %2368 = vmatprep.subr.mxu0 0.0
    %2369 = vmatpush1.msra.mxu0 0.0
    %2370 = vmatprep.subr.mxu0 0.0
    %2371 = vmatpush1.msra.mxu0 0.0
    %2372 = vmatprep.subr.mxu0 0.0
    %2373 = vmatpush1.msra.mxu0 0.0
    %2374 = vmatprep.subr.mxu0 0.0
    %2375 = vmatpush1.msra.mxu0 0.0
    %2376 = vmatprep.subr.mxu0 0.0
    %2377 = vmatpush1.msra.mxu0 0.0
    %2378 = vmatprep.subr.mxu0 0.0
    %2379 = vmatpush1.msra.mxu0 0.0
    %2380 = vmatprep.subr.mxu0 %v2281
    %2381 = vmatpush1.msra.mxu0 %v2280
    %2382 = vmatprep.subr.mxu0 %v2277
    %2383 = vmatpush1.msra.mxu0 %v2276
    %2384 = vmatprep.subr.mxu0 %v2273
    %2385 = vmatpush1.msra.mxu0 %v2272
    %2386 = vmatprep.subr.mxu0 %v2269
    %2387 = vmatpush1.msra.mxu0 %v2268
    %2388 = vmatprep.subr.mxu0 0.0
    %2389 = vmatpush2.msra.mxu0 0.0
    %2390 = vmatprep.subr.mxu0 0.0
    %2391 = vmatpush2.msra.mxu0 0.0
    %2392 = vmatprep.subr.mxu0 0.0
    %2393 = vmatpush2.msra.mxu0 0.0
    %2394 = vmatprep.subr.mxu0 0.0
    %2395 = vmatpush2.msra.mxu0 0.0
    %2396 = vmatprep.subr.mxu0 0.0
    %2397 = vmatpush2.msra.mxu0 0.0
    %2398 = vmatprep.subr.mxu0 0.0
    %2399 = vmatpush2.msra.mxu0 0.0
    %2400 = vmatprep.subr.mxu0 0.0
    %2401 = vmatpush2.msra.mxu0 0.0
    %2402 = vmatprep.subr.mxu0 0.0
    %2403 = vmatpush2.msra.mxu0 0.0
    %2404 = vmatprep.subr.mxu0 0.0
    %2405 = vmatpush2.msra.mxu0 0.0
    %2406 = vmatprep.subr.mxu0 0.0
    %2407 = vmatpush2.msra.mxu0 0.0
    %2408 = vmatprep.subr.mxu0 0.0
    %2409 = vmatpush2.msra.mxu0 0.0
    %2410 = vmatprep.subr.mxu0 0.0
    %2411 = vmatpush2.msra.mxu0 0.0
    %2412 = vmatprep.subr.mxu0 0.0
    %2413 = vmatpush2.msra.mxu0 0.0
    %2414 = vmatprep.subr.mxu0 0.0
    %2415 = vmatpush2.msra.mxu0 0.0
    %2416 = vmatprep.subr.mxu0 0.0
    %2417 = vmatpush2.msra.mxu0 0.0
    %2418 = vmatprep.subr.mxu0 0.0
    %2419 = vmatpush2.msra.mxu0 0.0
    %2420 = vmatprep.mubr.f32.mxu0 0.0
    %2421 = vmatmul.mubr.f32.gmra.mxu0 %v2283
    %v2422 = vpop.f32.mrf.mxu0
    %v2423 = vadd.f32 0.0, %v2422
    %v2424 = vpop.f32.mrf.mxu0
    %v2425 = vadd.f32 0.0, %v2424
    %2426 = vdwg.mxu0
    %v2427 = vadd.f32 %v2191, %v2352
    %v2428 = vadd.f32 %v2193, %v2354
    %v2429 = vadd.f32 %v2262, %v2423
    %v2430 = vadd.f32 %v2264, %v2425
    %v2431 = vxor.u32 %v2427, 2147483648
    %v2432 = vxor.u32 %v2428, 2147483648
    %v2433 = vxor.u32 %v2429, 2147483648
    %v2434 = vmul.f32 %v2431, 1.442695
    %v2435 = vpow.pop %v2434
    %v2436 = vmul.f32 %v2432, 1.442695
    %v2437 = vpow.pop %v2436
    %v2438 = vmul.f32 %v2433, 1.442695
    %v2439 = vpow.pop %v2438
    %v2440 = vadd.f32 %v2435, 1.0
    %v2441 = vadd.f32 %v2437, 1.0
    %v2442 = vadd.f32 %v2439, 1.0
    %v2443 = vrcp.pop %v2440
    %v2444 = vmul.f32 1.0, %v2443
    %v2445 = vrcp.pop %v2441
    %v2446 = vmul.f32 1.0, %v2445
    %v2447 = vrcp.pop %v2442
    %v2448 = vmul.f32 1.0, %v2447
    %v2449 = vtanh.pop %v2430
    %v2450 = vmul.f32 %v2446, %v1502
    %v2451 = vmul.f32 %v2444, %v2449
    %v2452 = vadd.f32 %v2450, %v2451
    %v2453 = vtanh.pop %v2452
    %v2454 = vmul.f32 %v2448, %v2453
    %v2455 = vld [vmem:[#allocation4 + $0x1a0] sm:$0xff]
    %v2456 = vld [vmem:[#allocation4 + $0x1a8] sm:$0xff]
    %v2457 = vld [vmem:[#allocation4 + $0x1b0] sm:$0xff]
    %v2458 = vld [vmem:[#allocation4 + $0x1b8] sm:$0xff]
    %v2459 = vld [vmem:[#allocation4 + $0x1c0] sm:$0xff]
    %v2460 = vld [vmem:[#allocation4 + $0x1c8] sm:$0xff]
    %v2461 = vld [vmem:[#allocation4 + $0x1d0] sm:$0xff]
    %v2462 = vld [vmem:[#allocation4 + $0x1d8] sm:$0xff]
    %v2463 = vld [vmem:[#allocation4 + $0x1e0] sm:$0xff]
    %v2464 = vld [vmem:[#allocation4 + $0x1e8] sm:$0xff]
    %v2465 = vld [vmem:[#allocation4 + $0x1f0] sm:$0xff]
    %v2466 = vld [vmem:[#allocation4 + $0x1f8] sm:$0xff]
    %v2467 = vld [vmem:[#allocation4 + $0x200] sm:$0xff]
    %v2468 = vld [vmem:[#allocation4 + $0x208] sm:$0xff]
    %v2469 = vld [vmem:[#allocation4 + $0x210] sm:$0xff]
    %v2470 = vld [vmem:[#allocation4 + $0x218] sm:$0xff]
    %v2471 = vld [vmem:[%s1521] ss:$8 sm:$0xf]
    %v2473 = vlaneseq
    %v2474 = vshrl.u32 %v2473, 7
    %v2475 = vsub.s32 0, %v2474
    %v2476 = vrot.slane %v2471, %v2475
    %v2477 = vlaneseq
    %v2478 = vshrl.u32 %v2477, 7
    %v2479 = vsub.s32 1, %v2478
    %v2480 = vrot.slane %v2471, %v2479
    %v2481 = vlaneseq
    %v2482 = vshrl.u32 %v2481, 7
    %v2483 = vsub.s32 2, %v2482
    %v2484 = vrot.slane %v2471, %v2483
    %v2485 = vlaneseq
    %v2486 = vshrl.u32 %v2485, 7
    %v2487 = vsub.s32 3, %v2486
    %v2488 = vrot.slane %v2471, %v2487
    %2493 = vmatprep.subr.mxu0 0.0
    %2494 = vmatpush1.msra.mxu0 0.0
    %2495 = vmatprep.subr.mxu0 0.0
    %2496 = vmatpush1.msra.mxu0 0.0
    %2497 = vmatprep.subr.mxu0 0.0
    %2498 = vmatpush1.msra.mxu0 0.0
    %2499 = vmatprep.subr.mxu0 0.0
    %2500 = vmatpush1.msra.mxu0 0.0
    %2501 = vmatprep.subr.mxu0 0.0
    %2502 = vmatpush1.msra.mxu0 0.0
    %2503 = vmatprep.subr.mxu0 0.0
    %2504 = vmatpush1.msra.mxu0 0.0
    %2505 = vmatprep.subr.mxu0 0.0
    %2506 = vmatpush1.msra.mxu0 0.0
    %2507 = vmatprep.subr.mxu0 0.0
    %2508 = vmatpush1.msra.mxu0 0.0
    %2509 = vmatprep.subr.mxu0 0.0
    %2510 = vmatpush1.msra.mxu0 0.0
    %2511 = vmatprep.subr.mxu0 0.0
    %2512 = vmatpush1.msra.mxu0 0.0
    %2513 = vmatprep.subr.mxu0 0.0
    %2514 = vmatpush1.msra.mxu0 0.0
    %2515 = vmatprep.subr.mxu0 0.0
    %2516 = vmatpush1.msra.mxu0 0.0
    %2517 = vmatprep.subr.mxu0 %v2468
    %2518 = vmatpush1.msra.mxu0 %v2467
    %2519 = vmatprep.subr.mxu0 %v2464
    %2520 = vmatpush1.msra.mxu0 %v2463
    %2521 = vmatprep.subr.mxu0 %v2460
    %2522 = vmatpush1.msra.mxu0 %v2459
    %2523 = vmatprep.subr.mxu0 %v2456
    %2524 = vmatpush1.msra.mxu0 %v2455
    %2525 = vmatprep.subr.mxu0 0.0
    %2526 = vmatpush2.msra.mxu0 0.0
    %2527 = vmatprep.subr.mxu0 0.0
    %2528 = vmatpush2.msra.mxu0 0.0
    %2529 = vmatprep.subr.mxu0 0.0
    %2530 = vmatpush2.msra.mxu0 0.0
    %2531 = vmatprep.subr.mxu0 0.0
    %2532 = vmatpush2.msra.mxu0 0.0
    %2533 = vmatprep.subr.mxu0 0.0
    %2534 = vmatpush2.msra.mxu0 0.0
    %2535 = vmatprep.subr.mxu0 0.0
    %2536 = vmatpush2.msra.mxu0 0.0
    %2537 = vmatprep.subr.mxu0 0.0
    %2538 = vmatpush2.msra.mxu0 0.0
    %2539 = vmatprep.subr.mxu0 0.0
    %2540 = vmatpush2.msra.mxu0 0.0
    %2541 = vmatprep.subr.mxu0 0.0
    %2542 = vmatpush2.msra.mxu0 0.0
    %2543 = vmatprep.subr.mxu0 0.0
    %2544 = vmatpush2.msra.mxu0 0.0
    %2545 = vmatprep.subr.mxu0 0.0
    %2546 = vmatpush2.msra.mxu0 0.0
    %2547 = vmatprep.subr.mxu0 0.0
    %2548 = vmatpush2.msra.mxu0 0.0
    %2549 = vmatprep.subr.mxu0 0.0
    %2550 = vmatpush2.msra.mxu0 0.0
    %2551 = vmatprep.subr.mxu0 0.0
    %2552 = vmatpush2.msra.mxu0 0.0
    %2553 = vmatprep.subr.mxu0 0.0
    %2554 = vmatpush2.msra.mxu0 0.0
    %2555 = vmatprep.subr.mxu0 0.0
    %2556 = vmatpush2.msra.mxu0 0.0
    %2557 = vmatprep.mubr.f32.mxu0 0.0
    %2558 = vmatmul.mubr.f32.gmra.mxu0 %v2283
    %v2559 = vpop.f32.mrf.mxu0
    %v2560 = vadd.f32 %v2476, %v2559
    %v2561 = vpop.f32.mrf.mxu0
    %v2562 = vadd.f32 %v2480, %v2561
    %2563 = vdwg.mxu0
    %2564 = vmatprep.subr.mxu0 0.0
    %2565 = vmatpush1.msra.mxu0 0.0
    %2566 = vmatprep.subr.mxu0 0.0
    %2567 = vmatpush1.msra.mxu0 0.0
    %2568 = vmatprep.subr.mxu0 0.0
    %2569 = vmatpush1.msra.mxu0 0.0
    %2570 = vmatprep.subr.mxu0 0.0
    %2571 = vmatpush1.msra.mxu0 0.0
    %2572 = vmatprep.subr.mxu0 0.0
    %2573 = vmatpush1.msra.mxu0 0.0
    %2574 = vmatprep.subr.mxu0 0.0
    %2575 = vmatpush1.msra.mxu0 0.0
    %2576 = vmatprep.subr.mxu0 0.0
    %2577 = vmatpush1.msra.mxu0 0.0
    %2578 = vmatprep.subr.mxu0 0.0
    %2579 = vmatpush1.msra.mxu0 0.0
    %2580 = vmatprep.subr.mxu0 0.0
    %2581 = vmatpush1.msra.mxu0 0.0
    %2582 = vmatprep.subr.mxu0 0.0
    %2583 = vmatpush1.msra.mxu0 0.0
    %2584 = vmatprep.subr.mxu0 0.0
    %2585 = vmatpush1.msra.mxu0 0.0
    %2586 = vmatprep.subr.mxu0 0.0
    %2587 = vmatpush1.msra.mxu0 0.0
    %2588 = vmatprep.subr.mxu0 %v2470
    %2589 = vmatpush1.msra.mxu0 %v2469
    %2590 = vmatprep.subr.mxu0 %v2466
    %2591 = vmatpush1.msra.mxu0 %v2465
    %2592 = vmatprep.subr.mxu0 %v2462
    %2593 = vmatpush1.msra.mxu0 %v2461
    %2594 = vmatprep.subr.mxu0 %v2458
    %2595 = vmatpush1.msra.mxu0 %v2457
    %2596 = vmatprep.subr.mxu0 0.0
    %2597 = vmatpush2.msra.mxu0 0.0
    %2598 = vmatprep.subr.mxu0 0.0
    %2599 = vmatpush2.msra.mxu0 0.0
    %2600 = vmatprep.subr.mxu0 0.0
    %2601 = vmatpush2.msra.mxu0 0.0
    %2602 = vmatprep.subr.mxu0 0.0
    %2603 = vmatpush2.msra.mxu0 0.0
    %2604 = vmatprep.subr.mxu0 0.0
    %2605 = vmatpush2.msra.mxu0 0.0
    %2606 = vmatprep.subr.mxu0 0.0
    %2607 = vmatpush2.msra.mxu0 0.0
    %2608 = vmatprep.subr.mxu0 0.0
    %2609 = vmatpush2.msra.mxu0 0.0
    %2610 = vmatprep.subr.mxu0 0.0
    %2611 = vmatpush2.msra.mxu0 0.0
    %2612 = vmatprep.subr.mxu0 0.0
    %2613 = vmatpush2.msra.mxu0 0.0
    %2614 = vmatprep.subr.mxu0 0.0
    %2615 = vmatpush2.msra.mxu0 0.0
    %2616 = vmatprep.subr.mxu0 0.0
    %2617 = vmatpush2.msra.mxu0 0.0
    %2618 = vmatprep.subr.mxu0 0.0
    %2619 = vmatpush2.msra.mxu0 0.0
    %2620 = vmatprep.subr.mxu0 0.0
    %2621 = vmatpush2.msra.mxu0 0.0
    %2622 = vmatprep.subr.mxu0 0.0
    %2623 = vmatpush2.msra.mxu0 0.0
    %2624 = vmatprep.subr.mxu0 0.0
    %2625 = vmatpush2.msra.mxu0 0.0
    %2626 = vmatprep.subr.mxu0 0.0
    %2627 = vmatpush2.msra.mxu0 0.0
    %2628 = vmatprep.mubr.f32.mxu0 0.0
    %2629 = vmatmul.mubr.f32.gmra.mxu0 %v2283
    %v2630 = vpop.f32.mrf.mxu0
    %v2631 = vadd.f32 %v2484, %v2630
    %v2632 = vpop.f32.mrf.mxu0
    %v2633 = vadd.f32 %v2488, %v2632
    %2634 = vdwg.mxu0
    %v2635 = vld [vmem:[#allocation4 + $0x220] sm:$0xff]
    %v2636 = vld [vmem:[#allocation4 + $0x228] sm:$0xff]
    %v2637 = vld [vmem:[#allocation4 + $0x230] sm:$0xff]
    %v2638 = vld [vmem:[#allocation4 + $0x238] sm:$0xff]
    %v2639 = vld [vmem:[#allocation4 + $0x240] sm:$0xff]
    %v2640 = vld [vmem:[#allocation4 + $0x248] sm:$0xff]
    %v2641 = vld [vmem:[#allocation4 + $0x250] sm:$0xff]
    %v2642 = vld [vmem:[#allocation4 + $0x258] sm:$0xff]
    %v2643 = vld [vmem:[#allocation4 + $0x260] sm:$0xff]
    %v2644 = vld [vmem:[#allocation4 + $0x268] sm:$0xff]
    %v2645 = vld [vmem:[#allocation4 + $0x270] sm:$0xff]
    %v2646 = vld [vmem:[#allocation4 + $0x278] sm:$0xff]
    %v2647 = vld [vmem:[#allocation4 + $0x280] sm:$0xff]
    %v2648 = vld [vmem:[#allocation4 + $0x288] sm:$0xff]
    %v2649 = vld [vmem:[#allocation4 + $0x290] sm:$0xff]
    %v2650 = vld [vmem:[#allocation4 + $0x298] sm:$0xff]
    %v2652 = vsel %vm233, %v1871, 0
    %2654 = vmatprep.subr.mxu0 0.0
    %2655 = vmatpush1.msra.mxu0 0.0
    %2656 = vmatprep.subr.mxu0 0.0
    %2657 = vmatpush1.msra.mxu0 0.0
    %2658 = vmatprep.subr.mxu0 0.0
    %2659 = vmatpush1.msra.mxu0 0.0
    %2660 = vmatprep.subr.mxu0 0.0
    %2661 = vmatpush1.msra.mxu0 0.0
    %2662 = vmatprep.subr.mxu0 0.0
    %2663 = vmatpush1.msra.mxu0 0.0
    %2664 = vmatprep.subr.mxu0 0.0
    %2665 = vmatpush1.msra.mxu0 0.0
    %2666 = vmatprep.subr.mxu0 0.0
    %2667 = vmatpush1.msra.mxu0 0.0
    %2668 = vmatprep.subr.mxu0 0.0
    %2669 = vmatpush1.msra.mxu0 0.0
    %2670 = vmatprep.subr.mxu0 0.0
    %2671 = vmatpush1.msra.mxu0 0.0
    %2672 = vmatprep.subr.mxu0 0.0
    %2673 = vmatpush1.msra.mxu0 0.0
    %2674 = vmatprep.subr.mxu0 0.0
    %2675 = vmatpush1.msra.mxu0 0.0
    %2676 = vmatprep.subr.mxu0 0.0
    %2677 = vmatpush1.msra.mxu0 0.0
    %2678 = vmatprep.subr.mxu0 %v2648
    %2679 = vmatpush1.msra.mxu0 %v2647
    %2680 = vmatprep.subr.mxu0 %v2644
    %2681 = vmatpush1.msra.mxu0 %v2643
    %2682 = vmatprep.subr.mxu0 %v2640
    %2683 = vmatpush1.msra.mxu0 %v2639
    %2684 = vmatprep.subr.mxu0 %v2636
    %2685 = vmatpush1.msra.mxu0 %v2635
    %2686 = vmatprep.subr.mxu0 0.0
    %2687 = vmatpush2.msra.mxu0 0.0
    %2688 = vmatprep.subr.mxu0 0.0
    %2689 = vmatpush2.msra.mxu0 0.0
    %2690 = vmatprep.subr.mxu0 0.0
    %2691 = vmatpush2.msra.mxu0 0.0
    %2692 = vmatprep.subr.mxu0 0.0
    %2693 = vmatpush2.msra.mxu0 0.0
    %2694 = vmatprep.subr.mxu0 0.0
    %2695 = vmatpush2.msra.mxu0 0.0
    %2696 = vmatprep.subr.mxu0 0.0
    %2697 = vmatpush2.msra.mxu0 0.0
    %2698 = vmatprep.subr.mxu0 0.0
    %2699 = vmatpush2.msra.mxu0 0.0
    %2700 = vmatprep.subr.mxu0 0.0
    %2701 = vmatpush2.msra.mxu0 0.0
    %2702 = vmatprep.subr.mxu0 0.0
    %2703 = vmatpush2.msra.mxu0 0.0
    %2704 = vmatprep.subr.mxu0 0.0
    %2705 = vmatpush2.msra.mxu0 0.0
    %2706 = vmatprep.subr.mxu0 0.0
    %2707 = vmatpush2.msra.mxu0 0.0
    %2708 = vmatprep.subr.mxu0 0.0
    %2709 = vmatpush2.msra.mxu0 0.0
    %2710 = vmatprep.subr.mxu0 0.0
    %2711 = vmatpush2.msra.mxu0 0.0
    %2712 = vmatprep.subr.mxu0 0.0
    %2713 = vmatpush2.msra.mxu0 0.0
    %2714 = vmatprep.subr.mxu0 0.0
    %2715 = vmatpush2.msra.mxu0 0.0
    %2716 = vmatprep.subr.mxu0 0.0
    %2717 = vmatpush2.msra.mxu0 0.0
    %2718 = vmatprep.mubr.f32.mxu0 0.0
    %2719 = vmatmul.mubr.f32.gmra.mxu0 %v2652
    %v2720 = vpop.f32.mrf.mxu0
    %v2721 = vadd.f32 0.0, %v2720
    %v2722 = vpop.f32.mrf.mxu0
    %v2723 = vadd.f32 0.0, %v2722
    %2724 = vdwg.mxu0
    %2725 = vmatprep.subr.mxu0 0.0
    %2726 = vmatpush1.msra.mxu0 0.0
    %2727 = vmatprep.subr.mxu0 0.0
    %2728 = vmatpush1.msra.mxu0 0.0
    %2729 = vmatprep.subr.mxu0 0.0
    %2730 = vmatpush1.msra.mxu0 0.0
    %2731 = vmatprep.subr.mxu0 0.0
    %2732 = vmatpush1.msra.mxu0 0.0
    %2733 = vmatprep.subr.mxu0 0.0
    %2734 = vmatpush1.msra.mxu0 0.0
    %2735 = vmatprep.subr.mxu0 0.0
    %2736 = vmatpush1.msra.mxu0 0.0
    %2737 = vmatprep.subr.mxu0 0.0
    %2738 = vmatpush1.msra.mxu0 0.0
    %2739 = vmatprep.subr.mxu0 0.0
    %2740 = vmatpush1.msra.mxu0 0.0
    %2741 = vmatprep.subr.mxu0 0.0
    %2742 = vmatpush1.msra.mxu0 0.0
    %2743 = vmatprep.subr.mxu0 0.0
    %2744 = vmatpush1.msra.mxu0 0.0
    %2745 = vmatprep.subr.mxu0 0.0
    %2746 = vmatpush1.msra.mxu0 0.0
    %2747 = vmatprep.subr.mxu0 0.0
    %2748 = vmatpush1.msra.mxu0 0.0
    %2749 = vmatprep.subr.mxu0 %v2650
    %2750 = vmatpush1.msra.mxu0 %v2649
    %2751 = vmatprep.subr.mxu0 %v2646
    %2752 = vmatpush1.msra.mxu0 %v2645
    %2753 = vmatprep.subr.mxu0 %v2642
    %2754 = vmatpush1.msra.mxu0 %v2641
    %2755 = vmatprep.subr.mxu0 %v2638
    %2756 = vmatpush1.msra.mxu0 %v2637
    %2757 = vmatprep.subr.mxu0 0.0
    %2758 = vmatpush2.msra.mxu0 0.0
    %2759 = vmatprep.subr.mxu0 0.0
    %2760 = vmatpush2.msra.mxu0 0.0
    %2761 = vmatprep.subr.mxu0 0.0
    %2762 = vmatpush2.msra.mxu0 0.0
    %2763 = vmatprep.subr.mxu0 0.0
    %2764 = vmatpush2.msra.mxu0 0.0
    %2765 = vmatprep.subr.mxu0 0.0
    %2766 = vmatpush2.msra.mxu0 0.0
    %2767 = vmatprep.subr.mxu0 0.0
    %2768 = vmatpush2.msra.mxu0 0.0
    %2769 = vmatprep.subr.mxu0 0.0
    %2770 = vmatpush2.msra.mxu0 0.0
    %2771 = vmatprep.subr.mxu0 0.0
    %2772 = vmatpush2.msra.mxu0 0.0
    %2773 = vmatprep.subr.mxu0 0.0
    %2774 = vmatpush2.msra.mxu0 0.0
    %2775 = vmatprep.subr.mxu0 0.0
    %2776 = vmatpush2.msra.mxu0 0.0
    %2777 = vmatprep.subr.mxu0 0.0
    %2778 = vmatpush2.msra.mxu0 0.0
    %2779 = vmatprep.subr.mxu0 0.0
    %2780 = vmatpush2.msra.mxu0 0.0
    %2781 = vmatprep.subr.mxu0 0.0
    %2782 = vmatpush2.msra.mxu0 0.0
    %2783 = vmatprep.subr.mxu0 0.0
    %2784 = vmatpush2.msra.mxu0 0.0
    %2785 = vmatprep.subr.mxu0 0.0
    %2786 = vmatpush2.msra.mxu0 0.0
    %2787 = vmatprep.subr.mxu0 0.0
    %2788 = vmatpush2.msra.mxu0 0.0
    %2789 = vmatprep.mubr.f32.mxu0 0.0
    %2790 = vmatmul.mubr.f32.gmra.mxu0 %v2652
    %v2791 = vpop.f32.mrf.mxu0
    %v2792 = vadd.f32 0.0, %v2791
    %v2793 = vpop.f32.mrf.mxu0
    %v2794 = vadd.f32 0.0, %v2793
    %2795 = vdwg.mxu0
    %v2796 = vadd.f32 %v2560, %v2721
    %v2797 = vadd.f32 %v2562, %v2723
    %v2798 = vadd.f32 %v2631, %v2792
    %v2799 = vadd.f32 %v2633, %v2794
    %v2800 = vxor.u32 %v2796, 2147483648
    %v2801 = vxor.u32 %v2797, 2147483648
    %v2802 = vxor.u32 %v2798, 2147483648
    %v2803 = vmul.f32 %v2800, 1.442695
    %v2804 = vpow.pop %v2803
    %v2805 = vmul.f32 %v2801, 1.442695
    %v2806 = vpow.pop %v2805
    %v2807 = vmul.f32 %v2802, 1.442695
    %v2808 = vpow.pop %v2807
    %v2809 = vadd.f32 %v2804, 1.0
    %v2810 = vadd.f32 %v2806, 1.0
    %v2811 = vadd.f32 %v2808, 1.0
    %v2812 = vrcp.pop %v2809
    %v2813 = vmul.f32 1.0, %v2812
    %v2814 = vrcp.pop %v2810
    %v2815 = vmul.f32 1.0, %v2814
    %v2816 = vrcp.pop %v2811
    %v2817 = vmul.f32 1.0, %v2816
    %v2818 = vtanh.pop %v2799
    %v2819 = vmul.f32 %v2815, %v1869
    %v2820 = vmul.f32 %v2813, %v2818
    %v2821 = vadd.f32 %v2819, %v2820
    %v2822 = vtanh.pop %v2821
    %v2823 = vmul.f32 %v2817, %v2822
    %2824 = vst [vmem:[#allocation3 + $0x1] sm:$0x1] %v2823
    %s2825 = scalar_lea.vmem [#allocation2], 4
    %v2826 = vld [vmem:[%s2825] ss:$8 sm:$0xf]
    %v2827 = vld [vmem:[#allocation4 + $0x20] sm:$0xff]
    %v2828 = vld [vmem:[#allocation4 + $0x28] sm:$0xff]
    %v2829 = vld [vmem:[#allocation4 + $0x30] sm:$0xff]
    %v2830 = vld [vmem:[#allocation4 + $0x38] sm:$0xff]
    %v2831 = vld [vmem:[#allocation4 + $0x40] sm:$0xff]
    %v2832 = vld [vmem:[#allocation4 + $0x48] sm:$0xff]
    %v2833 = vld [vmem:[#allocation4 + $0x50] sm:$0xff]
    %v2834 = vld [vmem:[#allocation4 + $0x58] sm:$0xff]
    %v2835 = vld [vmem:[#allocation4 + $0x60] sm:$0xff]
    %v2836 = vld [vmem:[#allocation4 + $0x68] sm:$0xff]
    %v2837 = vld [vmem:[#allocation4 + $0x70] sm:$0xff]
    %v2838 = vld [vmem:[#allocation4 + $0x78] sm:$0xff]
    %v2839 = vld [vmem:[#allocation4 + $0x80] sm:$0xff]
    %v2840 = vld [vmem:[#allocation4 + $0x88] sm:$0xff]
    %v2841 = vld [vmem:[#allocation4 + $0x90] sm:$0xff]
    %v2842 = vld [vmem:[#allocation4 + $0x98] sm:$0xff]
    %v2844 = vsel %vm233, %v2085, 0
    %2846 = vmatprep.subr.mxu0 0.0
    %2847 = vmatpush1.msra.mxu0 0.0
    %2848 = vmatprep.subr.mxu0 0.0
    %2849 = vmatpush1.msra.mxu0 0.0
    %2850 = vmatprep.subr.mxu0 0.0
    %2851 = vmatpush1.msra.mxu0 0.0
    %2852 = vmatprep.subr.mxu0 0.0
    %2853 = vmatpush1.msra.mxu0 0.0
    %2854 = vmatprep.subr.mxu0 0.0
    %2855 = vmatpush1.msra.mxu0 0.0
    %2856 = vmatprep.subr.mxu0 0.0
    %2857 = vmatpush1.msra.mxu0 0.0
    %2858 = vmatprep.subr.mxu0 0.0
    %2859 = vmatpush1.msra.mxu0 0.0
    %2860 = vmatprep.subr.mxu0 0.0
    %2861 = vmatpush1.msra.mxu0 0.0
    %2862 = vmatprep.subr.mxu0 0.0
    %2863 = vmatpush1.msra.mxu0 0.0
    %2864 = vmatprep.subr.mxu0 0.0
    %2865 = vmatpush1.msra.mxu0 0.0
    %2866 = vmatprep.subr.mxu0 0.0
    %2867 = vmatpush1.msra.mxu0 0.0
    %2868 = vmatprep.subr.mxu0 0.0
    %2869 = vmatpush1.msra.mxu0 0.0
    %2870 = vmatprep.subr.mxu0 %v2840
    %2871 = vmatpush1.msra.mxu0 %v2839
    %2872 = vmatprep.subr.mxu0 %v2836
    %2873 = vmatpush1.msra.mxu0 %v2835
    %2874 = vmatprep.subr.mxu0 %v2832
    %2875 = vmatpush1.msra.mxu0 %v2831
    %2876 = vmatprep.subr.mxu0 %v2828
    %2877 = vmatpush1.msra.mxu0 %v2827
    %2878 = vmatprep.subr.mxu0 0.0
    %2879 = vmatpush2.msra.mxu0 0.0
    %2880 = vmatprep.subr.mxu0 0.0
    %2881 = vmatpush2.msra.mxu0 0.0
    %2882 = vmatprep.subr.mxu0 0.0
    %2883 = vmatpush2.msra.mxu0 0.0
    %2884 = vmatprep.subr.mxu0 0.0
    %2885 = vmatpush2.msra.mxu0 0.0
    %2886 = vmatprep.subr.mxu0 0.0
    %2887 = vmatpush2.msra.mxu0 0.0
    %2888 = vmatprep.subr.mxu0 0.0
    %2889 = vmatpush2.msra.mxu0 0.0
    %2890 = vmatprep.subr.mxu0 0.0
    %2891 = vmatpush2.msra.mxu0 0.0
    %2892 = vmatprep.subr.mxu0 0.0
    %2893 = vmatpush2.msra.mxu0 0.0
    %2894 = vmatprep.subr.mxu0 0.0
    %2895 = vmatpush2.msra.mxu0 0.0
    %2896 = vmatprep.subr.mxu0 0.0
    %2897 = vmatpush2.msra.mxu0 0.0
    %2898 = vmatprep.subr.mxu0 0.0
    %2899 = vmatpush2.msra.mxu0 0.0
    %2900 = vmatprep.subr.mxu0 0.0
    %2901 = vmatpush2.msra.mxu0 0.0
    %2902 = vmatprep.subr.mxu0 0.0
    %2903 = vmatpush2.msra.mxu0 0.0
    %2904 = vmatprep.subr.mxu0 0.0
    %2905 = vmatpush2.msra.mxu0 0.0
    %2906 = vmatprep.subr.mxu0 0.0
    %2907 = vmatpush2.msra.mxu0 0.0
    %2908 = vmatprep.subr.mxu0 0.0
    %2909 = vmatpush2.msra.mxu0 0.0
    %2910 = vmatprep.mubr.f32.mxu0 0.0
    %2911 = vmatmul.mubr.f32.gmra.mxu0 %v2844
    %v2912 = vpop.f32.mrf.mxu0
    %v2913 = vadd.f32 0.0, %v2912
    %v2914 = vpop.f32.mrf.mxu0
    %v2915 = vadd.f32 0.0, %v2914
    %2916 = vdwg.mxu0
    %2917 = vmatprep.subr.mxu0 0.0
    %2918 = vmatpush1.msra.mxu0 0.0
    %2919 = vmatprep.subr.mxu0 0.0
    %2920 = vmatpush1.msra.mxu0 0.0
    %2921 = vmatprep.subr.mxu0 0.0
    %2922 = vmatpush1.msra.mxu0 0.0
    %2923 = vmatprep.subr.mxu0 0.0
    %2924 = vmatpush1.msra.mxu0 0.0
    %2925 = vmatprep.subr.mxu0 0.0
    %2926 = vmatpush1.msra.mxu0 0.0
    %2927 = vmatprep.subr.mxu0 0.0
    %2928 = vmatpush1.msra.mxu0 0.0
    %2929 = vmatprep.subr.mxu0 0.0
    %2930 = vmatpush1.msra.mxu0 0.0
    %2931 = vmatprep.subr.mxu0 0.0
    %2932 = vmatpush1.msra.mxu0 0.0
    %2933 = vmatprep.subr.mxu0 0.0
    %2934 = vmatpush1.msra.mxu0 0.0
    %2935 = vmatprep.subr.mxu0 0.0
    %2936 = vmatpush1.msra.mxu0 0.0
    %2937 = vmatprep.subr.mxu0 0.0
    %2938 = vmatpush1.msra.mxu0 0.0
    %2939 = vmatprep.subr.mxu0 0.0
    %2940 = vmatpush1.msra.mxu0 0.0
    %2941 = vmatprep.subr.mxu0 %v2842
    %2942 = vmatpush1.msra.mxu0 %v2841
    %2943 = vmatprep.subr.mxu0 %v2838
    %2944 = vmatpush1.msra.mxu0 %v2837
    %2945 = vmatprep.subr.mxu0 %v2834
    %2946 = vmatpush1.msra.mxu0 %v2833
    %2947 = vmatprep.subr.mxu0 %v2830
    %2948 = vmatpush1.msra.mxu0 %v2829
    %2949 = vmatprep.subr.mxu0 0.0
    %2950 = vmatpush2.msra.mxu0 0.0
    %2951 = vmatprep.subr.mxu0 0.0
    %2952 = vmatpush2.msra.mxu0 0.0
    %2953 = vmatprep.subr.mxu0 0.0
    %2954 = vmatpush2.msra.mxu0 0.0
    %2955 = vmatprep.subr.mxu0 0.0
    %2956 = vmatpush2.msra.mxu0 0.0
    %2957 = vmatprep.subr.mxu0 0.0
    %2958 = vmatpush2.msra.mxu0 0.0
    %2959 = vmatprep.subr.mxu0 0.0
    %2960 = vmatpush2.msra.mxu0 0.0
    %2961 = vmatprep.subr.mxu0 0.0
    %2962 = vmatpush2.msra.mxu0 0.0
    %2963 = vmatprep.subr.mxu0 0.0
    %2964 = vmatpush2.msra.mxu0 0.0
    %2965 = vmatprep.subr.mxu0 0.0
    %2966 = vmatpush2.msra.mxu0 0.0
    %2967 = vmatprep.subr.mxu0 0.0
    %2968 = vmatpush2.msra.mxu0 0.0
    %2969 = vmatprep.subr.mxu0 0.0
    %2970 = vmatpush2.msra.mxu0 0.0
    %2971 = vmatprep.subr.mxu0 0.0
    %2972 = vmatpush2.msra.mxu0 0.0
    %2973 = vmatprep.subr.mxu0 0.0
    %2974 = vmatpush2.msra.mxu0 0.0
    %2975 = vmatprep.subr.mxu0 0.0
    %2976 = vmatpush2.msra.mxu0 0.0
    %2977 = vmatprep.subr.mxu0 0.0
    %2978 = vmatpush2.msra.mxu0 0.0
    %2979 = vmatprep.subr.mxu0 0.0
    %2980 = vmatpush2.msra.mxu0 0.0
    %2981 = vmatprep.mubr.f32.mxu0 0.0
    %2982 = vmatmul.mubr.f32.gmra.mxu0 %v2844
    %v2983 = vpop.f32.mrf.mxu0
    %v2984 = vadd.f32 0.0, %v2983
    %v2985 = vpop.f32.mrf.mxu0
    %v2986 = vadd.f32 0.0, %v2985
    %2987 = vdwg.mxu0
    %v2992 = vcombine.low %v2913, %v2915
    %v2993 = vcombine.low %v2984, %v2986
    %v2995 = vunpack.c.l.s4 1966171168
    %v2996 = vunpack.c.0.s8 %v2995
    %v2997 = vlaneseq
    %v2998 = vshrl.u32 %v2997, 7
    %v2999 = vsub.s32 %v2996, %v2998
    %v3000 = vrot.slane %v2992, %v2999
    %v3002 = vunpack.c.l.s4 1966171168
    %v3003 = vunpack.c.0.s8 %v3002
    %v3004 = vlaneseq
    %v3005 = vshrl.u32 %v3004, 7
    %v3006 = vsub.s32 %v3003, %v3005
    %v3007 = vrot.slane %v2993, %v3006
    %v3008 = vcombine.low %v3000, %v3007
    %v3010 = vunpack.c.l.s4 1966171168
    %v3011 = vunpack.c.0.s8 %v3010
    %v3012 = vlaneseq
    %v3013 = vshrl.u32 %v3012, 7
    %v3014 = vsub.s32 %v3011, %v3013
    %v3015 = vrot.slane %v3008, %v3014
    %v3017 = vadd.f32 %v2826, %v3015
    %v3018 = vxor.u32 %v3017, 2147483648
    %v3019 = vmul.f32 %v3018, 1.442695
    %v3020 = vpow.pop %v3019
    %v3021 = vadd.f32 %v3020, 1.0
    %v3022 = vrcp.pop %v3021
    %v3023 = vmul.f32 1.0, %v3022
    %v3025 = vrot.slane %v3017, 3
    %v3027 = vtanh.pop %v3025
    %v3029 = vrot.slane %v3023, 1
    %v3031 = vmul.f32 %v3029, %v2081
    %v3032 = vmul.f32 %v3023, %v3027
    %v3033 = vadd.f32 %v3031, %v3032
    %v3034 = vtanh.pop %v3033
    %v3035 = vrot.slane %v3023, 2
    %v3037 = vmul.f32 %v3035, %v3034
    %v3038 = vld [vmem:[#allocation4 + $0xa0] sm:$0xff]
    %v3039 = vld [vmem:[#allocation4 + $0xa8] sm:$0xff]
    %v3040 = vld [vmem:[#allocation4 + $0xb0] sm:$0xff]
    %v3041 = vld [vmem:[#allocation4 + $0xb8] sm:$0xff]
    %v3042 = vld [vmem:[#allocation4 + $0xc0] sm:$0xff]
    %v3043 = vld [vmem:[#allocation4 + $0xc8] sm:$0xff]
    %v3044 = vld [vmem:[#allocation4 + $0xd0] sm:$0xff]
    %v3045 = vld [vmem:[#allocation4 + $0xd8] sm:$0xff]
    %v3046 = vld [vmem:[#allocation4 + $0xe0] sm:$0xff]
    %v3047 = vld [vmem:[#allocation4 + $0xe8] sm:$0xff]
    %v3048 = vld [vmem:[#allocation4 + $0xf0] sm:$0xff]
    %v3049 = vld [vmem:[#allocation4 + $0xf8] sm:$0xff]
    %v3050 = vld [vmem:[#allocation4 + $0x100] sm:$0xff]
    %v3051 = vld [vmem:[#allocation4 + $0x108] sm:$0xff]
    %v3052 = vld [vmem:[#allocation4 + $0x110] sm:$0xff]
    %v3053 = vld [vmem:[#allocation4 + $0x118] sm:$0xff]
    %v3054 = vld [vmem:[%s642] ss:$8 sm:$0xf]
    %v3056 = vlaneseq
    %v3057 = vshrl.u32 %v3056, 7
    %v3058 = vsub.s32 0, %v3057
    %v3059 = vrot.slane %v3054, %v3058
    %v3060 = vlaneseq
    %v3061 = vshrl.u32 %v3060, 7
    %v3062 = vsub.s32 1, %v3061
    %v3063 = vrot.slane %v3054, %v3062
    %v3064 = vlaneseq
    %v3065 = vshrl.u32 %v3064, 7
    %v3066 = vsub.s32 2, %v3065
    %v3067 = vrot.slane %v3054, %v3066
    %v3068 = vlaneseq
    %v3069 = vshrl.u32 %v3068, 7
    %v3070 = vsub.s32 3, %v3069
    %v3071 = vrot.slane %v3054, %v3070
    %3076 = vmatprep.subr.mxu0 0.0
    %3077 = vmatpush1.msra.mxu0 0.0
    %3078 = vmatprep.subr.mxu0 0.0
    %3079 = vmatpush1.msra.mxu0 0.0
    %3080 = vmatprep.subr.mxu0 0.0
    %3081 = vmatpush1.msra.mxu0 0.0
    %3082 = vmatprep.subr.mxu0 0.0
    %3083 = vmatpush1.msra.mxu0 0.0
    %3084 = vmatprep.subr.mxu0 0.0
    %3085 = vmatpush1.msra.mxu0 0.0
    %3086 = vmatprep.subr.mxu0 0.0
    %3087 = vmatpush1.msra.mxu0 0.0
    %3088 = vmatprep.subr.mxu0 0.0
    %3089 = vmatpush1.msra.mxu0 0.0
    %3090 = vmatprep.subr.mxu0 0.0
    %3091 = vmatpush1.msra.mxu0 0.0
    %3092 = vmatprep.subr.mxu0 0.0
    %3093 = vmatpush1.msra.mxu0 0.0
    %3094 = vmatprep.subr.mxu0 0.0
    %3095 = vmatpush1.msra.mxu0 0.0
    %3096 = vmatprep.subr.mxu0 0.0
    %3097 = vmatpush1.msra.mxu0 0.0
    %3098 = vmatprep.subr.mxu0 0.0
    %3099 = vmatpush1.msra.mxu0 0.0
    %3100 = vmatprep.subr.mxu0 %v3051
    %3101 = vmatpush1.msra.mxu0 %v3050
    %3102 = vmatprep.subr.mxu0 %v3047
    %3103 = vmatpush1.msra.mxu0 %v3046
    %3104 = vmatprep.subr.mxu0 %v3043
    %3105 = vmatpush1.msra.mxu0 %v3042
    %3106 = vmatprep.subr.mxu0 %v3039
    %3107 = vmatpush1.msra.mxu0 %v3038
    %3108 = vmatprep.subr.mxu0 0.0
    %3109 = vmatpush2.msra.mxu0 0.0
    %3110 = vmatprep.subr.mxu0 0.0
    %3111 = vmatpush2.msra.mxu0 0.0
    %3112 = vmatprep.subr.mxu0 0.0
    %3113 = vmatpush2.msra.mxu0 0.0
    %3114 = vmatprep.subr.mxu0 0.0
    %3115 = vmatpush2.msra.mxu0 0.0
    %3116 = vmatprep.subr.mxu0 0.0
    %3117 = vmatpush2.msra.mxu0 0.0
    %3118 = vmatprep.subr.mxu0 0.0
    %3119 = vmatpush2.msra.mxu0 0.0
    %3120 = vmatprep.subr.mxu0 0.0
    %3121 = vmatpush2.msra.mxu0 0.0
    %3122 = vmatprep.subr.mxu0 0.0
    %3123 = vmatpush2.msra.mxu0 0.0
    %3124 = vmatprep.subr.mxu0 0.0
    %3125 = vmatpush2.msra.mxu0 0.0
    %3126 = vmatprep.subr.mxu0 0.0
    %3127 = vmatpush2.msra.mxu0 0.0
    %3128 = vmatprep.subr.mxu0 0.0
    %3129 = vmatpush2.msra.mxu0 0.0
    %3130 = vmatprep.subr.mxu0 0.0
    %3131 = vmatpush2.msra.mxu0 0.0
    %3132 = vmatprep.subr.mxu0 0.0
    %3133 = vmatpush2.msra.mxu0 0.0
    %3134 = vmatprep.subr.mxu0 0.0
    %3135 = vmatpush2.msra.mxu0 0.0
    %3136 = vmatprep.subr.mxu0 0.0
    %3137 = vmatpush2.msra.mxu0 0.0
    %3138 = vmatprep.subr.mxu0 0.0
    %3139 = vmatpush2.msra.mxu0 0.0
    %3140 = vmatprep.mubr.f32.mxu0 0.0
    %3141 = vmatmul.mubr.f32.gmra.mxu0 %v2844
    %v3142 = vpop.f32.mrf.mxu0
    %v3143 = vadd.f32 %v3059, %v3142
    %v3144 = vpop.f32.mrf.mxu0
    %v3145 = vadd.f32 %v3063, %v3144
    %3146 = vdwg.mxu0
    %3147 = vmatprep.subr.mxu0 0.0
    %3148 = vmatpush1.msra.mxu0 0.0
    %3149 = vmatprep.subr.mxu0 0.0
    %3150 = vmatpush1.msra.mxu0 0.0
    %3151 = vmatprep.subr.mxu0 0.0
    %3152 = vmatpush1.msra.mxu0 0.0
    %3153 = vmatprep.subr.mxu0 0.0
    %3154 = vmatpush1.msra.mxu0 0.0
    %3155 = vmatprep.subr.mxu0 0.0
    %3156 = vmatpush1.msra.mxu0 0.0
    %3157 = vmatprep.subr.mxu0 0.0
    %3158 = vmatpush1.msra.mxu0 0.0
    %3159 = vmatprep.subr.mxu0 0.0
    %3160 = vmatpush1.msra.mxu0 0.0
    %3161 = vmatprep.subr.mxu0 0.0
    %3162 = vmatpush1.msra.mxu0 0.0
    %3163 = vmatprep.subr.mxu0 0.0
    %3164 = vmatpush1.msra.mxu0 0.0
    %3165 = vmatprep.subr.mxu0 0.0
    %3166 = vmatpush1.msra.mxu0 0.0
    %3167 = vmatprep.subr.mxu0 0.0
    %3168 = vmatpush1.msra.mxu0 0.0
    %3169 = vmatprep.subr.mxu0 0.0
    %3170 = vmatpush1.msra.mxu0 0.0
    %3171 = vmatprep.subr.mxu0 %v3053
    %3172 = vmatpush1.msra.mxu0 %v3052
    %3173 = vmatprep.subr.mxu0 %v3049
    %3174 = vmatpush1.msra.mxu0 %v3048
    %3175 = vmatprep.subr.mxu0 %v3045
    %3176 = vmatpush1.msra.mxu0 %v3044
    %3177 = vmatprep.subr.mxu0 %v3041
    %3178 = vmatpush1.msra.mxu0 %v3040
    %3179 = vmatprep.subr.mxu0 0.0
    %3180 = vmatpush2.msra.mxu0 0.0
    %3181 = vmatprep.subr.mxu0 0.0
    %3182 = vmatpush2.msra.mxu0 0.0
    %3183 = vmatprep.subr.mxu0 0.0
    %3184 = vmatpush2.msra.mxu0 0.0
    %3185 = vmatprep.subr.mxu0 0.0
    %3186 = vmatpush2.msra.mxu0 0.0
    %3187 = vmatprep.subr.mxu0 0.0
    %3188 = vmatpush2.msra.mxu0 0.0
    %3189 = vmatprep.subr.mxu0 0.0
    %3190 = vmatpush2.msra.mxu0 0.0
    %3191 = vmatprep.subr.mxu0 0.0
    %3192 = vmatpush2.msra.mxu0 0.0
    %3193 = vmatprep.subr.mxu0 0.0
    %3194 = vmatpush2.msra.mxu0 0.0
    %3195 = vmatprep.subr.mxu0 0.0
    %3196 = vmatpush2.msra.mxu0 0.0
    %3197 = vmatprep.subr.mxu0 0.0
    %3198 = vmatpush2.msra.mxu0 0.0
    %3199 = vmatprep.subr.mxu0 0.0
    %3200 = vmatpush2.msra.mxu0 0.0
    %3201 = vmatprep.subr.mxu0 0.0
    %3202 = vmatpush2.msra.mxu0 0.0
    %3203 = vmatprep.subr.mxu0 0.0
    %3204 = vmatpush2.msra.mxu0 0.0
    %3205 = vmatprep.subr.mxu0 0.0
    %3206 = vmatpush2.msra.mxu0 0.0
    %3207 = vmatprep.subr.mxu0 0.0
    %3208 = vmatpush2.msra.mxu0 0.0
    %3209 = vmatprep.subr.mxu0 0.0
    %3210 = vmatpush2.msra.mxu0 0.0
    %3211 = vmatprep.mubr.f32.mxu0 0.0
    %3212 = vmatmul.mubr.f32.gmra.mxu0 %v2844
    %v3213 = vpop.f32.mrf.mxu0
    %v3214 = vadd.f32 %v3067, %v3213
    %v3215 = vpop.f32.mrf.mxu0
    %v3216 = vadd.f32 %v3071, %v3215
    %3217 = vdwg.mxu0
    %v3218 = vld [vmem:[#allocation4 + $0x120] sm:$0xff]
    %v3219 = vld [vmem:[#allocation4 + $0x128] sm:$0xff]
    %v3220 = vld [vmem:[#allocation4 + $0x130] sm:$0xff]
    %v3221 = vld [vmem:[#allocation4 + $0x138] sm:$0xff]
    %v3222 = vld [vmem:[#allocation4 + $0x140] sm:$0xff]
    %v3223 = vld [vmem:[#allocation4 + $0x148] sm:$0xff]
    %v3224 = vld [vmem:[#allocation4 + $0x150] sm:$0xff]
    %v3225 = vld [vmem:[#allocation4 + $0x158] sm:$0xff]
    %v3226 = vld [vmem:[#allocation4 + $0x160] sm:$0xff]
    %v3227 = vld [vmem:[#allocation4 + $0x168] sm:$0xff]
    %v3228 = vld [vmem:[#allocation4 + $0x170] sm:$0xff]
    %v3229 = vld [vmem:[#allocation4 + $0x178] sm:$0xff]
    %v3230 = vld [vmem:[#allocation4 + $0x180] sm:$0xff]
    %v3231 = vld [vmem:[#allocation4 + $0x188] sm:$0xff]
    %v3232 = vld [vmem:[#allocation4 + $0x190] sm:$0xff]
    %v3233 = vld [vmem:[#allocation4 + $0x198] sm:$0xff]
    %v3235 = vsel %vm233, %v2454, 0
    %3237 = vmatprep.subr.mxu0 0.0
    %3238 = vmatpush1.msra.mxu0 0.0
    %3239 = vmatprep.subr.mxu0 0.0
    %3240 = vmatpush1.msra.mxu0 0.0
    %3241 = vmatprep.subr.mxu0 0.0
    %3242 = vmatpush1.msra.mxu0 0.0
    %3243 = vmatprep.subr.mxu0 0.0
    %3244 = vmatpush1.msra.mxu0 0.0
    %3245 = vmatprep.subr.mxu0 0.0
    %3246 = vmatpush1.msra.mxu0 0.0
    %3247 = vmatprep.subr.mxu0 0.0
    %3248 = vmatpush1.msra.mxu0 0.0
    %3249 = vmatprep.subr.mxu0 0.0
    %3250 = vmatpush1.msra.mxu0 0.0
    %3251 = vmatprep.subr.mxu0 0.0
    %3252 = vmatpush1.msra.mxu0 0.0
    %3253 = vmatprep.subr.mxu0 0.0
    %3254 = vmatpush1.msra.mxu0 0.0
    %3255 = vmatprep.subr.mxu0 0.0
    %3256 = vmatpush1.msra.mxu0 0.0
    %3257 = vmatprep.subr.mxu0 0.0
    %3258 = vmatpush1.msra.mxu0 0.0
    %3259 = vmatprep.subr.mxu0 0.0
    %3260 = vmatpush1.msra.mxu0 0.0
    %3261 = vmatprep.subr.mxu0 %v3231
    %3262 = vmatpush1.msra.mxu0 %v3230
    %3263 = vmatprep.subr.mxu0 %v3227
    %3264 = vmatpush1.msra.mxu0 %v3226
    %3265 = vmatprep.subr.mxu0 %v3223
    %3266 = vmatpush1.msra.mxu0 %v3222
    %3267 = vmatprep.subr.mxu0 %v3219
    %3268 = vmatpush1.msra.mxu0 %v3218
    %3269 = vmatprep.subr.mxu0 0.0
    %3270 = vmatpush2.msra.mxu0 0.0
    %3271 = vmatprep.subr.mxu0 0.0
    %3272 = vmatpush2.msra.mxu0 0.0
    %3273 = vmatprep.subr.mxu0 0.0
    %3274 = vmatpush2.msra.mxu0 0.0
    %3275 = vmatprep.subr.mxu0 0.0
    %3276 = vmatpush2.msra.mxu0 0.0
    %3277 = vmatprep.subr.mxu0 0.0
    %3278 = vmatpush2.msra.mxu0 0.0
    %3279 = vmatprep.subr.mxu0 0.0
    %3280 = vmatpush2.msra.mxu0 0.0
    %3281 = vmatprep.subr.mxu0 0.0
    %3282 = vmatpush2.msra.mxu0 0.0
    %3283 = vmatprep.subr.mxu0 0.0
    %3284 = vmatpush2.msra.mxu0 0.0
    %3285 = vmatprep.subr.mxu0 0.0
    %3286 = vmatpush2.msra.mxu0 0.0
    %3287 = vmatprep.subr.mxu0 0.0
    %3288 = vmatpush2.msra.mxu0 0.0
    %3289 = vmatprep.subr.mxu0 0.0
    %3290 = vmatpush2.msra.mxu0 0.0
    %3291 = vmatprep.subr.mxu0 0.0
    %3292 = vmatpush2.msra.mxu0 0.0
    %3293 = vmatprep.subr.mxu0 0.0
    %3294 = vmatpush2.msra.mxu0 0.0
    %3295 = vmatprep.subr.mxu0 0.0
    %3296 = vmatpush2.msra.mxu0 0.0
    %3297 = vmatprep.subr.mxu0 0.0
    %3298 = vmatpush2.msra.mxu0 0.0
    %3299 = vmatprep.subr.mxu0 0.0
    %3300 = vmatpush2.msra.mxu0 0.0
    %3301 = vmatprep.mubr.f32.mxu0 0.0
    %3302 = vmatmul.mubr.f32.gmra.mxu0 %v3235
    %v3303 = vpop.f32.mrf.mxu0
    %v3304 = vadd.f32 0.0, %v3303
    %v3305 = vpop.f32.mrf.mxu0
    %v3306 = vadd.f32 0.0, %v3305
    %3307 = vdwg.mxu0
    %3308 = vmatprep.subr.mxu0 0.0
    %3309 = vmatpush1.msra.mxu0 0.0
    %3310 = vmatprep.subr.mxu0 0.0
    %3311 = vmatpush1.msra.mxu0 0.0
    %3312 = vmatprep.subr.mxu0 0.0
    %3313 = vmatpush1.msra.mxu0 0.0
    %3314 = vmatprep.subr.mxu0 0.0
    %3315 = vmatpush1.msra.mxu0 0.0
    %3316 = vmatprep.subr.mxu0 0.0
    %3317 = vmatpush1.msra.mxu0 0.0
    %3318 = vmatprep.subr.mxu0 0.0
    %3319 = vmatpush1.msra.mxu0 0.0
    %3320 = vmatprep.subr.mxu0 0.0
    %3321 = vmatpush1.msra.mxu0 0.0
    %3322 = vmatprep.subr.mxu0 0.0
    %3323 = vmatpush1.msra.mxu0 0.0
    %3324 = vmatprep.subr.mxu0 0.0
    %3325 = vmatpush1.msra.mxu0 0.0
    %3326 = vmatprep.subr.mxu0 0.0
    %3327 = vmatpush1.msra.mxu0 0.0
    %3328 = vmatprep.subr.mxu0 0.0
    %3329 = vmatpush1.msra.mxu0 0.0
    %3330 = vmatprep.subr.mxu0 0.0
    %3331 = vmatpush1.msra.mxu0 0.0
    %3332 = vmatprep.subr.mxu0 %v3233
    %3333 = vmatpush1.msra.mxu0 %v3232
    %3334 = vmatprep.subr.mxu0 %v3229
    %3335 = vmatpush1.msra.mxu0 %v3228
    %3336 = vmatprep.subr.mxu0 %v3225
    %3337 = vmatpush1.msra.mxu0 %v3224
    %3338 = vmatprep.subr.mxu0 %v3221
    %3339 = vmatpush1.msra.mxu0 %v3220
    %3340 = vmatprep.subr.mxu0 0.0
    %3341 = vmatpush2.msra.mxu0 0.0
    %3342 = vmatprep.subr.mxu0 0.0
    %3343 = vmatpush2.msra.mxu0 0.0
    %3344 = vmatprep.subr.mxu0 0.0
    %3345 = vmatpush2.msra.mxu0 0.0
    %3346 = vmatprep.subr.mxu0 0.0
    %3347 = vmatpush2.msra.mxu0 0.0
    %3348 = vmatprep.subr.mxu0 0.0
    %3349 = vmatpush2.msra.mxu0 0.0
    %3350 = vmatprep.subr.mxu0 0.0
    %3351 = vmatpush2.msra.mxu0 0.0
    %3352 = vmatprep.subr.mxu0 0.0
    %3353 = vmatpush2.msra.mxu0 0.0
    %3354 = vmatprep.subr.mxu0 0.0
    %3355 = vmatpush2.msra.mxu0 0.0
    %3356 = vmatprep.subr.mxu0 0.0
    %3357 = vmatpush2.msra.mxu0 0.0
    %3358 = vmatprep.subr.mxu0 0.0
    %3359 = vmatpush2.msra.mxu0 0.0
    %3360 = vmatprep.subr.mxu0 0.0
    %3361 = vmatpush2.msra.mxu0 0.0
    %3362 = vmatprep.subr.mxu0 0.0
    %3363 = vmatpush2.msra.mxu0 0.0
    %3364 = vmatprep.subr.mxu0 0.0
    %3365 = vmatpush2.msra.mxu0 0.0
    %3366 = vmatprep.subr.mxu0 0.0
    %3367 = vmatpush2.msra.mxu0 0.0
    %3368 = vmatprep.subr.mxu0 0.0
    %3369 = vmatpush2.msra.mxu0 0.0
    %3370 = vmatprep.subr.mxu0 0.0
    %3371 = vmatpush2.msra.mxu0 0.0
    %3372 = vmatprep.mubr.f32.mxu0 0.0
    %3373 = vmatmul.mubr.f32.gmra.mxu0 %v3235
    %v3374 = vpop.f32.mrf.mxu0
    %v3375 = vadd.f32 0.0, %v3374
    %v3376 = vpop.f32.mrf.mxu0
    %v3377 = vadd.f32 0.0, %v3376
    %3378 = vdwg.mxu0
    %v3379 = vadd.f32 %v3143, %v3304
    %v3380 = vadd.f32 %v3145, %v3306
    %v3381 = vadd.f32 %v3214, %v3375
    %v3382 = vadd.f32 %v3216, %v3377
    %v3383 = vxor.u32 %v3379, 2147483648
    %v3384 = vxor.u32 %v3380, 2147483648
    %v3385 = vxor.u32 %v3381, 2147483648
    %v3386 = vmul.f32 %v3383, 1.442695
    %v3387 = vpow.pop %v3386
    %v3388 = vmul.f32 %v3384, 1.442695
    %v3389 = vpow.pop %v3388
    %v3390 = vmul.f32 %v3385, 1.442695
    %v3391 = vpow.pop %v3390
    %v3392 = vadd.f32 %v3387, 1.0
    %v3393 = vadd.f32 %v3389, 1.0
    %v3394 = vadd.f32 %v3391, 1.0
    %v3395 = vrcp.pop %v3392
    %v3396 = vmul.f32 1.0, %v3395
    %v3397 = vrcp.pop %v3393
    %v3398 = vmul.f32 1.0, %v3397
    %v3399 = vrcp.pop %v3394
    %v3400 = vmul.f32 1.0, %v3399
    %v3401 = vtanh.pop %v3382
    %v3402 = vmul.f32 %v3398, %v2452
    %v3403 = vmul.f32 %v3396, %v3401
    %v3404 = vadd.f32 %v3402, %v3403
    %v3405 = vtanh.pop %v3404
    %v3406 = vmul.f32 %v3400, %v3405
    %v3407 = vld [vmem:[#allocation4 + $0x1a0] sm:$0xff]
    %v3408 = vld [vmem:[#allocation4 + $0x1a8] sm:$0xff]
    %v3409 = vld [vmem:[#allocation4 + $0x1b0] sm:$0xff]
    %v3410 = vld [vmem:[#allocation4 + $0x1b8] sm:$0xff]
    %v3411 = vld [vmem:[#allocation4 + $0x1c0] sm:$0xff]
    %v3412 = vld [vmem:[#allocation4 + $0x1c8] sm:$0xff]
    %v3413 = vld [vmem:[#allocation4 + $0x1d0] sm:$0xff]
    %v3414 = vld [vmem:[#allocation4 + $0x1d8] sm:$0xff]
    %v3415 = vld [vmem:[#allocation4 + $0x1e0] sm:$0xff]
    %v3416 = vld [vmem:[#allocation4 + $0x1e8] sm:$0xff]
    %v3417 = vld [vmem:[#allocation4 + $0x1f0] sm:$0xff]
    %v3418 = vld [vmem:[#allocation4 + $0x1f8] sm:$0xff]
    %v3419 = vld [vmem:[#allocation4 + $0x200] sm:$0xff]
    %v3420 = vld [vmem:[#allocation4 + $0x208] sm:$0xff]
    %v3421 = vld [vmem:[#allocation4 + $0x210] sm:$0xff]
    %v3422 = vld [vmem:[#allocation4 + $0x218] sm:$0xff]
    %v3423 = vld [vmem:[%s1521] ss:$8 sm:$0xf]
    %v3425 = vlaneseq
    %v3426 = vshrl.u32 %v3425, 7
    %v3427 = vsub.s32 0, %v3426
    %v3428 = vrot.slane %v3423, %v3427
    %v3429 = vlaneseq
    %v3430 = vshrl.u32 %v3429, 7
    %v3431 = vsub.s32 1, %v3430
    %v3432 = vrot.slane %v3423, %v3431
    %v3433 = vlaneseq
    %v3434 = vshrl.u32 %v3433, 7
    %v3435 = vsub.s32 2, %v3434
    %v3436 = vrot.slane %v3423, %v3435
    %v3437 = vlaneseq
    %v3438 = vshrl.u32 %v3437, 7
    %v3439 = vsub.s32 3, %v3438
    %v3440 = vrot.slane %v3423, %v3439
    %3445 = vmatprep.subr.mxu0 0.0
    %3446 = vmatpush1.msra.mxu0 0.0
    %3447 = vmatprep.subr.mxu0 0.0
    %3448 = vmatpush1.msra.mxu0 0.0
    %3449 = vmatprep.subr.mxu0 0.0
    %3450 = vmatpush1.msra.mxu0 0.0
    %3451 = vmatprep.subr.mxu0 0.0
    %3452 = vmatpush1.msra.mxu0 0.0
    %3453 = vmatprep.subr.mxu0 0.0
    %3454 = vmatpush1.msra.mxu0 0.0
    %3455 = vmatprep.subr.mxu0 0.0
    %3456 = vmatpush1.msra.mxu0 0.0
    %3457 = vmatprep.subr.mxu0 0.0
    %3458 = vmatpush1.msra.mxu0 0.0
    %3459 = vmatprep.subr.mxu0 0.0
    %3460 = vmatpush1.msra.mxu0 0.0
    %3461 = vmatprep.subr.mxu0 0.0
    %3462 = vmatpush1.msra.mxu0 0.0
    %3463 = vmatprep.subr.mxu0 0.0
    %3464 = vmatpush1.msra.mxu0 0.0
    %3465 = vmatprep.subr.mxu0 0.0
    %3466 = vmatpush1.msra.mxu0 0.0
    %3467 = vmatprep.subr.mxu0 0.0
    %3468 = vmatpush1.msra.mxu0 0.0
    %3469 = vmatprep.subr.mxu0 %v3420
    %3470 = vmatpush1.msra.mxu0 %v3419
    %3471 = vmatprep.subr.mxu0 %v3416
    %3472 = vmatpush1.msra.mxu0 %v3415
    %3473 = vmatprep.subr.mxu0 %v3412
    %3474 = vmatpush1.msra.mxu0 %v3411
    %3475 = vmatprep.subr.mxu0 %v3408
    %3476 = vmatpush1.msra.mxu0 %v3407
    %3477 = vmatprep.subr.mxu0 0.0
    %3478 = vmatpush2.msra.mxu0 0.0
    %3479 = vmatprep.subr.mxu0 0.0
    %3480 = vmatpush2.msra.mxu0 0.0
    %3481 = vmatprep.subr.mxu0 0.0
    %3482 = vmatpush2.msra.mxu0 0.0
    %3483 = vmatprep.subr.mxu0 0.0
    %3484 = vmatpush2.msra.mxu0 0.0
    %3485 = vmatprep.subr.mxu0 0.0
    %3486 = vmatpush2.msra.mxu0 0.0
    %3487 = vmatprep.subr.mxu0 0.0
    %3488 = vmatpush2.msra.mxu0 0.0
    %3489 = vmatprep.subr.mxu0 0.0
    %3490 = vmatpush2.msra.mxu0 0.0
    %3491 = vmatprep.subr.mxu0 0.0
    %3492 = vmatpush2.msra.mxu0 0.0
    %3493 = vmatprep.subr.mxu0 0.0
    %3494 = vmatpush2.msra.mxu0 0.0
    %3495 = vmatprep.subr.mxu0 0.0
    %3496 = vmatpush2.msra.mxu0 0.0
    %3497 = vmatprep.subr.mxu0 0.0
    %3498 = vmatpush2.msra.mxu0 0.0
    %3499 = vmatprep.subr.mxu0 0.0
    %3500 = vmatpush2.msra.mxu0 0.0
    %3501 = vmatprep.subr.mxu0 0.0
    %3502 = vmatpush2.msra.mxu0 0.0
    %3503 = vmatprep.subr.mxu0 0.0
    %3504 = vmatpush2.msra.mxu0 0.0
    %3505 = vmatprep.subr.mxu0 0.0
    %3506 = vmatpush2.msra.mxu0 0.0
    %3507 = vmatprep.subr.mxu0 0.0
    %3508 = vmatpush2.msra.mxu0 0.0
    %3509 = vmatprep.mubr.f32.mxu0 0.0
    %3510 = vmatmul.mubr.f32.gmra.mxu0 %v3235
    %v3511 = vpop.f32.mrf.mxu0
    %v3512 = vadd.f32 %v3428, %v3511
    %v3513 = vpop.f32.mrf.mxu0
    %v3514 = vadd.f32 %v3432, %v3513
    %3515 = vdwg.mxu0
    %3516 = vmatprep.subr.mxu0 0.0
    %3517 = vmatpush1.msra.mxu0 0.0
    %3518 = vmatprep.subr.mxu0 0.0
    %3519 = vmatpush1.msra.mxu0 0.0
    %3520 = vmatprep.subr.mxu0 0.0
    %3521 = vmatpush1.msra.mxu0 0.0
    %3522 = vmatprep.subr.mxu0 0.0
    %3523 = vmatpush1.msra.mxu0 0.0
    %3524 = vmatprep.subr.mxu0 0.0
    %3525 = vmatpush1.msra.mxu0 0.0
    %3526 = vmatprep.subr.mxu0 0.0
    %3527 = vmatpush1.msra.mxu0 0.0
    %3528 = vmatprep.subr.mxu0 0.0
    %3529 = vmatpush1.msra.mxu0 0.0
    %3530 = vmatprep.subr.mxu0 0.0
    %3531 = vmatpush1.msra.mxu0 0.0
    %3532 = vmatprep.subr.mxu0 0.0
    %3533 = vmatpush1.msra.mxu0 0.0
    %3534 = vmatprep.subr.mxu0 0.0
    %3535 = vmatpush1.msra.mxu0 0.0
    %3536 = vmatprep.subr.mxu0 0.0
    %3537 = vmatpush1.msra.mxu0 0.0
    %3538 = vmatprep.subr.mxu0 0.0
    %3539 = vmatpush1.msra.mxu0 0.0
    %3540 = vmatprep.subr.mxu0 %v3422
    %3541 = vmatpush1.msra.mxu0 %v3421
    %3542 = vmatprep.subr.mxu0 %v3418
    %3543 = vmatpush1.msra.mxu0 %v3417
    %3544 = vmatprep.subr.mxu0 %v3414
    %3545 = vmatpush1.msra.mxu0 %v3413
    %3546 = vmatprep.subr.mxu0 %v3410
    %3547 = vmatpush1.msra.mxu0 %v3409
    %3548 = vmatprep.subr.mxu0 0.0
    %3549 = vmatpush2.msra.mxu0 0.0
    %3550 = vmatprep.subr.mxu0 0.0
    %3551 = vmatpush2.msra.mxu0 0.0
    %3552 = vmatprep.subr.mxu0 0.0
    %3553 = vmatpush2.msra.mxu0 0.0
    %3554 = vmatprep.subr.mxu0 0.0
    %3555 = vmatpush2.msra.mxu0 0.0
    %3556 = vmatprep.subr.mxu0 0.0
    %3557 = vmatpush2.msra.mxu0 0.0
    %3558 = vmatprep.subr.mxu0 0.0
    %3559 = vmatpush2.msra.mxu0 0.0
    %3560 = vmatprep.subr.mxu0 0.0
    %3561 = vmatpush2.msra.mxu0 0.0
    %3562 = vmatprep.subr.mxu0 0.0
    %3563 = vmatpush2.msra.mxu0 0.0
    %3564 = vmatprep.subr.mxu0 0.0
    %3565 = vmatpush2.msra.mxu0 0.0
    %3566 = vmatprep.subr.mxu0 0.0
    %3567 = vmatpush2.msra.mxu0 0.0
    %3568 = vmatprep.subr.mxu0 0.0
    %3569 = vmatpush2.msra.mxu0 0.0
    %3570 = vmatprep.subr.mxu0 0.0
    %3571 = vmatpush2.msra.mxu0 0.0
    %3572 = vmatprep.subr.mxu0 0.0
    %3573 = vmatpush2.msra.mxu0 0.0
    %3574 = vmatprep.subr.mxu0 0.0
    %3575 = vmatpush2.msra.mxu0 0.0
    %3576 = vmatprep.subr.mxu0 0.0
    %3577 = vmatpush2.msra.mxu0 0.0
    %3578 = vmatprep.subr.mxu0 0.0
    %3579 = vmatpush2.msra.mxu0 0.0
    %3580 = vmatprep.mubr.f32.mxu0 0.0
    %3581 = vmatmul.mubr.f32.gmra.mxu0 %v3235
    %v3582 = vpop.f32.mrf.mxu0
    %v3583 = vadd.f32 %v3436, %v3582
    %v3584 = vpop.f32.mrf.mxu0
    %v3585 = vadd.f32 %v3440, %v3584
    %3586 = vdwg.mxu0
    %v3587 = vld [vmem:[#allocation4 + $0x220] sm:$0xff]
    %v3588 = vld [vmem:[#allocation4 + $0x228] sm:$0xff]
    %v3589 = vld [vmem:[#allocation4 + $0x230] sm:$0xff]
    %v3590 = vld [vmem:[#allocation4 + $0x238] sm:$0xff]
    %v3591 = vld [vmem:[#allocation4 + $0x240] sm:$0xff]
    %v3592 = vld [vmem:[#allocation4 + $0x248] sm:$0xff]
    %v3593 = vld [vmem:[#allocation4 + $0x250] sm:$0xff]
    %v3594 = vld [vmem:[#allocation4 + $0x258] sm:$0xff]
    %v3595 = vld [vmem:[#allocation4 + $0x260] sm:$0xff]
    %v3596 = vld [vmem:[#allocation4 + $0x268] sm:$0xff]
    %v3597 = vld [vmem:[#allocation4 + $0x270] sm:$0xff]
    %v3598 = vld [vmem:[#allocation4 + $0x278] sm:$0xff]
    %v3599 = vld [vmem:[#allocation4 + $0x280] sm:$0xff]
    %v3600 = vld [vmem:[#allocation4 + $0x288] sm:$0xff]
    %v3601 = vld [vmem:[#allocation4 + $0x290] sm:$0xff]
    %v3602 = vld [vmem:[#allocation4 + $0x298] sm:$0xff]
    %v3604 = vsel %vm233, %v2823, 0
    %3606 = vmatprep.subr.mxu0 0.0
    %3607 = vmatpush1.msra.mxu0 0.0
    %3608 = vmatprep.subr.mxu0 0.0
    %3609 = vmatpush1.msra.mxu0 0.0
    %3610 = vmatprep.subr.mxu0 0.0
    %3611 = vmatpush1.msra.mxu0 0.0
    %3612 = vmatprep.subr.mxu0 0.0
    %3613 = vmatpush1.msra.mxu0 0.0
    %3614 = vmatprep.subr.mxu0 0.0
    %3615 = vmatpush1.msra.mxu0 0.0
    %3616 = vmatprep.subr.mxu0 0.0
    %3617 = vmatpush1.msra.mxu0 0.0
    %3618 = vmatprep.subr.mxu0 0.0
    %3619 = vmatpush1.msra.mxu0 0.0
    %3620 = vmatprep.subr.mxu0 0.0
    %3621 = vmatpush1.msra.mxu0 0.0
    %3622 = vmatprep.subr.mxu0 0.0
    %3623 = vmatpush1.msra.mxu0 0.0
    %3624 = vmatprep.subr.mxu0 0.0
    %3625 = vmatpush1.msra.mxu0 0.0
    %3626 = vmatprep.subr.mxu0 0.0
    %3627 = vmatpush1.msra.mxu0 0.0
    %3628 = vmatprep.subr.mxu0 0.0
    %3629 = vmatpush1.msra.mxu0 0.0
    %3630 = vmatprep.subr.mxu0 %v3600
    %3631 = vmatpush1.msra.mxu0 %v3599
    %3632 = vmatprep.subr.mxu0 %v3596
    %3633 = vmatpush1.msra.mxu0 %v3595
    %3634 = vmatprep.subr.mxu0 %v3592
    %3635 = vmatpush1.msra.mxu0 %v3591
    %3636 = vmatprep.subr.mxu0 %v3588
    %3637 = vmatpush1.msra.mxu0 %v3587
    %3638 = vmatprep.subr.mxu0 0.0
    %3639 = vmatpush2.msra.mxu0 0.0
    %3640 = vmatprep.subr.mxu0 0.0
    %3641 = vmatpush2.msra.mxu0 0.0
    %3642 = vmatprep.subr.mxu0 0.0
    %3643 = vmatpush2.msra.mxu0 0.0
    %3644 = vmatprep.subr.mxu0 0.0
    %3645 = vmatpush2.msra.mxu0 0.0
    %3646 = vmatprep.subr.mxu0 0.0
    %3647 = vmatpush2.msra.mxu0 0.0
    %3648 = vmatprep.subr.mxu0 0.0
    %3649 = vmatpush2.msra.mxu0 0.0
    %3650 = vmatprep.subr.mxu0 0.0
    %3651 = vmatpush2.msra.mxu0 0.0
    %3652 = vmatprep.subr.mxu0 0.0
    %3653 = vmatpush2.msra.mxu0 0.0
    %3654 = vmatprep.subr.mxu0 0.0
    %3655 = vmatpush2.msra.mxu0 0.0
    %3656 = vmatprep.subr.mxu0 0.0
    %3657 = vmatpush2.msra.mxu0 0.0
    %3658 = vmatprep.subr.mxu0 0.0
    %3659 = vmatpush2.msra.mxu0 0.0
    %3660 = vmatprep.subr.mxu0 0.0
    %3661 = vmatpush2.msra.mxu0 0.0
    %3662 = vmatprep.subr.mxu0 0.0
    %3663 = vmatpush2.msra.mxu0 0.0
    %3664 = vmatprep.subr.mxu0 0.0
    %3665 = vmatpush2.msra.mxu0 0.0
    %3666 = vmatprep.subr.mxu0 0.0
    %3667 = vmatpush2.msra.mxu0 0.0
    %3668 = vmatprep.subr.mxu0 0.0
    %3669 = vmatpush2.msra.mxu0 0.0
    %3670 = vmatprep.mubr.f32.mxu0 0.0
    %3671 = vmatmul.mubr.f32.gmra.mxu0 %v3604
    %v3672 = vpop.f32.mrf.mxu0
    %v3673 = vadd.f32 0.0, %v3672
    %v3674 = vpop.f32.mrf.mxu0
    %v3675 = vadd.f32 0.0, %v3674
    %3676 = vdwg.mxu0
    %3677 = vmatprep.subr.mxu0 0.0
    %3678 = vmatpush1.msra.mxu0 0.0
    %3679 = vmatprep.subr.mxu0 0.0
    %3680 = vmatpush1.msra.mxu0 0.0
    %3681 = vmatprep.subr.mxu0 0.0
    %3682 = vmatpush1.msra.mxu0 0.0
    %3683 = vmatprep.subr.mxu0 0.0
    %3684 = vmatpush1.msra.mxu0 0.0
    %3685 = vmatprep.subr.mxu0 0.0
    %3686 = vmatpush1.msra.mxu0 0.0
    %3687 = vmatprep.subr.mxu0 0.0
    %3688 = vmatpush1.msra.mxu0 0.0
    %3689 = vmatprep.subr.mxu0 0.0
    %3690 = vmatpush1.msra.mxu0 0.0
    %3691 = vmatprep.subr.mxu0 0.0
    %3692 = vmatpush1.msra.mxu0 0.0
    %3693 = vmatprep.subr.mxu0 0.0
    %3694 = vmatpush1.msra.mxu0 0.0
    %3695 = vmatprep.subr.mxu0 0.0
    %3696 = vmatpush1.msra.mxu0 0.0
    %3697 = vmatprep.subr.mxu0 0.0
    %3698 = vmatpush1.msra.mxu0 0.0
    %3699 = vmatprep.subr.mxu0 0.0
    %3700 = vmatpush1.msra.mxu0 0.0
    %3701 = vmatprep.subr.mxu0 %v3602
    %3702 = vmatpush1.msra.mxu0 %v3601
    %3703 = vmatprep.subr.mxu0 %v3598
    %3704 = vmatpush1.msra.mxu0 %v3597
    %3705 = vmatprep.subr.mxu0 %v3594
    %3706 = vmatpush1.msra.mxu0 %v3593
    %3707 = vmatprep.subr.mxu0 %v3590
    %3708 = vmatpush1.msra.mxu0 %v3589
    %3709 = vmatprep.subr.mxu0 0.0
    %3710 = vmatpush2.msra.mxu0 0.0
    %3711 = vmatprep.subr.mxu0 0.0
    %3712 = vmatpush2.msra.mxu0 0.0
    %3713 = vmatprep.subr.mxu0 0.0
    %3714 = vmatpush2.msra.mxu0 0.0
    %3715 = vmatprep.subr.mxu0 0.0
    %3716 = vmatpush2.msra.mxu0 0.0
    %3717 = vmatprep.subr.mxu0 0.0
    %3718 = vmatpush2.msra.mxu0 0.0
    %3719 = vmatprep.subr.mxu0 0.0
    %3720 = vmatpush2.msra.mxu0 0.0
    %3721 = vmatprep.subr.mxu0 0.0
    %3722 = vmatpush2.msra.mxu0 0.0
    %3723 = vmatprep.subr.mxu0 0.0
    %3724 = vmatpush2.msra.mxu0 0.0
    %3725 = vmatprep.subr.mxu0 0.0
    %3726 = vmatpush2.msra.mxu0 0.0
    %3727 = vmatprep.subr.mxu0 0.0
    %3728 = vmatpush2.msra.mxu0 0.0
    %3729 = vmatprep.subr.mxu0 0.0
    %3730 = vmatpush2.msra.mxu0 0.0
    %3731 = vmatprep.subr.mxu0 0.0
    %3732 = vmatpush2.msra.mxu0 0.0
    %3733 = vmatprep.subr.mxu0 0.0
    %3734 = vmatpush2.msra.mxu0 0.0
    %3735 = vmatprep.subr.mxu0 0.0
    %3736 = vmatpush2.msra.mxu0 0.0
    %3737 = vmatprep.subr.mxu0 0.0
    %3738 = vmatpush2.msra.mxu0 0.0
    %3739 = vmatprep.subr.mxu0 0.0
    %3740 = vmatpush2.msra.mxu0 0.0
    %3741 = vmatprep.mubr.f32.mxu0 0.0
    %3742 = vmatmul.mubr.f32.gmra.mxu0 %v3604
    %v3743 = vpop.f32.mrf.mxu0
    %v3744 = vadd.f32 0.0, %v3743
    %v3745 = vpop.f32.mrf.mxu0
    %v3746 = vadd.f32 0.0, %v3745
    %3747 = vdwg.mxu0
    %v3748 = vadd.f32 %v3512, %v3673
    %v3749 = vadd.f32 %v3514, %v3675
    %v3750 = vadd.f32 %v3583, %v3744
    %v3751 = vadd.f32 %v3585, %v3746
    %v3752 = vxor.u32 %v3748, 2147483648
    %v3753 = vxor.u32 %v3749, 2147483648
    %v3754 = vxor.u32 %v3750, 2147483648
    %v3755 = vmul.f32 %v3752, 1.442695
    %v3756 = vpow.pop %v3755
    %v3757 = vmul.f32 %v3753, 1.442695
    %v3758 = vpow.pop %v3757
    %v3759 = vmul.f32 %v3754, 1.442695
    %v3760 = vpow.pop %v3759
    %v3761 = vadd.f32 %v3756, 1.0
    %v3762 = vadd.f32 %v3758, 1.0
    %v3763 = vadd.f32 %v3760, 1.0
    %v3764 = vrcp.pop %v3761
    %v3765 = vmul.f32 1.0, %v3764
    %v3766 = vrcp.pop %v3762
    %v3767 = vmul.f32 1.0, %v3766
    %v3768 = vrcp.pop %v3763
    %v3769 = vmul.f32 1.0, %v3768
    %v3770 = vtanh.pop %v3751
    %v3771 = vmul.f32 %v3767, %v2821
    %v3772 = vmul.f32 %v3765, %v3770
    %v3773 = vadd.f32 %v3771, %v3772
    %v3774 = vtanh.pop %v3773
    %v3775 = vmul.f32 %v3769, %v3774
    %3776 = vst [vmem:[#allocation3 + $0x2] sm:$0x1] %v3775
    %s3777 = scalar_lea.vmem [#allocation2], 5
    %v3778 = vld [vmem:[%s3777] ss:$8 sm:$0xf]
    %v3779 = vld [vmem:[#allocation4 + $0x20] sm:$0xff]
    %v3780 = vld [vmem:[#allocation4 + $0x28] sm:$0xff]
    %v3781 = vld [vmem:[#allocation4 + $0x30] sm:$0xff]
    %v3782 = vld [vmem:[#allocation4 + $0x38] sm:$0xff]
    %v3783 = vld [vmem:[#allocation4 + $0x40] sm:$0xff]
    %v3784 = vld [vmem:[#allocation4 + $0x48] sm:$0xff]
    %v3785 = vld [vmem:[#allocation4 + $0x50] sm:$0xff]
    %v3786 = vld [vmem:[#allocation4 + $0x58] sm:$0xff]
    %v3787 = vld [vmem:[#allocation4 + $0x60] sm:$0xff]
    %v3788 = vld [vmem:[#allocation4 + $0x68] sm:$0xff]
    %v3789 = vld [vmem:[#allocation4 + $0x70] sm:$0xff]
    %v3790 = vld [vmem:[#allocation4 + $0x78] sm:$0xff]
    %v3791 = vld [vmem:[#allocation4 + $0x80] sm:$0xff]
    %v3792 = vld [vmem:[#allocation4 + $0x88] sm:$0xff]
    %v3793 = vld [vmem:[#allocation4 + $0x90] sm:$0xff]
    %v3794 = vld [vmem:[#allocation4 + $0x98] sm:$0xff]
    %v3796 = vsel %vm233, %v3037, 0
    %3798 = vmatprep.subr.mxu0 0.0
    %3799 = vmatpush1.msra.mxu0 0.0
    %3800 = vmatprep.subr.mxu0 0.0
    %3801 = vmatpush1.msra.mxu0 0.0
    %3802 = vmatprep.subr.mxu0 0.0
    %3803 = vmatpush1.msra.mxu0 0.0
    %3804 = vmatprep.subr.mxu0 0.0
    %3805 = vmatpush1.msra.mxu0 0.0
    %3806 = vmatprep.subr.mxu0 0.0
    %3807 = vmatpush1.msra.mxu0 0.0
    %3808 = vmatprep.subr.mxu0 0.0
    %3809 = vmatpush1.msra.mxu0 0.0
    %3810 = vmatprep.subr.mxu0 0.0
    %3811 = vmatpush1.msra.mxu0 0.0
    %3812 = vmatprep.subr.mxu0 0.0
    %3813 = vmatpush1.msra.mxu0 0.0
    %3814 = vmatprep.subr.mxu0 0.0
    %3815 = vmatpush1.msra.mxu0 0.0
    %3816 = vmatprep.subr.mxu0 0.0
    %3817 = vmatpush1.msra.mxu0 0.0
    %3818 = vmatprep.subr.mxu0 0.0
    %3819 = vmatpush1.msra.mxu0 0.0
    %3820 = vmatprep.subr.mxu0 0.0
    %3821 = vmatpush1.msra.mxu0 0.0
    %3822 = vmatprep.subr.mxu0 %v3792
    %3823 = vmatpush1.msra.mxu0 %v3791
    %3824 = vmatprep.subr.mxu0 %v3788
    %3825 = vmatpush1.msra.mxu0 %v3787
    %3826 = vmatprep.subr.mxu0 %v3784
    %3827 = vmatpush1.msra.mxu0 %v3783
    %3828 = vmatprep.subr.mxu0 %v3780
    %3829 = vmatpush1.msra.mxu0 %v3779
    %3830 = vmatprep.subr.mxu0 0.0
    %3831 = vmatpush2.msra.mxu0 0.0
    %3832 = vmatprep.subr.mxu0 0.0
    %3833 = vmatpush2.msra.mxu0 0.0
    %3834 = vmatprep.subr.mxu0 0.0
    %3835 = vmatpush2.msra.mxu0 0.0
    %3836 = vmatprep.subr.mxu0 0.0
    %3837 = vmatpush2.msra.mxu0 0.0
    %3838 = vmatprep.subr.mxu0 0.0
    %3839 = vmatpush2.msra.mxu0 0.0
    %3840 = vmatprep.subr.mxu0 0.0
    %3841 = vmatpush2.msra.mxu0 0.0
    %3842 = vmatprep.subr.mxu0 0.0
    %3843 = vmatpush2.msra.mxu0 0.0
    %3844 = vmatprep.subr.mxu0 0.0
    %3845 = vmatpush2.msra.mxu0 0.0
    %3846 = vmatprep.subr.mxu0 0.0
    %3847 = vmatpush2.msra.mxu0 0.0
    %3848 = vmatprep.subr.mxu0 0.0
    %3849 = vmatpush2.msra.mxu0 0.0
    %3850 = vmatprep.subr.mxu0 0.0
    %3851 = vmatpush2.msra.mxu0 0.0
    %3852 = vmatprep.subr.mxu0 0.0
    %3853 = vmatpush2.msra.mxu0 0.0
    %3854 = vmatprep.subr.mxu0 0.0
    %3855 = vmatpush2.msra.mxu0 0.0
    %3856 = vmatprep.subr.mxu0 0.0
    %3857 = vmatpush2.msra.mxu0 0.0
    %3858 = vmatprep.subr.mxu0 0.0
    %3859 = vmatpush2.msra.mxu0 0.0
    %3860 = vmatprep.subr.mxu0 0.0
    %3861 = vmatpush2.msra.mxu0 0.0
    %3862 = vmatprep.mubr.f32.mxu0 0.0
    %3863 = vmatmul.mubr.f32.gmra.mxu0 %v3796
    %v3864 = vpop.f32.mrf.mxu0
    %v3865 = vadd.f32 0.0, %v3864
    %v3866 = vpop.f32.mrf.mxu0
    %v3867 = vadd.f32 0.0, %v3866
    %3868 = vdwg.mxu0
    %3869 = vmatprep.subr.mxu0 0.0
    %3870 = vmatpush1.msra.mxu0 0.0
    %3871 = vmatprep.subr.mxu0 0.0
    %3872 = vmatpush1.msra.mxu0 0.0
    %3873 = vmatprep.subr.mxu0 0.0
    %3874 = vmatpush1.msra.mxu0 0.0
    %3875 = vmatprep.subr.mxu0 0.0
    %3876 = vmatpush1.msra.mxu0 0.0
    %3877 = vmatprep.subr.mxu0 0.0
    %3878 = vmatpush1.msra.mxu0 0.0
    %3879 = vmatprep.subr.mxu0 0.0
    %3880 = vmatpush1.msra.mxu0 0.0
    %3881 = vmatprep.subr.mxu0 0.0
    %3882 = vmatpush1.msra.mxu0 0.0
    %3883 = vmatprep.subr.mxu0 0.0
    %3884 = vmatpush1.msra.mxu0 0.0
    %3885 = vmatprep.subr.mxu0 0.0
    %3886 = vmatpush1.msra.mxu0 0.0
    %3887 = vmatprep.subr.mxu0 0.0
    %3888 = vmatpush1.msra.mxu0 0.0
    %3889 = vmatprep.subr.mxu0 0.0
    %3890 = vmatpush1.msra.mxu0 0.0
    %3891 = vmatprep.subr.mxu0 0.0
    %3892 = vmatpush1.msra.mxu0 0.0
    %3893 = vmatprep.subr.mxu0 %v3794
    %3894 = vmatpush1.msra.mxu0 %v3793
    %3895 = vmatprep.subr.mxu0 %v3790
    %3896 = vmatpush1.msra.mxu0 %v3789
    %3897 = vmatprep.subr.mxu0 %v3786
    %3898 = vmatpush1.msra.mxu0 %v3785
    %3899 = vmatprep.subr.mxu0 %v3782
    %3900 = vmatpush1.msra.mxu0 %v3781
    %3901 = vmatprep.subr.mxu0 0.0
    %3902 = vmatpush2.msra.mxu0 0.0
    %3903 = vmatprep.subr.mxu0 0.0
    %3904 = vmatpush2.msra.mxu0 0.0
    %3905 = vmatprep.subr.mxu0 0.0
    %3906 = vmatpush2.msra.mxu0 0.0
    %3907 = vmatprep.subr.mxu0 0.0
    %3908 = vmatpush2.msra.mxu0 0.0
    %3909 = vmatprep.subr.mxu0 0.0
    %3910 = vmatpush2.msra.mxu0 0.0
    %3911 = vmatprep.subr.mxu0 0.0
    %3912 = vmatpush2.msra.mxu0 0.0
    %3913 = vmatprep.subr.mxu0 0.0
    %3914 = vmatpush2.msra.mxu0 0.0
    %3915 = vmatprep.subr.mxu0 0.0
    %3916 = vmatpush2.msra.mxu0 0.0
    %3917 = vmatprep.subr.mxu0 0.0
    %3918 = vmatpush2.msra.mxu0 0.0
    %3919 = vmatprep.subr.mxu0 0.0
    %3920 = vmatpush2.msra.mxu0 0.0
    %3921 = vmatprep.subr.mxu0 0.0
    %3922 = vmatpush2.msra.mxu0 0.0
    %3923 = vmatprep.subr.mxu0 0.0
    %3924 = vmatpush2.msra.mxu0 0.0
    %3925 = vmatprep.subr.mxu0 0.0
    %3926 = vmatpush2.msra.mxu0 0.0
    %3927 = vmatprep.subr.mxu0 0.0
    %3928 = vmatpush2.msra.mxu0 0.0
    %3929 = vmatprep.subr.mxu0 0.0
    %3930 = vmatpush2.msra.mxu0 0.0
    %3931 = vmatprep.subr.mxu0 0.0
    %3932 = vmatpush2.msra.mxu0 0.0
    %3933 = vmatprep.mubr.f32.mxu0 0.0
    %3934 = vmatmul.mubr.f32.gmra.mxu0 %v3796
    %v3935 = vpop.f32.mrf.mxu0
    %v3936 = vadd.f32 0.0, %v3935
    %v3937 = vpop.f32.mrf.mxu0
    %v3938 = vadd.f32 0.0, %v3937
    %3939 = vdwg.mxu0
    %v3944 = vcombine.low %v3865, %v3867
    %v3945 = vcombine.low %v3936, %v3938
    %v3947 = vunpack.c.l.s4 1966171168
    %v3948 = vunpack.c.0.s8 %v3947
    %v3949 = vlaneseq
    %v3950 = vshrl.u32 %v3949, 7
    %v3951 = vsub.s32 %v3948, %v3950
    %v3952 = vrot.slane %v3944, %v3951
    %v3954 = vunpack.c.l.s4 1966171168
    %v3955 = vunpack.c.0.s8 %v3954
    %v3956 = vlaneseq
    %v3957 = vshrl.u32 %v3956, 7
    %v3958 = vsub.s32 %v3955, %v3957
    %v3959 = vrot.slane %v3945, %v3958
    %v3960 = vcombine.low %v3952, %v3959
    %v3962 = vunpack.c.l.s4 1966171168
    %v3963 = vunpack.c.0.s8 %v3962
    %v3964 = vlaneseq
    %v3965 = vshrl.u32 %v3964, 7
    %v3966 = vsub.s32 %v3963, %v3965
    %v3967 = vrot.slane %v3960, %v3966
    %v3969 = vadd.f32 %v3778, %v3967
    %v3970 = vxor.u32 %v3969, 2147483648
    %v3971 = vmul.f32 %v3970, 1.442695
    %v3972 = vpow.pop %v3971
    %v3973 = vadd.f32 %v3972, 1.0
    %v3974 = vrcp.pop %v3973
    %v3975 = vmul.f32 1.0, %v3974
    %v3977 = vrot.slane %v3969, 3
    %v3979 = vtanh.pop %v3977
    %v3981 = vrot.slane %v3975, 1
    %v3983 = vmul.f32 %v3981, %v3033
    %v3984 = vmul.f32 %v3975, %v3979
    %v3985 = vadd.f32 %v3983, %v3984
    %v3986 = vtanh.pop %v3985
    %v3987 = vrot.slane %v3975, 2
    %v3989 = vmul.f32 %v3987, %v3986
    %v3990 = vld [vmem:[#allocation4 + $0xa0] sm:$0xff]
    %v3991 = vld [vmem:[#allocation4 + $0xa8] sm:$0xff]
    %v3992 = vld [vmem:[#allocation4 + $0xb0] sm:$0xff]
    %v3993 = vld [vmem:[#allocation4 + $0xb8] sm:$0xff]
    %v3994 = vld [vmem:[#allocation4 + $0xc0] sm:$0xff]
    %v3995 = vld [vmem:[#allocation4 + $0xc8] sm:$0xff]
    %v3996 = vld [vmem:[#allocation4 + $0xd0] sm:$0xff]
    %v3997 = vld [vmem:[#allocation4 + $0xd8] sm:$0xff]
    %v3998 = vld [vmem:[#allocation4 + $0xe0] sm:$0xff]
    %v3999 = vld [vmem:[#allocation4 + $0xe8] sm:$0xff]
    %v4000 = vld [vmem:[#allocation4 + $0xf0] sm:$0xff]
    %v4001 = vld [vmem:[#allocation4 + $0xf8] sm:$0xff]
    %v4002 = vld [vmem:[#allocation4 + $0x100] sm:$0xff]
    %v4003 = vld [vmem:[#allocation4 + $0x108] sm:$0xff]
    %v4004 = vld [vmem:[#allocation4 + $0x110] sm:$0xff]
    %v4005 = vld [vmem:[#allocation4 + $0x118] sm:$0xff]
    %v4006 = vld [vmem:[%s642] ss:$8 sm:$0xf]
    %v4008 = vlaneseq
    %v4009 = vshrl.u32 %v4008, 7
    %v4010 = vsub.s32 0, %v4009
    %v4011 = vrot.slane %v4006, %v4010
    %v4012 = vlaneseq
    %v4013 = vshrl.u32 %v4012, 7
    %v4014 = vsub.s32 1, %v4013
    %v4015 = vrot.slane %v4006, %v4014
    %v4016 = vlaneseq
    %v4017 = vshrl.u32 %v4016, 7
    %v4018 = vsub.s32 2, %v4017
    %v4019 = vrot.slane %v4006, %v4018
    %v4020 = vlaneseq
    %v4021 = vshrl.u32 %v4020, 7
    %v4022 = vsub.s32 3, %v4021
    %v4023 = vrot.slane %v4006, %v4022
    %4028 = vmatprep.subr.mxu0 0.0
    %4029 = vmatpush1.msra.mxu0 0.0
    %4030 = vmatprep.subr.mxu0 0.0
    %4031 = vmatpush1.msra.mxu0 0.0
    %4032 = vmatprep.subr.mxu0 0.0
    %4033 = vmatpush1.msra.mxu0 0.0
    %4034 = vmatprep.subr.mxu0 0.0
    %4035 = vmatpush1.msra.mxu0 0.0
    %4036 = vmatprep.subr.mxu0 0.0
    %4037 = vmatpush1.msra.mxu0 0.0
    %4038 = vmatprep.subr.mxu0 0.0
    %4039 = vmatpush1.msra.mxu0 0.0
    %4040 = vmatprep.subr.mxu0 0.0
    %4041 = vmatpush1.msra.mxu0 0.0
    %4042 = vmatprep.subr.mxu0 0.0
    %4043 = vmatpush1.msra.mxu0 0.0
    %4044 = vmatprep.subr.mxu0 0.0
    %4045 = vmatpush1.msra.mxu0 0.0
    %4046 = vmatprep.subr.mxu0 0.0
    %4047 = vmatpush1.msra.mxu0 0.0
    %4048 = vmatprep.subr.mxu0 0.0
    %4049 = vmatpush1.msra.mxu0 0.0
    %4050 = vmatprep.subr.mxu0 0.0
    %4051 = vmatpush1.msra.mxu0 0.0
    %4052 = vmatprep.subr.mxu0 %v4003
    %4053 = vmatpush1.msra.mxu0 %v4002
    %4054 = vmatprep.subr.mxu0 %v3999
    %4055 = vmatpush1.msra.mxu0 %v3998
    %4056 = vmatprep.subr.mxu0 %v3995
    %4057 = vmatpush1.msra.mxu0 %v3994
    %4058 = vmatprep.subr.mxu0 %v3991
    %4059 = vmatpush1.msra.mxu0 %v3990
    %4060 = vmatprep.subr.mxu0 0.0
    %4061 = vmatpush2.msra.mxu0 0.0
    %4062 = vmatprep.subr.mxu0 0.0
    %4063 = vmatpush2.msra.mxu0 0.0
    %4064 = vmatprep.subr.mxu0 0.0
    %4065 = vmatpush2.msra.mxu0 0.0
    %4066 = vmatprep.subr.mxu0 0.0
    %4067 = vmatpush2.msra.mxu0 0.0
    %4068 = vmatprep.subr.mxu0 0.0
    %4069 = vmatpush2.msra.mxu0 0.0
    %4070 = vmatprep.subr.mxu0 0.0
    %4071 = vmatpush2.msra.mxu0 0.0
    %4072 = vmatprep.subr.mxu0 0.0
    %4073 = vmatpush2.msra.mxu0 0.0
    %4074 = vmatprep.subr.mxu0 0.0
    %4075 = vmatpush2.msra.mxu0 0.0
    %4076 = vmatprep.subr.mxu0 0.0
    %4077 = vmatpush2.msra.mxu0 0.0
    %4078 = vmatprep.subr.mxu0 0.0
    %4079 = vmatpush2.msra.mxu0 0.0
    %4080 = vmatprep.subr.mxu0 0.0
    %4081 = vmatpush2.msra.mxu0 0.0
    %4082 = vmatprep.subr.mxu0 0.0
    %4083 = vmatpush2.msra.mxu0 0.0
    %4084 = vmatprep.subr.mxu0 0.0
    %4085 = vmatpush2.msra.mxu0 0.0
    %4086 = vmatprep.subr.mxu0 0.0
    %4087 = vmatpush2.msra.mxu0 0.0
    %4088 = vmatprep.subr.mxu0 0.0
    %4089 = vmatpush2.msra.mxu0 0.0
    %4090 = vmatprep.subr.mxu0 0.0
    %4091 = vmatpush2.msra.mxu0 0.0
    %4092 = vmatprep.mubr.f32.mxu0 0.0
    %4093 = vmatmul.mubr.f32.gmra.mxu0 %v3796
    %v4094 = vpop.f32.mrf.mxu0
    %v4095 = vadd.f32 %v4011, %v4094
    %v4096 = vpop.f32.mrf.mxu0
    %v4097 = vadd.f32 %v4015, %v4096
    %4098 = vdwg.mxu0
    %4099 = vmatprep.subr.mxu0 0.0
    %4100 = vmatpush1.msra.mxu0 0.0
    %4101 = vmatprep.subr.mxu0 0.0
    %4102 = vmatpush1.msra.mxu0 0.0
    %4103 = vmatprep.subr.mxu0 0.0
    %4104 = vmatpush1.msra.mxu0 0.0
    %4105 = vmatprep.subr.mxu0 0.0
    %4106 = vmatpush1.msra.mxu0 0.0
    %4107 = vmatprep.subr.mxu0 0.0
    %4108 = vmatpush1.msra.mxu0 0.0
    %4109 = vmatprep.subr.mxu0 0.0
    %4110 = vmatpush1.msra.mxu0 0.0
    %4111 = vmatprep.subr.mxu0 0.0
    %4112 = vmatpush1.msra.mxu0 0.0
    %4113 = vmatprep.subr.mxu0 0.0
    %4114 = vmatpush1.msra.mxu0 0.0
    %4115 = vmatprep.subr.mxu0 0.0
    %4116 = vmatpush1.msra.mxu0 0.0
    %4117 = vmatprep.subr.mxu0 0.0
    %4118 = vmatpush1.msra.mxu0 0.0
    %4119 = vmatprep.subr.mxu0 0.0
    %4120 = vmatpush1.msra.mxu0 0.0
    %4121 = vmatprep.subr.mxu0 0.0
    %4122 = vmatpush1.msra.mxu0 0.0
    %4123 = vmatprep.subr.mxu0 %v4005
    %4124 = vmatpush1.msra.mxu0 %v4004
    %4125 = vmatprep.subr.mxu0 %v4001
    %4126 = vmatpush1.msra.mxu0 %v4000
    %4127 = vmatprep.subr.mxu0 %v3997
    %4128 = vmatpush1.msra.mxu0 %v3996
    %4129 = vmatprep.subr.mxu0 %v3993
    %4130 = vmatpush1.msra.mxu0 %v3992
    %4131 = vmatprep.subr.mxu0 0.0
    %4132 = vmatpush2.msra.mxu0 0.0
    %4133 = vmatprep.subr.mxu0 0.0
    %4134 = vmatpush2.msra.mxu0 0.0
    %4135 = vmatprep.subr.mxu0 0.0
    %4136 = vmatpush2.msra.mxu0 0.0
    %4137 = vmatprep.subr.mxu0 0.0
    %4138 = vmatpush2.msra.mxu0 0.0
    %4139 = vmatprep.subr.mxu0 0.0
    %4140 = vmatpush2.msra.mxu0 0.0
    %4141 = vmatprep.subr.mxu0 0.0
    %4142 = vmatpush2.msra.mxu0 0.0
    %4143 = vmatprep.subr.mxu0 0.0
    %4144 = vmatpush2.msra.mxu0 0.0
    %4145 = vmatprep.subr.mxu0 0.0
    %4146 = vmatpush2.msra.mxu0 0.0
    %4147 = vmatprep.subr.mxu0 0.0
    %4148 = vmatpush2.msra.mxu0 0.0
    %4149 = vmatprep.subr.mxu0 0.0
    %4150 = vmatpush2.msra.mxu0 0.0
    %4151 = vmatprep.subr.mxu0 0.0
    %4152 = vmatpush2.msra.mxu0 0.0
    %4153 = vmatprep.subr.mxu0 0.0
    %4154 = vmatpush2.msra.mxu0 0.0
    %4155 = vmatprep.subr.mxu0 0.0
    %4156 = vmatpush2.msra.mxu0 0.0
    %4157 = vmatprep.subr.mxu0 0.0
    %4158 = vmatpush2.msra.mxu0 0.0
    %4159 = vmatprep.subr.mxu0 0.0
    %4160 = vmatpush2.msra.mxu0 0.0
    %4161 = vmatprep.subr.mxu0 0.0
    %4162 = vmatpush2.msra.mxu0 0.0
    %4163 = vmatprep.mubr.f32.mxu0 0.0
    %4164 = vmatmul.mubr.f32.gmra.mxu0 %v3796
    %v4165 = vpop.f32.mrf.mxu0
    %v4166 = vadd.f32 %v4019, %v4165
    %v4167 = vpop.f32.mrf.mxu0
    %v4168 = vadd.f32 %v4023, %v4167
    %4169 = vdwg.mxu0
    %v4170 = vld [vmem:[#allocation4 + $0x120] sm:$0xff]
    %v4171 = vld [vmem:[#allocation4 + $0x128] sm:$0xff]
    %v4172 = vld [vmem:[#allocation4 + $0x130] sm:$0xff]
    %v4173 = vld [vmem:[#allocation4 + $0x138] sm:$0xff]
    %v4174 = vld [vmem:[#allocation4 + $0x140] sm:$0xff]
    %v4175 = vld [vmem:[#allocation4 + $0x148] sm:$0xff]
    %v4176 = vld [vmem:[#allocation4 + $0x150] sm:$0xff]
    %v4177 = vld [vmem:[#allocation4 + $0x158] sm:$0xff]
    %v4178 = vld [vmem:[#allocation4 + $0x160] sm:$0xff]
    %v4179 = vld [vmem:[#allocation4 + $0x168] sm:$0xff]
    %v4180 = vld [vmem:[#allocation4 + $0x170] sm:$0xff]
    %v4181 = vld [vmem:[#allocation4 + $0x178] sm:$0xff]
    %v4182 = vld [vmem:[#allocation4 + $0x180] sm:$0xff]
    %v4183 = vld [vmem:[#allocation4 + $0x188] sm:$0xff]
    %v4184 = vld [vmem:[#allocation4 + $0x190] sm:$0xff]
    %v4185 = vld [vmem:[#allocation4 + $0x198] sm:$0xff]
    %v4187 = vsel %vm233, %v3406, 0
    %4189 = vmatprep.subr.mxu0 0.0
    %4190 = vmatpush1.msra.mxu0 0.0
    %4191 = vmatprep.subr.mxu0 0.0
    %4192 = vmatpush1.msra.mxu0 0.0
    %4193 = vmatprep.subr.mxu0 0.0
    %4194 = vmatpush1.msra.mxu0 0.0
    %4195 = vmatprep.subr.mxu0 0.0
    %4196 = vmatpush1.msra.mxu0 0.0
    %4197 = vmatprep.subr.mxu0 0.0
    %4198 = vmatpush1.msra.mxu0 0.0
    %4199 = vmatprep.subr.mxu0 0.0
    %4200 = vmatpush1.msra.mxu0 0.0
    %4201 = vmatprep.subr.mxu0 0.0
    %4202 = vmatpush1.msra.mxu0 0.0
    %4203 = vmatprep.subr.mxu0 0.0
    %4204 = vmatpush1.msra.mxu0 0.0
    %4205 = vmatprep.subr.mxu0 0.0
    %4206 = vmatpush1.msra.mxu0 0.0
    %4207 = vmatprep.subr.mxu0 0.0
    %4208 = vmatpush1.msra.mxu0 0.0
    %4209 = vmatprep.subr.mxu0 0.0
    %4210 = vmatpush1.msra.mxu0 0.0
    %4211 = vmatprep.subr.mxu0 0.0
    %4212 = vmatpush1.msra.mxu0 0.0
    %4213 = vmatprep.subr.mxu0 %v4183
    %4214 = vmatpush1.msra.mxu0 %v4182
    %4215 = vmatprep.subr.mxu0 %v4179
    %4216 = vmatpush1.msra.mxu0 %v4178
    %4217 = vmatprep.subr.mxu0 %v4175
    %4218 = vmatpush1.msra.mxu0 %v4174
    %4219 = vmatprep.subr.mxu0 %v4171
    %4220 = vmatpush1.msra.mxu0 %v4170
    %4221 = vmatprep.subr.mxu0 0.0
    %4222 = vmatpush2.msra.mxu0 0.0
    %4223 = vmatprep.subr.mxu0 0.0
    %4224 = vmatpush2.msra.mxu0 0.0
    %4225 = vmatprep.subr.mxu0 0.0
    %4226 = vmatpush2.msra.mxu0 0.0
    %4227 = vmatprep.subr.mxu0 0.0
    %4228 = vmatpush2.msra.mxu0 0.0
    %4229 = vmatprep.subr.mxu0 0.0
    %4230 = vmatpush2.msra.mxu0 0.0
    %4231 = vmatprep.subr.mxu0 0.0
    %4232 = vmatpush2.msra.mxu0 0.0
    %4233 = vmatprep.subr.mxu0 0.0
    %4234 = vmatpush2.msra.mxu0 0.0
    %4235 = vmatprep.subr.mxu0 0.0
    %4236 = vmatpush2.msra.mxu0 0.0
    %4237 = vmatprep.subr.mxu0 0.0
    %4238 = vmatpush2.msra.mxu0 0.0
    %4239 = vmatprep.subr.mxu0 0.0
    %4240 = vmatpush2.msra.mxu0 0.0
    %4241 = vmatprep.subr.mxu0 0.0
    %4242 = vmatpush2.msra.mxu0 0.0
    %4243 = vmatprep.subr.mxu0 0.0
    %4244 = vmatpush2.msra.mxu0 0.0
    %4245 = vmatprep.subr.mxu0 0.0
    %4246 = vmatpush2.msra.mxu0 0.0
    %4247 = vmatprep.subr.mxu0 0.0
    %4248 = vmatpush2.msra.mxu0 0.0
    %4249 = vmatprep.subr.mxu0 0.0
    %4250 = vmatpush2.msra.mxu0 0.0
    %4251 = vmatprep.subr.mxu0 0.0
    %4252 = vmatpush2.msra.mxu0 0.0
    %4253 = vmatprep.mubr.f32.mxu0 0.0
    %4254 = vmatmul.mubr.f32.gmra.mxu0 %v4187
    %v4255 = vpop.f32.mrf.mxu0
    %v4256 = vadd.f32 0.0, %v4255
    %v4257 = vpop.f32.mrf.mxu0
    %v4258 = vadd.f32 0.0, %v4257
    %4259 = vdwg.mxu0
    %4260 = vmatprep.subr.mxu0 0.0
    %4261 = vmatpush1.msra.mxu0 0.0
    %4262 = vmatprep.subr.mxu0 0.0
    %4263 = vmatpush1.msra.mxu0 0.0
    %4264 = vmatprep.subr.mxu0 0.0
    %4265 = vmatpush1.msra.mxu0 0.0
    %4266 = vmatprep.subr.mxu0 0.0
    %4267 = vmatpush1.msra.mxu0 0.0
    %4268 = vmatprep.subr.mxu0 0.0
    %4269 = vmatpush1.msra.mxu0 0.0
    %4270 = vmatprep.subr.mxu0 0.0
    %4271 = vmatpush1.msra.mxu0 0.0
    %4272 = vmatprep.subr.mxu0 0.0
    %4273 = vmatpush1.msra.mxu0 0.0
    %4274 = vmatprep.subr.mxu0 0.0
    %4275 = vmatpush1.msra.mxu0 0.0
    %4276 = vmatprep.subr.mxu0 0.0
    %4277 = vmatpush1.msra.mxu0 0.0
    %4278 = vmatprep.subr.mxu0 0.0
    %4279 = vmatpush1.msra.mxu0 0.0
    %4280 = vmatprep.subr.mxu0 0.0
    %4281 = vmatpush1.msra.mxu0 0.0
    %4282 = vmatprep.subr.mxu0 0.0
    %4283 = vmatpush1.msra.mxu0 0.0
    %4284 = vmatprep.subr.mxu0 %v4185
    %4285 = vmatpush1.msra.mxu0 %v4184
    %4286 = vmatprep.subr.mxu0 %v4181
    %4287 = vmatpush1.msra.mxu0 %v4180
    %4288 = vmatprep.subr.mxu0 %v4177
    %4289 = vmatpush1.msra.mxu0 %v4176
    %4290 = vmatprep.subr.mxu0 %v4173
    %4291 = vmatpush1.msra.mxu0 %v4172
    %4292 = vmatprep.subr.mxu0 0.0
    %4293 = vmatpush2.msra.mxu0 0.0
    %4294 = vmatprep.subr.mxu0 0.0
    %4295 = vmatpush2.msra.mxu0 0.0
    %4296 = vmatprep.subr.mxu0 0.0
    %4297 = vmatpush2.msra.mxu0 0.0
    %4298 = vmatprep.subr.mxu0 0.0
    %4299 = vmatpush2.msra.mxu0 0.0
    %4300 = vmatprep.subr.mxu0 0.0
    %4301 = vmatpush2.msra.mxu0 0.0
    %4302 = vmatprep.subr.mxu0 0.0
    %4303 = vmatpush2.msra.mxu0 0.0
    %4304 = vmatprep.subr.mxu0 0.0
    %4305 = vmatpush2.msra.mxu0 0.0
    %4306 = vmatprep.subr.mxu0 0.0
    %4307 = vmatpush2.msra.mxu0 0.0
    %4308 = vmatprep.subr.mxu0 0.0
    %4309 = vmatpush2.msra.mxu0 0.0
    %4310 = vmatprep.subr.mxu0 0.0
    %4311 = vmatpush2.msra.mxu0 0.0
    %4312 = vmatprep.subr.mxu0 0.0
    %4313 = vmatpush2.msra.mxu0 0.0
    %4314 = vmatprep.subr.mxu0 0.0
    %4315 = vmatpush2.msra.mxu0 0.0
    %4316 = vmatprep.subr.mxu0 0.0
    %4317 = vmatpush2.msra.mxu0 0.0
    %4318 = vmatprep.subr.mxu0 0.0
    %4319 = vmatpush2.msra.mxu0 0.0
    %4320 = vmatprep.subr.mxu0 0.0
    %4321 = vmatpush2.msra.mxu0 0.0
    %4322 = vmatprep.subr.mxu0 0.0
    %4323 = vmatpush2.msra.mxu0 0.0
    %4324 = vmatprep.mubr.f32.mxu0 0.0
    %4325 = vmatmul.mubr.f32.gmra.mxu0 %v4187
    %v4326 = vpop.f32.mrf.mxu0
    %v4327 = vadd.f32 0.0, %v4326
    %v4328 = vpop.f32.mrf.mxu0
    %v4329 = vadd.f32 0.0, %v4328
    %4330 = vdwg.mxu0
    %v4331 = vadd.f32 %v4095, %v4256
    %v4332 = vadd.f32 %v4097, %v4258
    %v4333 = vadd.f32 %v4166, %v4327
    %v4334 = vadd.f32 %v4168, %v4329
    %v4335 = vxor.u32 %v4331, 2147483648
    %v4336 = vxor.u32 %v4332, 2147483648
    %v4337 = vxor.u32 %v4333, 2147483648
    %v4338 = vmul.f32 %v4335, 1.442695
    %v4339 = vpow.pop %v4338
    %v4340 = vmul.f32 %v4336, 1.442695
    %v4341 = vpow.pop %v4340
    %v4342 = vmul.f32 %v4337, 1.442695
    %v4343 = vpow.pop %v4342
    %v4344 = vadd.f32 %v4339, 1.0
    %v4345 = vadd.f32 %v4341, 1.0
    %v4346 = vadd.f32 %v4343, 1.0
    %v4347 = vrcp.pop %v4344
    %v4348 = vmul.f32 1.0, %v4347
    %v4349 = vrcp.pop %v4345
    %v4350 = vmul.f32 1.0, %v4349
    %v4351 = vrcp.pop %v4346
    %v4352 = vmul.f32 1.0, %v4351
    %v4353 = vtanh.pop %v4334
    %v4354 = vmul.f32 %v4350, %v3404
    %v4355 = vmul.f32 %v4348, %v4353
    %v4356 = vadd.f32 %v4354, %v4355
    %v4357 = vtanh.pop %v4356
    %v4358 = vmul.f32 %v4352, %v4357
    %v4359 = vld [vmem:[#allocation4 + $0x1a0] sm:$0xff]
    %v4360 = vld [vmem:[#allocation4 + $0x1a8] sm:$0xff]
    %v4361 = vld [vmem:[#allocation4 + $0x1b0] sm:$0xff]
    %v4362 = vld [vmem:[#allocation4 + $0x1b8] sm:$0xff]
    %v4363 = vld [vmem:[#allocation4 + $0x1c0] sm:$0xff]
    %v4364 = vld [vmem:[#allocation4 + $0x1c8] sm:$0xff]
    %v4365 = vld [vmem:[#allocation4 + $0x1d0] sm:$0xff]
    %v4366 = vld [vmem:[#allocation4 + $0x1d8] sm:$0xff]
    %v4367 = vld [vmem:[#allocation4 + $0x1e0] sm:$0xff]
    %v4368 = vld [vmem:[#allocation4 + $0x1e8] sm:$0xff]
    %v4369 = vld [vmem:[#allocation4 + $0x1f0] sm:$0xff]
    %v4370 = vld [vmem:[#allocation4 + $0x1f8] sm:$0xff]
    %v4371 = vld [vmem:[#allocation4 + $0x200] sm:$0xff]
    %v4372 = vld [vmem:[#allocation4 + $0x208] sm:$0xff]
    %v4373 = vld [vmem:[#allocation4 + $0x210] sm:$0xff]
    %v4374 = vld [vmem:[#allocation4 + $0x218] sm:$0xff]
    %v4375 = vld [vmem:[%s1521] ss:$8 sm:$0xf]
    %v4377 = vlaneseq
    %v4378 = vshrl.u32 %v4377, 7
    %v4379 = vsub.s32 0, %v4378
    %v4380 = vrot.slane %v4375, %v4379
    %v4381 = vlaneseq
    %v4382 = vshrl.u32 %v4381, 7
    %v4383 = vsub.s32 1, %v4382
    %v4384 = vrot.slane %v4375, %v4383
    %v4385 = vlaneseq
    %v4386 = vshrl.u32 %v4385, 7
    %v4387 = vsub.s32 2, %v4386
    %v4388 = vrot.slane %v4375, %v4387
    %v4389 = vlaneseq
    %v4390 = vshrl.u32 %v4389, 7
    %v4391 = vsub.s32 3, %v4390
    %v4392 = vrot.slane %v4375, %v4391
    %4397 = vmatprep.subr.mxu0 0.0
    %4398 = vmatpush1.msra.mxu0 0.0
    %4399 = vmatprep.subr.mxu0 0.0
    %4400 = vmatpush1.msra.mxu0 0.0
    %4401 = vmatprep.subr.mxu0 0.0
    %4402 = vmatpush1.msra.mxu0 0.0
    %4403 = vmatprep.subr.mxu0 0.0
    %4404 = vmatpush1.msra.mxu0 0.0
    %4405 = vmatprep.subr.mxu0 0.0
    %4406 = vmatpush1.msra.mxu0 0.0
    %4407 = vmatprep.subr.mxu0 0.0
    %4408 = vmatpush1.msra.mxu0 0.0
    %4409 = vmatprep.subr.mxu0 0.0
    %4410 = vmatpush1.msra.mxu0 0.0
    %4411 = vmatprep.subr.mxu0 0.0
    %4412 = vmatpush1.msra.mxu0 0.0
    %4413 = vmatprep.subr.mxu0 0.0
    %4414 = vmatpush1.msra.mxu0 0.0
    %4415 = vmatprep.subr.mxu0 0.0
    %4416 = vmatpush1.msra.mxu0 0.0
    %4417 = vmatprep.subr.mxu0 0.0
    %4418 = vmatpush1.msra.mxu0 0.0
    %4419 = vmatprep.subr.mxu0 0.0
    %4420 = vmatpush1.msra.mxu0 0.0
    %4421 = vmatprep.subr.mxu0 %v4372
    %4422 = vmatpush1.msra.mxu0 %v4371
    %4423 = vmatprep.subr.mxu0 %v4368
    %4424 = vmatpush1.msra.mxu0 %v4367
    %4425 = vmatprep.subr.mxu0 %v4364
    %4426 = vmatpush1.msra.mxu0 %v4363
    %4427 = vmatprep.subr.mxu0 %v4360
    %4428 = vmatpush1.msra.mxu0 %v4359
    %4429 = vmatprep.subr.mxu0 0.0
    %4430 = vmatpush2.msra.mxu0 0.0
    %4431 = vmatprep.subr.mxu0 0.0
    %4432 = vmatpush2.msra.mxu0 0.0
    %4433 = vmatprep.subr.mxu0 0.0
    %4434 = vmatpush2.msra.mxu0 0.0
    %4435 = vmatprep.subr.mxu0 0.0
    %4436 = vmatpush2.msra.mxu0 0.0
    %4437 = vmatprep.subr.mxu0 0.0
    %4438 = vmatpush2.msra.mxu0 0.0
    %4439 = vmatprep.subr.mxu0 0.0
    %4440 = vmatpush2.msra.mxu0 0.0
    %4441 = vmatprep.subr.mxu0 0.0
    %4442 = vmatpush2.msra.mxu0 0.0
    %4443 = vmatprep.subr.mxu0 0.0
    %4444 = vmatpush2.msra.mxu0 0.0
    %4445 = vmatprep.subr.mxu0 0.0
    %4446 = vmatpush2.msra.mxu0 0.0
    %4447 = vmatprep.subr.mxu0 0.0
    %4448 = vmatpush2.msra.mxu0 0.0
    %4449 = vmatprep.subr.mxu0 0.0
    %4450 = vmatpush2.msra.mxu0 0.0
    %4451 = vmatprep.subr.mxu0 0.0
    %4452 = vmatpush2.msra.mxu0 0.0
    %4453 = vmatprep.subr.mxu0 0.0
    %4454 = vmatpush2.msra.mxu0 0.0
    %4455 = vmatprep.subr.mxu0 0.0
    %4456 = vmatpush2.msra.mxu0 0.0
    %4457 = vmatprep.subr.mxu0 0.0
    %4458 = vmatpush2.msra.mxu0 0.0
    %4459 = vmatprep.subr.mxu0 0.0
    %4460 = vmatpush2.msra.mxu0 0.0
    %4461 = vmatprep.mubr.f32.mxu0 0.0
    %4462 = vmatmul.mubr.f32.gmra.mxu0 %v4187
    %v4463 = vpop.f32.mrf.mxu0
    %v4464 = vadd.f32 %v4380, %v4463
    %v4465 = vpop.f32.mrf.mxu0
    %v4466 = vadd.f32 %v4384, %v4465
    %4467 = vdwg.mxu0
    %4468 = vmatprep.subr.mxu0 0.0
    %4469 = vmatpush1.msra.mxu0 0.0
    %4470 = vmatprep.subr.mxu0 0.0
    %4471 = vmatpush1.msra.mxu0 0.0
    %4472 = vmatprep.subr.mxu0 0.0
    %4473 = vmatpush1.msra.mxu0 0.0
    %4474 = vmatprep.subr.mxu0 0.0
    %4475 = vmatpush1.msra.mxu0 0.0
    %4476 = vmatprep.subr.mxu0 0.0
    %4477 = vmatpush1.msra.mxu0 0.0
    %4478 = vmatprep.subr.mxu0 0.0
    %4479 = vmatpush1.msra.mxu0 0.0
    %4480 = vmatprep.subr.mxu0 0.0
    %4481 = vmatpush1.msra.mxu0 0.0
    %4482 = vmatprep.subr.mxu0 0.0
    %4483 = vmatpush1.msra.mxu0 0.0
    %4484 = vmatprep.subr.mxu0 0.0
    %4485 = vmatpush1.msra.mxu0 0.0
    %4486 = vmatprep.subr.mxu0 0.0
    %4487 = vmatpush1.msra.mxu0 0.0
    %4488 = vmatprep.subr.mxu0 0.0
    %4489 = vmatpush1.msra.mxu0 0.0
    %4490 = vmatprep.subr.mxu0 0.0
    %4491 = vmatpush1.msra.mxu0 0.0
    %4492 = vmatprep.subr.mxu0 %v4374
    %4493 = vmatpush1.msra.mxu0 %v4373
    %4494 = vmatprep.subr.mxu0 %v4370
    %4495 = vmatpush1.msra.mxu0 %v4369
    %4496 = vmatprep.subr.mxu0 %v4366
    %4497 = vmatpush1.msra.mxu0 %v4365
    %4498 = vmatprep.subr.mxu0 %v4362
    %4499 = vmatpush1.msra.mxu0 %v4361
    %4500 = vmatprep.subr.mxu0 0.0
    %4501 = vmatpush2.msra.mxu0 0.0
    %4502 = vmatprep.subr.mxu0 0.0
    %4503 = vmatpush2.msra.mxu0 0.0
    %4504 = vmatprep.subr.mxu0 0.0
    %4505 = vmatpush2.msra.mxu0 0.0
    %4506 = vmatprep.subr.mxu0 0.0
    %4507 = vmatpush2.msra.mxu0 0.0
    %4508 = vmatprep.subr.mxu0 0.0
    %4509 = vmatpush2.msra.mxu0 0.0
    %4510 = vmatprep.subr.mxu0 0.0
    %4511 = vmatpush2.msra.mxu0 0.0
    %4512 = vmatprep.subr.mxu0 0.0
    %4513 = vmatpush2.msra.mxu0 0.0
    %4514 = vmatprep.subr.mxu0 0.0
    %4515 = vmatpush2.msra.mxu0 0.0
    %4516 = vmatprep.subr.mxu0 0.0
    %4517 = vmatpush2.msra.mxu0 0.0
    %4518 = vmatprep.subr.mxu0 0.0
    %4519 = vmatpush2.msra.mxu0 0.0
    %4520 = vmatprep.subr.mxu0 0.0
    %4521 = vmatpush2.msra.mxu0 0.0
    %4522 = vmatprep.subr.mxu0 0.0
    %4523 = vmatpush2.msra.mxu0 0.0
    %4524 = vmatprep.subr.mxu0 0.0
    %4525 = vmatpush2.msra.mxu0 0.0
    %4526 = vmatprep.subr.mxu0 0.0
    %4527 = vmatpush2.msra.mxu0 0.0
    %4528 = vmatprep.subr.mxu0 0.0
    %4529 = vmatpush2.msra.mxu0 0.0
    %4530 = vmatprep.subr.mxu0 0.0
    %4531 = vmatpush2.msra.mxu0 0.0
    %4532 = vmatprep.mubr.f32.mxu0 0.0
    %4533 = vmatmul.mubr.f32.gmra.mxu0 %v4187
    %v4534 = vpop.f32.mrf.mxu0
    %v4535 = vadd.f32 %v4388, %v4534
    %v4536 = vpop.f32.mrf.mxu0
    %v4537 = vadd.f32 %v4392, %v4536
    %4538 = vdwg.mxu0
    %v4539 = vld [vmem:[#allocation4 + $0x220] sm:$0xff]
    %v4540 = vld [vmem:[#allocation4 + $0x228] sm:$0xff]
    %v4541 = vld [vmem:[#allocation4 + $0x230] sm:$0xff]
    %v4542 = vld [vmem:[#allocation4 + $0x238] sm:$0xff]
    %v4543 = vld [vmem:[#allocation4 + $0x240] sm:$0xff]
    %v4544 = vld [vmem:[#allocation4 + $0x248] sm:$0xff]
    %v4545 = vld [vmem:[#allocation4 + $0x250] sm:$0xff]
    %v4546 = vld [vmem:[#allocation4 + $0x258] sm:$0xff]
    %v4547 = vld [vmem:[#allocation4 + $0x260] sm:$0xff]
    %v4548 = vld [vmem:[#allocation4 + $0x268] sm:$0xff]
    %v4549 = vld [vmem:[#allocation4 + $0x270] sm:$0xff]
    %v4550 = vld [vmem:[#allocation4 + $0x278] sm:$0xff]
    %v4551 = vld [vmem:[#allocation4 + $0x280] sm:$0xff]
    %v4552 = vld [vmem:[#allocation4 + $0x288] sm:$0xff]
    %v4553 = vld [vmem:[#allocation4 + $0x290] sm:$0xff]
    %v4554 = vld [vmem:[#allocation4 + $0x298] sm:$0xff]
    %v4556 = vsel %vm233, %v3775, 0
    %4558 = vmatprep.subr.mxu0 0.0
    %4559 = vmatpush1.msra.mxu0 0.0
    %4560 = vmatprep.subr.mxu0 0.0
    %4561 = vmatpush1.msra.mxu0 0.0
    %4562 = vmatprep.subr.mxu0 0.0
    %4563 = vmatpush1.msra.mxu0 0.0
    %4564 = vmatprep.subr.mxu0 0.0
    %4565 = vmatpush1.msra.mxu0 0.0
    %4566 = vmatprep.subr.mxu0 0.0
    %4567 = vmatpush1.msra.mxu0 0.0
    %4568 = vmatprep.subr.mxu0 0.0
    %4569 = vmatpush1.msra.mxu0 0.0
    %4570 = vmatprep.subr.mxu0 0.0
    %4571 = vmatpush1.msra.mxu0 0.0
    %4572 = vmatprep.subr.mxu0 0.0
    %4573 = vmatpush1.msra.mxu0 0.0
    %4574 = vmatprep.subr.mxu0 0.0
    %4575 = vmatpush1.msra.mxu0 0.0
    %4576 = vmatprep.subr.mxu0 0.0
    %4577 = vmatpush1.msra.mxu0 0.0
    %4578 = vmatprep.subr.mxu0 0.0
    %4579 = vmatpush1.msra.mxu0 0.0
    %4580 = vmatprep.subr.mxu0 0.0
    %4581 = vmatpush1.msra.mxu0 0.0
    %4582 = vmatprep.subr.mxu0 %v4552
    %4583 = vmatpush1.msra.mxu0 %v4551
    %4584 = vmatprep.subr.mxu0 %v4548
    %4585 = vmatpush1.msra.mxu0 %v4547
    %4586 = vmatprep.subr.mxu0 %v4544
    %4587 = vmatpush1.msra.mxu0 %v4543
    %4588 = vmatprep.subr.mxu0 %v4540
    %4589 = vmatpush1.msra.mxu0 %v4539
    %4590 = vmatprep.subr.mxu0 0.0
    %4591 = vmatpush2.msra.mxu0 0.0
    %4592 = vmatprep.subr.mxu0 0.0
    %4593 = vmatpush2.msra.mxu0 0.0
    %4594 = vmatprep.subr.mxu0 0.0
    %4595 = vmatpush2.msra.mxu0 0.0
    %4596 = vmatprep.subr.mxu0 0.0
    %4597 = vmatpush2.msra.mxu0 0.0
    %4598 = vmatprep.subr.mxu0 0.0
    %4599 = vmatpush2.msra.mxu0 0.0
    %4600 = vmatprep.subr.mxu0 0.0
    %4601 = vmatpush2.msra.mxu0 0.0
    %4602 = vmatprep.subr.mxu0 0.0
    %4603 = vmatpush2.msra.mxu0 0.0
    %4604 = vmatprep.subr.mxu0 0.0
    %4605 = vmatpush2.msra.mxu0 0.0
    %4606 = vmatprep.subr.mxu0 0.0
    %4607 = vmatpush2.msra.mxu0 0.0
    %4608 = vmatprep.subr.mxu0 0.0
    %4609 = vmatpush2.msra.mxu0 0.0
    %4610 = vmatprep.subr.mxu0 0.0
    %4611 = vmatpush2.msra.mxu0 0.0
    %4612 = vmatprep.subr.mxu0 0.0
    %4613 = vmatpush2.msra.mxu0 0.0
    %4614 = vmatprep.subr.mxu0 0.0
    %4615 = vmatpush2.msra.mxu0 0.0
    %4616 = vmatprep.subr.mxu0 0.0
    %4617 = vmatpush2.msra.mxu0 0.0
    %4618 = vmatprep.subr.mxu0 0.0
    %4619 = vmatpush2.msra.mxu0 0.0
    %4620 = vmatprep.subr.mxu0 0.0
    %4621 = vmatpush2.msra.mxu0 0.0
    %4622 = vmatprep.mubr.f32.mxu0 0.0
    %4623 = vmatmul.mubr.f32.gmra.mxu0 %v4556
    %v4624 = vpop.f32.mrf.mxu0
    %v4625 = vadd.f32 0.0, %v4624
    %v4626 = vpop.f32.mrf.mxu0
    %v4627 = vadd.f32 0.0, %v4626
    %4628 = vdwg.mxu0
    %4629 = vmatprep.subr.mxu0 0.0
    %4630 = vmatpush1.msra.mxu0 0.0
    %4631 = vmatprep.subr.mxu0 0.0
    %4632 = vmatpush1.msra.mxu0 0.0
    %4633 = vmatprep.subr.mxu0 0.0
    %4634 = vmatpush1.msra.mxu0 0.0
    %4635 = vmatprep.subr.mxu0 0.0
    %4636 = vmatpush1.msra.mxu0 0.0
    %4637 = vmatprep.subr.mxu0 0.0
    %4638 = vmatpush1.msra.mxu0 0.0
    %4639 = vmatprep.subr.mxu0 0.0
    %4640 = vmatpush1.msra.mxu0 0.0
    %4641 = vmatprep.subr.mxu0 0.0
    %4642 = vmatpush1.msra.mxu0 0.0
    %4643 = vmatprep.subr.mxu0 0.0
    %4644 = vmatpush1.msra.mxu0 0.0
    %4645 = vmatprep.subr.mxu0 0.0
    %4646 = vmatpush1.msra.mxu0 0.0
    %4647 = vmatprep.subr.mxu0 0.0
    %4648 = vmatpush1.msra.mxu0 0.0
    %4649 = vmatprep.subr.mxu0 0.0
    %4650 = vmatpush1.msra.mxu0 0.0
    %4651 = vmatprep.subr.mxu0 0.0
    %4652 = vmatpush1.msra.mxu0 0.0
    %4653 = vmatprep.subr.mxu0 %v4554
    %4654 = vmatpush1.msra.mxu0 %v4553
    %4655 = vmatprep.subr.mxu0 %v4550
    %4656 = vmatpush1.msra.mxu0 %v4549
    %4657 = vmatprep.subr.mxu0 %v4546
    %4658 = vmatpush1.msra.mxu0 %v4545
    %4659 = vmatprep.subr.mxu0 %v4542
    %4660 = vmatpush1.msra.mxu0 %v4541
    %4661 = vmatprep.subr.mxu0 0.0
    %4662 = vmatpush2.msra.mxu0 0.0
    %4663 = vmatprep.subr.mxu0 0.0
    %4664 = vmatpush2.msra.mxu0 0.0
    %4665 = vmatprep.subr.mxu0 0.0
    %4666 = vmatpush2.msra.mxu0 0.0
    %4667 = vmatprep.subr.mxu0 0.0
    %4668 = vmatpush2.msra.mxu0 0.0
    %4669 = vmatprep.subr.mxu0 0.0
    %4670 = vmatpush2.msra.mxu0 0.0
    %4671 = vmatprep.subr.mxu0 0.0
    %4672 = vmatpush2.msra.mxu0 0.0
    %4673 = vmatprep.subr.mxu0 0.0
    %4674 = vmatpush2.msra.mxu0 0.0
    %4675 = vmatprep.subr.mxu0 0.0
    %4676 = vmatpush2.msra.mxu0 0.0
    %4677 = vmatprep.subr.mxu0 0.0
    %4678 = vmatpush2.msra.mxu0 0.0
    %4679 = vmatprep.subr.mxu0 0.0
    %4680 = vmatpush2.msra.mxu0 0.0
    %4681 = vmatprep.subr.mxu0 0.0
    %4682 = vmatpush2.msra.mxu0 0.0
    %4683 = vmatprep.subr.mxu0 0.0
    %4684 = vmatpush2.msra.mxu0 0.0
    %4685 = vmatprep.subr.mxu0 0.0
    %4686 = vmatpush2.msra.mxu0 0.0
    %4687 = vmatprep.subr.mxu0 0.0
    %4688 = vmatpush2.msra.mxu0 0.0
    %4689 = vmatprep.subr.mxu0 0.0
    %4690 = vmatpush2.msra.mxu0 0.0
    %4691 = vmatprep.subr.mxu0 0.0
    %4692 = vmatpush2.msra.mxu0 0.0
    %4693 = vmatprep.mubr.f32.mxu0 0.0
    %4694 = vmatmul.mubr.f32.gmra.mxu0 %v4556
    %v4695 = vpop.f32.mrf.mxu0
    %v4696 = vadd.f32 0.0, %v4695
    %v4697 = vpop.f32.mrf.mxu0
    %v4698 = vadd.f32 0.0, %v4697
    %4699 = vdwg.mxu0
    %v4700 = vadd.f32 %v4464, %v4625
    %v4701 = vadd.f32 %v4466, %v4627
    %v4702 = vadd.f32 %v4535, %v4696
    %v4703 = vadd.f32 %v4537, %v4698
    %v4704 = vxor.u32 %v4700, 2147483648
    %v4705 = vxor.u32 %v4701, 2147483648
    %v4706 = vxor.u32 %v4702, 2147483648
    %v4707 = vmul.f32 %v4704, 1.442695
    %v4708 = vpow.pop %v4707
    %v4709 = vmul.f32 %v4705, 1.442695
    %v4710 = vpow.pop %v4709
    %v4711 = vmul.f32 %v4706, 1.442695
    %v4712 = vpow.pop %v4711
    %v4713 = vadd.f32 %v4708, 1.0
    %v4714 = vadd.f32 %v4710, 1.0
    %v4715 = vadd.f32 %v4712, 1.0
    %v4716 = vrcp.pop %v4713
    %v4717 = vmul.f32 1.0, %v4716
    %v4718 = vrcp.pop %v4714
    %v4719 = vmul.f32 1.0, %v4718
    %v4720 = vrcp.pop %v4715
    %v4721 = vmul.f32 1.0, %v4720
    %v4722 = vtanh.pop %v4703
    %v4723 = vmul.f32 %v4719, %v3773
    %v4724 = vmul.f32 %v4717, %v4722
    %v4725 = vadd.f32 %v4723, %v4724
    %v4726 = vtanh.pop %v4725
    %v4727 = vmul.f32 %v4721, %v4726
    %4728 = vst [vmem:[#allocation3 + $0x3] sm:$0x1] %v4727
    %s4729 = scalar_lea.vmem [#allocation2], 6
    %v4730 = vld [vmem:[%s4729] ss:$8 sm:$0xf]
    %v4731 = vld [vmem:[#allocation4 + $0x20] sm:$0xff]
    %v4732 = vld [vmem:[#allocation4 + $0x28] sm:$0xff]
    %v4733 = vld [vmem:[#allocation4 + $0x30] sm:$0xff]
    %v4734 = vld [vmem:[#allocation4 + $0x38] sm:$0xff]
    %v4735 = vld [vmem:[#allocation4 + $0x40] sm:$0xff]
    %v4736 = vld [vmem:[#allocation4 + $0x48] sm:$0xff]
    %v4737 = vld [vmem:[#allocation4 + $0x50] sm:$0xff]
    %v4738 = vld [vmem:[#allocation4 + $0x58] sm:$0xff]
    %v4739 = vld [vmem:[#allocation4 + $0x60] sm:$0xff]
    %v4740 = vld [vmem:[#allocation4 + $0x68] sm:$0xff]
    %v4741 = vld [vmem:[#allocation4 + $0x70] sm:$0xff]
    %v4742 = vld [vmem:[#allocation4 + $0x78] sm:$0xff]
    %v4743 = vld [vmem:[#allocation4 + $0x80] sm:$0xff]
    %v4744 = vld [vmem:[#allocation4 + $0x88] sm:$0xff]
    %v4745 = vld [vmem:[#allocation4 + $0x90] sm:$0xff]
    %v4746 = vld [vmem:[#allocation4 + $0x98] sm:$0xff]
    %v4748 = vsel %vm233, %v3989, 0
    %4750 = vmatprep.subr.mxu0 0.0
    %4751 = vmatpush1.msra.mxu0 0.0
    %4752 = vmatprep.subr.mxu0 0.0
    %4753 = vmatpush1.msra.mxu0 0.0
    %4754 = vmatprep.subr.mxu0 0.0
    %4755 = vmatpush1.msra.mxu0 0.0
    %4756 = vmatprep.subr.mxu0 0.0
    %4757 = vmatpush1.msra.mxu0 0.0
    %4758 = vmatprep.subr.mxu0 0.0
    %4759 = vmatpush1.msra.mxu0 0.0
    %4760 = vmatprep.subr.mxu0 0.0
    %4761 = vmatpush1.msra.mxu0 0.0
    %4762 = vmatprep.subr.mxu0 0.0
    %4763 = vmatpush1.msra.mxu0 0.0
    %4764 = vmatprep.subr.mxu0 0.0
    %4765 = vmatpush1.msra.mxu0 0.0
    %4766 = vmatprep.subr.mxu0 0.0
    %4767 = vmatpush1.msra.mxu0 0.0
    %4768 = vmatprep.subr.mxu0 0.0
    %4769 = vmatpush1.msra.mxu0 0.0
    %4770 = vmatprep.subr.mxu0 0.0
    %4771 = vmatpush1.msra.mxu0 0.0
    %4772 = vmatprep.subr.mxu0 0.0
    %4773 = vmatpush1.msra.mxu0 0.0
    %4774 = vmatprep.subr.mxu0 %v4744
    %4775 = vmatpush1.msra.mxu0 %v4743
    %4776 = vmatprep.subr.mxu0 %v4740
    %4777 = vmatpush1.msra.mxu0 %v4739
    %4778 = vmatprep.subr.mxu0 %v4736
    %4779 = vmatpush1.msra.mxu0 %v4735
    %4780 = vmatprep.subr.mxu0 %v4732
    %4781 = vmatpush1.msra.mxu0 %v4731
    %4782 = vmatprep.subr.mxu0 0.0
    %4783 = vmatpush2.msra.mxu0 0.0
    %4784 = vmatprep.subr.mxu0 0.0
    %4785 = vmatpush2.msra.mxu0 0.0
    %4786 = vmatprep.subr.mxu0 0.0
    %4787 = vmatpush2.msra.mxu0 0.0
    %4788 = vmatprep.subr.mxu0 0.0
    %4789 = vmatpush2.msra.mxu0 0.0
    %4790 = vmatprep.subr.mxu0 0.0
    %4791 = vmatpush2.msra.mxu0 0.0
    %4792 = vmatprep.subr.mxu0 0.0
    %4793 = vmatpush2.msra.mxu0 0.0
    %4794 = vmatprep.subr.mxu0 0.0
    %4795 = vmatpush2.msra.mxu0 0.0
    %4796 = vmatprep.subr.mxu0 0.0
    %4797 = vmatpush2.msra.mxu0 0.0
    %4798 = vmatprep.subr.mxu0 0.0
    %4799 = vmatpush2.msra.mxu0 0.0
    %4800 = vmatprep.subr.mxu0 0.0
    %4801 = vmatpush2.msra.mxu0 0.0
    %4802 = vmatprep.subr.mxu0 0.0
    %4803 = vmatpush2.msra.mxu0 0.0
    %4804 = vmatprep.subr.mxu0 0.0
    %4805 = vmatpush2.msra.mxu0 0.0
    %4806 = vmatprep.subr.mxu0 0.0
    %4807 = vmatpush2.msra.mxu0 0.0
    %4808 = vmatprep.subr.mxu0 0.0
    %4809 = vmatpush2.msra.mxu0 0.0
    %4810 = vmatprep.subr.mxu0 0.0
    %4811 = vmatpush2.msra.mxu0 0.0
    %4812 = vmatprep.subr.mxu0 0.0
    %4813 = vmatpush2.msra.mxu0 0.0
    %4814 = vmatprep.mubr.f32.mxu0 0.0
    %4815 = vmatmul.mubr.f32.gmra.mxu0 %v4748
    %v4816 = vpop.f32.mrf.mxu0
    %v4817 = vadd.f32 0.0, %v4816
    %v4818 = vpop.f32.mrf.mxu0
    %v4819 = vadd.f32 0.0, %v4818
    %4820 = vdwg.mxu0
    %4821 = vmatprep.subr.mxu0 0.0
    %4822 = vmatpush1.msra.mxu0 0.0
    %4823 = vmatprep.subr.mxu0 0.0
    %4824 = vmatpush1.msra.mxu0 0.0
    %4825 = vmatprep.subr.mxu0 0.0
    %4826 = vmatpush1.msra.mxu0 0.0
    %4827 = vmatprep.subr.mxu0 0.0
    %4828 = vmatpush1.msra.mxu0 0.0
    %4829 = vmatprep.subr.mxu0 0.0
    %4830 = vmatpush1.msra.mxu0 0.0
    %4831 = vmatprep.subr.mxu0 0.0
    %4832 = vmatpush1.msra.mxu0 0.0
    %4833 = vmatprep.subr.mxu0 0.0
    %4834 = vmatpush1.msra.mxu0 0.0
    %4835 = vmatprep.subr.mxu0 0.0
    %4836 = vmatpush1.msra.mxu0 0.0
    %4837 = vmatprep.subr.mxu0 0.0
    %4838 = vmatpush1.msra.mxu0 0.0
    %4839 = vmatprep.subr.mxu0 0.0
    %4840 = vmatpush1.msra.mxu0 0.0
    %4841 = vmatprep.subr.mxu0 0.0
    %4842 = vmatpush1.msra.mxu0 0.0
    %4843 = vmatprep.subr.mxu0 0.0
    %4844 = vmatpush1.msra.mxu0 0.0
    %4845 = vmatprep.subr.mxu0 %v4746
    %4846 = vmatpush1.msra.mxu0 %v4745
    %4847 = vmatprep.subr.mxu0 %v4742
    %4848 = vmatpush1.msra.mxu0 %v4741
    %4849 = vmatprep.subr.mxu0 %v4738
    %4850 = vmatpush1.msra.mxu0 %v4737
    %4851 = vmatprep.subr.mxu0 %v4734
    %4852 = vmatpush1.msra.mxu0 %v4733
    %4853 = vmatprep.subr.mxu0 0.0
    %4854 = vmatpush2.msra.mxu0 0.0
    %4855 = vmatprep.subr.mxu0 0.0
    %4856 = vmatpush2.msra.mxu0 0.0
    %4857 = vmatprep.subr.mxu0 0.0
    %4858 = vmatpush2.msra.mxu0 0.0
    %4859 = vmatprep.subr.mxu0 0.0
    %4860 = vmatpush2.msra.mxu0 0.0
    %4861 = vmatprep.subr.mxu0 0.0
    %4862 = vmatpush2.msra.mxu0 0.0
    %4863 = vmatprep.subr.mxu0 0.0
    %4864 = vmatpush2.msra.mxu0 0.0
    %4865 = vmatprep.subr.mxu0 0.0
    %4866 = vmatpush2.msra.mxu0 0.0
    %4867 = vmatprep.subr.mxu0 0.0
    %4868 = vmatpush2.msra.mxu0 0.0
    %4869 = vmatprep.subr.mxu0 0.0
    %4870 = vmatpush2.msra.mxu0 0.0
    %4871 = vmatprep.subr.mxu0 0.0
    %4872 = vmatpush2.msra.mxu0 0.0
    %4873 = vmatprep.subr.mxu0 0.0
    %4874 = vmatpush2.msra.mxu0 0.0
    %4875 = vmatprep.subr.mxu0 0.0
    %4876 = vmatpush2.msra.mxu0 0.0
    %4877 = vmatprep.subr.mxu0 0.0
    %4878 = vmatpush2.msra.mxu0 0.0
    %4879 = vmatprep.subr.mxu0 0.0
    %4880 = vmatpush2.msra.mxu0 0.0
    %4881 = vmatprep.subr.mxu0 0.0
    %4882 = vmatpush2.msra.mxu0 0.0
    %4883 = vmatprep.subr.mxu0 0.0
    %4884 = vmatpush2.msra.mxu0 0.0
    %4885 = vmatprep.mubr.f32.mxu0 0.0
    %4886 = vmatmul.mubr.f32.gmra.mxu0 %v4748
    %v4887 = vpop.f32.mrf.mxu0
    %v4888 = vadd.f32 0.0, %v4887
    %v4889 = vpop.f32.mrf.mxu0
    %v4890 = vadd.f32 0.0, %v4889
    %4891 = vdwg.mxu0
    %v4896 = vcombine.low %v4817, %v4819
    %v4897 = vcombine.low %v4888, %v4890
    %v4899 = vunpack.c.l.s4 1966171168
    %v4900 = vunpack.c.0.s8 %v4899
    %v4901 = vlaneseq
    %v4902 = vshrl.u32 %v4901, 7
    %v4903 = vsub.s32 %v4900, %v4902
    %v4904 = vrot.slane %v4896, %v4903
    %v4906 = vunpack.c.l.s4 1966171168
    %v4907 = vunpack.c.0.s8 %v4906
    %v4908 = vlaneseq
    %v4909 = vshrl.u32 %v4908, 7
    %v4910 = vsub.s32 %v4907, %v4909
    %v4911 = vrot.slane %v4897, %v4910
    %v4912 = vcombine.low %v4904, %v4911
    %v4914 = vunpack.c.l.s4 1966171168
    %v4915 = vunpack.c.0.s8 %v4914
    %v4916 = vlaneseq
    %v4917 = vshrl.u32 %v4916, 7
    %v4918 = vsub.s32 %v4915, %v4917
    %v4919 = vrot.slane %v4912, %v4918
    %v4921 = vadd.f32 %v4730, %v4919
    %v4922 = vxor.u32 %v4921, 2147483648
    %v4923 = vmul.f32 %v4922, 1.442695
    %v4924 = vpow.pop %v4923
    %v4925 = vadd.f32 %v4924, 1.0
    %v4926 = vrcp.pop %v4925
    %v4927 = vmul.f32 1.0, %v4926
    %v4929 = vrot.slane %v4921, 3
    %v4931 = vtanh.pop %v4929
    %v4933 = vrot.slane %v4927, 1
    %v4935 = vmul.f32 %v4933, %v3985
    %v4936 = vmul.f32 %v4927, %v4931
    %v4937 = vadd.f32 %v4935, %v4936
    %v4938 = vtanh.pop %v4937
    %v4939 = vrot.slane %v4927, 2
    %v4941 = vmul.f32 %v4939, %v4938
    %v4942 = vld [vmem:[#allocation4 + $0xa0] sm:$0xff]
    %v4943 = vld [vmem:[#allocation4 + $0xa8] sm:$0xff]
    %v4944 = vld [vmem:[#allocation4 + $0xb0] sm:$0xff]
    %v4945 = vld [vmem:[#allocation4 + $0xb8] sm:$0xff]
    %v4946 = vld [vmem:[#allocation4 + $0xc0] sm:$0xff]
    %v4947 = vld [vmem:[#allocation4 + $0xc8] sm:$0xff]
    %v4948 = vld [vmem:[#allocation4 + $0xd0] sm:$0xff]
    %v4949 = vld [vmem:[#allocation4 + $0xd8] sm:$0xff]
    %v4950 = vld [vmem:[#allocation4 + $0xe0] sm:$0xff]
    %v4951 = vld [vmem:[#allocation4 + $0xe8] sm:$0xff]
    %v4952 = vld [vmem:[#allocation4 + $0xf0] sm:$0xff]
    %v4953 = vld [vmem:[#allocation4 + $0xf8] sm:$0xff]
    %v4954 = vld [vmem:[#allocation4 + $0x100] sm:$0xff]
    %v4955 = vld [vmem:[#allocation4 + $0x108] sm:$0xff]
    %v4956 = vld [vmem:[#allocation4 + $0x110] sm:$0xff]
    %v4957 = vld [vmem:[#allocation4 + $0x118] sm:$0xff]
    %v4958 = vld [vmem:[%s642] ss:$8 sm:$0xf]
    %v4960 = vlaneseq
    %v4961 = vshrl.u32 %v4960, 7
    %v4962 = vsub.s32 0, %v4961
    %v4963 = vrot.slane %v4958, %v4962
    %v4964 = vlaneseq
    %v4965 = vshrl.u32 %v4964, 7
    %v4966 = vsub.s32 1, %v4965
    %v4967 = vrot.slane %v4958, %v4966
    %v4968 = vlaneseq
    %v4969 = vshrl.u32 %v4968, 7
    %v4970 = vsub.s32 2, %v4969
    %v4971 = vrot.slane %v4958, %v4970
    %v4972 = vlaneseq
    %v4973 = vshrl.u32 %v4972, 7
    %v4974 = vsub.s32 3, %v4973
    %v4975 = vrot.slane %v4958, %v4974
    %4980 = vmatprep.subr.mxu0 0.0
    %4981 = vmatpush1.msra.mxu0 0.0
    %4982 = vmatprep.subr.mxu0 0.0
    %4983 = vmatpush1.msra.mxu0 0.0
    %4984 = vmatprep.subr.mxu0 0.0
    %4985 = vmatpush1.msra.mxu0 0.0
    %4986 = vmatprep.subr.mxu0 0.0
    %4987 = vmatpush1.msra.mxu0 0.0
    %4988 = vmatprep.subr.mxu0 0.0
    %4989 = vmatpush1.msra.mxu0 0.0
    %4990 = vmatprep.subr.mxu0 0.0
    %4991 = vmatpush1.msra.mxu0 0.0
    %4992 = vmatprep.subr.mxu0 0.0
    %4993 = vmatpush1.msra.mxu0 0.0
    %4994 = vmatprep.subr.mxu0 0.0
    %4995 = vmatpush1.msra.mxu0 0.0
    %4996 = vmatprep.subr.mxu0 0.0
    %4997 = vmatpush1.msra.mxu0 0.0
    %4998 = vmatprep.subr.mxu0 0.0
    %4999 = vmatpush1.msra.mxu0 0.0
    %5000 = vmatprep.subr.mxu0 0.0
    %5001 = vmatpush1.msra.mxu0 0.0
    %5002 = vmatprep.subr.mxu0 0.0
    %5003 = vmatpush1.msra.mxu0 0.0
    %5004 = vmatprep.subr.mxu0 %v4955
    %5005 = vmatpush1.msra.mxu0 %v4954
    %5006 = vmatprep.subr.mxu0 %v4951
    %5007 = vmatpush1.msra.mxu0 %v4950
    %5008 = vmatprep.subr.mxu0 %v4947
    %5009 = vmatpush1.msra.mxu0 %v4946
    %5010 = vmatprep.subr.mxu0 %v4943
    %5011 = vmatpush1.msra.mxu0 %v4942
    %5012 = vmatprep.subr.mxu0 0.0
    %5013 = vmatpush2.msra.mxu0 0.0
    %5014 = vmatprep.subr.mxu0 0.0
    %5015 = vmatpush2.msra.mxu0 0.0
    %5016 = vmatprep.subr.mxu0 0.0
    %5017 = vmatpush2.msra.mxu0 0.0
    %5018 = vmatprep.subr.mxu0 0.0
    %5019 = vmatpush2.msra.mxu0 0.0
    %5020 = vmatprep.subr.mxu0 0.0
    %5021 = vmatpush2.msra.mxu0 0.0
    %5022 = vmatprep.subr.mxu0 0.0
    %5023 = vmatpush2.msra.mxu0 0.0
    %5024 = vmatprep.subr.mxu0 0.0
    %5025 = vmatpush2.msra.mxu0 0.0
    %5026 = vmatprep.subr.mxu0 0.0
    %5027 = vmatpush2.msra.mxu0 0.0
    %5028 = vmatprep.subr.mxu0 0.0
    %5029 = vmatpush2.msra.mxu0 0.0
    %5030 = vmatprep.subr.mxu0 0.0
    %5031 = vmatpush2.msra.mxu0 0.0
    %5032 = vmatprep.subr.mxu0 0.0
    %5033 = vmatpush2.msra.mxu0 0.0
    %5034 = vmatprep.subr.mxu0 0.0
    %5035 = vmatpush2.msra.mxu0 0.0
    %5036 = vmatprep.subr.mxu0 0.0
    %5037 = vmatpush2.msra.mxu0 0.0
    %5038 = vmatprep.subr.mxu0 0.0
    %5039 = vmatpush2.msra.mxu0 0.0
    %5040 = vmatprep.subr.mxu0 0.0
    %5041 = vmatpush2.msra.mxu0 0.0
    %5042 = vmatprep.subr.mxu0 0.0
    %5043 = vmatpush2.msra.mxu0 0.0
    %5044 = vmatprep.mubr.f32.mxu0 0.0
    %5045 = vmatmul.mubr.f32.gmra.mxu0 %v4748
    %v5046 = vpop.f32.mrf.mxu0
    %v5047 = vadd.f32 %v4963, %v5046
    %v5048 = vpop.f32.mrf.mxu0
    %v5049 = vadd.f32 %v4967, %v5048
    %5050 = vdwg.mxu0
    %5051 = vmatprep.subr.mxu0 0.0
    %5052 = vmatpush1.msra.mxu0 0.0
    %5053 = vmatprep.subr.mxu0 0.0
    %5054 = vmatpush1.msra.mxu0 0.0
    %5055 = vmatprep.subr.mxu0 0.0
    %5056 = vmatpush1.msra.mxu0 0.0
    %5057 = vmatprep.subr.mxu0 0.0
    %5058 = vmatpush1.msra.mxu0 0.0
    %5059 = vmatprep.subr.mxu0 0.0
    %5060 = vmatpush1.msra.mxu0 0.0
    %5061 = vmatprep.subr.mxu0 0.0
    %5062 = vmatpush1.msra.mxu0 0.0
    %5063 = vmatprep.subr.mxu0 0.0
    %5064 = vmatpush1.msra.mxu0 0.0
    %5065 = vmatprep.subr.mxu0 0.0
    %5066 = vmatpush1.msra.mxu0 0.0
    %5067 = vmatprep.subr.mxu0 0.0
    %5068 = vmatpush1.msra.mxu0 0.0
    %5069 = vmatprep.subr.mxu0 0.0
    %5070 = vmatpush1.msra.mxu0 0.0
    %5071 = vmatprep.subr.mxu0 0.0
    %5072 = vmatpush1.msra.mxu0 0.0
    %5073 = vmatprep.subr.mxu0 0.0
    %5074 = vmatpush1.msra.mxu0 0.0
    %5075 = vmatprep.subr.mxu0 %v4957
    %5076 = vmatpush1.msra.mxu0 %v4956
    %5077 = vmatprep.subr.mxu0 %v4953
    %5078 = vmatpush1.msra.mxu0 %v4952
    %5079 = vmatprep.subr.mxu0 %v4949
    %5080 = vmatpush1.msra.mxu0 %v4948
    %5081 = vmatprep.subr.mxu0 %v4945
    %5082 = vmatpush1.msra.mxu0 %v4944
    %5083 = vmatprep.subr.mxu0 0.0
    %5084 = vmatpush2.msra.mxu0 0.0
    %5085 = vmatprep.subr.mxu0 0.0
    %5086 = vmatpush2.msra.mxu0 0.0
    %5087 = vmatprep.subr.mxu0 0.0
    %5088 = vmatpush2.msra.mxu0 0.0
    %5089 = vmatprep.subr.mxu0 0.0
    %5090 = vmatpush2.msra.mxu0 0.0
    %5091 = vmatprep.subr.mxu0 0.0
    %5092 = vmatpush2.msra.mxu0 0.0
    %5093 = vmatprep.subr.mxu0 0.0
    %5094 = vmatpush2.msra.mxu0 0.0
    %5095 = vmatprep.subr.mxu0 0.0
    %5096 = vmatpush2.msra.mxu0 0.0
    %5097 = vmatprep.subr.mxu0 0.0
    %5098 = vmatpush2.msra.mxu0 0.0
    %5099 = vmatprep.subr.mxu0 0.0
    %5100 = vmatpush2.msra.mxu0 0.0
    %5101 = vmatprep.subr.mxu0 0.0
    %5102 = vmatpush2.msra.mxu0 0.0
    %5103 = vmatprep.subr.mxu0 0.0
    %5104 = vmatpush2.msra.mxu0 0.0
    %5105 = vmatprep.subr.mxu0 0.0
    %5106 = vmatpush2.msra.mxu0 0.0
    %5107 = vmatprep.subr.mxu0 0.0
    %5108 = vmatpush2.msra.mxu0 0.0
    %5109 = vmatprep.subr.mxu0 0.0
    %5110 = vmatpush2.msra.mxu0 0.0
    %5111 = vmatprep.subr.mxu0 0.0
    %5112 = vmatpush2.msra.mxu0 0.0
    %5113 = vmatprep.subr.mxu0 0.0
    %5114 = vmatpush2.msra.mxu0 0.0
    %5115 = vmatprep.mubr.f32.mxu0 0.0
    %5116 = vmatmul.mubr.f32.gmra.mxu0 %v4748
    %v5117 = vpop.f32.mrf.mxu0
    %v5118 = vadd.f32 %v4971, %v5117
    %v5119 = vpop.f32.mrf.mxu0
    %v5120 = vadd.f32 %v4975, %v5119
    %5121 = vdwg.mxu0
    %v5122 = vld [vmem:[#allocation4 + $0x120] sm:$0xff]
    %v5123 = vld [vmem:[#allocation4 + $0x128] sm:$0xff]
    %v5124 = vld [vmem:[#allocation4 + $0x130] sm:$0xff]
    %v5125 = vld [vmem:[#allocation4 + $0x138] sm:$0xff]
    %v5126 = vld [vmem:[#allocation4 + $0x140] sm:$0xff]
    %v5127 = vld [vmem:[#allocation4 + $0x148] sm:$0xff]
    %v5128 = vld [vmem:[#allocation4 + $0x150] sm:$0xff]
    %v5129 = vld [vmem:[#allocation4 + $0x158] sm:$0xff]
    %v5130 = vld [vmem:[#allocation4 + $0x160] sm:$0xff]
    %v5131 = vld [vmem:[#allocation4 + $0x168] sm:$0xff]
    %v5132 = vld [vmem:[#allocation4 + $0x170] sm:$0xff]
    %v5133 = vld [vmem:[#allocation4 + $0x178] sm:$0xff]
    %v5134 = vld [vmem:[#allocation4 + $0x180] sm:$0xff]
    %v5135 = vld [vmem:[#allocation4 + $0x188] sm:$0xff]
    %v5136 = vld [vmem:[#allocation4 + $0x190] sm:$0xff]
    %v5137 = vld [vmem:[#allocation4 + $0x198] sm:$0xff]
    %v5139 = vsel %vm233, %v4358, 0
    %5141 = vmatprep.subr.mxu0 0.0
    %5142 = vmatpush1.msra.mxu0 0.0
    %5143 = vmatprep.subr.mxu0 0.0
    %5144 = vmatpush1.msra.mxu0 0.0
    %5145 = vmatprep.subr.mxu0 0.0
    %5146 = vmatpush1.msra.mxu0 0.0
    %5147 = vmatprep.subr.mxu0 0.0
    %5148 = vmatpush1.msra.mxu0 0.0
    %5149 = vmatprep.subr.mxu0 0.0
    %5150 = vmatpush1.msra.mxu0 0.0
    %5151 = vmatprep.subr.mxu0 0.0
    %5152 = vmatpush1.msra.mxu0 0.0
    %5153 = vmatprep.subr.mxu0 0.0
    %5154 = vmatpush1.msra.mxu0 0.0
    %5155 = vmatprep.subr.mxu0 0.0
    %5156 = vmatpush1.msra.mxu0 0.0
    %5157 = vmatprep.subr.mxu0 0.0
    %5158 = vmatpush1.msra.mxu0 0.0
    %5159 = vmatprep.subr.mxu0 0.0
    %5160 = vmatpush1.msra.mxu0 0.0
    %5161 = vmatprep.subr.mxu0 0.0
    %5162 = vmatpush1.msra.mxu0 0.0
    %5163 = vmatprep.subr.mxu0 0.0
    %5164 = vmatpush1.msra.mxu0 0.0
    %5165 = vmatprep.subr.mxu0 %v5135
    %5166 = vmatpush1.msra.mxu0 %v5134
    %5167 = vmatprep.subr.mxu0 %v5131
    %5168 = vmatpush1.msra.mxu0 %v5130
    %5169 = vmatprep.subr.mxu0 %v5127
    %5170 = vmatpush1.msra.mxu0 %v5126
    %5171 = vmatprep.subr.mxu0 %v5123
    %5172 = vmatpush1.msra.mxu0 %v5122
    %5173 = vmatprep.subr.mxu0 0.0
    %5174 = vmatpush2.msra.mxu0 0.0
    %5175 = vmatprep.subr.mxu0 0.0
    %5176 = vmatpush2.msra.mxu0 0.0
    %5177 = vmatprep.subr.mxu0 0.0
    %5178 = vmatpush2.msra.mxu0 0.0
    %5179 = vmatprep.subr.mxu0 0.0
    %5180 = vmatpush2.msra.mxu0 0.0
    %5181 = vmatprep.subr.mxu0 0.0
    %5182 = vmatpush2.msra.mxu0 0.0
    %5183 = vmatprep.subr.mxu0 0.0
    %5184 = vmatpush2.msra.mxu0 0.0
    %5185 = vmatprep.subr.mxu0 0.0
    %5186 = vmatpush2.msra.mxu0 0.0
    %5187 = vmatprep.subr.mxu0 0.0
    %5188 = vmatpush2.msra.mxu0 0.0
    %5189 = vmatprep.subr.mxu0 0.0
    %5190 = vmatpush2.msra.mxu0 0.0
    %5191 = vmatprep.subr.mxu0 0.0
    %5192 = vmatpush2.msra.mxu0 0.0
    %5193 = vmatprep.subr.mxu0 0.0
    %5194 = vmatpush2.msra.mxu0 0.0
    %5195 = vmatprep.subr.mxu0 0.0
    %5196 = vmatpush2.msra.mxu0 0.0
    %5197 = vmatprep.subr.mxu0 0.0
    %5198 = vmatpush2.msra.mxu0 0.0
    %5199 = vmatprep.subr.mxu0 0.0
    %5200 = vmatpush2.msra.mxu0 0.0
    %5201 = vmatprep.subr.mxu0 0.0
    %5202 = vmatpush2.msra.mxu0 0.0
    %5203 = vmatprep.subr.mxu0 0.0
    %5204 = vmatpush2.msra.mxu0 0.0
    %5205 = vmatprep.mubr.f32.mxu0 0.0
    %5206 = vmatmul.mubr.f32.gmra.mxu0 %v5139
    %v5207 = vpop.f32.mrf.mxu0
    %v5208 = vadd.f32 0.0, %v5207
    %v5209 = vpop.f32.mrf.mxu0
    %v5210 = vadd.f32 0.0, %v5209
    %5211 = vdwg.mxu0
    %5212 = vmatprep.subr.mxu0 0.0
    %5213 = vmatpush1.msra.mxu0 0.0
    %5214 = vmatprep.subr.mxu0 0.0
    %5215 = vmatpush1.msra.mxu0 0.0
    %5216 = vmatprep.subr.mxu0 0.0
    %5217 = vmatpush1.msra.mxu0 0.0
    %5218 = vmatprep.subr.mxu0 0.0
    %5219 = vmatpush1.msra.mxu0 0.0
    %5220 = vmatprep.subr.mxu0 0.0
    %5221 = vmatpush1.msra.mxu0 0.0
    %5222 = vmatprep.subr.mxu0 0.0
    %5223 = vmatpush1.msra.mxu0 0.0
    %5224 = vmatprep.subr.mxu0 0.0
    %5225 = vmatpush1.msra.mxu0 0.0
    %5226 = vmatprep.subr.mxu0 0.0
    %5227 = vmatpush1.msra.mxu0 0.0
    %5228 = vmatprep.subr.mxu0 0.0
    %5229 = vmatpush1.msra.mxu0 0.0
    %5230 = vmatprep.subr.mxu0 0.0
    %5231 = vmatpush1.msra.mxu0 0.0
    %5232 = vmatprep.subr.mxu0 0.0
    %5233 = vmatpush1.msra.mxu0 0.0
    %5234 = vmatprep.subr.mxu0 0.0
    %5235 = vmatpush1.msra.mxu0 0.0
    %5236 = vmatprep.subr.mxu0 %v5137
    %5237 = vmatpush1.msra.mxu0 %v5136
    %5238 = vmatprep.subr.mxu0 %v5133
    %5239 = vmatpush1.msra.mxu0 %v5132
    %5240 = vmatprep.subr.mxu0 %v5129
    %5241 = vmatpush1.msra.mxu0 %v5128
    %5242 = vmatprep.subr.mxu0 %v5125
    %5243 = vmatpush1.msra.mxu0 %v5124
    %5244 = vmatprep.subr.mxu0 0.0
    %5245 = vmatpush2.msra.mxu0 0.0
    %5246 = vmatprep.subr.mxu0 0.0
    %5247 = vmatpush2.msra.mxu0 0.0
    %5248 = vmatprep.subr.mxu0 0.0
    %5249 = vmatpush2.msra.mxu0 0.0
    %5250 = vmatprep.subr.mxu0 0.0
    %5251 = vmatpush2.msra.mxu0 0.0
    %5252 = vmatprep.subr.mxu0 0.0
    %5253 = vmatpush2.msra.mxu0 0.0
    %5254 = vmatprep.subr.mxu0 0.0
    %5255 = vmatpush2.msra.mxu0 0.0
    %5256 = vmatprep.subr.mxu0 0.0
    %5257 = vmatpush2.msra.mxu0 0.0
    %5258 = vmatprep.subr.mxu0 0.0
    %5259 = vmatpush2.msra.mxu0 0.0
    %5260 = vmatprep.subr.mxu0 0.0
    %5261 = vmatpush2.msra.mxu0 0.0
    %5262 = vmatprep.subr.mxu0 0.0
    %5263 = vmatpush2.msra.mxu0 0.0
    %5264 = vmatprep.subr.mxu0 0.0
    %5265 = vmatpush2.msra.mxu0 0.0
    %5266 = vmatprep.subr.mxu0 0.0
    %5267 = vmatpush2.msra.mxu0 0.0
    %5268 = vmatprep.subr.mxu0 0.0
    %5269 = vmatpush2.msra.mxu0 0.0
    %5270 = vmatprep.subr.mxu0 0.0
    %5271 = vmatpush2.msra.mxu0 0.0
    %5272 = vmatprep.subr.mxu0 0.0
    %5273 = vmatpush2.msra.mxu0 0.0
    %5274 = vmatprep.subr.mxu0 0.0
    %5275 = vmatpush2.msra.mxu0 0.0
    %5276 = vmatprep.mubr.f32.mxu0 0.0
    %5277 = vmatmul.mubr.f32.gmra.mxu0 %v5139
    %v5278 = vpop.f32.mrf.mxu0
    %v5279 = vadd.f32 0.0, %v5278
    %v5280 = vpop.f32.mrf.mxu0
    %v5281 = vadd.f32 0.0, %v5280
    %5282 = vdwg.mxu0
    %v5283 = vadd.f32 %v5047, %v5208
    %v5284 = vadd.f32 %v5049, %v5210
    %v5285 = vadd.f32 %v5118, %v5279
    %v5286 = vadd.f32 %v5120, %v5281
    %v5287 = vxor.u32 %v5283, 2147483648
    %v5288 = vxor.u32 %v5284, 2147483648
    %v5289 = vxor.u32 %v5285, 2147483648
    %v5290 = vmul.f32 %v5287, 1.442695
    %v5291 = vpow.pop %v5290
    %v5292 = vmul.f32 %v5288, 1.442695
    %v5293 = vpow.pop %v5292
    %v5294 = vmul.f32 %v5289, 1.442695
    %v5295 = vpow.pop %v5294
    %v5296 = vadd.f32 %v5291, 1.0
    %v5297 = vadd.f32 %v5293, 1.0
    %v5298 = vadd.f32 %v5295, 1.0
    %v5299 = vrcp.pop %v5296
    %v5300 = vmul.f32 1.0, %v5299
    %v5301 = vrcp.pop %v5297
    %v5302 = vmul.f32 1.0, %v5301
    %v5303 = vrcp.pop %v5298
    %v5304 = vmul.f32 1.0, %v5303
    %v5305 = vtanh.pop %v5286
    %v5306 = vmul.f32 %v5302, %v4356
    %v5307 = vmul.f32 %v5300, %v5305
    %v5308 = vadd.f32 %v5306, %v5307
    %v5309 = vtanh.pop %v5308
    %v5310 = vmul.f32 %v5304, %v5309
    %v5311 = vld [vmem:[#allocation4 + $0x1a0] sm:$0xff]
    %v5312 = vld [vmem:[#allocation4 + $0x1a8] sm:$0xff]
    %v5313 = vld [vmem:[#allocation4 + $0x1b0] sm:$0xff]
    %v5314 = vld [vmem:[#allocation4 + $0x1b8] sm:$0xff]
    %v5315 = vld [vmem:[#allocation4 + $0x1c0] sm:$0xff]
    %v5316 = vld [vmem:[#allocation4 + $0x1c8] sm:$0xff]
    %v5317 = vld [vmem:[#allocation4 + $0x1d0] sm:$0xff]
    %v5318 = vld [vmem:[#allocation4 + $0x1d8] sm:$0xff]
    %v5319 = vld [vmem:[#allocation4 + $0x1e0] sm:$0xff]
    %v5320 = vld [vmem:[#allocation4 + $0x1e8] sm:$0xff]
    %v5321 = vld [vmem:[#allocation4 + $0x1f0] sm:$0xff]
    %v5322 = vld [vmem:[#allocation4 + $0x1f8] sm:$0xff]
    %v5323 = vld [vmem:[#allocation4 + $0x200] sm:$0xff]
    %v5324 = vld [vmem:[#allocation4 + $0x208] sm:$0xff]
    %v5325 = vld [vmem:[#allocation4 + $0x210] sm:$0xff]
    %v5326 = vld [vmem:[#allocation4 + $0x218] sm:$0xff]
    %v5327 = vld [vmem:[%s1521] ss:$8 sm:$0xf]
    %v5329 = vlaneseq
    %v5330 = vshrl.u32 %v5329, 7
    %v5331 = vsub.s32 0, %v5330
    %v5332 = vrot.slane %v5327, %v5331
    %v5333 = vlaneseq
    %v5334 = vshrl.u32 %v5333, 7
    %v5335 = vsub.s32 1, %v5334
    %v5336 = vrot.slane %v5327, %v5335
    %v5337 = vlaneseq
    %v5338 = vshrl.u32 %v5337, 7
    %v5339 = vsub.s32 2, %v5338
    %v5340 = vrot.slane %v5327, %v5339
    %v5341 = vlaneseq
    %v5342 = vshrl.u32 %v5341, 7
    %v5343 = vsub.s32 3, %v5342
    %v5344 = vrot.slane %v5327, %v5343
    %5349 = vmatprep.subr.mxu0 0.0
    %5350 = vmatpush1.msra.mxu0 0.0
    %5351 = vmatprep.subr.mxu0 0.0
    %5352 = vmatpush1.msra.mxu0 0.0
    %5353 = vmatprep.subr.mxu0 0.0
    %5354 = vmatpush1.msra.mxu0 0.0
    %5355 = vmatprep.subr.mxu0 0.0
    %5356 = vmatpush1.msra.mxu0 0.0
    %5357 = vmatprep.subr.mxu0 0.0
    %5358 = vmatpush1.msra.mxu0 0.0
    %5359 = vmatprep.subr.mxu0 0.0
    %5360 = vmatpush1.msra.mxu0 0.0
    %5361 = vmatprep.subr.mxu0 0.0
    %5362 = vmatpush1.msra.mxu0 0.0
    %5363 = vmatprep.subr.mxu0 0.0
    %5364 = vmatpush1.msra.mxu0 0.0
    %5365 = vmatprep.subr.mxu0 0.0
    %5366 = vmatpush1.msra.mxu0 0.0
    %5367 = vmatprep.subr.mxu0 0.0
    %5368 = vmatpush1.msra.mxu0 0.0
    %5369 = vmatprep.subr.mxu0 0.0
    %5370 = vmatpush1.msra.mxu0 0.0
    %5371 = vmatprep.subr.mxu0 0.0
    %5372 = vmatpush1.msra.mxu0 0.0
    %5373 = vmatprep.subr.mxu0 %v5324
    %5374 = vmatpush1.msra.mxu0 %v5323
    %5375 = vmatprep.subr.mxu0 %v5320
    %5376 = vmatpush1.msra.mxu0 %v5319
    %5377 = vmatprep.subr.mxu0 %v5316
    %5378 = vmatpush1.msra.mxu0 %v5315
    %5379 = vmatprep.subr.mxu0 %v5312
    %5380 = vmatpush1.msra.mxu0 %v5311
    %5381 = vmatprep.subr.mxu0 0.0
    %5382 = vmatpush2.msra.mxu0 0.0
    %5383 = vmatprep.subr.mxu0 0.0
    %5384 = vmatpush2.msra.mxu0 0.0
    %5385 = vmatprep.subr.mxu0 0.0
    %5386 = vmatpush2.msra.mxu0 0.0
    %5387 = vmatprep.subr.mxu0 0.0
    %5388 = vmatpush2.msra.mxu0 0.0
    %5389 = vmatprep.subr.mxu0 0.0
    %5390 = vmatpush2.msra.mxu0 0.0
    %5391 = vmatprep.subr.mxu0 0.0
    %5392 = vmatpush2.msra.mxu0 0.0
    %5393 = vmatprep.subr.mxu0 0.0
    %5394 = vmatpush2.msra.mxu0 0.0
    %5395 = vmatprep.subr.mxu0 0.0
    %5396 = vmatpush2.msra.mxu0 0.0
    %5397 = vmatprep.subr.mxu0 0.0
    %5398 = vmatpush2.msra.mxu0 0.0
    %5399 = vmatprep.subr.mxu0 0.0
    %5400 = vmatpush2.msra.mxu0 0.0
    %5401 = vmatprep.subr.mxu0 0.0
    %5402 = vmatpush2.msra.mxu0 0.0
    %5403 = vmatprep.subr.mxu0 0.0
    %5404 = vmatpush2.msra.mxu0 0.0
    %5405 = vmatprep.subr.mxu0 0.0
    %5406 = vmatpush2.msra.mxu0 0.0
    %5407 = vmatprep.subr.mxu0 0.0
    %5408 = vmatpush2.msra.mxu0 0.0
    %5409 = vmatprep.subr.mxu0 0.0
    %5410 = vmatpush2.msra.mxu0 0.0
    %5411 = vmatprep.subr.mxu0 0.0
    %5412 = vmatpush2.msra.mxu0 0.0
    %5413 = vmatprep.mubr.f32.mxu0 0.0
    %5414 = vmatmul.mubr.f32.gmra.mxu0 %v5139
    %v5415 = vpop.f32.mrf.mxu0
    %v5416 = vadd.f32 %v5332, %v5415
    %v5417 = vpop.f32.mrf.mxu0
    %v5418 = vadd.f32 %v5336, %v5417
    %5419 = vdwg.mxu0
    %5420 = vmatprep.subr.mxu0 0.0
    %5421 = vmatpush1.msra.mxu0 0.0
    %5422 = vmatprep.subr.mxu0 0.0
    %5423 = vmatpush1.msra.mxu0 0.0
    %5424 = vmatprep.subr.mxu0 0.0
    %5425 = vmatpush1.msra.mxu0 0.0
    %5426 = vmatprep.subr.mxu0 0.0
    %5427 = vmatpush1.msra.mxu0 0.0
    %5428 = vmatprep.subr.mxu0 0.0
    %5429 = vmatpush1.msra.mxu0 0.0
    %5430 = vmatprep.subr.mxu0 0.0
    %5431 = vmatpush1.msra.mxu0 0.0
    %5432 = vmatprep.subr.mxu0 0.0
    %5433 = vmatpush1.msra.mxu0 0.0
    %5434 = vmatprep.subr.mxu0 0.0
    %5435 = vmatpush1.msra.mxu0 0.0
    %5436 = vmatprep.subr.mxu0 0.0
    %5437 = vmatpush1.msra.mxu0 0.0
    %5438 = vmatprep.subr.mxu0 0.0
    %5439 = vmatpush1.msra.mxu0 0.0
    %5440 = vmatprep.subr.mxu0 0.0
    %5441 = vmatpush1.msra.mxu0 0.0
    %5442 = vmatprep.subr.mxu0 0.0
    %5443 = vmatpush1.msra.mxu0 0.0
    %5444 = vmatprep.subr.mxu0 %v5326
    %5445 = vmatpush1.msra.mxu0 %v5325
    %5446 = vmatprep.subr.mxu0 %v5322
    %5447 = vmatpush1.msra.mxu0 %v5321
    %5448 = vmatprep.subr.mxu0 %v5318
    %5449 = vmatpush1.msra.mxu0 %v5317
    %5450 = vmatprep.subr.mxu0 %v5314
    %5451 = vmatpush1.msra.mxu0 %v5313
    %5452 = vmatprep.subr.mxu0 0.0
    %5453 = vmatpush2.msra.mxu0 0.0
    %5454 = vmatprep.subr.mxu0 0.0
    %5455 = vmatpush2.msra.mxu0 0.0
    %5456 = vmatprep.subr.mxu0 0.0
    %5457 = vmatpush2.msra.mxu0 0.0
    %5458 = vmatprep.subr.mxu0 0.0
    %5459 = vmatpush2.msra.mxu0 0.0
    %5460 = vmatprep.subr.mxu0 0.0
    %5461 = vmatpush2.msra.mxu0 0.0
    %5462 = vmatprep.subr.mxu0 0.0
    %5463 = vmatpush2.msra.mxu0 0.0
    %5464 = vmatprep.subr.mxu0 0.0
    %5465 = vmatpush2.msra.mxu0 0.0
    %5466 = vmatprep.subr.mxu0 0.0
    %5467 = vmatpush2.msra.mxu0 0.0
    %5468 = vmatprep.subr.mxu0 0.0
    %5469 = vmatpush2.msra.mxu0 0.0
    %5470 = vmatprep.subr.mxu0 0.0
    %5471 = vmatpush2.msra.mxu0 0.0
    %5472 = vmatprep.subr.mxu0 0.0
    %5473 = vmatpush2.msra.mxu0 0.0
    %5474 = vmatprep.subr.mxu0 0.0
    %5475 = vmatpush2.msra.mxu0 0.0
    %5476 = vmatprep.subr.mxu0 0.0
    %5477 = vmatpush2.msra.mxu0 0.0
    %5478 = vmatprep.subr.mxu0 0.0
    %5479 = vmatpush2.msra.mxu0 0.0
    %5480 = vmatprep.subr.mxu0 0.0
    %5481 = vmatpush2.msra.mxu0 0.0
    %5482 = vmatprep.subr.mxu0 0.0
    %5483 = vmatpush2.msra.mxu0 0.0
    %5484 = vmatprep.mubr.f32.mxu0 0.0
    %5485 = vmatmul.mubr.f32.gmra.mxu0 %v5139
    %v5486 = vpop.f32.mrf.mxu0
    %v5487 = vadd.f32 %v5340, %v5486
    %v5488 = vpop.f32.mrf.mxu0
    %v5489 = vadd.f32 %v5344, %v5488
    %5490 = vdwg.mxu0
    %v5491 = vld [vmem:[#allocation4 + $0x220] sm:$0xff]
    %v5492 = vld [vmem:[#allocation4 + $0x228] sm:$0xff]
    %v5493 = vld [vmem:[#allocation4 + $0x230] sm:$0xff]
    %v5494 = vld [vmem:[#allocation4 + $0x238] sm:$0xff]
    %v5495 = vld [vmem:[#allocation4 + $0x240] sm:$0xff]
    %v5496 = vld [vmem:[#allocation4 + $0x248] sm:$0xff]
    %v5497 = vld [vmem:[#allocation4 + $0x250] sm:$0xff]
    %v5498 = vld [vmem:[#allocation4 + $0x258] sm:$0xff]
    %v5499 = vld [vmem:[#allocation4 + $0x260] sm:$0xff]
    %v5500 = vld [vmem:[#allocation4 + $0x268] sm:$0xff]
    %v5501 = vld [vmem:[#allocation4 + $0x270] sm:$0xff]
    %v5502 = vld [vmem:[#allocation4 + $0x278] sm:$0xff]
    %v5503 = vld [vmem:[#allocation4 + $0x280] sm:$0xff]
    %v5504 = vld [vmem:[#allocation4 + $0x288] sm:$0xff]
    %v5505 = vld [vmem:[#allocation4 + $0x290] sm:$0xff]
    %v5506 = vld [vmem:[#allocation4 + $0x298] sm:$0xff]
    %v5508 = vsel %vm233, %v4727, 0
    %5510 = vmatprep.subr.mxu0 0.0
    %5511 = vmatpush1.msra.mxu0 0.0
    %5512 = vmatprep.subr.mxu0 0.0
    %5513 = vmatpush1.msra.mxu0 0.0
    %5514 = vmatprep.subr.mxu0 0.0
    %5515 = vmatpush1.msra.mxu0 0.0
    %5516 = vmatprep.subr.mxu0 0.0
    %5517 = vmatpush1.msra.mxu0 0.0
    %5518 = vmatprep.subr.mxu0 0.0
    %5519 = vmatpush1.msra.mxu0 0.0
    %5520 = vmatprep.subr.mxu0 0.0
    %5521 = vmatpush1.msra.mxu0 0.0
    %5522 = vmatprep.subr.mxu0 0.0
    %5523 = vmatpush1.msra.mxu0 0.0
    %5524 = vmatprep.subr.mxu0 0.0
    %5525 = vmatpush1.msra.mxu0 0.0
    %5526 = vmatprep.subr.mxu0 0.0
    %5527 = vmatpush1.msra.mxu0 0.0
    %5528 = vmatprep.subr.mxu0 0.0
    %5529 = vmatpush1.msra.mxu0 0.0
    %5530 = vmatprep.subr.mxu0 0.0
    %5531 = vmatpush1.msra.mxu0 0.0
    %5532 = vmatprep.subr.mxu0 0.0
    %5533 = vmatpush1.msra.mxu0 0.0
    %5534 = vmatprep.subr.mxu0 %v5504
    %5535 = vmatpush1.msra.mxu0 %v5503
    %5536 = vmatprep.subr.mxu0 %v5500
    %5537 = vmatpush1.msra.mxu0 %v5499
    %5538 = vmatprep.subr.mxu0 %v5496
    %5539 = vmatpush1.msra.mxu0 %v5495
    %5540 = vmatprep.subr.mxu0 %v5492
    %5541 = vmatpush1.msra.mxu0 %v5491
    %5542 = vmatprep.subr.mxu0 0.0
    %5543 = vmatpush2.msra.mxu0 0.0
    %5544 = vmatprep.subr.mxu0 0.0
    %5545 = vmatpush2.msra.mxu0 0.0
    %5546 = vmatprep.subr.mxu0 0.0
    %5547 = vmatpush2.msra.mxu0 0.0
    %5548 = vmatprep.subr.mxu0 0.0
    %5549 = vmatpush2.msra.mxu0 0.0
    %5550 = vmatprep.subr.mxu0 0.0
    %5551 = vmatpush2.msra.mxu0 0.0
    %5552 = vmatprep.subr.mxu0 0.0
    %5553 = vmatpush2.msra.mxu0 0.0
    %5554 = vmatprep.subr.mxu0 0.0
    %5555 = vmatpush2.msra.mxu0 0.0
    %5556 = vmatprep.subr.mxu0 0.0
    %5557 = vmatpush2.msra.mxu0 0.0
    %5558 = vmatprep.subr.mxu0 0.0
    %5559 = vmatpush2.msra.mxu0 0.0
    %5560 = vmatprep.subr.mxu0 0.0
    %5561 = vmatpush2.msra.mxu0 0.0
    %5562 = vmatprep.subr.mxu0 0.0
    %5563 = vmatpush2.msra.mxu0 0.0
    %5564 = vmatprep.subr.mxu0 0.0
    %5565 = vmatpush2.msra.mxu0 0.0
    %5566 = vmatprep.subr.mxu0 0.0
    %5567 = vmatpush2.msra.mxu0 0.0
    %5568 = vmatprep.subr.mxu0 0.0
    %5569 = vmatpush2.msra.mxu0 0.0
    %5570 = vmatprep.subr.mxu0 0.0
    %5571 = vmatpush2.msra.mxu0 0.0
    %5572 = vmatprep.subr.mxu0 0.0
    %5573 = vmatpush2.msra.mxu0 0.0
    %5574 = vmatprep.mubr.f32.mxu0 0.0
    %5575 = vmatmul.mubr.f32.gmra.mxu0 %v5508
    %v5576 = vpop.f32.mrf.mxu0
    %v5577 = vadd.f32 0.0, %v5576
    %v5578 = vpop.f32.mrf.mxu0
    %v5579 = vadd.f32 0.0, %v5578
    %5580 = vdwg.mxu0
    %5581 = vmatprep.subr.mxu0 0.0
    %5582 = vmatpush1.msra.mxu0 0.0
    %5583 = vmatprep.subr.mxu0 0.0
    %5584 = vmatpush1.msra.mxu0 0.0
    %5585 = vmatprep.subr.mxu0 0.0
    %5586 = vmatpush1.msra.mxu0 0.0
    %5587 = vmatprep.subr.mxu0 0.0
    %5588 = vmatpush1.msra.mxu0 0.0
    %5589 = vmatprep.subr.mxu0 0.0
    %5590 = vmatpush1.msra.mxu0 0.0
    %5591 = vmatprep.subr.mxu0 0.0
    %5592 = vmatpush1.msra.mxu0 0.0
    %5593 = vmatprep.subr.mxu0 0.0
    %5594 = vmatpush1.msra.mxu0 0.0
    %5595 = vmatprep.subr.mxu0 0.0
    %5596 = vmatpush1.msra.mxu0 0.0
    %5597 = vmatprep.subr.mxu0 0.0
    %5598 = vmatpush1.msra.mxu0 0.0
    %5599 = vmatprep.subr.mxu0 0.0
    %5600 = vmatpush1.msra.mxu0 0.0
    %5601 = vmatprep.subr.mxu0 0.0
    %5602 = vmatpush1.msra.mxu0 0.0
    %5603 = vmatprep.subr.mxu0 0.0
    %5604 = vmatpush1.msra.mxu0 0.0
    %5605 = vmatprep.subr.mxu0 %v5506
    %5606 = vmatpush1.msra.mxu0 %v5505
    %5607 = vmatprep.subr.mxu0 %v5502
    %5608 = vmatpush1.msra.mxu0 %v5501
    %5609 = vmatprep.subr.mxu0 %v5498
    %5610 = vmatpush1.msra.mxu0 %v5497
    %5611 = vmatprep.subr.mxu0 %v5494
    %5612 = vmatpush1.msra.mxu0 %v5493
    %5613 = vmatprep.subr.mxu0 0.0
    %5614 = vmatpush2.msra.mxu0 0.0
    %5615 = vmatprep.subr.mxu0 0.0
    %5616 = vmatpush2.msra.mxu0 0.0
    %5617 = vmatprep.subr.mxu0 0.0
    %5618 = vmatpush2.msra.mxu0 0.0
    %5619 = vmatprep.subr.mxu0 0.0
    %5620 = vmatpush2.msra.mxu0 0.0
    %5621 = vmatprep.subr.mxu0 0.0
    %5622 = vmatpush2.msra.mxu0 0.0
    %5623 = vmatprep.subr.mxu0 0.0
    %5624 = vmatpush2.msra.mxu0 0.0
    %5625 = vmatprep.subr.mxu0 0.0
    %5626 = vmatpush2.msra.mxu0 0.0
    %5627 = vmatprep.subr.mxu0 0.0
    %5628 = vmatpush2.msra.mxu0 0.0
    %5629 = vmatprep.subr.mxu0 0.0
    %5630 = vmatpush2.msra.mxu0 0.0
    %5631 = vmatprep.subr.mxu0 0.0
    %5632 = vmatpush2.msra.mxu0 0.0
    %5633 = vmatprep.subr.mxu0 0.0
    %5634 = vmatpush2.msra.mxu0 0.0
    %5635 = vmatprep.subr.mxu0 0.0
    %5636 = vmatpush2.msra.mxu0 0.0
    %5637 = vmatprep.subr.mxu0 0.0
    %5638 = vmatpush2.msra.mxu0 0.0
    %5639 = vmatprep.subr.mxu0 0.0
    %5640 = vmatpush2.msra.mxu0 0.0
    %5641 = vmatprep.subr.mxu0 0.0
    %5642 = vmatpush2.msra.mxu0 0.0
    %5643 = vmatprep.subr.mxu0 0.0
    %5644 = vmatpush2.msra.mxu0 0.0
    %5645 = vmatprep.mubr.f32.mxu0 0.0
    %5646 = vmatmul.mubr.f32.gmra.mxu0 %v5508
    %v5647 = vpop.f32.mrf.mxu0
    %v5648 = vadd.f32 0.0, %v5647
    %v5649 = vpop.f32.mrf.mxu0
    %v5650 = vadd.f32 0.0, %v5649
    %5651 = vdwg.mxu0
    %v5652 = vadd.f32 %v5416, %v5577
    %v5653 = vadd.f32 %v5418, %v5579
    %v5654 = vadd.f32 %v5487, %v5648
    %v5655 = vadd.f32 %v5489, %v5650
    %v5656 = vxor.u32 %v5652, 2147483648
    %v5657 = vxor.u32 %v5653, 2147483648
    %v5658 = vxor.u32 %v5654, 2147483648
    %v5659 = vmul.f32 %v5656, 1.442695
    %v5660 = vpow.pop %v5659
    %v5661 = vmul.f32 %v5657, 1.442695
    %v5662 = vpow.pop %v5661
    %v5663 = vmul.f32 %v5658, 1.442695
    %v5664 = vpow.pop %v5663
    %v5665 = vadd.f32 %v5660, 1.0
    %v5666 = vadd.f32 %v5662, 1.0
    %v5667 = vadd.f32 %v5664, 1.0
    %v5668 = vrcp.pop %v5665
    %v5669 = vmul.f32 1.0, %v5668
    %v5670 = vrcp.pop %v5666
    %v5671 = vmul.f32 1.0, %v5670
    %v5672 = vrcp.pop %v5667
    %v5673 = vmul.f32 1.0, %v5672
    %v5674 = vtanh.pop %v5655
    %v5675 = vmul.f32 %v5671, %v4725
    %v5676 = vmul.f32 %v5669, %v5674
    %v5677 = vadd.f32 %v5675, %v5676
    %v5678 = vtanh.pop %v5677
    %v5679 = vmul.f32 %v5673, %v5678
    %5680 = vst [vmem:[#allocation3 + $0x4] sm:$0x1] %v5679
    %s5681 = scalar_lea.vmem [#allocation2], 7
    %v5682 = vld [vmem:[%s5681] ss:$8 sm:$0xf]
    %v5683 = vld [vmem:[#allocation4 + $0x20] sm:$0xff]
    %v5684 = vld [vmem:[#allocation4 + $0x28] sm:$0xff]
    %v5685 = vld [vmem:[#allocation4 + $0x30] sm:$0xff]
    %v5686 = vld [vmem:[#allocation4 + $0x38] sm:$0xff]
    %v5687 = vld [vmem:[#allocation4 + $0x40] sm:$0xff]
    %v5688 = vld [vmem:[#allocation4 + $0x48] sm:$0xff]
    %v5689 = vld [vmem:[#allocation4 + $0x50] sm:$0xff]
    %v5690 = vld [vmem:[#allocation4 + $0x58] sm:$0xff]
    %v5691 = vld [vmem:[#allocation4 + $0x60] sm:$0xff]
    %v5692 = vld [vmem:[#allocation4 + $0x68] sm:$0xff]
    %v5693 = vld [vmem:[#allocation4 + $0x70] sm:$0xff]
    %v5694 = vld [vmem:[#allocation4 + $0x78] sm:$0xff]
    %v5695 = vld [vmem:[#allocation4 + $0x80] sm:$0xff]
    %v5696 = vld [vmem:[#allocation4 + $0x88] sm:$0xff]
    %v5697 = vld [vmem:[#allocation4 + $0x90] sm:$0xff]
    %v5698 = vld [vmem:[#allocation4 + $0x98] sm:$0xff]
    %v5700 = vsel %vm233, %v4941, 0
    %5702 = vmatprep.subr.mxu0 0.0
    %5703 = vmatpush1.msra.mxu0 0.0
    %5704 = vmatprep.subr.mxu0 0.0
    %5705 = vmatpush1.msra.mxu0 0.0
    %5706 = vmatprep.subr.mxu0 0.0
    %5707 = vmatpush1.msra.mxu0 0.0
    %5708 = vmatprep.subr.mxu0 0.0
    %5709 = vmatpush1.msra.mxu0 0.0
    %5710 = vmatprep.subr.mxu0 0.0
    %5711 = vmatpush1.msra.mxu0 0.0
    %5712 = vmatprep.subr.mxu0 0.0
    %5713 = vmatpush1.msra.mxu0 0.0
    %5714 = vmatprep.subr.mxu0 0.0
    %5715 = vmatpush1.msra.mxu0 0.0
    %5716 = vmatprep.subr.mxu0 0.0
    %5717 = vmatpush1.msra.mxu0 0.0
    %5718 = vmatprep.subr.mxu0 0.0
    %5719 = vmatpush1.msra.mxu0 0.0
    %5720 = vmatprep.subr.mxu0 0.0
    %5721 = vmatpush1.msra.mxu0 0.0
    %5722 = vmatprep.subr.mxu0 0.0
    %5723 = vmatpush1.msra.mxu0 0.0
    %5724 = vmatprep.subr.mxu0 0.0
    %5725 = vmatpush1.msra.mxu0 0.0
    %5726 = vmatprep.subr.mxu0 %v5696
    %5727 = vmatpush1.msra.mxu0 %v5695
    %5728 = vmatprep.subr.mxu0 %v5692
    %5729 = vmatpush1.msra.mxu0 %v5691
    %5730 = vmatprep.subr.mxu0 %v5688
    %5731 = vmatpush1.msra.mxu0 %v5687
    %5732 = vmatprep.subr.mxu0 %v5684
    %5733 = vmatpush1.msra.mxu0 %v5683
    %5734 = vmatprep.subr.mxu0 0.0
    %5735 = vmatpush2.msra.mxu0 0.0
    %5736 = vmatprep.subr.mxu0 0.0
    %5737 = vmatpush2.msra.mxu0 0.0
    %5738 = vmatprep.subr.mxu0 0.0
    %5739 = vmatpush2.msra.mxu0 0.0
    %5740 = vmatprep.subr.mxu0 0.0
    %5741 = vmatpush2.msra.mxu0 0.0
    %5742 = vmatprep.subr.mxu0 0.0
    %5743 = vmatpush2.msra.mxu0 0.0
    %5744 = vmatprep.subr.mxu0 0.0
    %5745 = vmatpush2.msra.mxu0 0.0
    %5746 = vmatprep.subr.mxu0 0.0
    %5747 = vmatpush2.msra.mxu0 0.0
    %5748 = vmatprep.subr.mxu0 0.0
    %5749 = vmatpush2.msra.mxu0 0.0
    %5750 = vmatprep.subr.mxu0 0.0
    %5751 = vmatpush2.msra.mxu0 0.0
    %5752 = vmatprep.subr.mxu0 0.0
    %5753 = vmatpush2.msra.mxu0 0.0
    %5754 = vmatprep.subr.mxu0 0.0
    %5755 = vmatpush2.msra.mxu0 0.0
    %5756 = vmatprep.subr.mxu0 0.0
    %5757 = vmatpush2.msra.mxu0 0.0
    %5758 = vmatprep.subr.mxu0 0.0
    %5759 = vmatpush2.msra.mxu0 0.0
    %5760 = vmatprep.subr.mxu0 0.0
    %5761 = vmatpush2.msra.mxu0 0.0
    %5762 = vmatprep.subr.mxu0 0.0
    %5763 = vmatpush2.msra.mxu0 0.0
    %5764 = vmatprep.subr.mxu0 0.0
    %5765 = vmatpush2.msra.mxu0 0.0
    %5766 = vmatprep.mubr.f32.mxu0 0.0
    %5767 = vmatmul.mubr.f32.gmra.mxu0 %v5700
    %v5768 = vpop.f32.mrf.mxu0
    %v5769 = vadd.f32 0.0, %v5768
    %v5770 = vpop.f32.mrf.mxu0
    %v5771 = vadd.f32 0.0, %v5770
    %5772 = vdwg.mxu0
    %5773 = vmatprep.subr.mxu0 0.0
    %5774 = vmatpush1.msra.mxu0 0.0
    %5775 = vmatprep.subr.mxu0 0.0
    %5776 = vmatpush1.msra.mxu0 0.0
    %5777 = vmatprep.subr.mxu0 0.0
    %5778 = vmatpush1.msra.mxu0 0.0
    %5779 = vmatprep.subr.mxu0 0.0
    %5780 = vmatpush1.msra.mxu0 0.0
    %5781 = vmatprep.subr.mxu0 0.0
    %5782 = vmatpush1.msra.mxu0 0.0
    %5783 = vmatprep.subr.mxu0 0.0
    %5784 = vmatpush1.msra.mxu0 0.0
    %5785 = vmatprep.subr.mxu0 0.0
    %5786 = vmatpush1.msra.mxu0 0.0
    %5787 = vmatprep.subr.mxu0 0.0
    %5788 = vmatpush1.msra.mxu0 0.0
    %5789 = vmatprep.subr.mxu0 0.0
    %5790 = vmatpush1.msra.mxu0 0.0
    %5791 = vmatprep.subr.mxu0 0.0
    %5792 = vmatpush1.msra.mxu0 0.0
    %5793 = vmatprep.subr.mxu0 0.0
    %5794 = vmatpush1.msra.mxu0 0.0
    %5795 = vmatprep.subr.mxu0 0.0
    %5796 = vmatpush1.msra.mxu0 0.0
    %5797 = vmatprep.subr.mxu0 %v5698
    %5798 = vmatpush1.msra.mxu0 %v5697
    %5799 = vmatprep.subr.mxu0 %v5694
    %5800 = vmatpush1.msra.mxu0 %v5693
    %5801 = vmatprep.subr.mxu0 %v5690
    %5802 = vmatpush1.msra.mxu0 %v5689
    %5803 = vmatprep.subr.mxu0 %v5686
    %5804 = vmatpush1.msra.mxu0 %v5685
    %5805 = vmatprep.subr.mxu0 0.0
    %5806 = vmatpush2.msra.mxu0 0.0
    %5807 = vmatprep.subr.mxu0 0.0
    %5808 = vmatpush2.msra.mxu0 0.0
    %5809 = vmatprep.subr.mxu0 0.0
    %5810 = vmatpush2.msra.mxu0 0.0
    %5811 = vmatprep.subr.mxu0 0.0
    %5812 = vmatpush2.msra.mxu0 0.0
    %5813 = vmatprep.subr.mxu0 0.0
    %5814 = vmatpush2.msra.mxu0 0.0
    %5815 = vmatprep.subr.mxu0 0.0
    %5816 = vmatpush2.msra.mxu0 0.0
    %5817 = vmatprep.subr.mxu0 0.0
    %5818 = vmatpush2.msra.mxu0 0.0
    %5819 = vmatprep.subr.mxu0 0.0
    %5820 = vmatpush2.msra.mxu0 0.0
    %5821 = vmatprep.subr.mxu0 0.0
    %5822 = vmatpush2.msra.mxu0 0.0
    %5823 = vmatprep.subr.mxu0 0.0
    %5824 = vmatpush2.msra.mxu0 0.0
    %5825 = vmatprep.subr.mxu0 0.0
    %5826 = vmatpush2.msra.mxu0 0.0
    %5827 = vmatprep.subr.mxu0 0.0
    %5828 = vmatpush2.msra.mxu0 0.0
    %5829 = vmatprep.subr.mxu0 0.0
    %5830 = vmatpush2.msra.mxu0 0.0
    %5831 = vmatprep.subr.mxu0 0.0
    %5832 = vmatpush2.msra.mxu0 0.0
    %5833 = vmatprep.subr.mxu0 0.0
    %5834 = vmatpush2.msra.mxu0 0.0
    %5835 = vmatprep.subr.mxu0 0.0
    %5836 = vmatpush2.msra.mxu0 0.0
    %5837 = vmatprep.mubr.f32.mxu0 0.0
    %5838 = vmatmul.mubr.f32.gmra.mxu0 %v5700
    %v5839 = vpop.f32.mrf.mxu0
    %v5840 = vadd.f32 0.0, %v5839
    %v5841 = vpop.f32.mrf.mxu0
    %v5842 = vadd.f32 0.0, %v5841
    %5843 = vdwg.mxu0
    %v5848 = vcombine.low %v5769, %v5771
    %v5849 = vcombine.low %v5840, %v5842
    %v5851 = vunpack.c.l.s4 1966171168
    %v5852 = vunpack.c.0.s8 %v5851
    %v5853 = vlaneseq
    %v5854 = vshrl.u32 %v5853, 7
    %v5855 = vsub.s32 %v5852, %v5854
    %v5856 = vrot.slane %v5848, %v5855
    %v5858 = vunpack.c.l.s4 1966171168
    %v5859 = vunpack.c.0.s8 %v5858
    %v5860 = vlaneseq
    %v5861 = vshrl.u32 %v5860, 7
    %v5862 = vsub.s32 %v5859, %v5861
    %v5863 = vrot.slane %v5849, %v5862
    %v5864 = vcombine.low %v5856, %v5863
    %v5866 = vunpack.c.l.s4 1966171168
    %v5867 = vunpack.c.0.s8 %v5866
    %v5868 = vlaneseq
    %v5869 = vshrl.u32 %v5868, 7
    %v5870 = vsub.s32 %v5867, %v5869
    %v5871 = vrot.slane %v5864, %v5870
    %v5873 = vadd.f32 %v5682, %v5871
    %v5874 = vxor.u32 %v5873, 2147483648
    %v5875 = vmul.f32 %v5874, 1.442695
    %v5876 = vpow.pop %v5875
    %v5877 = vadd.f32 %v5876, 1.0
    %v5878 = vrcp.pop %v5877
    %v5879 = vmul.f32 1.0, %v5878
    %v5881 = vrot.slane %v5873, 3
    %v5883 = vtanh.pop %v5881
    %v5885 = vrot.slane %v5879, 1
    %v5887 = vmul.f32 %v5885, %v4937
    %v5888 = vmul.f32 %v5879, %v5883
    %v5889 = vadd.f32 %v5887, %v5888
    %v5890 = vtanh.pop %v5889
    %v5891 = vrot.slane %v5879, 2
    %v5893 = vmul.f32 %v5891, %v5890
    %v5894 = vld [vmem:[#allocation4 + $0xa0] sm:$0xff]
    %v5895 = vld [vmem:[#allocation4 + $0xa8] sm:$0xff]
    %v5896 = vld [vmem:[#allocation4 + $0xb0] sm:$0xff]
    %v5897 = vld [vmem:[#allocation4 + $0xb8] sm:$0xff]
    %v5898 = vld [vmem:[#allocation4 + $0xc0] sm:$0xff]
    %v5899 = vld [vmem:[#allocation4 + $0xc8] sm:$0xff]
    %v5900 = vld [vmem:[#allocation4 + $0xd0] sm:$0xff]
    %v5901 = vld [vmem:[#allocation4 + $0xd8] sm:$0xff]
    %v5902 = vld [vmem:[#allocation4 + $0xe0] sm:$0xff]
    %v5903 = vld [vmem:[#allocation4 + $0xe8] sm:$0xff]
    %v5904 = vld [vmem:[#allocation4 + $0xf0] sm:$0xff]
    %v5905 = vld [vmem:[#allocation4 + $0xf8] sm:$0xff]
    %v5906 = vld [vmem:[#allocation4 + $0x100] sm:$0xff]
    %v5907 = vld [vmem:[#allocation4 + $0x108] sm:$0xff]
    %v5908 = vld [vmem:[#allocation4 + $0x110] sm:$0xff]
    %v5909 = vld [vmem:[#allocation4 + $0x118] sm:$0xff]
    %v5910 = vld [vmem:[%s642] ss:$8 sm:$0xf]
    %v5912 = vlaneseq
    %v5913 = vshrl.u32 %v5912, 7
    %v5914 = vsub.s32 0, %v5913
    %v5915 = vrot.slane %v5910, %v5914
    %v5916 = vlaneseq
    %v5917 = vshrl.u32 %v5916, 7
    %v5918 = vsub.s32 1, %v5917
    %v5919 = vrot.slane %v5910, %v5918
    %v5920 = vlaneseq
    %v5921 = vshrl.u32 %v5920, 7
    %v5922 = vsub.s32 2, %v5921
    %v5923 = vrot.slane %v5910, %v5922
    %v5924 = vlaneseq
    %v5925 = vshrl.u32 %v5924, 7
    %v5926 = vsub.s32 3, %v5925
    %v5927 = vrot.slane %v5910, %v5926
    %5932 = vmatprep.subr.mxu0 0.0
    %5933 = vmatpush1.msra.mxu0 0.0
    %5934 = vmatprep.subr.mxu0 0.0
    %5935 = vmatpush1.msra.mxu0 0.0
    %5936 = vmatprep.subr.mxu0 0.0
    %5937 = vmatpush1.msra.mxu0 0.0
    %5938 = vmatprep.subr.mxu0 0.0
    %5939 = vmatpush1.msra.mxu0 0.0
    %5940 = vmatprep.subr.mxu0 0.0
    %5941 = vmatpush1.msra.mxu0 0.0
    %5942 = vmatprep.subr.mxu0 0.0
    %5943 = vmatpush1.msra.mxu0 0.0
    %5944 = vmatprep.subr.mxu0 0.0
    %5945 = vmatpush1.msra.mxu0 0.0
    %5946 = vmatprep.subr.mxu0 0.0
    %5947 = vmatpush1.msra.mxu0 0.0
    %5948 = vmatprep.subr.mxu0 0.0
    %5949 = vmatpush1.msra.mxu0 0.0
    %5950 = vmatprep.subr.mxu0 0.0
    %5951 = vmatpush1.msra.mxu0 0.0
    %5952 = vmatprep.subr.mxu0 0.0
    %5953 = vmatpush1.msra.mxu0 0.0
    %5954 = vmatprep.subr.mxu0 0.0
    %5955 = vmatpush1.msra.mxu0 0.0
    %5956 = vmatprep.subr.mxu0 %v5907
    %5957 = vmatpush1.msra.mxu0 %v5906
    %5958 = vmatprep.subr.mxu0 %v5903
    %5959 = vmatpush1.msra.mxu0 %v5902
    %5960 = vmatprep.subr.mxu0 %v5899
    %5961 = vmatpush1.msra.mxu0 %v5898
    %5962 = vmatprep.subr.mxu0 %v5895
    %5963 = vmatpush1.msra.mxu0 %v5894
    %5964 = vmatprep.subr.mxu0 0.0
    %5965 = vmatpush2.msra.mxu0 0.0
    %5966 = vmatprep.subr.mxu0 0.0
    %5967 = vmatpush2.msra.mxu0 0.0
    %5968 = vmatprep.subr.mxu0 0.0
    %5969 = vmatpush2.msra.mxu0 0.0
    %5970 = vmatprep.subr.mxu0 0.0
    %5971 = vmatpush2.msra.mxu0 0.0
    %5972 = vmatprep.subr.mxu0 0.0
    %5973 = vmatpush2.msra.mxu0 0.0
    %5974 = vmatprep.subr.mxu0 0.0
    %5975 = vmatpush2.msra.mxu0 0.0
    %5976 = vmatprep.subr.mxu0 0.0
    %5977 = vmatpush2.msra.mxu0 0.0
    %5978 = vmatprep.subr.mxu0 0.0
    %5979 = vmatpush2.msra.mxu0 0.0
    %5980 = vmatprep.subr.mxu0 0.0
    %5981 = vmatpush2.msra.mxu0 0.0
    %5982 = vmatprep.subr.mxu0 0.0
    %5983 = vmatpush2.msra.mxu0 0.0
    %5984 = vmatprep.subr.mxu0 0.0
    %5985 = vmatpush2.msra.mxu0 0.0
    %5986 = vmatprep.subr.mxu0 0.0
    %5987 = vmatpush2.msra.mxu0 0.0
    %5988 = vmatprep.subr.mxu0 0.0
    %5989 = vmatpush2.msra.mxu0 0.0
    %5990 = vmatprep.subr.mxu0 0.0
    %5991 = vmatpush2.msra.mxu0 0.0
    %5992 = vmatprep.subr.mxu0 0.0
    %5993 = vmatpush2.msra.mxu0 0.0
    %5994 = vmatprep.subr.mxu0 0.0
    %5995 = vmatpush2.msra.mxu0 0.0
    %5996 = vmatprep.mubr.f32.mxu0 0.0
    %5997 = vmatmul.mubr.f32.gmra.mxu0 %v5700
    %v5998 = vpop.f32.mrf.mxu0
    %v5999 = vadd.f32 %v5915, %v5998
    %v6000 = vpop.f32.mrf.mxu0
    %v6001 = vadd.f32 %v5919, %v6000
    %6002 = vdwg.mxu0
    %6003 = vmatprep.subr.mxu0 0.0
    %6004 = vmatpush1.msra.mxu0 0.0
    %6005 = vmatprep.subr.mxu0 0.0
    %6006 = vmatpush1.msra.mxu0 0.0
    %6007 = vmatprep.subr.mxu0 0.0
    %6008 = vmatpush1.msra.mxu0 0.0
    %6009 = vmatprep.subr.mxu0 0.0
    %6010 = vmatpush1.msra.mxu0 0.0
    %6011 = vmatprep.subr.mxu0 0.0
    %6012 = vmatpush1.msra.mxu0 0.0
    %6013 = vmatprep.subr.mxu0 0.0
    %6014 = vmatpush1.msra.mxu0 0.0
    %6015 = vmatprep.subr.mxu0 0.0
    %6016 = vmatpush1.msra.mxu0 0.0
    %6017 = vmatprep.subr.mxu0 0.0
    %6018 = vmatpush1.msra.mxu0 0.0
    %6019 = vmatprep.subr.mxu0 0.0
    %6020 = vmatpush1.msra.mxu0 0.0
    %6021 = vmatprep.subr.mxu0 0.0
    %6022 = vmatpush1.msra.mxu0 0.0
    %6023 = vmatprep.subr.mxu0 0.0
    %6024 = vmatpush1.msra.mxu0 0.0
    %6025 = vmatprep.subr.mxu0 0.0
    %6026 = vmatpush1.msra.mxu0 0.0
    %6027 = vmatprep.subr.mxu0 %v5909
    %6028 = vmatpush1.msra.mxu0 %v5908
    %6029 = vmatprep.subr.mxu0 %v5905
    %6030 = vmatpush1.msra.mxu0 %v5904
    %6031 = vmatprep.subr.mxu0 %v5901
    %6032 = vmatpush1.msra.mxu0 %v5900
    %6033 = vmatprep.subr.mxu0 %v5897
    %6034 = vmatpush1.msra.mxu0 %v5896
    %6035 = vmatprep.subr.mxu0 0.0
    %6036 = vmatpush2.msra.mxu0 0.0
    %6037 = vmatprep.subr.mxu0 0.0
    %6038 = vmatpush2.msra.mxu0 0.0
    %6039 = vmatprep.subr.mxu0 0.0
    %6040 = vmatpush2.msra.mxu0 0.0
    %6041 = vmatprep.subr.mxu0 0.0
    %6042 = vmatpush2.msra.mxu0 0.0
    %6043 = vmatprep.subr.mxu0 0.0
    %6044 = vmatpush2.msra.mxu0 0.0
    %6045 = vmatprep.subr.mxu0 0.0
    %6046 = vmatpush2.msra.mxu0 0.0
    %6047 = vmatprep.subr.mxu0 0.0
    %6048 = vmatpush2.msra.mxu0 0.0
    %6049 = vmatprep.subr.mxu0 0.0
    %6050 = vmatpush2.msra.mxu0 0.0
    %6051 = vmatprep.subr.mxu0 0.0
    %6052 = vmatpush2.msra.mxu0 0.0
    %6053 = vmatprep.subr.mxu0 0.0
    %6054 = vmatpush2.msra.mxu0 0.0
    %6055 = vmatprep.subr.mxu0 0.0
    %6056 = vmatpush2.msra.mxu0 0.0
    %6057 = vmatprep.subr.mxu0 0.0
    %6058 = vmatpush2.msra.mxu0 0.0
    %6059 = vmatprep.subr.mxu0 0.0
    %6060 = vmatpush2.msra.mxu0 0.0
    %6061 = vmatprep.subr.mxu0 0.0
    %6062 = vmatpush2.msra.mxu0 0.0
    %6063 = vmatprep.subr.mxu0 0.0
    %6064 = vmatpush2.msra.mxu0 0.0
    %6065 = vmatprep.subr.mxu0 0.0
    %6066 = vmatpush2.msra.mxu0 0.0
    %6067 = vmatprep.mubr.f32.mxu0 0.0
    %6068 = vmatmul.mubr.f32.gmra.mxu0 %v5700
    %v6069 = vpop.f32.mrf.mxu0
    %v6070 = vadd.f32 %v5923, %v6069
    %v6071 = vpop.f32.mrf.mxu0
    %v6072 = vadd.f32 %v5927, %v6071
    %6073 = vdwg.mxu0
    %v6074 = vld [vmem:[#allocation4 + $0x120] sm:$0xff]
    %v6075 = vld [vmem:[#allocation4 + $0x128] sm:$0xff]
    %v6076 = vld [vmem:[#allocation4 + $0x130] sm:$0xff]
    %v6077 = vld [vmem:[#allocation4 + $0x138] sm:$0xff]
    %v6078 = vld [vmem:[#allocation4 + $0x140] sm:$0xff]
    %v6079 = vld [vmem:[#allocation4 + $0x148] sm:$0xff]
    %v6080 = vld [vmem:[#allocation4 + $0x150] sm:$0xff]
    %v6081 = vld [vmem:[#allocation4 + $0x158] sm:$0xff]
    %v6082 = vld [vmem:[#allocation4 + $0x160] sm:$0xff]
    %v6083 = vld [vmem:[#allocation4 + $0x168] sm:$0xff]
    %v6084 = vld [vmem:[#allocation4 + $0x170] sm:$0xff]
    %v6085 = vld [vmem:[#allocation4 + $0x178] sm:$0xff]
    %v6086 = vld [vmem:[#allocation4 + $0x180] sm:$0xff]
    %v6087 = vld [vmem:[#allocation4 + $0x188] sm:$0xff]
    %v6088 = vld [vmem:[#allocation4 + $0x190] sm:$0xff]
    %v6089 = vld [vmem:[#allocation4 + $0x198] sm:$0xff]
    %v6091 = vsel %vm233, %v5310, 0
    %6093 = vmatprep.subr.mxu0 0.0
    %6094 = vmatpush1.msra.mxu0 0.0
    %6095 = vmatprep.subr.mxu0 0.0
    %6096 = vmatpush1.msra.mxu0 0.0
    %6097 = vmatprep.subr.mxu0 0.0
    %6098 = vmatpush1.msra.mxu0 0.0
    %6099 = vmatprep.subr.mxu0 0.0
    %6100 = vmatpush1.msra.mxu0 0.0
    %6101 = vmatprep.subr.mxu0 0.0
    %6102 = vmatpush1.msra.mxu0 0.0
    %6103 = vmatprep.subr.mxu0 0.0
    %6104 = vmatpush1.msra.mxu0 0.0
    %6105 = vmatprep.subr.mxu0 0.0
    %6106 = vmatpush1.msra.mxu0 0.0
    %6107 = vmatprep.subr.mxu0 0.0
    %6108 = vmatpush1.msra.mxu0 0.0
    %6109 = vmatprep.subr.mxu0 0.0
    %6110 = vmatpush1.msra.mxu0 0.0
    %6111 = vmatprep.subr.mxu0 0.0
    %6112 = vmatpush1.msra.mxu0 0.0
    %6113 = vmatprep.subr.mxu0 0.0
    %6114 = vmatpush1.msra.mxu0 0.0
    %6115 = vmatprep.subr.mxu0 0.0
    %6116 = vmatpush1.msra.mxu0 0.0
    %6117 = vmatprep.subr.mxu0 %v6087
    %6118 = vmatpush1.msra.mxu0 %v6086
    %6119 = vmatprep.subr.mxu0 %v6083
    %6120 = vmatpush1.msra.mxu0 %v6082
    %6121 = vmatprep.subr.mxu0 %v6079
    %6122 = vmatpush1.msra.mxu0 %v6078
    %6123 = vmatprep.subr.mxu0 %v6075
    %6124 = vmatpush1.msra.mxu0 %v6074
    %6125 = vmatprep.subr.mxu0 0.0
    %6126 = vmatpush2.msra.mxu0 0.0
    %6127 = vmatprep.subr.mxu0 0.0
    %6128 = vmatpush2.msra.mxu0 0.0
    %6129 = vmatprep.subr.mxu0 0.0
    %6130 = vmatpush2.msra.mxu0 0.0
    %6131 = vmatprep.subr.mxu0 0.0
    %6132 = vmatpush2.msra.mxu0 0.0
    %6133 = vmatprep.subr.mxu0 0.0
    %6134 = vmatpush2.msra.mxu0 0.0
    %6135 = vmatprep.subr.mxu0 0.0
    %6136 = vmatpush2.msra.mxu0 0.0
    %6137 = vmatprep.subr.mxu0 0.0
    %6138 = vmatpush2.msra.mxu0 0.0
    %6139 = vmatprep.subr.mxu0 0.0
    %6140 = vmatpush2.msra.mxu0 0.0
    %6141 = vmatprep.subr.mxu0 0.0
    %6142 = vmatpush2.msra.mxu0 0.0
    %6143 = vmatprep.subr.mxu0 0.0
    %6144 = vmatpush2.msra.mxu0 0.0
    %6145 = vmatprep.subr.mxu0 0.0
    %6146 = vmatpush2.msra.mxu0 0.0
    %6147 = vmatprep.subr.mxu0 0.0
    %6148 = vmatpush2.msra.mxu0 0.0
    %6149 = vmatprep.subr.mxu0 0.0
    %6150 = vmatpush2.msra.mxu0 0.0
    %6151 = vmatprep.subr.mxu0 0.0
    %6152 = vmatpush2.msra.mxu0 0.0
    %6153 = vmatprep.subr.mxu0 0.0
    %6154 = vmatpush2.msra.mxu0 0.0
    %6155 = vmatprep.subr.mxu0 0.0
    %6156 = vmatpush2.msra.mxu0 0.0
    %6157 = vmatprep.mubr.f32.mxu0 0.0
    %6158 = vmatmul.mubr.f32.gmra.mxu0 %v6091
    %v6159 = vpop.f32.mrf.mxu0
    %v6160 = vadd.f32 0.0, %v6159
    %v6161 = vpop.f32.mrf.mxu0
    %v6162 = vadd.f32 0.0, %v6161
    %6163 = vdwg.mxu0
    %6164 = vmatprep.subr.mxu0 0.0
    %6165 = vmatpush1.msra.mxu0 0.0
    %6166 = vmatprep.subr.mxu0 0.0
    %6167 = vmatpush1.msra.mxu0 0.0
    %6168 = vmatprep.subr.mxu0 0.0
    %6169 = vmatpush1.msra.mxu0 0.0
    %6170 = vmatprep.subr.mxu0 0.0
    %6171 = vmatpush1.msra.mxu0 0.0
    %6172 = vmatprep.subr.mxu0 0.0
    %6173 = vmatpush1.msra.mxu0 0.0
    %6174 = vmatprep.subr.mxu0 0.0
    %6175 = vmatpush1.msra.mxu0 0.0
    %6176 = vmatprep.subr.mxu0 0.0
    %6177 = vmatpush1.msra.mxu0 0.0
    %6178 = vmatprep.subr.mxu0 0.0
    %6179 = vmatpush1.msra.mxu0 0.0
    %6180 = vmatprep.subr.mxu0 0.0
    %6181 = vmatpush1.msra.mxu0 0.0
    %6182 = vmatprep.subr.mxu0 0.0
    %6183 = vmatpush1.msra.mxu0 0.0
    %6184 = vmatprep.subr.mxu0 0.0
    %6185 = vmatpush1.msra.mxu0 0.0
    %6186 = vmatprep.subr.mxu0 0.0
    %6187 = vmatpush1.msra.mxu0 0.0
    %6188 = vmatprep.subr.mxu0 %v6089
    %6189 = vmatpush1.msra.mxu0 %v6088
    %6190 = vmatprep.subr.mxu0 %v6085
    %6191 = vmatpush1.msra.mxu0 %v6084
    %6192 = vmatprep.subr.mxu0 %v6081
    %6193 = vmatpush1.msra.mxu0 %v6080
    %6194 = vmatprep.subr.mxu0 %v6077
    %6195 = vmatpush1.msra.mxu0 %v6076
    %6196 = vmatprep.subr.mxu0 0.0
    %6197 = vmatpush2.msra.mxu0 0.0
    %6198 = vmatprep.subr.mxu0 0.0
    %6199 = vmatpush2.msra.mxu0 0.0
    %6200 = vmatprep.subr.mxu0 0.0
    %6201 = vmatpush2.msra.mxu0 0.0
    %6202 = vmatprep.subr.mxu0 0.0
    %6203 = vmatpush2.msra.mxu0 0.0
    %6204 = vmatprep.subr.mxu0 0.0
    %6205 = vmatpush2.msra.mxu0 0.0
    %6206 = vmatprep.subr.mxu0 0.0
    %6207 = vmatpush2.msra.mxu0 0.0
    %6208 = vmatprep.subr.mxu0 0.0
    %6209 = vmatpush2.msra.mxu0 0.0
    %6210 = vmatprep.subr.mxu0 0.0
    %6211 = vmatpush2.msra.mxu0 0.0
    %6212 = vmatprep.subr.mxu0 0.0
    %6213 = vmatpush2.msra.mxu0 0.0
    %6214 = vmatprep.subr.mxu0 0.0
    %6215 = vmatpush2.msra.mxu0 0.0
    %6216 = vmatprep.subr.mxu0 0.0
    %6217 = vmatpush2.msra.mxu0 0.0
    %6218 = vmatprep.subr.mxu0 0.0
    %6219 = vmatpush2.msra.mxu0 0.0
    %6220 = vmatprep.subr.mxu0 0.0
    %6221 = vmatpush2.msra.mxu0 0.0
    %6222 = vmatprep.subr.mxu0 0.0
    %6223 = vmatpush2.msra.mxu0 0.0
    %6224 = vmatprep.subr.mxu0 0.0
    %6225 = vmatpush2.msra.mxu0 0.0
    %6226 = vmatprep.subr.mxu0 0.0
    %6227 = vmatpush2.msra.mxu0 0.0
    %6228 = vmatprep.mubr.f32.mxu0 0.0
    %6229 = vmatmul.mubr.f32.gmra.mxu0 %v6091
    %v6230 = vpop.f32.mrf.mxu0
    %v6231 = vadd.f32 0.0, %v6230
    %v6232 = vpop.f32.mrf.mxu0
    %v6233 = vadd.f32 0.0, %v6232
    %6234 = vdwg.mxu0
    %v6235 = vadd.f32 %v5999, %v6160
    %v6236 = vadd.f32 %v6001, %v6162
    %v6237 = vadd.f32 %v6070, %v6231
    %v6238 = vadd.f32 %v6072, %v6233
    %v6239 = vxor.u32 %v6235, 2147483648
    %v6240 = vxor.u32 %v6236, 2147483648
    %v6241 = vxor.u32 %v6237, 2147483648
    %v6242 = vmul.f32 %v6239, 1.442695
    %v6243 = vpow.pop %v6242
    %v6244 = vmul.f32 %v6240, 1.442695
    %v6245 = vpow.pop %v6244
    %v6246 = vmul.f32 %v6241, 1.442695
    %v6247 = vpow.pop %v6246
    %v6248 = vadd.f32 %v6243, 1.0
    %v6249 = vadd.f32 %v6245, 1.0
    %v6250 = vadd.f32 %v6247, 1.0
    %v6251 = vrcp.pop %v6248
    %v6252 = vmul.f32 1.0, %v6251
    %v6253 = vrcp.pop %v6249
    %v6254 = vmul.f32 1.0, %v6253
    %v6255 = vrcp.pop %v6250
    %v6256 = vmul.f32 1.0, %v6255
    %v6257 = vtanh.pop %v6238
    %v6258 = vmul.f32 %v6254, %v5308
    %v6259 = vmul.f32 %v6252, %v6257
    %v6260 = vadd.f32 %v6258, %v6259
    %v6261 = vtanh.pop %v6260
    %v6262 = vmul.f32 %v6256, %v6261
    %v6263 = vld [vmem:[#allocation4 + $0x1a0] sm:$0xff]
    %v6264 = vld [vmem:[#allocation4 + $0x1a8] sm:$0xff]
    %v6265 = vld [vmem:[#allocation4 + $0x1b0] sm:$0xff]
    %v6266 = vld [vmem:[#allocation4 + $0x1b8] sm:$0xff]
    %v6267 = vld [vmem:[#allocation4 + $0x1c0] sm:$0xff]
    %v6268 = vld [vmem:[#allocation4 + $0x1c8] sm:$0xff]
    %v6269 = vld [vmem:[#allocation4 + $0x1d0] sm:$0xff]
    %v6270 = vld [vmem:[#allocation4 + $0x1d8] sm:$0xff]
    %v6271 = vld [vmem:[#allocation4 + $0x1e0] sm:$0xff]
    %v6272 = vld [vmem:[#allocation4 + $0x1e8] sm:$0xff]
    %v6273 = vld [vmem:[#allocation4 + $0x1f0] sm:$0xff]
    %v6274 = vld [vmem:[#allocation4 + $0x1f8] sm:$0xff]
    %v6275 = vld [vmem:[#allocation4 + $0x200] sm:$0xff]
    %v6276 = vld [vmem:[#allocation4 + $0x208] sm:$0xff]
    %v6277 = vld [vmem:[#allocation4 + $0x210] sm:$0xff]
    %v6278 = vld [vmem:[#allocation4 + $0x218] sm:$0xff]
    %v6279 = vld [vmem:[%s1521] ss:$8 sm:$0xf]
    %v6281 = vlaneseq
    %v6282 = vshrl.u32 %v6281, 7
    %v6283 = vsub.s32 0, %v6282
    %v6284 = vrot.slane %v6279, %v6283
    %v6285 = vlaneseq
    %v6286 = vshrl.u32 %v6285, 7
    %v6287 = vsub.s32 1, %v6286
    %v6288 = vrot.slane %v6279, %v6287
    %v6289 = vlaneseq
    %v6290 = vshrl.u32 %v6289, 7
    %v6291 = vsub.s32 2, %v6290
    %v6292 = vrot.slane %v6279, %v6291
    %v6293 = vlaneseq
    %v6294 = vshrl.u32 %v6293, 7
    %v6295 = vsub.s32 3, %v6294
    %v6296 = vrot.slane %v6279, %v6295
    %6301 = vmatprep.subr.mxu0 0.0
    %6302 = vmatpush1.msra.mxu0 0.0
    %6303 = vmatprep.subr.mxu0 0.0
    %6304 = vmatpush1.msra.mxu0 0.0
    %6305 = vmatprep.subr.mxu0 0.0
    %6306 = vmatpush1.msra.mxu0 0.0
    %6307 = vmatprep.subr.mxu0 0.0
    %6308 = vmatpush1.msra.mxu0 0.0
    %6309 = vmatprep.subr.mxu0 0.0
    %6310 = vmatpush1.msra.mxu0 0.0
    %6311 = vmatprep.subr.mxu0 0.0
    %6312 = vmatpush1.msra.mxu0 0.0
    %6313 = vmatprep.subr.mxu0 0.0
    %6314 = vmatpush1.msra.mxu0 0.0
    %6315 = vmatprep.subr.mxu0 0.0
    %6316 = vmatpush1.msra.mxu0 0.0
    %6317 = vmatprep.subr.mxu0 0.0
    %6318 = vmatpush1.msra.mxu0 0.0
    %6319 = vmatprep.subr.mxu0 0.0
    %6320 = vmatpush1.msra.mxu0 0.0
    %6321 = vmatprep.subr.mxu0 0.0
    %6322 = vmatpush1.msra.mxu0 0.0
    %6323 = vmatprep.subr.mxu0 0.0
    %6324 = vmatpush1.msra.mxu0 0.0
    %6325 = vmatprep.subr.mxu0 %v6276
    %6326 = vmatpush1.msra.mxu0 %v6275
    %6327 = vmatprep.subr.mxu0 %v6272
    %6328 = vmatpush1.msra.mxu0 %v6271
    %6329 = vmatprep.subr.mxu0 %v6268
    %6330 = vmatpush1.msra.mxu0 %v6267
    %6331 = vmatprep.subr.mxu0 %v6264
    %6332 = vmatpush1.msra.mxu0 %v6263
    %6333 = vmatprep.subr.mxu0 0.0
    %6334 = vmatpush2.msra.mxu0 0.0
    %6335 = vmatprep.subr.mxu0 0.0
    %6336 = vmatpush2.msra.mxu0 0.0
    %6337 = vmatprep.subr.mxu0 0.0
    %6338 = vmatpush2.msra.mxu0 0.0
    %6339 = vmatprep.subr.mxu0 0.0
    %6340 = vmatpush2.msra.mxu0 0.0
    %6341 = vmatprep.subr.mxu0 0.0
    %6342 = vmatpush2.msra.mxu0 0.0
    %6343 = vmatprep.subr.mxu0 0.0
    %6344 = vmatpush2.msra.mxu0 0.0
    %6345 = vmatprep.subr.mxu0 0.0
    %6346 = vmatpush2.msra.mxu0 0.0
    %6347 = vmatprep.subr.mxu0 0.0
    %6348 = vmatpush2.msra.mxu0 0.0
    %6349 = vmatprep.subr.mxu0 0.0
    %6350 = vmatpush2.msra.mxu0 0.0
    %6351 = vmatprep.subr.mxu0 0.0
    %6352 = vmatpush2.msra.mxu0 0.0
    %6353 = vmatprep.subr.mxu0 0.0
    %6354 = vmatpush2.msra.mxu0 0.0
    %6355 = vmatprep.subr.mxu0 0.0
    %6356 = vmatpush2.msra.mxu0 0.0
    %6357 = vmatprep.subr.mxu0 0.0
    %6358 = vmatpush2.msra.mxu0 0.0
    %6359 = vmatprep.subr.mxu0 0.0
    %6360 = vmatpush2.msra.mxu0 0.0
    %6361 = vmatprep.subr.mxu0 0.0
    %6362 = vmatpush2.msra.mxu0 0.0
    %6363 = vmatprep.subr.mxu0 0.0
    %6364 = vmatpush2.msra.mxu0 0.0
    %6365 = vmatprep.mubr.f32.mxu0 0.0
    %6366 = vmatmul.mubr.f32.gmra.mxu0 %v6091
    %v6367 = vpop.f32.mrf.mxu0
    %v6368 = vadd.f32 %v6284, %v6367
    %v6369 = vpop.f32.mrf.mxu0
    %v6370 = vadd.f32 %v6288, %v6369
    %6371 = vdwg.mxu0
    %6372 = vmatprep.subr.mxu0 0.0
    %6373 = vmatpush1.msra.mxu0 0.0
    %6374 = vmatprep.subr.mxu0 0.0
    %6375 = vmatpush1.msra.mxu0 0.0
    %6376 = vmatprep.subr.mxu0 0.0
    %6377 = vmatpush1.msra.mxu0 0.0
    %6378 = vmatprep.subr.mxu0 0.0
    %6379 = vmatpush1.msra.mxu0 0.0
    %6380 = vmatprep.subr.mxu0 0.0
    %6381 = vmatpush1.msra.mxu0 0.0
    %6382 = vmatprep.subr.mxu0 0.0
    %6383 = vmatpush1.msra.mxu0 0.0
    %6384 = vmatprep.subr.mxu0 0.0
    %6385 = vmatpush1.msra.mxu0 0.0
    %6386 = vmatprep.subr.mxu0 0.0
    %6387 = vmatpush1.msra.mxu0 0.0
    %6388 = vmatprep.subr.mxu0 0.0
    %6389 = vmatpush1.msra.mxu0 0.0
    %6390 = vmatprep.subr.mxu0 0.0
    %6391 = vmatpush1.msra.mxu0 0.0
    %6392 = vmatprep.subr.mxu0 0.0
    %6393 = vmatpush1.msra.mxu0 0.0
    %6394 = vmatprep.subr.mxu0 0.0
    %6395 = vmatpush1.msra.mxu0 0.0
    %6396 = vmatprep.subr.mxu0 %v6278
    %6397 = vmatpush1.msra.mxu0 %v6277
    %6398 = vmatprep.subr.mxu0 %v6274
    %6399 = vmatpush1.msra.mxu0 %v6273
    %6400 = vmatprep.subr.mxu0 %v6270
    %6401 = vmatpush1.msra.mxu0 %v6269
    %6402 = vmatprep.subr.mxu0 %v6266
    %6403 = vmatpush1.msra.mxu0 %v6265
    %6404 = vmatprep.subr.mxu0 0.0
    %6405 = vmatpush2.msra.mxu0 0.0
    %6406 = vmatprep.subr.mxu0 0.0
    %6407 = vmatpush2.msra.mxu0 0.0
    %6408 = vmatprep.subr.mxu0 0.0
    %6409 = vmatpush2.msra.mxu0 0.0
    %6410 = vmatprep.subr.mxu0 0.0
    %6411 = vmatpush2.msra.mxu0 0.0
    %6412 = vmatprep.subr.mxu0 0.0
    %6413 = vmatpush2.msra.mxu0 0.0
    %6414 = vmatprep.subr.mxu0 0.0
    %6415 = vmatpush2.msra.mxu0 0.0
    %6416 = vmatprep.subr.mxu0 0.0
    %6417 = vmatpush2.msra.mxu0 0.0
    %6418 = vmatprep.subr.mxu0 0.0
    %6419 = vmatpush2.msra.mxu0 0.0
    %6420 = vmatprep.subr.mxu0 0.0
    %6421 = vmatpush2.msra.mxu0 0.0
    %6422 = vmatprep.subr.mxu0 0.0
    %6423 = vmatpush2.msra.mxu0 0.0
    %6424 = vmatprep.subr.mxu0 0.0
    %6425 = vmatpush2.msra.mxu0 0.0
    %6426 = vmatprep.subr.mxu0 0.0
    %6427 = vmatpush2.msra.mxu0 0.0
    %6428 = vmatprep.subr.mxu0 0.0
    %6429 = vmatpush2.msra.mxu0 0.0
    %6430 = vmatprep.subr.mxu0 0.0
    %6431 = vmatpush2.msra.mxu0 0.0
    %6432 = vmatprep.subr.mxu0 0.0
    %6433 = vmatpush2.msra.mxu0 0.0
    %6434 = vmatprep.subr.mxu0 0.0
    %6435 = vmatpush2.msra.mxu0 0.0
    %6436 = vmatprep.mubr.f32.mxu0 0.0
    %6437 = vmatmul.mubr.f32.gmra.mxu0 %v6091
    %v6438 = vpop.f32.mrf.mxu0
    %v6439 = vadd.f32 %v6292, %v6438
    %v6440 = vpop.f32.mrf.mxu0
    %v6441 = vadd.f32 %v6296, %v6440
    %6442 = vdwg.mxu0
    %v6443 = vld [vmem:[#allocation4 + $0x220] sm:$0xff]
    %v6444 = vld [vmem:[#allocation4 + $0x228] sm:$0xff]
    %v6445 = vld [vmem:[#allocation4 + $0x230] sm:$0xff]
    %v6446 = vld [vmem:[#allocation4 + $0x238] sm:$0xff]
    %v6447 = vld [vmem:[#allocation4 + $0x240] sm:$0xff]
    %v6448 = vld [vmem:[#allocation4 + $0x248] sm:$0xff]
    %v6449 = vld [vmem:[#allocation4 + $0x250] sm:$0xff]
    %v6450 = vld [vmem:[#allocation4 + $0x258] sm:$0xff]
    %v6451 = vld [vmem:[#allocation4 + $0x260] sm:$0xff]
    %v6452 = vld [vmem:[#allocation4 + $0x268] sm:$0xff]
    %v6453 = vld [vmem:[#allocation4 + $0x270] sm:$0xff]
    %v6454 = vld [vmem:[#allocation4 + $0x278] sm:$0xff]
    %v6455 = vld [vmem:[#allocation4 + $0x280] sm:$0xff]
    %v6456 = vld [vmem:[#allocation4 + $0x288] sm:$0xff]
    %v6457 = vld [vmem:[#allocation4 + $0x290] sm:$0xff]
    %v6458 = vld [vmem:[#allocation4 + $0x298] sm:$0xff]
    %v6460 = vsel %vm233, %v5679, 0
    %6462 = vmatprep.subr.mxu0 0.0
    %6463 = vmatpush1.msra.mxu0 0.0
    %6464 = vmatprep.subr.mxu0 0.0
    %6465 = vmatpush1.msra.mxu0 0.0
    %6466 = vmatprep.subr.mxu0 0.0
    %6467 = vmatpush1.msra.mxu0 0.0
    %6468 = vmatprep.subr.mxu0 0.0
    %6469 = vmatpush1.msra.mxu0 0.0
    %6470 = vmatprep.subr.mxu0 0.0
    %6471 = vmatpush1.msra.mxu0 0.0
    %6472 = vmatprep.subr.mxu0 0.0
    %6473 = vmatpush1.msra.mxu0 0.0
    %6474 = vmatprep.subr.mxu0 0.0
    %6475 = vmatpush1.msra.mxu0 0.0
    %6476 = vmatprep.subr.mxu0 0.0
    %6477 = vmatpush1.msra.mxu0 0.0
    %6478 = vmatprep.subr.mxu0 0.0
    %6479 = vmatpush1.msra.mxu0 0.0
    %6480 = vmatprep.subr.mxu0 0.0
    %6481 = vmatpush1.msra.mxu0 0.0
    %6482 = vmatprep.subr.mxu0 0.0
    %6483 = vmatpush1.msra.mxu0 0.0
    %6484 = vmatprep.subr.mxu0 0.0
    %6485 = vmatpush1.msra.mxu0 0.0
    %6486 = vmatprep.subr.mxu0 %v6456
    %6487 = vmatpush1.msra.mxu0 %v6455
    %6488 = vmatprep.subr.mxu0 %v6452
    %6489 = vmatpush1.msra.mxu0 %v6451
    %6490 = vmatprep.subr.mxu0 %v6448
    %6491 = vmatpush1.msra.mxu0 %v6447
    %6492 = vmatprep.subr.mxu0 %v6444
    %6493 = vmatpush1.msra.mxu0 %v6443
    %6494 = vmatprep.subr.mxu0 0.0
    %6495 = vmatpush2.msra.mxu0 0.0
    %6496 = vmatprep.subr.mxu0 0.0
    %6497 = vmatpush2.msra.mxu0 0.0
    %6498 = vmatprep.subr.mxu0 0.0
    %6499 = vmatpush2.msra.mxu0 0.0
    %6500 = vmatprep.subr.mxu0 0.0
    %6501 = vmatpush2.msra.mxu0 0.0
    %6502 = vmatprep.subr.mxu0 0.0
    %6503 = vmatpush2.msra.mxu0 0.0
    %6504 = vmatprep.subr.mxu0 0.0
    %6505 = vmatpush2.msra.mxu0 0.0
    %6506 = vmatprep.subr.mxu0 0.0
    %6507 = vmatpush2.msra.mxu0 0.0
    %6508 = vmatprep.subr.mxu0 0.0
    %6509 = vmatpush2.msra.mxu0 0.0
    %6510 = vmatprep.subr.mxu0 0.0
    %6511 = vmatpush2.msra.mxu0 0.0
    %6512 = vmatprep.subr.mxu0 0.0
    %6513 = vmatpush2.msra.mxu0 0.0
    %6514 = vmatprep.subr.mxu0 0.0
    %6515 = vmatpush2.msra.mxu0 0.0
    %6516 = vmatprep.subr.mxu0 0.0
    %6517 = vmatpush2.msra.mxu0 0.0
    %6518 = vmatprep.subr.mxu0 0.0
    %6519 = vmatpush2.msra.mxu0 0.0
    %6520 = vmatprep.subr.mxu0 0.0
    %6521 = vmatpush2.msra.mxu0 0.0
    %6522 = vmatprep.subr.mxu0 0.0
    %6523 = vmatpush2.msra.mxu0 0.0
    %6524 = vmatprep.subr.mxu0 0.0
    %6525 = vmatpush2.msra.mxu0 0.0
    %6526 = vmatprep.mubr.f32.mxu0 0.0
    %6527 = vmatmul.mubr.f32.gmra.mxu0 %v6460
    %v6528 = vpop.f32.mrf.mxu0
    %v6529 = vadd.f32 0.0, %v6528
    %v6530 = vpop.f32.mrf.mxu0
    %v6531 = vadd.f32 0.0, %v6530
    %6532 = vdwg.mxu0
    %6533 = vmatprep.subr.mxu0 0.0
    %6534 = vmatpush1.msra.mxu0 0.0
    %6535 = vmatprep.subr.mxu0 0.0
    %6536 = vmatpush1.msra.mxu0 0.0
    %6537 = vmatprep.subr.mxu0 0.0
    %6538 = vmatpush1.msra.mxu0 0.0
    %6539 = vmatprep.subr.mxu0 0.0
    %6540 = vmatpush1.msra.mxu0 0.0
    %6541 = vmatprep.subr.mxu0 0.0
    %6542 = vmatpush1.msra.mxu0 0.0
    %6543 = vmatprep.subr.mxu0 0.0
    %6544 = vmatpush1.msra.mxu0 0.0
    %6545 = vmatprep.subr.mxu0 0.0
    %6546 = vmatpush1.msra.mxu0 0.0
    %6547 = vmatprep.subr.mxu0 0.0
    %6548 = vmatpush1.msra.mxu0 0.0
    %6549 = vmatprep.subr.mxu0 0.0
    %6550 = vmatpush1.msra.mxu0 0.0
    %6551 = vmatprep.subr.mxu0 0.0
    %6552 = vmatpush1.msra.mxu0 0.0
    %6553 = vmatprep.subr.mxu0 0.0
    %6554 = vmatpush1.msra.mxu0 0.0
    %6555 = vmatprep.subr.mxu0 0.0
    %6556 = vmatpush1.msra.mxu0 0.0
    %6557 = vmatprep.subr.mxu0 %v6458
    %6558 = vmatpush1.msra.mxu0 %v6457
    %6559 = vmatprep.subr.mxu0 %v6454
    %6560 = vmatpush1.msra.mxu0 %v6453
    %6561 = vmatprep.subr.mxu0 %v6450
    %6562 = vmatpush1.msra.mxu0 %v6449
    %6563 = vmatprep.subr.mxu0 %v6446
    %6564 = vmatpush1.msra.mxu0 %v6445
    %6565 = vmatprep.subr.mxu0 0.0
    %6566 = vmatpush2.msra.mxu0 0.0
    %6567 = vmatprep.subr.mxu0 0.0
    %6568 = vmatpush2.msra.mxu0 0.0
    %6569 = vmatprep.subr.mxu0 0.0
    %6570 = vmatpush2.msra.mxu0 0.0
    %6571 = vmatprep.subr.mxu0 0.0
    %6572 = vmatpush2.msra.mxu0 0.0
    %6573 = vmatprep.subr.mxu0 0.0
    %6574 = vmatpush2.msra.mxu0 0.0
    %6575 = vmatprep.subr.mxu0 0.0
    %6576 = vmatpush2.msra.mxu0 0.0
    %6577 = vmatprep.subr.mxu0 0.0
    %6578 = vmatpush2.msra.mxu0 0.0
    %6579 = vmatprep.subr.mxu0 0.0
    %6580 = vmatpush2.msra.mxu0 0.0
    %6581 = vmatprep.subr.mxu0 0.0
    %6582 = vmatpush2.msra.mxu0 0.0
    %6583 = vmatprep.subr.mxu0 0.0
    %6584 = vmatpush2.msra.mxu0 0.0
    %6585 = vmatprep.subr.mxu0 0.0
    %6586 = vmatpush2.msra.mxu0 0.0
    %6587 = vmatprep.subr.mxu0 0.0
    %6588 = vmatpush2.msra.mxu0 0.0
    %6589 = vmatprep.subr.mxu0 0.0
    %6590 = vmatpush2.msra.mxu0 0.0
    %6591 = vmatprep.subr.mxu0 0.0
    %6592 = vmatpush2.msra.mxu0 0.0
    %6593 = vmatprep.subr.mxu0 0.0
    %6594 = vmatpush2.msra.mxu0 0.0
    %6595 = vmatprep.subr.mxu0 0.0
    %6596 = vmatpush2.msra.mxu0 0.0
    %6597 = vmatprep.mubr.f32.mxu0 0.0
    %6598 = vmatmul.mubr.f32.gmra.mxu0 %v6460
    %v6599 = vpop.f32.mrf.mxu0
    %v6600 = vadd.f32 0.0, %v6599
    %v6601 = vpop.f32.mrf.mxu0
    %v6602 = vadd.f32 0.0, %v6601
    %6603 = vdwg.mxu0
    %v6604 = vadd.f32 %v6368, %v6529
    %v6605 = vadd.f32 %v6370, %v6531
    %v6606 = vadd.f32 %v6439, %v6600
    %v6607 = vadd.f32 %v6441, %v6602
    %v6608 = vxor.u32 %v6604, 2147483648
    %v6609 = vxor.u32 %v6605, 2147483648
    %v6610 = vxor.u32 %v6606, 2147483648
    %v6611 = vmul.f32 %v6608, 1.442695
    %v6612 = vpow.pop %v6611
    %v6613 = vmul.f32 %v6609, 1.442695
    %v6614 = vpow.pop %v6613
    %v6615 = vmul.f32 %v6610, 1.442695
    %v6616 = vpow.pop %v6615
    %v6617 = vadd.f32 %v6612, 1.0
    %v6618 = vadd.f32 %v6614, 1.0
    %v6619 = vadd.f32 %v6616, 1.0
    %v6620 = vrcp.pop %v6617
    %v6621 = vmul.f32 1.0, %v6620
    %v6622 = vrcp.pop %v6618
    %v6623 = vmul.f32 1.0, %v6622
    %v6624 = vrcp.pop %v6619
    %v6625 = vmul.f32 1.0, %v6624
    %v6626 = vtanh.pop %v6607
    %v6627 = vmul.f32 %v6623, %v5677
    %v6628 = vmul.f32 %v6621, %v6626
    %v6629 = vadd.f32 %v6627, %v6628
    %v6630 = vtanh.pop %v6629
    %v6631 = vmul.f32 %v6625, %v6630
    %6632 = vst [vmem:[#allocation3 + $0x5] sm:$0x1] %v6631
    %v6633 = vld [vmem:[#allocation4 + $0xa0] sm:$0xff]
    %v6634 = vld [vmem:[#allocation4 + $0xa8] sm:$0xff]
    %v6635 = vld [vmem:[#allocation4 + $0xb0] sm:$0xff]
    %v6636 = vld [vmem:[#allocation4 + $0xb8] sm:$0xff]
    %v6637 = vld [vmem:[#allocation4 + $0xc0] sm:$0xff]
    %v6638 = vld [vmem:[#allocation4 + $0xc8] sm:$0xff]
    %v6639 = vld [vmem:[#allocation4 + $0xd0] sm:$0xff]
    %v6640 = vld [vmem:[#allocation4 + $0xd8] sm:$0xff]
    %v6641 = vld [vmem:[#allocation4 + $0xe0] sm:$0xff]
    %v6642 = vld [vmem:[#allocation4 + $0xe8] sm:$0xff]
    %v6643 = vld [vmem:[#allocation4 + $0xf0] sm:$0xff]
    %v6644 = vld [vmem:[#allocation4 + $0xf8] sm:$0xff]
    %v6645 = vld [vmem:[#allocation4 + $0x100] sm:$0xff]
    %v6646 = vld [vmem:[#allocation4 + $0x108] sm:$0xff]
    %v6647 = vld [vmem:[#allocation4 + $0x110] sm:$0xff]
    %v6648 = vld [vmem:[#allocation4 + $0x118] sm:$0xff]
    %v6649 = vld [vmem:[%s642] ss:$8 sm:$0xf]
    %v6651 = vlaneseq
    %v6652 = vshrl.u32 %v6651, 7
    %v6653 = vsub.s32 0, %v6652
    %v6654 = vrot.slane %v6649, %v6653
    %v6655 = vlaneseq
    %v6656 = vshrl.u32 %v6655, 7
    %v6657 = vsub.s32 1, %v6656
    %v6658 = vrot.slane %v6649, %v6657
    %v6659 = vlaneseq
    %v6660 = vshrl.u32 %v6659, 7
    %v6661 = vsub.s32 2, %v6660
    %v6662 = vrot.slane %v6649, %v6661
    %v6663 = vlaneseq
    %v6664 = vshrl.u32 %v6663, 7
    %v6665 = vsub.s32 3, %v6664
    %v6666 = vrot.slane %v6649, %v6665
    %v6672 = vsel %vm233, %v5893, 0
    %6674 = vmatprep.subr.mxu0 0.0
    %6675 = vmatpush1.msra.mxu0 0.0
    %6676 = vmatprep.subr.mxu0 0.0
    %6677 = vmatpush1.msra.mxu0 0.0
    %6678 = vmatprep.subr.mxu0 0.0
    %6679 = vmatpush1.msra.mxu0 0.0
    %6680 = vmatprep.subr.mxu0 0.0
    %6681 = vmatpush1.msra.mxu0 0.0
    %6682 = vmatprep.subr.mxu0 0.0
    %6683 = vmatpush1.msra.mxu0 0.0
    %6684 = vmatprep.subr.mxu0 0.0
    %6685 = vmatpush1.msra.mxu0 0.0
    %6686 = vmatprep.subr.mxu0 0.0
    %6687 = vmatpush1.msra.mxu0 0.0
    %6688 = vmatprep.subr.mxu0 0.0
    %6689 = vmatpush1.msra.mxu0 0.0
    %6690 = vmatprep.subr.mxu0 0.0
    %6691 = vmatpush1.msra.mxu0 0.0
    %6692 = vmatprep.subr.mxu0 0.0
    %6693 = vmatpush1.msra.mxu0 0.0
    %6694 = vmatprep.subr.mxu0 0.0
    %6695 = vmatpush1.msra.mxu0 0.0
    %6696 = vmatprep.subr.mxu0 0.0
    %6697 = vmatpush1.msra.mxu0 0.0
    %6698 = vmatprep.subr.mxu0 %v6646
    %6699 = vmatpush1.msra.mxu0 %v6645
    %6700 = vmatprep.subr.mxu0 %v6642
    %6701 = vmatpush1.msra.mxu0 %v6641
    %6702 = vmatprep.subr.mxu0 %v6638
    %6703 = vmatpush1.msra.mxu0 %v6637
    %6704 = vmatprep.subr.mxu0 %v6634
    %6705 = vmatpush1.msra.mxu0 %v6633
    %6706 = vmatprep.subr.mxu0 0.0
    %6707 = vmatpush2.msra.mxu0 0.0
    %6708 = vmatprep.subr.mxu0 0.0
    %6709 = vmatpush2.msra.mxu0 0.0
    %6710 = vmatprep.subr.mxu0 0.0
    %6711 = vmatpush2.msra.mxu0 0.0
    %6712 = vmatprep.subr.mxu0 0.0
    %6713 = vmatpush2.msra.mxu0 0.0
    %6714 = vmatprep.subr.mxu0 0.0
    %6715 = vmatpush2.msra.mxu0 0.0
    %6716 = vmatprep.subr.mxu0 0.0
    %6717 = vmatpush2.msra.mxu0 0.0
    %6718 = vmatprep.subr.mxu0 0.0
    %6719 = vmatpush2.msra.mxu0 0.0
    %6720 = vmatprep.subr.mxu0 0.0
    %6721 = vmatpush2.msra.mxu0 0.0
    %6722 = vmatprep.subr.mxu0 0.0
    %6723 = vmatpush2.msra.mxu0 0.0
    %6724 = vmatprep.subr.mxu0 0.0
    %6725 = vmatpush2.msra.mxu0 0.0
    %6726 = vmatprep.subr.mxu0 0.0
    %6727 = vmatpush2.msra.mxu0 0.0
    %6728 = vmatprep.subr.mxu0 0.0
    %6729 = vmatpush2.msra.mxu0 0.0
    %6730 = vmatprep.subr.mxu0 0.0
    %6731 = vmatpush2.msra.mxu0 0.0
    %6732 = vmatprep.subr.mxu0 0.0
    %6733 = vmatpush2.msra.mxu0 0.0
    %6734 = vmatprep.subr.mxu0 0.0
    %6735 = vmatpush2.msra.mxu0 0.0
    %6736 = vmatprep.subr.mxu0 0.0
    %6737 = vmatpush2.msra.mxu0 0.0
    %6738 = vmatprep.mubr.f32.mxu0 0.0
    %6739 = vmatmul.mubr.f32.gmra.mxu0 %v6672
    %v6740 = vpop.f32.mrf.mxu0
    %v6741 = vadd.f32 %v6654, %v6740
    %v6742 = vpop.f32.mrf.mxu0
    %v6743 = vadd.f32 %v6658, %v6742
    %6744 = vdwg.mxu0
    %6745 = vmatprep.subr.mxu0 0.0
    %6746 = vmatpush1.msra.mxu0 0.0
    %6747 = vmatprep.subr.mxu0 0.0
    %6748 = vmatpush1.msra.mxu0 0.0
    %6749 = vmatprep.subr.mxu0 0.0
    %6750 = vmatpush1.msra.mxu0 0.0
    %6751 = vmatprep.subr.mxu0 0.0
    %6752 = vmatpush1.msra.mxu0 0.0
    %6753 = vmatprep.subr.mxu0 0.0
    %6754 = vmatpush1.msra.mxu0 0.0
    %6755 = vmatprep.subr.mxu0 0.0
    %6756 = vmatpush1.msra.mxu0 0.0
    %6757 = vmatprep.subr.mxu0 0.0
    %6758 = vmatpush1.msra.mxu0 0.0
    %6759 = vmatprep.subr.mxu0 0.0
    %6760 = vmatpush1.msra.mxu0 0.0
    %6761 = vmatprep.subr.mxu0 0.0
    %6762 = vmatpush1.msra.mxu0 0.0
    %6763 = vmatprep.subr.mxu0 0.0
    %6764 = vmatpush1.msra.mxu0 0.0
    %6765 = vmatprep.subr.mxu0 0.0
    %6766 = vmatpush1.msra.mxu0 0.0
    %6767 = vmatprep.subr.mxu0 0.0
    %6768 = vmatpush1.msra.mxu0 0.0
    %6769 = vmatprep.subr.mxu0 %v6648
    %6770 = vmatpush1.msra.mxu0 %v6647
    %6771 = vmatprep.subr.mxu0 %v6644
    %6772 = vmatpush1.msra.mxu0 %v6643
    %6773 = vmatprep.subr.mxu0 %v6640
    %6774 = vmatpush1.msra.mxu0 %v6639
    %6775 = vmatprep.subr.mxu0 %v6636
    %6776 = vmatpush1.msra.mxu0 %v6635
    %6777 = vmatprep.subr.mxu0 0.0
    %6778 = vmatpush2.msra.mxu0 0.0
    %6779 = vmatprep.subr.mxu0 0.0
    %6780 = vmatpush2.msra.mxu0 0.0
    %6781 = vmatprep.subr.mxu0 0.0
    %6782 = vmatpush2.msra.mxu0 0.0
    %6783 = vmatprep.subr.mxu0 0.0
    %6784 = vmatpush2.msra.mxu0 0.0
    %6785 = vmatprep.subr.mxu0 0.0
    %6786 = vmatpush2.msra.mxu0 0.0
    %6787 = vmatprep.subr.mxu0 0.0
    %6788 = vmatpush2.msra.mxu0 0.0
    %6789 = vmatprep.subr.mxu0 0.0
    %6790 = vmatpush2.msra.mxu0 0.0
    %6791 = vmatprep.subr.mxu0 0.0
    %6792 = vmatpush2.msra.mxu0 0.0
    %6793 = vmatprep.subr.mxu0 0.0
    %6794 = vmatpush2.msra.mxu0 0.0
    %6795 = vmatprep.subr.mxu0 0.0
    %6796 = vmatpush2.msra.mxu0 0.0
    %6797 = vmatprep.subr.mxu0 0.0
    %6798 = vmatpush2.msra.mxu0 0.0
    %6799 = vmatprep.subr.mxu0 0.0
    %6800 = vmatpush2.msra.mxu0 0.0
    %6801 = vmatprep.subr.mxu0 0.0
    %6802 = vmatpush2.msra.mxu0 0.0
    %6803 = vmatprep.subr.mxu0 0.0
    %6804 = vmatpush2.msra.mxu0 0.0
    %6805 = vmatprep.subr.mxu0 0.0
    %6806 = vmatpush2.msra.mxu0 0.0
    %6807 = vmatprep.subr.mxu0 0.0
    %6808 = vmatpush2.msra.mxu0 0.0
    %6809 = vmatprep.mubr.f32.mxu0 0.0
    %6810 = vmatmul.mubr.f32.gmra.mxu0 %v6672
    %v6811 = vpop.f32.mrf.mxu0
    %v6812 = vadd.f32 %v6662, %v6811
    %v6813 = vpop.f32.mrf.mxu0
    %v6814 = vadd.f32 %v6666, %v6813
    %6815 = vdwg.mxu0
    %v6816 = vld [vmem:[#allocation4 + $0x120] sm:$0xff]
    %v6817 = vld [vmem:[#allocation4 + $0x128] sm:$0xff]
    %v6818 = vld [vmem:[#allocation4 + $0x130] sm:$0xff]
    %v6819 = vld [vmem:[#allocation4 + $0x138] sm:$0xff]
    %v6820 = vld [vmem:[#allocation4 + $0x140] sm:$0xff]
    %v6821 = vld [vmem:[#allocation4 + $0x148] sm:$0xff]
    %v6822 = vld [vmem:[#allocation4 + $0x150] sm:$0xff]
    %v6823 = vld [vmem:[#allocation4 + $0x158] sm:$0xff]
    %v6824 = vld [vmem:[#allocation4 + $0x160] sm:$0xff]
    %v6825 = vld [vmem:[#allocation4 + $0x168] sm:$0xff]
    %v6826 = vld [vmem:[#allocation4 + $0x170] sm:$0xff]
    %v6827 = vld [vmem:[#allocation4 + $0x178] sm:$0xff]
    %v6828 = vld [vmem:[#allocation4 + $0x180] sm:$0xff]
    %v6829 = vld [vmem:[#allocation4 + $0x188] sm:$0xff]
    %v6830 = vld [vmem:[#allocation4 + $0x190] sm:$0xff]
    %v6831 = vld [vmem:[#allocation4 + $0x198] sm:$0xff]
    %v6833 = vsel %vm233, %v6262, 0
    %6835 = vmatprep.subr.mxu0 0.0
    %6836 = vmatpush1.msra.mxu0 0.0
    %6837 = vmatprep.subr.mxu0 0.0
    %6838 = vmatpush1.msra.mxu0 0.0
    %6839 = vmatprep.subr.mxu0 0.0
    %6840 = vmatpush1.msra.mxu0 0.0
    %6841 = vmatprep.subr.mxu0 0.0
    %6842 = vmatpush1.msra.mxu0 0.0
    %6843 = vmatprep.subr.mxu0 0.0
    %6844 = vmatpush1.msra.mxu0 0.0
    %6845 = vmatprep.subr.mxu0 0.0
    %6846 = vmatpush1.msra.mxu0 0.0
    %6847 = vmatprep.subr.mxu0 0.0
    %6848 = vmatpush1.msra.mxu0 0.0
    %6849 = vmatprep.subr.mxu0 0.0
    %6850 = vmatpush1.msra.mxu0 0.0
    %6851 = vmatprep.subr.mxu0 0.0
    %6852 = vmatpush1.msra.mxu0 0.0
    %6853 = vmatprep.subr.mxu0 0.0
    %6854 = vmatpush1.msra.mxu0 0.0
    %6855 = vmatprep.subr.mxu0 0.0
    %6856 = vmatpush1.msra.mxu0 0.0
    %6857 = vmatprep.subr.mxu0 0.0
    %6858 = vmatpush1.msra.mxu0 0.0
    %6859 = vmatprep.subr.mxu0 %v6829
    %6860 = vmatpush1.msra.mxu0 %v6828
    %6861 = vmatprep.subr.mxu0 %v6825
    %6862 = vmatpush1.msra.mxu0 %v6824
    %6863 = vmatprep.subr.mxu0 %v6821
    %6864 = vmatpush1.msra.mxu0 %v6820
    %6865 = vmatprep.subr.mxu0 %v6817
    %6866 = vmatpush1.msra.mxu0 %v6816
    %6867 = vmatprep.subr.mxu0 0.0
    %6868 = vmatpush2.msra.mxu0 0.0
    %6869 = vmatprep.subr.mxu0 0.0
    %6870 = vmatpush2.msra.mxu0 0.0
    %6871 = vmatprep.subr.mxu0 0.0
    %6872 = vmatpush2.msra.mxu0 0.0
    %6873 = vmatprep.subr.mxu0 0.0
    %6874 = vmatpush2.msra.mxu0 0.0
    %6875 = vmatprep.subr.mxu0 0.0
    %6876 = vmatpush2.msra.mxu0 0.0
    %6877 = vmatprep.subr.mxu0 0.0
    %6878 = vmatpush2.msra.mxu0 0.0
    %6879 = vmatprep.subr.mxu0 0.0
    %6880 = vmatpush2.msra.mxu0 0.0
    %6881 = vmatprep.subr.mxu0 0.0
    %6882 = vmatpush2.msra.mxu0 0.0
    %6883 = vmatprep.subr.mxu0 0.0
    %6884 = vmatpush2.msra.mxu0 0.0
    %6885 = vmatprep.subr.mxu0 0.0
    %6886 = vmatpush2.msra.mxu0 0.0
    %6887 = vmatprep.subr.mxu0 0.0
    %6888 = vmatpush2.msra.mxu0 0.0
    %6889 = vmatprep.subr.mxu0 0.0
    %6890 = vmatpush2.msra.mxu0 0.0
    %6891 = vmatprep.subr.mxu0 0.0
    %6892 = vmatpush2.msra.mxu0 0.0
    %6893 = vmatprep.subr.mxu0 0.0
    %6894 = vmatpush2.msra.mxu0 0.0
    %6895 = vmatprep.subr.mxu0 0.0
    %6896 = vmatpush2.msra.mxu0 0.0
    %6897 = vmatprep.subr.mxu0 0.0
    %6898 = vmatpush2.msra.mxu0 0.0
    %6899 = vmatprep.mubr.f32.mxu0 0.0
    %6900 = vmatmul.mubr.f32.gmra.mxu0 %v6833
    %v6901 = vpop.f32.mrf.mxu0
    %v6902 = vadd.f32 0.0, %v6901
    %v6903 = vpop.f32.mrf.mxu0
    %v6904 = vadd.f32 0.0, %v6903
    %6905 = vdwg.mxu0
    %6906 = vmatprep.subr.mxu0 0.0
    %6907 = vmatpush1.msra.mxu0 0.0
    %6908 = vmatprep.subr.mxu0 0.0
    %6909 = vmatpush1.msra.mxu0 0.0
    %6910 = vmatprep.subr.mxu0 0.0
    %6911 = vmatpush1.msra.mxu0 0.0
    %6912 = vmatprep.subr.mxu0 0.0
    %6913 = vmatpush1.msra.mxu0 0.0
    %6914 = vmatprep.subr.mxu0 0.0
    %6915 = vmatpush1.msra.mxu0 0.0
    %6916 = vmatprep.subr.mxu0 0.0
    %6917 = vmatpush1.msra.mxu0 0.0
    %6918 = vmatprep.subr.mxu0 0.0
    %6919 = vmatpush1.msra.mxu0 0.0
    %6920 = vmatprep.subr.mxu0 0.0
    %6921 = vmatpush1.msra.mxu0 0.0
    %6922 = vmatprep.subr.mxu0 0.0
    %6923 = vmatpush1.msra.mxu0 0.0
    %6924 = vmatprep.subr.mxu0 0.0
    %6925 = vmatpush1.msra.mxu0 0.0
    %6926 = vmatprep.subr.mxu0 0.0
    %6927 = vmatpush1.msra.mxu0 0.0
    %6928 = vmatprep.subr.mxu0 0.0
    %6929 = vmatpush1.msra.mxu0 0.0
    %6930 = vmatprep.subr.mxu0 %v6831
    %6931 = vmatpush1.msra.mxu0 %v6830
    %6932 = vmatprep.subr.mxu0 %v6827
    %6933 = vmatpush1.msra.mxu0 %v6826
    %6934 = vmatprep.subr.mxu0 %v6823
    %6935 = vmatpush1.msra.mxu0 %v6822
    %6936 = vmatprep.subr.mxu0 %v6819
    %6937 = vmatpush1.msra.mxu0 %v6818
    %6938 = vmatprep.subr.mxu0 0.0
    %6939 = vmatpush2.msra.mxu0 0.0
    %6940 = vmatprep.subr.mxu0 0.0
    %6941 = vmatpush2.msra.mxu0 0.0
    %6942 = vmatprep.subr.mxu0 0.0
    %6943 = vmatpush2.msra.mxu0 0.0
    %6944 = vmatprep.subr.mxu0 0.0
    %6945 = vmatpush2.msra.mxu0 0.0
    %6946 = vmatprep.subr.mxu0 0.0
    %6947 = vmatpush2.msra.mxu0 0.0
    %6948 = vmatprep.subr.mxu0 0.0
    %6949 = vmatpush2.msra.mxu0 0.0
    %6950 = vmatprep.subr.mxu0 0.0
    %6951 = vmatpush2.msra.mxu0 0.0
    %6952 = vmatprep.subr.mxu0 0.0
    %6953 = vmatpush2.msra.mxu0 0.0
    %6954 = vmatprep.subr.mxu0 0.0
    %6955 = vmatpush2.msra.mxu0 0.0
    %6956 = vmatprep.subr.mxu0 0.0
    %6957 = vmatpush2.msra.mxu0 0.0
    %6958 = vmatprep.subr.mxu0 0.0
    %6959 = vmatpush2.msra.mxu0 0.0
    %6960 = vmatprep.subr.mxu0 0.0
    %6961 = vmatpush2.msra.mxu0 0.0
    %6962 = vmatprep.subr.mxu0 0.0
    %6963 = vmatpush2.msra.mxu0 0.0
    %6964 = vmatprep.subr.mxu0 0.0
    %6965 = vmatpush2.msra.mxu0 0.0
    %6966 = vmatprep.subr.mxu0 0.0
    %6967 = vmatpush2.msra.mxu0 0.0
    %6968 = vmatprep.subr.mxu0 0.0
    %6969 = vmatpush2.msra.mxu0 0.0
    %6970 = vmatprep.mubr.f32.mxu0 0.0
    %6971 = vmatmul.mubr.f32.gmra.mxu0 %v6833
    %v6972 = vpop.f32.mrf.mxu0
    %v6973 = vadd.f32 0.0, %v6972
    %v6974 = vpop.f32.mrf.mxu0
    %v6975 = vadd.f32 0.0, %v6974
    %6976 = vdwg.mxu0
    %v6977 = vadd.f32 %v6741, %v6902
    %v6978 = vadd.f32 %v6743, %v6904
    %v6979 = vadd.f32 %v6812, %v6973
    %v6980 = vadd.f32 %v6814, %v6975
    %v6981 = vxor.u32 %v6977, 2147483648
    %v6982 = vxor.u32 %v6978, 2147483648
    %v6983 = vxor.u32 %v6979, 2147483648
    %v6984 = vmul.f32 %v6981, 1.442695
    %v6985 = vpow.pop %v6984
    %v6986 = vmul.f32 %v6982, 1.442695
    %v6987 = vpow.pop %v6986
    %v6988 = vmul.f32 %v6983, 1.442695
    %v6989 = vpow.pop %v6988
    %v6990 = vadd.f32 %v6985, 1.0
    %v6991 = vadd.f32 %v6987, 1.0
    %v6992 = vadd.f32 %v6989, 1.0
    %v6993 = vrcp.pop %v6990
    %v6994 = vmul.f32 1.0, %v6993
    %v6995 = vrcp.pop %v6991
    %v6996 = vmul.f32 1.0, %v6995
    %v6997 = vrcp.pop %v6992
    %v6998 = vmul.f32 1.0, %v6997
    %v6999 = vtanh.pop %v6980
    %v7000 = vmul.f32 %v6996, %v6260
    %v7001 = vmul.f32 %v6994, %v6999
    %v7002 = vadd.f32 %v7000, %v7001
    %v7003 = vtanh.pop %v7002
    %v7004 = vmul.f32 %v6998, %v7003
    %v7005 = vld [vmem:[#allocation4 + $0x1a0] sm:$0xff]
    %v7006 = vld [vmem:[#allocation4 + $0x1a8] sm:$0xff]
    %v7007 = vld [vmem:[#allocation4 + $0x1b0] sm:$0xff]
    %v7008 = vld [vmem:[#allocation4 + $0x1b8] sm:$0xff]
    %v7009 = vld [vmem:[#allocation4 + $0x1c0] sm:$0xff]
    %v7010 = vld [vmem:[#allocation4 + $0x1c8] sm:$0xff]
    %v7011 = vld [vmem:[#allocation4 + $0x1d0] sm:$0xff]
    %v7012 = vld [vmem:[#allocation4 + $0x1d8] sm:$0xff]
    %v7013 = vld [vmem:[#allocation4 + $0x1e0] sm:$0xff]
    %v7014 = vld [vmem:[#allocation4 + $0x1e8] sm:$0xff]
    %v7015 = vld [vmem:[#allocation4 + $0x1f0] sm:$0xff]
    %v7016 = vld [vmem:[#allocation4 + $0x1f8] sm:$0xff]
    %v7017 = vld [vmem:[#allocation4 + $0x200] sm:$0xff]
    %v7018 = vld [vmem:[#allocation4 + $0x208] sm:$0xff]
    %v7019 = vld [vmem:[#allocation4 + $0x210] sm:$0xff]
    %v7020 = vld [vmem:[#allocation4 + $0x218] sm:$0xff]
    %v7021 = vld [vmem:[%s1521] ss:$8 sm:$0xf]
    %v7023 = vlaneseq
    %v7024 = vshrl.u32 %v7023, 7
    %v7025 = vsub.s32 0, %v7024
    %v7026 = vrot.slane %v7021, %v7025
    %v7027 = vlaneseq
    %v7028 = vshrl.u32 %v7027, 7
    %v7029 = vsub.s32 1, %v7028
    %v7030 = vrot.slane %v7021, %v7029
    %v7031 = vlaneseq
    %v7032 = vshrl.u32 %v7031, 7
    %v7033 = vsub.s32 2, %v7032
    %v7034 = vrot.slane %v7021, %v7033
    %v7035 = vlaneseq
    %v7036 = vshrl.u32 %v7035, 7
    %v7037 = vsub.s32 3, %v7036
    %v7038 = vrot.slane %v7021, %v7037
    %7043 = vmatprep.subr.mxu0 0.0
    %7044 = vmatpush1.msra.mxu0 0.0
    %7045 = vmatprep.subr.mxu0 0.0
    %7046 = vmatpush1.msra.mxu0 0.0
    %7047 = vmatprep.subr.mxu0 0.0
    %7048 = vmatpush1.msra.mxu0 0.0
    %7049 = vmatprep.subr.mxu0 0.0
    %7050 = vmatpush1.msra.mxu0 0.0
    %7051 = vmatprep.subr.mxu0 0.0
    %7052 = vmatpush1.msra.mxu0 0.0
    %7053 = vmatprep.subr.mxu0 0.0
    %7054 = vmatpush1.msra.mxu0 0.0
    %7055 = vmatprep.subr.mxu0 0.0
    %7056 = vmatpush1.msra.mxu0 0.0
    %7057 = vmatprep.subr.mxu0 0.0
    %7058 = vmatpush1.msra.mxu0 0.0
    %7059 = vmatprep.subr.mxu0 0.0
    %7060 = vmatpush1.msra.mxu0 0.0
    %7061 = vmatprep.subr.mxu0 0.0
    %7062 = vmatpush1.msra.mxu0 0.0
    %7063 = vmatprep.subr.mxu0 0.0
    %7064 = vmatpush1.msra.mxu0 0.0
    %7065 = vmatprep.subr.mxu0 0.0
    %7066 = vmatpush1.msra.mxu0 0.0
    %7067 = vmatprep.subr.mxu0 %v7018
    %7068 = vmatpush1.msra.mxu0 %v7017
    %7069 = vmatprep.subr.mxu0 %v7014
    %7070 = vmatpush1.msra.mxu0 %v7013
    %7071 = vmatprep.subr.mxu0 %v7010
    %7072 = vmatpush1.msra.mxu0 %v7009
    %7073 = vmatprep.subr.mxu0 %v7006
    %7074 = vmatpush1.msra.mxu0 %v7005
    %7075 = vmatprep.subr.mxu0 0.0
    %7076 = vmatpush2.msra.mxu0 0.0
    %7077 = vmatprep.subr.mxu0 0.0
    %7078 = vmatpush2.msra.mxu0 0.0
    %7079 = vmatprep.subr.mxu0 0.0
    %7080 = vmatpush2.msra.mxu0 0.0
    %7081 = vmatprep.subr.mxu0 0.0
    %7082 = vmatpush2.msra.mxu0 0.0
    %7083 = vmatprep.subr.mxu0 0.0
    %7084 = vmatpush2.msra.mxu0 0.0
    %7085 = vmatprep.subr.mxu0 0.0
    %7086 = vmatpush2.msra.mxu0 0.0
    %7087 = vmatprep.subr.mxu0 0.0
    %7088 = vmatpush2.msra.mxu0 0.0
    %7089 = vmatprep.subr.mxu0 0.0
    %7090 = vmatpush2.msra.mxu0 0.0
    %7091 = vmatprep.subr.mxu0 0.0
    %7092 = vmatpush2.msra.mxu0 0.0
    %7093 = vmatprep.subr.mxu0 0.0
    %7094 = vmatpush2.msra.mxu0 0.0
    %7095 = vmatprep.subr.mxu0 0.0
    %7096 = vmatpush2.msra.mxu0 0.0
    %7097 = vmatprep.subr.mxu0 0.0
    %7098 = vmatpush2.msra.mxu0 0.0
    %7099 = vmatprep.subr.mxu0 0.0
    %7100 = vmatpush2.msra.mxu0 0.0
    %7101 = vmatprep.subr.mxu0 0.0
    %7102 = vmatpush2.msra.mxu0 0.0
    %7103 = vmatprep.subr.mxu0 0.0
    %7104 = vmatpush2.msra.mxu0 0.0
    %7105 = vmatprep.subr.mxu0 0.0
    %7106 = vmatpush2.msra.mxu0 0.0
    %7107 = vmatprep.mubr.f32.mxu0 0.0
    %7108 = vmatmul.mubr.f32.gmra.mxu0 %v6833
    %v7109 = vpop.f32.mrf.mxu0
    %v7110 = vadd.f32 %v7026, %v7109
    %v7111 = vpop.f32.mrf.mxu0
    %v7112 = vadd.f32 %v7030, %v7111
    %7113 = vdwg.mxu0
    %7114 = vmatprep.subr.mxu0 0.0
    %7115 = vmatpush1.msra.mxu0 0.0
    %7116 = vmatprep.subr.mxu0 0.0
    %7117 = vmatpush1.msra.mxu0 0.0
    %7118 = vmatprep.subr.mxu0 0.0
    %7119 = vmatpush1.msra.mxu0 0.0
    %7120 = vmatprep.subr.mxu0 0.0
    %7121 = vmatpush1.msra.mxu0 0.0
    %7122 = vmatprep.subr.mxu0 0.0
    %7123 = vmatpush1.msra.mxu0 0.0
    %7124 = vmatprep.subr.mxu0 0.0
    %7125 = vmatpush1.msra.mxu0 0.0
    %7126 = vmatprep.subr.mxu0 0.0
    %7127 = vmatpush1.msra.mxu0 0.0
    %7128 = vmatprep.subr.mxu0 0.0
    %7129 = vmatpush1.msra.mxu0 0.0
    %7130 = vmatprep.subr.mxu0 0.0
    %7131 = vmatpush1.msra.mxu0 0.0
    %7132 = vmatprep.subr.mxu0 0.0
    %7133 = vmatpush1.msra.mxu0 0.0
    %7134 = vmatprep.subr.mxu0 0.0
    %7135 = vmatpush1.msra.mxu0 0.0
    %7136 = vmatprep.subr.mxu0 0.0
    %7137 = vmatpush1.msra.mxu0 0.0
    %7138 = vmatprep.subr.mxu0 %v7020
    %7139 = vmatpush1.msra.mxu0 %v7019
    %7140 = vmatprep.subr.mxu0 %v7016
    %7141 = vmatpush1.msra.mxu0 %v7015
    %7142 = vmatprep.subr.mxu0 %v7012
    %7143 = vmatpush1.msra.mxu0 %v7011
    %7144 = vmatprep.subr.mxu0 %v7008
    %7145 = vmatpush1.msra.mxu0 %v7007
    %7146 = vmatprep.subr.mxu0 0.0
    %7147 = vmatpush2.msra.mxu0 0.0
    %7148 = vmatprep.subr.mxu0 0.0
    %7149 = vmatpush2.msra.mxu0 0.0
    %7150 = vmatprep.subr.mxu0 0.0
    %7151 = vmatpush2.msra.mxu0 0.0
    %7152 = vmatprep.subr.mxu0 0.0
    %7153 = vmatpush2.msra.mxu0 0.0
    %7154 = vmatprep.subr.mxu0 0.0
    %7155 = vmatpush2.msra.mxu0 0.0
    %7156 = vmatprep.subr.mxu0 0.0
    %7157 = vmatpush2.msra.mxu0 0.0
    %7158 = vmatprep.subr.mxu0 0.0
    %7159 = vmatpush2.msra.mxu0 0.0
    %7160 = vmatprep.subr.mxu0 0.0
    %7161 = vmatpush2.msra.mxu0 0.0
    %7162 = vmatprep.subr.mxu0 0.0
    %7163 = vmatpush2.msra.mxu0 0.0
    %7164 = vmatprep.subr.mxu0 0.0
    %7165 = vmatpush2.msra.mxu0 0.0
    %7166 = vmatprep.subr.mxu0 0.0
    %7167 = vmatpush2.msra.mxu0 0.0
    %7168 = vmatprep.subr.mxu0 0.0
    %7169 = vmatpush2.msra.mxu0 0.0
    %7170 = vmatprep.subr.mxu0 0.0
    %7171 = vmatpush2.msra.mxu0 0.0
    %7172 = vmatprep.subr.mxu0 0.0
    %7173 = vmatpush2.msra.mxu0 0.0
    %7174 = vmatprep.subr.mxu0 0.0
    %7175 = vmatpush2.msra.mxu0 0.0
    %7176 = vmatprep.subr.mxu0 0.0
    %7177 = vmatpush2.msra.mxu0 0.0
    %7178 = vmatprep.mubr.f32.mxu0 0.0
    %7179 = vmatmul.mubr.f32.gmra.mxu0 %v6833
    %v7180 = vpop.f32.mrf.mxu0
    %v7181 = vadd.f32 %v7034, %v7180
    %v7182 = vpop.f32.mrf.mxu0
    %v7183 = vadd.f32 %v7038, %v7182
    %7184 = vdwg.mxu0
    %v7185 = vld [vmem:[#allocation4 + $0x220] sm:$0xff]
    %v7186 = vld [vmem:[#allocation4 + $0x228] sm:$0xff]
    %v7187 = vld [vmem:[#allocation4 + $0x230] sm:$0xff]
    %v7188 = vld [vmem:[#allocation4 + $0x238] sm:$0xff]
    %v7189 = vld [vmem:[#allocation4 + $0x240] sm:$0xff]
    %v7190 = vld [vmem:[#allocation4 + $0x248] sm:$0xff]
    %v7191 = vld [vmem:[#allocation4 + $0x250] sm:$0xff]
    %v7192 = vld [vmem:[#allocation4 + $0x258] sm:$0xff]
    %v7193 = vld [vmem:[#allocation4 + $0x260] sm:$0xff]
    %v7194 = vld [vmem:[#allocation4 + $0x268] sm:$0xff]
    %v7195 = vld [vmem:[#allocation4 + $0x270] sm:$0xff]
    %v7196 = vld [vmem:[#allocation4 + $0x278] sm:$0xff]
    %v7197 = vld [vmem:[#allocation4 + $0x280] sm:$0xff]
    %v7198 = vld [vmem:[#allocation4 + $0x288] sm:$0xff]
    %v7199 = vld [vmem:[#allocation4 + $0x290] sm:$0xff]
    %v7200 = vld [vmem:[#allocation4 + $0x298] sm:$0xff]
    %v7202 = vsel %vm233, %v6631, 0
    %7204 = vmatprep.subr.mxu0 0.0
    %7205 = vmatpush1.msra.mxu0 0.0
    %7206 = vmatprep.subr.mxu0 0.0
    %7207 = vmatpush1.msra.mxu0 0.0
    %7208 = vmatprep.subr.mxu0 0.0
    %7209 = vmatpush1.msra.mxu0 0.0
    %7210 = vmatprep.subr.mxu0 0.0
    %7211 = vmatpush1.msra.mxu0 0.0
    %7212 = vmatprep.subr.mxu0 0.0
    %7213 = vmatpush1.msra.mxu0 0.0
    %7214 = vmatprep.subr.mxu0 0.0
    %7215 = vmatpush1.msra.mxu0 0.0
    %7216 = vmatprep.subr.mxu0 0.0
    %7217 = vmatpush1.msra.mxu0 0.0
    %7218 = vmatprep.subr.mxu0 0.0
    %7219 = vmatpush1.msra.mxu0 0.0
    %7220 = vmatprep.subr.mxu0 0.0
    %7221 = vmatpush1.msra.mxu0 0.0
    %7222 = vmatprep.subr.mxu0 0.0
    %7223 = vmatpush1.msra.mxu0 0.0
    %7224 = vmatprep.subr.mxu0 0.0
    %7225 = vmatpush1.msra.mxu0 0.0
    %7226 = vmatprep.subr.mxu0 0.0
    %7227 = vmatpush1.msra.mxu0 0.0
    %7228 = vmatprep.subr.mxu0 %v7198
    %7229 = vmatpush1.msra.mxu0 %v7197
    %7230 = vmatprep.subr.mxu0 %v7194
    %7231 = vmatpush1.msra.mxu0 %v7193
    %7232 = vmatprep.subr.mxu0 %v7190
    %7233 = vmatpush1.msra.mxu0 %v7189
    %7234 = vmatprep.subr.mxu0 %v7186
    %7235 = vmatpush1.msra.mxu0 %v7185
    %7236 = vmatprep.subr.mxu0 0.0
    %7237 = vmatpush2.msra.mxu0 0.0
    %7238 = vmatprep.subr.mxu0 0.0
    %7239 = vmatpush2.msra.mxu0 0.0
    %7240 = vmatprep.subr.mxu0 0.0
    %7241 = vmatpush2.msra.mxu0 0.0
    %7242 = vmatprep.subr.mxu0 0.0
    %7243 = vmatpush2.msra.mxu0 0.0
    %7244 = vmatprep.subr.mxu0 0.0
    %7245 = vmatpush2.msra.mxu0 0.0
    %7246 = vmatprep.subr.mxu0 0.0
    %7247 = vmatpush2.msra.mxu0 0.0
    %7248 = vmatprep.subr.mxu0 0.0
    %7249 = vmatpush2.msra.mxu0 0.0
    %7250 = vmatprep.subr.mxu0 0.0
    %7251 = vmatpush2.msra.mxu0 0.0
    %7252 = vmatprep.subr.mxu0 0.0
    %7253 = vmatpush2.msra.mxu0 0.0
    %7254 = vmatprep.subr.mxu0 0.0
    %7255 = vmatpush2.msra.mxu0 0.0
    %7256 = vmatprep.subr.mxu0 0.0
    %7257 = vmatpush2.msra.mxu0 0.0
    %7258 = vmatprep.subr.mxu0 0.0
    %7259 = vmatpush2.msra.mxu0 0.0
    %7260 = vmatprep.subr.mxu0 0.0
    %7261 = vmatpush2.msra.mxu0 0.0
    %7262 = vmatprep.subr.mxu0 0.0
    %7263 = vmatpush2.msra.mxu0 0.0
    %7264 = vmatprep.subr.mxu0 0.0
    %7265 = vmatpush2.msra.mxu0 0.0
    %7266 = vmatprep.subr.mxu0 0.0
    %7267 = vmatpush2.msra.mxu0 0.0
    %7268 = vmatprep.mubr.f32.mxu0 0.0
    %7269 = vmatmul.mubr.f32.gmra.mxu0 %v7202
    %v7270 = vpop.f32.mrf.mxu0
    %v7271 = vadd.f32 0.0, %v7270
    %v7272 = vpop.f32.mrf.mxu0
    %v7273 = vadd.f32 0.0, %v7272
    %7274 = vdwg.mxu0
    %7275 = vmatprep.subr.mxu0 0.0
    %7276 = vmatpush1.msra.mxu0 0.0
    %7277 = vmatprep.subr.mxu0 0.0
    %7278 = vmatpush1.msra.mxu0 0.0
    %7279 = vmatprep.subr.mxu0 0.0
    %7280 = vmatpush1.msra.mxu0 0.0
    %7281 = vmatprep.subr.mxu0 0.0
    %7282 = vmatpush1.msra.mxu0 0.0
    %7283 = vmatprep.subr.mxu0 0.0
    %7284 = vmatpush1.msra.mxu0 0.0
    %7285 = vmatprep.subr.mxu0 0.0
    %7286 = vmatpush1.msra.mxu0 0.0
    %7287 = vmatprep.subr.mxu0 0.0
    %7288 = vmatpush1.msra.mxu0 0.0
    %7289 = vmatprep.subr.mxu0 0.0
    %7290 = vmatpush1.msra.mxu0 0.0
    %7291 = vmatprep.subr.mxu0 0.0
    %7292 = vmatpush1.msra.mxu0 0.0
    %7293 = vmatprep.subr.mxu0 0.0
    %7294 = vmatpush1.msra.mxu0 0.0
    %7295 = vmatprep.subr.mxu0 0.0
    %7296 = vmatpush1.msra.mxu0 0.0
    %7297 = vmatprep.subr.mxu0 0.0
    %7298 = vmatpush1.msra.mxu0 0.0
    %7299 = vmatprep.subr.mxu0 %v7200
    %7300 = vmatpush1.msra.mxu0 %v7199
    %7301 = vmatprep.subr.mxu0 %v7196
    %7302 = vmatpush1.msra.mxu0 %v7195
    %7303 = vmatprep.subr.mxu0 %v7192
    %7304 = vmatpush1.msra.mxu0 %v7191
    %7305 = vmatprep.subr.mxu0 %v7188
    %7306 = vmatpush1.msra.mxu0 %v7187
    %7307 = vmatprep.subr.mxu0 0.0
    %7308 = vmatpush2.msra.mxu0 0.0
    %7309 = vmatprep.subr.mxu0 0.0
    %7310 = vmatpush2.msra.mxu0 0.0
    %7311 = vmatprep.subr.mxu0 0.0
    %7312 = vmatpush2.msra.mxu0 0.0
    %7313 = vmatprep.subr.mxu0 0.0
    %7314 = vmatpush2.msra.mxu0 0.0
    %7315 = vmatprep.subr.mxu0 0.0
    %7316 = vmatpush2.msra.mxu0 0.0
    %7317 = vmatprep.subr.mxu0 0.0
    %7318 = vmatpush2.msra.mxu0 0.0
    %7319 = vmatprep.subr.mxu0 0.0
    %7320 = vmatpush2.msra.mxu0 0.0
    %7321 = vmatprep.subr.mxu0 0.0
    %7322 = vmatpush2.msra.mxu0 0.0
    %7323 = vmatprep.subr.mxu0 0.0
    %7324 = vmatpush2.msra.mxu0 0.0
    %7325 = vmatprep.subr.mxu0 0.0
    %7326 = vmatpush2.msra.mxu0 0.0
    %7327 = vmatprep.subr.mxu0 0.0
    %7328 = vmatpush2.msra.mxu0 0.0
    %7329 = vmatprep.subr.mxu0 0.0
    %7330 = vmatpush2.msra.mxu0 0.0
    %7331 = vmatprep.subr.mxu0 0.0
    %7332 = vmatpush2.msra.mxu0 0.0
    %7333 = vmatprep.subr.mxu0 0.0
    %7334 = vmatpush2.msra.mxu0 0.0
    %7335 = vmatprep.subr.mxu0 0.0
    %7336 = vmatpush2.msra.mxu0 0.0
    %7337 = vmatprep.subr.mxu0 0.0
    %7338 = vmatpush2.msra.mxu0 0.0
    %7339 = vmatprep.mubr.f32.mxu0 0.0
    %7340 = vmatmul.mubr.f32.gmra.mxu0 %v7202
    %v7341 = vpop.f32.mrf.mxu0
    %v7342 = vadd.f32 0.0, %v7341
    %v7343 = vpop.f32.mrf.mxu0
    %v7344 = vadd.f32 0.0, %v7343
    %7345 = vdwg.mxu0
    %v7346 = vadd.f32 %v7110, %v7271
    %v7347 = vadd.f32 %v7112, %v7273
    %v7348 = vadd.f32 %v7181, %v7342
    %v7349 = vadd.f32 %v7183, %v7344
    %v7350 = vxor.u32 %v7346, 2147483648
    %v7351 = vxor.u32 %v7347, 2147483648
    %v7352 = vxor.u32 %v7348, 2147483648
    %v7353 = vmul.f32 %v7350, 1.442695
    %v7354 = vpow.pop %v7353
    %v7355 = vmul.f32 %v7351, 1.442695
    %v7356 = vpow.pop %v7355
    %v7357 = vmul.f32 %v7352, 1.442695
    %v7358 = vpow.pop %v7357
    %v7359 = vadd.f32 %v7354, 1.0
    %v7360 = vadd.f32 %v7356, 1.0
    %v7361 = vadd.f32 %v7358, 1.0
    %v7362 = vrcp.pop %v7359
    %v7363 = vmul.f32 1.0, %v7362
    %v7364 = vrcp.pop %v7360
    %v7365 = vmul.f32 1.0, %v7364
    %v7366 = vrcp.pop %v7361
    %v7367 = vmul.f32 1.0, %v7366
    %v7368 = vtanh.pop %v7349
    %v7369 = vmul.f32 %v7365, %v6629
    %v7370 = vmul.f32 %v7363, %v7368
    %v7371 = vadd.f32 %v7369, %v7370
    %v7372 = vtanh.pop %v7371
    %v7373 = vmul.f32 %v7367, %v7372
    %7374 = vst [vmem:[#allocation3 + $0x6] sm:$0x1] %v7373
    %v7375 = vld [vmem:[#allocation4 + $0x1a0] sm:$0xff]
    %v7376 = vld [vmem:[#allocation4 + $0x1a8] sm:$0xff]
    %v7377 = vld [vmem:[#allocation4 + $0x1b0] sm:$0xff]
    %v7378 = vld [vmem:[#allocation4 + $0x1b8] sm:$0xff]
    %v7379 = vld [vmem:[#allocation4 + $0x1c0] sm:$0xff]
    %v7380 = vld [vmem:[#allocation4 + $0x1c8] sm:$0xff]
    %v7381 = vld [vmem:[#allocation4 + $0x1d0] sm:$0xff]
    %v7382 = vld [vmem:[#allocation4 + $0x1d8] sm:$0xff]
    %v7383 = vld [vmem:[#allocation4 + $0x1e0] sm:$0xff]
    %v7384 = vld [vmem:[#allocation4 + $0x1e8] sm:$0xff]
    %v7385 = vld [vmem:[#allocation4 + $0x1f0] sm:$0xff]
    %v7386 = vld [vmem:[#allocation4 + $0x1f8] sm:$0xff]
    %v7387 = vld [vmem:[#allocation4 + $0x200] sm:$0xff]
    %v7388 = vld [vmem:[#allocation4 + $0x208] sm:$0xff]
    %v7389 = vld [vmem:[#allocation4 + $0x210] sm:$0xff]
    %v7390 = vld [vmem:[#allocation4 + $0x218] sm:$0xff]
    %v7391 = vld [vmem:[%s1521] ss:$8 sm:$0xf]
    %v7393 = vlaneseq
    %v7394 = vshrl.u32 %v7393, 7
    %v7395 = vsub.s32 0, %v7394
    %v7396 = vrot.slane %v7391, %v7395
    %v7397 = vlaneseq
    %v7398 = vshrl.u32 %v7397, 7
    %v7399 = vsub.s32 1, %v7398
    %v7400 = vrot.slane %v7391, %v7399
    %v7401 = vlaneseq
    %v7402 = vshrl.u32 %v7401, 7
    %v7403 = vsub.s32 2, %v7402
    %v7404 = vrot.slane %v7391, %v7403
    %v7405 = vlaneseq
    %v7406 = vshrl.u32 %v7405, 7
    %v7407 = vsub.s32 3, %v7406
    %v7408 = vrot.slane %v7391, %v7407
    %v7414 = vsel %vm233, %v7004, 0
    %7416 = vmatprep.subr.mxu0 0.0
    %7417 = vmatpush1.msra.mxu0 0.0
    %7418 = vmatprep.subr.mxu0 0.0
    %7419 = vmatpush1.msra.mxu0 0.0
    %7420 = vmatprep.subr.mxu0 0.0
    %7421 = vmatpush1.msra.mxu0 0.0
    %7422 = vmatprep.subr.mxu0 0.0
    %7423 = vmatpush1.msra.mxu0 0.0
    %7424 = vmatprep.subr.mxu0 0.0
    %7425 = vmatpush1.msra.mxu0 0.0
    %7426 = vmatprep.subr.mxu0 0.0
    %7427 = vmatpush1.msra.mxu0 0.0
    %7428 = vmatprep.subr.mxu0 0.0
    %7429 = vmatpush1.msra.mxu0 0.0
    %7430 = vmatprep.subr.mxu0 0.0
    %7431 = vmatpush1.msra.mxu0 0.0
    %7432 = vmatprep.subr.mxu0 0.0
    %7433 = vmatpush1.msra.mxu0 0.0
    %7434 = vmatprep.subr.mxu0 0.0
    %7435 = vmatpush1.msra.mxu0 0.0
    %7436 = vmatprep.subr.mxu0 0.0
    %7437 = vmatpush1.msra.mxu0 0.0
    %7438 = vmatprep.subr.mxu0 0.0
    %7439 = vmatpush1.msra.mxu0 0.0
    %7440 = vmatprep.subr.mxu0 %v7388
    %7441 = vmatpush1.msra.mxu0 %v7387
    %7442 = vmatprep.subr.mxu0 %v7384
    %7443 = vmatpush1.msra.mxu0 %v7383
    %7444 = vmatprep.subr.mxu0 %v7380
    %7445 = vmatpush1.msra.mxu0 %v7379
    %7446 = vmatprep.subr.mxu0 %v7376
    %7447 = vmatpush1.msra.mxu0 %v7375
    %7448 = vmatprep.subr.mxu0 0.0
    %7449 = vmatpush2.msra.mxu0 0.0
    %7450 = vmatprep.subr.mxu0 0.0
    %7451 = vmatpush2.msra.mxu0 0.0
    %7452 = vmatprep.subr.mxu0 0.0
    %7453 = vmatpush2.msra.mxu0 0.0
    %7454 = vmatprep.subr.mxu0 0.0
    %7455 = vmatpush2.msra.mxu0 0.0
    %7456 = vmatprep.subr.mxu0 0.0
    %7457 = vmatpush2.msra.mxu0 0.0
    %7458 = vmatprep.subr.mxu0 0.0
    %7459 = vmatpush2.msra.mxu0 0.0
    %7460 = vmatprep.subr.mxu0 0.0
    %7461 = vmatpush2.msra.mxu0 0.0
    %7462 = vmatprep.subr.mxu0 0.0
    %7463 = vmatpush2.msra.mxu0 0.0
    %7464 = vmatprep.subr.mxu0 0.0
    %7465 = vmatpush2.msra.mxu0 0.0
    %7466 = vmatprep.subr.mxu0 0.0
    %7467 = vmatpush2.msra.mxu0 0.0
    %7468 = vmatprep.subr.mxu0 0.0
    %7469 = vmatpush2.msra.mxu0 0.0
    %7470 = vmatprep.subr.mxu0 0.0
    %7471 = vmatpush2.msra.mxu0 0.0
    %7472 = vmatprep.subr.mxu0 0.0
    %7473 = vmatpush2.msra.mxu0 0.0
    %7474 = vmatprep.subr.mxu0 0.0
    %7475 = vmatpush2.msra.mxu0 0.0
    %7476 = vmatprep.subr.mxu0 0.0
    %7477 = vmatpush2.msra.mxu0 0.0
    %7478 = vmatprep.subr.mxu0 0.0
    %7479 = vmatpush2.msra.mxu0 0.0
    %7480 = vmatprep.mubr.f32.mxu0 0.0
    %7481 = vmatmul.mubr.f32.gmra.mxu0 %v7414
    %v7482 = vpop.f32.mrf.mxu0
    %v7483 = vadd.f32 %v7396, %v7482
    %v7484 = vpop.f32.mrf.mxu0
    %v7485 = vadd.f32 %v7400, %v7484
    %7486 = vdwg.mxu0
    %7487 = vmatprep.subr.mxu0 0.0
    %7488 = vmatpush1.msra.mxu0 0.0
    %7489 = vmatprep.subr.mxu0 0.0
    %7490 = vmatpush1.msra.mxu0 0.0
    %7491 = vmatprep.subr.mxu0 0.0
    %7492 = vmatpush1.msra.mxu0 0.0
    %7493 = vmatprep.subr.mxu0 0.0
    %7494 = vmatpush1.msra.mxu0 0.0
    %7495 = vmatprep.subr.mxu0 0.0
    %7496 = vmatpush1.msra.mxu0 0.0
    %7497 = vmatprep.subr.mxu0 0.0
    %7498 = vmatpush1.msra.mxu0 0.0
    %7499 = vmatprep.subr.mxu0 0.0
    %7500 = vmatpush1.msra.mxu0 0.0
    %7501 = vmatprep.subr.mxu0 0.0
    %7502 = vmatpush1.msra.mxu0 0.0
    %7503 = vmatprep.subr.mxu0 0.0
    %7504 = vmatpush1.msra.mxu0 0.0
    %7505 = vmatprep.subr.mxu0 0.0
    %7506 = vmatpush1.msra.mxu0 0.0
    %7507 = vmatprep.subr.mxu0 0.0
    %7508 = vmatpush1.msra.mxu0 0.0
    %7509 = vmatprep.subr.mxu0 0.0
    %7510 = vmatpush1.msra.mxu0 0.0
    %7511 = vmatprep.subr.mxu0 %v7390
    %7512 = vmatpush1.msra.mxu0 %v7389
    %7513 = vmatprep.subr.mxu0 %v7386
    %7514 = vmatpush1.msra.mxu0 %v7385
    %7515 = vmatprep.subr.mxu0 %v7382
    %7516 = vmatpush1.msra.mxu0 %v7381
    %7517 = vmatprep.subr.mxu0 %v7378
    %7518 = vmatpush1.msra.mxu0 %v7377
    %7519 = vmatprep.subr.mxu0 0.0
    %7520 = vmatpush2.msra.mxu0 0.0
    %7521 = vmatprep.subr.mxu0 0.0
    %7522 = vmatpush2.msra.mxu0 0.0
    %7523 = vmatprep.subr.mxu0 0.0
    %7524 = vmatpush2.msra.mxu0 0.0
    %7525 = vmatprep.subr.mxu0 0.0
    %7526 = vmatpush2.msra.mxu0 0.0
    %7527 = vmatprep.subr.mxu0 0.0
    %7528 = vmatpush2.msra.mxu0 0.0
    %7529 = vmatprep.subr.mxu0 0.0
    %7530 = vmatpush2.msra.mxu0 0.0
    %7531 = vmatprep.subr.mxu0 0.0
    %7532 = vmatpush2.msra.mxu0 0.0
    %7533 = vmatprep.subr.mxu0 0.0
    %7534 = vmatpush2.msra.mxu0 0.0
    %7535 = vmatprep.subr.mxu0 0.0
    %7536 = vmatpush2.msra.mxu0 0.0
    %7537 = vmatprep.subr.mxu0 0.0
    %7538 = vmatpush2.msra.mxu0 0.0
    %7539 = vmatprep.subr.mxu0 0.0
    %7540 = vmatpush2.msra.mxu0 0.0
    %7541 = vmatprep.subr.mxu0 0.0
    %7542 = vmatpush2.msra.mxu0 0.0
    %7543 = vmatprep.subr.mxu0 0.0
    %7544 = vmatpush2.msra.mxu0 0.0
    %7545 = vmatprep.subr.mxu0 0.0
    %7546 = vmatpush2.msra.mxu0 0.0
    %7547 = vmatprep.subr.mxu0 0.0
    %7548 = vmatpush2.msra.mxu0 0.0
    %7549 = vmatprep.subr.mxu0 0.0
    %7550 = vmatpush2.msra.mxu0 0.0
    %7551 = vmatprep.mubr.f32.mxu0 0.0
    %7552 = vmatmul.mubr.f32.gmra.mxu0 %v7414
    %v7553 = vpop.f32.mrf.mxu0
    %v7554 = vadd.f32 %v7404, %v7553
    %v7555 = vpop.f32.mrf.mxu0
    %v7556 = vadd.f32 %v7408, %v7555
    %7557 = vdwg.mxu0
    %v7558 = vld [vmem:[#allocation4 + $0x220] sm:$0xff]
    %v7559 = vld [vmem:[#allocation4 + $0x228] sm:$0xff]
    %v7560 = vld [vmem:[#allocation4 + $0x230] sm:$0xff]
    %v7561 = vld [vmem:[#allocation4 + $0x238] sm:$0xff]
    %v7562 = vld [vmem:[#allocation4 + $0x240] sm:$0xff]
    %v7563 = vld [vmem:[#allocation4 + $0x248] sm:$0xff]
    %v7564 = vld [vmem:[#allocation4 + $0x250] sm:$0xff]
    %v7565 = vld [vmem:[#allocation4 + $0x258] sm:$0xff]
    %v7566 = vld [vmem:[#allocation4 + $0x260] sm:$0xff]
    %v7567 = vld [vmem:[#allocation4 + $0x268] sm:$0xff]
    %v7568 = vld [vmem:[#allocation4 + $0x270] sm:$0xff]
    %v7569 = vld [vmem:[#allocation4 + $0x278] sm:$0xff]
    %v7570 = vld [vmem:[#allocation4 + $0x280] sm:$0xff]
    %v7571 = vld [vmem:[#allocation4 + $0x288] sm:$0xff]
    %v7572 = vld [vmem:[#allocation4 + $0x290] sm:$0xff]
    %v7573 = vld [vmem:[#allocation4 + $0x298] sm:$0xff]
    %v7575 = vsel %vm233, %v7373, 0
    %7577 = vmatprep.subr.mxu0 0.0
    %7578 = vmatpush1.msra.mxu0 0.0
    %7579 = vmatprep.subr.mxu0 0.0
    %7580 = vmatpush1.msra.mxu0 0.0
    %7581 = vmatprep.subr.mxu0 0.0
    %7582 = vmatpush1.msra.mxu0 0.0
    %7583 = vmatprep.subr.mxu0 0.0
    %7584 = vmatpush1.msra.mxu0 0.0
    %7585 = vmatprep.subr.mxu0 0.0
    %7586 = vmatpush1.msra.mxu0 0.0
    %7587 = vmatprep.subr.mxu0 0.0
    %7588 = vmatpush1.msra.mxu0 0.0
    %7589 = vmatprep.subr.mxu0 0.0
    %7590 = vmatpush1.msra.mxu0 0.0
    %7591 = vmatprep.subr.mxu0 0.0
    %7592 = vmatpush1.msra.mxu0 0.0
    %7593 = vmatprep.subr.mxu0 0.0
    %7594 = vmatpush1.msra.mxu0 0.0
    %7595 = vmatprep.subr.mxu0 0.0
    %7596 = vmatpush1.msra.mxu0 0.0
    %7597 = vmatprep.subr.mxu0 0.0
    %7598 = vmatpush1.msra.mxu0 0.0
    %7599 = vmatprep.subr.mxu0 0.0
    %7600 = vmatpush1.msra.mxu0 0.0
    %7601 = vmatprep.subr.mxu0 %v7571
    %7602 = vmatpush1.msra.mxu0 %v7570
    %7603 = vmatprep.subr.mxu0 %v7567
    %7604 = vmatpush1.msra.mxu0 %v7566
    %7605 = vmatprep.subr.mxu0 %v7563
    %7606 = vmatpush1.msra.mxu0 %v7562
    %7607 = vmatprep.subr.mxu0 %v7559
    %7608 = vmatpush1.msra.mxu0 %v7558
    %7609 = vmatprep.subr.mxu0 0.0
    %7610 = vmatpush2.msra.mxu0 0.0
    %7611 = vmatprep.subr.mxu0 0.0
    %7612 = vmatpush2.msra.mxu0 0.0
    %7613 = vmatprep.subr.mxu0 0.0
    %7614 = vmatpush2.msra.mxu0 0.0
    %7615 = vmatprep.subr.mxu0 0.0
    %7616 = vmatpush2.msra.mxu0 0.0
    %7617 = vmatprep.subr.mxu0 0.0
    %7618 = vmatpush2.msra.mxu0 0.0
    %7619 = vmatprep.subr.mxu0 0.0
    %7620 = vmatpush2.msra.mxu0 0.0
    %7621 = vmatprep.subr.mxu0 0.0
    %7622 = vmatpush2.msra.mxu0 0.0
    %7623 = vmatprep.subr.mxu0 0.0
    %7624 = vmatpush2.msra.mxu0 0.0
    %7625 = vmatprep.subr.mxu0 0.0
    %7626 = vmatpush2.msra.mxu0 0.0
    %7627 = vmatprep.subr.mxu0 0.0
    %7628 = vmatpush2.msra.mxu0 0.0
    %7629 = vmatprep.subr.mxu0 0.0
    %7630 = vmatpush2.msra.mxu0 0.0
    %7631 = vmatprep.subr.mxu0 0.0
    %7632 = vmatpush2.msra.mxu0 0.0
    %7633 = vmatprep.subr.mxu0 0.0
    %7634 = vmatpush2.msra.mxu0 0.0
    %7635 = vmatprep.subr.mxu0 0.0
    %7636 = vmatpush2.msra.mxu0 0.0
    %7637 = vmatprep.subr.mxu0 0.0
    %7638 = vmatpush2.msra.mxu0 0.0
    %7639 = vmatprep.subr.mxu0 0.0
    %7640 = vmatpush2.msra.mxu0 0.0
    %7641 = vmatprep.mubr.f32.mxu0 0.0
    %7642 = vmatmul.mubr.f32.gmra.mxu0 %v7575
    %v7643 = vpop.f32.mrf.mxu0
    %v7644 = vadd.f32 0.0, %v7643
    %v7645 = vpop.f32.mrf.mxu0
    %v7646 = vadd.f32 0.0, %v7645
    %7647 = vdwg.mxu0
    %7648 = vmatprep.subr.mxu0 0.0
    %7649 = vmatpush1.msra.mxu0 0.0
    %7650 = vmatprep.subr.mxu0 0.0
    %7651 = vmatpush1.msra.mxu0 0.0
    %7652 = vmatprep.subr.mxu0 0.0
    %7653 = vmatpush1.msra.mxu0 0.0
    %7654 = vmatprep.subr.mxu0 0.0
    %7655 = vmatpush1.msra.mxu0 0.0
    %7656 = vmatprep.subr.mxu0 0.0
    %7657 = vmatpush1.msra.mxu0 0.0
    %7658 = vmatprep.subr.mxu0 0.0
    %7659 = vmatpush1.msra.mxu0 0.0
    %7660 = vmatprep.subr.mxu0 0.0
    %7661 = vmatpush1.msra.mxu0 0.0
    %7662 = vmatprep.subr.mxu0 0.0
    %7663 = vmatpush1.msra.mxu0 0.0
    %7664 = vmatprep.subr.mxu0 0.0
    %7665 = vmatpush1.msra.mxu0 0.0
    %7666 = vmatprep.subr.mxu0 0.0
    %7667 = vmatpush1.msra.mxu0 0.0
    %7668 = vmatprep.subr.mxu0 0.0
    %7669 = vmatpush1.msra.mxu0 0.0
    %7670 = vmatprep.subr.mxu0 0.0
    %7671 = vmatpush1.msra.mxu0 0.0
    %7672 = vmatprep.subr.mxu0 %v7573
    %7673 = vmatpush1.msra.mxu0 %v7572
    %7674 = vmatprep.subr.mxu0 %v7569
    %7675 = vmatpush1.msra.mxu0 %v7568
    %7676 = vmatprep.subr.mxu0 %v7565
    %7677 = vmatpush1.msra.mxu0 %v7564
    %7678 = vmatprep.subr.mxu0 %v7561
    %7679 = vmatpush1.msra.mxu0 %v7560
    %7680 = vmatprep.subr.mxu0 0.0
    %7681 = vmatpush2.msra.mxu0 0.0
    %7682 = vmatprep.subr.mxu0 0.0
    %7683 = vmatpush2.msra.mxu0 0.0
    %7684 = vmatprep.subr.mxu0 0.0
    %7685 = vmatpush2.msra.mxu0 0.0
    %7686 = vmatprep.subr.mxu0 0.0
    %7687 = vmatpush2.msra.mxu0 0.0
    %7688 = vmatprep.subr.mxu0 0.0
    %7689 = vmatpush2.msra.mxu0 0.0
    %7690 = vmatprep.subr.mxu0 0.0
    %7691 = vmatpush2.msra.mxu0 0.0
    %7692 = vmatprep.subr.mxu0 0.0
    %7693 = vmatpush2.msra.mxu0 0.0
    %7694 = vmatprep.subr.mxu0 0.0
    %7695 = vmatpush2.msra.mxu0 0.0
    %7696 = vmatprep.subr.mxu0 0.0
    %7697 = vmatpush2.msra.mxu0 0.0
    %7698 = vmatprep.subr.mxu0 0.0
    %7699 = vmatpush2.msra.mxu0 0.0
    %7700 = vmatprep.subr.mxu0 0.0
    %7701 = vmatpush2.msra.mxu0 0.0
    %7702 = vmatprep.subr.mxu0 0.0
    %7703 = vmatpush2.msra.mxu0 0.0
    %7704 = vmatprep.subr.mxu0 0.0
    %7705 = vmatpush2.msra.mxu0 0.0
    %7706 = vmatprep.subr.mxu0 0.0
    %7707 = vmatpush2.msra.mxu0 0.0
    %7708 = vmatprep.subr.mxu0 0.0
    %7709 = vmatpush2.msra.mxu0 0.0
    %7710 = vmatprep.subr.mxu0 0.0
    %7711 = vmatpush2.msra.mxu0 0.0
    %7712 = vmatprep.mubr.f32.mxu0 0.0
    %7713 = vmatmul.mubr.f32.gmra.mxu0 %v7575
    %v7714 = vpop.f32.mrf.mxu0
    %v7715 = vadd.f32 0.0, %v7714
    %v7716 = vpop.f32.mrf.mxu0
    %v7717 = vadd.f32 0.0, %v7716
    %7718 = vdwg.mxu0
    %v7719 = vadd.f32 %v7483, %v7644
    %v7720 = vadd.f32 %v7485, %v7646
    %v7721 = vadd.f32 %v7554, %v7715
    %v7722 = vadd.f32 %v7556, %v7717
    %v7723 = vxor.u32 %v7719, 2147483648
    %v7724 = vxor.u32 %v7720, 2147483648
    %v7725 = vxor.u32 %v7721, 2147483648
    %v7726 = vmul.f32 %v7723, 1.442695
    %v7727 = vpow.pop %v7726
    %v7728 = vmul.f32 %v7724, 1.442695
    %v7729 = vpow.pop %v7728
    %v7730 = vmul.f32 %v7725, 1.442695
    %v7731 = vpow.pop %v7730
    %v7732 = vadd.f32 %v7727, 1.0
    %v7733 = vadd.f32 %v7729, 1.0
    %v7734 = vadd.f32 %v7731, 1.0
    %v7735 = vrcp.pop %v7732
    %v7736 = vmul.f32 1.0, %v7735
    %v7737 = vrcp.pop %v7733
    %v7738 = vmul.f32 1.0, %v7737
    %v7739 = vrcp.pop %v7734
    %v7740 = vmul.f32 1.0, %v7739
    %v7741 = vtanh.pop %v7722
    %v7742 = vmul.f32 %v7738, %v7371
    %v7743 = vmul.f32 %v7736, %v7741
    %v7744 = vadd.f32 %v7742, %v7743
    %v7745 = vtanh.pop %v7744
    %v7746 = vmul.f32 %v7740, %v7745
    %7747 = vst [vmem:[#allocation3 + $0x7] sm:$0x1] %v7746
    %v7748 = vld [vmem:[#allocation3] sm:$0xff]
    %v7749 = vld [vmem:[#allocation4 + $0x2a0] sm:$0xff]
    %v7750 = vld [vmem:[#allocation4 + $0x2c0] sm:$0xff]
    %v7751 = vld [vmem:[#allocation4 + $0x2e0] sm:$0xff]
    %v7752 = vld [vmem:[#allocation4 + $0x300] sm:$0xff]
    %v7753 = vld [vmem:[#allocation4 + $0x323] ss:$0 sm:$0xff]
    %v7755 = vsel %vm233, %v7748, 0
    %7757 = vmatprep.subr.mxu0 0.0
    %7758 = vmatpush1.msra.mxu0 0.0
    %7759 = vmatprep.subr.mxu0 0.0
    %7760 = vmatpush1.msra.mxu0 0.0
    %7761 = vmatprep.subr.mxu0 0.0
    %7762 = vmatpush1.msra.mxu0 0.0
    %7763 = vmatprep.subr.mxu0 0.0
    %7764 = vmatpush1.msra.mxu0 0.0
    %7765 = vmatprep.subr.mxu0 0.0
    %7766 = vmatpush1.msra.mxu0 0.0
    %7767 = vmatprep.subr.mxu0 0.0
    %7768 = vmatpush1.msra.mxu0 0.0
    %7769 = vmatprep.subr.mxu0 0.0
    %7770 = vmatpush1.msra.mxu0 0.0
    %7771 = vmatprep.subr.mxu0 0.0
    %7772 = vmatpush1.msra.mxu0 0.0
    %7773 = vmatprep.subr.mxu0 0.0
    %7774 = vmatpush1.msra.mxu0 0.0
    %7775 = vmatprep.subr.mxu0 0.0
    %7776 = vmatpush1.msra.mxu0 0.0
    %7777 = vmatprep.subr.mxu0 0.0
    %7778 = vmatpush1.msra.mxu0 0.0
    %7779 = vmatprep.subr.mxu0 0.0
    %7780 = vmatpush1.msra.mxu0 0.0
    %7781 = vmatprep.subr.mxu0 0.0
    %7782 = vmatpush1.msra.mxu0 %v7752
    %7783 = vmatprep.subr.mxu0 0.0
    %7784 = vmatpush1.msra.mxu0 %v7751
    %7785 = vmatprep.subr.mxu0 0.0
    %7786 = vmatpush1.msra.mxu0 %v7750
    %7787 = vmatprep.subr.mxu0 0.0
    %7788 = vmatpush1.msra.mxu0 %v7749
    %7789 = vmatprep.subr.mxu0 0.0
    %7790 = vmatpush2.msra.mxu0 0.0
    %7791 = vmatprep.subr.mxu0 0.0
    %7792 = vmatpush2.msra.mxu0 0.0
    %7793 = vmatprep.subr.mxu0 0.0
    %7794 = vmatpush2.msra.mxu0 0.0
    %7795 = vmatprep.subr.mxu0 0.0
    %7796 = vmatpush2.msra.mxu0 0.0
    %7797 = vmatprep.subr.mxu0 0.0
    %7798 = vmatpush2.msra.mxu0 0.0
    %7799 = vmatprep.subr.mxu0 0.0
    %7800 = vmatpush2.msra.mxu0 0.0
    %7801 = vmatprep.subr.mxu0 0.0
    %7802 = vmatpush2.msra.mxu0 0.0
    %7803 = vmatprep.subr.mxu0 0.0
    %7804 = vmatpush2.msra.mxu0 0.0
    %7805 = vmatprep.subr.mxu0 0.0
    %7806 = vmatpush2.msra.mxu0 0.0
    %7807 = vmatprep.subr.mxu0 0.0
    %7808 = vmatpush2.msra.mxu0 0.0
    %7809 = vmatprep.subr.mxu0 0.0
    %7810 = vmatpush2.msra.mxu0 0.0
    %7811 = vmatprep.subr.mxu0 0.0
    %7812 = vmatpush2.msra.mxu0 0.0
    %7813 = vmatprep.subr.mxu0 0.0
    %7814 = vmatpush2.msra.mxu0 0.0
    %7815 = vmatprep.subr.mxu0 0.0
    %7816 = vmatpush2.msra.mxu0 0.0
    %7817 = vmatprep.subr.mxu0 0.0
    %7818 = vmatpush2.msra.mxu0 0.0
    %7819 = vmatprep.subr.mxu0 0.0
    %7820 = vmatpush2.msra.mxu0 0.0
    %7821 = vmatprep.mubr.f32.mxu0 0.0
    %7822 = vmatmul.mubr.f32.gmra.mxu0 %v7755
    %v7823 = vpop.f32.mrf.mxu0
    %v7824 = vadd.f32 %v7753, %v7823
    %v7825 = vpop.f32.mrf.mxu0
    %7826 = vdwg.mxu0
    %7827 = vst [vmem:[%s2] sm:$0xff] %v7824
    // Predicated region
    $region14: #{lstm_model_forward.1} parent=1 // pred_check
      _
    $region15: #{lstm_model_forward.1} parent=1 // pred_check_branch
      %7829 = sbr.rel (0) target = $region17
    $region16: #{lstm_model_forward.1} parent=1 // pred_region
      _
    $region17: #{lstm_model_forward.1} parent=1 // pred_fallthru
      _
    // Predicated region
    $region18: #{lstm_model_forward.1} parent=1 // pred_check
      _
    $region19: #{lstm_model_forward.1} parent=1 // pred_check_branch
      %7831 = sbr.rel (0) target = $region21
    $region20: #{lstm_model_forward.1} parent=1 // pred_region
      _
    $region21: #{lstm_model_forward.1} parent=1 // pred_fallthru
      _
    %7832 = vsyncpa [#allocation5], 1

</llo_original>
